<compile_context>
chip_gen: v5e
topology: v5e:2x2
jax: 0.10.0
libtpu: 0.0.40
codegen_flags: <defaults>
</compile_context>

<pallas_src>
import jax
import jax.numpy as jnp
from jax.experimental import pallas as pl
from jax.experimental.pallas import tpu as pltpu

C_IN = 3      # Conv2d input channels
C_MID = 8     # Conv2d output channels (becomes the batch axis after the view)
C_OUT = 8     # ConvTranspose2d output channels
LANE_CHUNK = 1024   # in-kernel lane chunk: (8, 1024) f32 accumulator = 8 vregs


def _pick_tile():
    # v7x has 2 TensorCores: keep >= 2 grid steps per core so output writeback
    # stays double-buffered.  Single-core v5e/v6e prefer fewer, bigger steps
    # (per-step overhead ~0.35 us rivals the whole HBM roofline here).
    try:
        kind = jax.devices()[0].device_kind.lower()
    except Exception:
        return 4096
    return 4096 if "7" in kind else 8192


def _make_kernel(tile):
    n_chunks = tile // LANE_CHUNK

    def fused_kernel(x_ref, w_ref, b_ref, o_ref):
        # x_ref: (1, C_IN, tile)          one spatial tile of one batch element
        # w_ref: (C_OUT, C_MID * C_IN)    folded weight  w1[co,ci] * w2[c2]
        # b_ref: (C_OUT, C_MID)           folded bias    b1[co]*w2[c2] + b2[c2]
        # o_ref: (1, C_MID, C_OUT, tile)
        for ch in range(n_chunks):
            s = ch * LANE_CHUNK
            # Sublane-broadcast each input row once per chunk -> full-density
            # (C_OUT, LANE_CHUNK) operands, reused across all co.
            xb = [
                jnp.broadcast_to(
                    x_ref[0, ci:ci + 1, s:s + LANE_CHUNK],
                    (C_OUT, LANE_CHUNK))
                for ci in range(C_IN)
            ]
            for co in range(C_MID):
                acc = b_ref[:, co:co + 1]                       # (C_OUT, 1)
                for ci in range(C_IN):
                    k = co * C_IN + ci
                    acc = acc + w_ref[:, k:k + 1] * xb[ci]      # (C_OUT, LC)
                o_ref[0, co, :, s:s + LANE_CHUNK] = (
                    jnp.maximum(acc, 0.0).astype(o_ref.dtype))

    return fused_kernel


def model_forward(x, conv_w, conv_b, tconv_w, tconv_b, *, tile=None):
    B, C, H, W = x.shape
    assert C == C_IN
    S = H + 2
    assert S == 128 and (B * C_MID * S * S) % (128 * 128) == 0, \
        "forward hardcodes view(-1, 1, 128, 128)"
    HW = H * W

    if tile is None:
        tile = _pick_tile()
    assert tile % LANE_CHUNK == 0
    nt = pl.cdiv(HW, tile)
    hw_pad = nt * tile

    # Flatten space.  Pad only the INPUT so every input block is full; the
    # output stays unpadded (HW) and the final block's stores are masked by
    # Pallas, so no post-kernel crop copy is needed.
    x_flat = x.reshape(B, C_IN, HW)
    if hw_pad != HW:
        x_flat = jnp.pad(x_flat, ((0, 0), (0, 0), (0, hw_pad - HW)))

    w1 = conv_w.reshape(C_MID, C_IN).astype(jnp.float32)   # (8, 3)
    b1 = conv_b.reshape(C_MID).astype(jnp.float32)         # (8,)
    w2 = tconv_w.reshape(C_OUT).astype(jnp.float32)        # (8,)
    b2 = tconv_b.reshape(C_OUT).astype(jnp.float32)        # (8,)

    # Fold the two 1x1 convs (ConvTranspose padding=1 just crops the Conv2d's
    # zero-padded border, so only the interior survives):
    #   out[co, c2, p] = relu(sum_ci w1[co,ci] w2[c2] x[ci,p]
    #                         + b1[co] w2[c2] + b2[c2])
    w_eff = (w2[:, None, None] * w1[None, :, :]).reshape(C_OUT, C_MID * C_IN)
    b_eff = w2[:, None] * b1[None, :] + b2[:, None]         # (C_OUT, C_MID)

    flops = B * C_MID * C_OUT * HW * (2 * C_IN + 1)
    bytes_accessed = 4 * (B * C_IN * HW + B * C_MID * C_OUT * HW
                          + w_eff.size + b_eff.size)

    out = pl.pallas_call(
        _make_kernel(tile),
        out_shape=jax.ShapeDtypeStruct((B, C_MID, C_OUT, HW), x.dtype),
        grid=(B, nt),
        in_specs=[
            pl.BlockSpec((1, C_IN, tile), lambda n, t: (n, 0, t)),
            pl.BlockSpec((C_OUT, C_MID * C_IN), lambda n, t: (0, 0)),
            pl.BlockSpec((C_OUT, C_MID), lambda n, t: (0, 0)),
        ],
        out_specs=pl.BlockSpec((1, C_MID, C_OUT, tile),
                               lambda n, t: (n, 0, 0, t)),
        compiler_params=pltpu.CompilerParams(
            dimension_semantics=("parallel", "parallel")),
        cost_estimate=pl.CostEstimate(flops=flops, transcendentals=0,
                                      bytes_accessed=bytes_accessed),
    )(x_flat, w_eff, b_eff)

    # (B, 8, 8, HW) -> (B*8, 8, H, W): contiguous, free bitcast reshape.
    return out.reshape(B * C_MID, C_OUT, H, W)


def reference_forward(x, conv_w, conv_b, tconv_w, tconv_b):
    # Pure-JAX reference mirroring the PyTorch ops.
    v1 = jax.lax.conv_general_dilated(
        x, conv_w, window_strides=(1, 1), padding=((1, 1), (1, 1)),
        dimension_numbers=("NCHW", "OIHW", "NCHW")) + conv_b.reshape(1, -1, 1, 1)
    v2 = v1.reshape(x.shape[0], -1)
    v3 = v2.reshape(-1, 1, 128, 128)
    # ConvTranspose2d(1, 8, k=1, s=1, p=1) == crop 1-px border then 1x1 conv.
    inner = v3[:, 0, 1:-1, 1:-1]                          # (B*8, 126, 126)
    w2 = tconv_w.reshape(C_OUT)
    v4 = inner[:, None, :, :] * w2[None, :, None, None] \
         + tconv_b.reshape(1, -1, 1, 1)
    return jnp.maximum(v4, 0.0)


if __name__ == "__main__":
    key = jax.random.PRNGKey(0)
    kx, k1, k2, k3, k4 = jax.random.split(key, 5)

    # 126x126 input -> Conv2d(pad=1) output is 128x128, so view(-1,1,128,128)
    # is valid (the module's own 128x128 example input is not).
    x = jax.random.normal(kx, (1, 3, 126, 126), jnp.float32)
    conv_w = jax.random.normal(k1, (8, 3, 1, 1), jnp.float32) * 0.3
    conv_b = jax.random.normal(k2, (8,), jnp.float32) * 0.1
    tconv_w = jax.random.normal(k3, (1, 8, 1, 1), jnp.float32) * 0.3
    tconv_b = jax.random.normal(k4, (8,), jnp.float32) * 0.1

    out = jax.block_until_ready(
        model_forward(x, conv_w, conv_b, tconv_w, tconv_b))

    ref = reference_forward(x, conv_w, conv_b, tconv_w, tconv_b)
    assert out.shape == (8, 8, 126, 126), out.shape
    err = float(jnp.max(jnp.abs(out - ref)))
    assert err < 1e-4, err
    print("KERNEL_OK")
</pallas_src>

<mosaic_0001>
module attributes {stable_mosaic.version = 11 : i64} {
  func.func @fused_kernel(%arg0: i32, %arg1: i32, %arg2: memref<1x3x8192xf32, #tpu.memory_space<vmem>>, %arg3: memref<8x24xf32, #tpu.memory_space<vmem>>, %arg4: memref<8x8xf32, #tpu.memory_space<vmem>>, %arg5: memref<1x8x8x8192xf32, #tpu.memory_space<vmem>>) attributes {dimension_semantics = [#tpu.dimension_semantics<parallel>, #tpu.dimension_semantics<parallel>], iteration_bounds = array<i64: 1, 2>, scalar_prefetch = 0 : i64, scratch_operands = 0 : i64, tpu.core_type = #tpu.core_type<tc>, window_params = [{transform_indices = @transform_0, window_bounds = array<i64: 1, 3, 8192>}, {pipeline_mode = #tpu.pipeline_mode<synchronous>, transform_indices = @transform_1, window_bounds = array<i64: 8, 24>}, {pipeline_mode = #tpu.pipeline_mode<synchronous>, transform_indices = @transform_2, window_bounds = array<i64: 8, 8>}, {transform_indices = @transform_3, window_bounds = array<i64: 1, 8, 8, 8192>}]} {
    %c0 = arith.constant 0 : index
    %c0_0 = arith.constant 0 : index
    %c0_1 = arith.constant 0 : index
    %0 = vector.load %arg2[%c0, %c0_0, %c0_1] : memref<1x3x8192xf32, #tpu.memory_space<vmem>>, vector<1x1x1024xf32>
    %1 = vector.shape_cast %0 : vector<1x1x1024xf32> to vector<1x1024xf32>
    %2 = vector.shape_cast %1 : vector<1x1024xf32> to vector<1x1024xf32>
    %3 = vector.broadcast %2 : vector<1x1024xf32> to vector<8x1024xf32>
    %c0_2 = arith.constant 0 : index
    %c1 = arith.constant 1 : index
    %c0_3 = arith.constant 0 : index
    %4 = vector.load %arg2[%c0_2, %c1, %c0_3] : memref<1x3x8192xf32, #tpu.memory_space<vmem>>, vector<1x1x1024xf32>
    %5 = vector.shape_cast %4 : vector<1x1x1024xf32> to vector<1x1024xf32>
    %6 = vector.shape_cast %5 : vector<1x1024xf32> to vector<1x1024xf32>
    %7 = vector.broadcast %6 : vector<1x1024xf32> to vector<8x1024xf32>
    %c0_4 = arith.constant 0 : index
    %c2 = arith.constant 2 : index
    %c0_5 = arith.constant 0 : index
    %8 = vector.load %arg2[%c0_4, %c2, %c0_5] : memref<1x3x8192xf32, #tpu.memory_space<vmem>>, vector<1x1x1024xf32>
    %9 = vector.shape_cast %8 : vector<1x1x1024xf32> to vector<1x1024xf32>
    %10 = vector.shape_cast %9 : vector<1x1024xf32> to vector<1x1024xf32>
    %11 = vector.broadcast %10 : vector<1x1024xf32> to vector<8x1024xf32>
    %c0_6 = arith.constant 0 : index
    %c0_7 = arith.constant 0 : index
    %12 = vector.load %arg4[%c0_6, %c0_7] : memref<8x8xf32, #tpu.memory_space<vmem>>, vector<8x1xf32>
    %c0_8 = arith.constant 0 : index
    %c0_9 = arith.constant 0 : index
    %13 = vector.load %arg3[%c0_8, %c0_9] : memref<8x24xf32, #tpu.memory_space<vmem>>, vector<8x1xf32>
    %14 = vector.broadcast %13 : vector<8x1xf32> to vector<8x1024xf32>
    %15 = arith.mulf %14, %3 : vector<8x1024xf32>
    %16 = vector.broadcast %12 : vector<8x1xf32> to vector<8x1024xf32>
    %17 = arith.addf %16, %15 : vector<8x1024xf32>
    %c0_10 = arith.constant 0 : index
    %c1_11 = arith.constant 1 : index
    %18 = vector.load %arg3[%c0_10, %c1_11] : memref<8x24xf32, #tpu.memory_space<vmem>>, vector<8x1xf32>
    %19 = vector.broadcast %18 : vector<8x1xf32> to vector<8x1024xf32>
    %20 = arith.mulf %19, %7 : vector<8x1024xf32>
    %21 = arith.addf %17, %20 : vector<8x1024xf32>
    %c0_12 = arith.constant 0 : index
    %c2_13 = arith.constant 2 : index
    %22 = vector.load %arg3[%c0_12, %c2_13] : memref<8x24xf32, #tpu.memory_space<vmem>>, vector<8x1xf32>
    %23 = vector.broadcast %22 : vector<8x1xf32> to vector<8x1024xf32>
    %24 = arith.mulf %23, %11 : vector<8x1024xf32>
    %25 = arith.addf %21, %24 : vector<8x1024xf32>
    %cst = arith.constant 0.000000e+00 : f32
    %26 = vector.broadcast %cst : f32 to vector<8x1024xf32>
    %27 = arith.maximumf %25, %26 : vector<8x1024xf32>
    %c0_14 = arith.constant 0 : index
    %c0_15 = arith.constant 0 : index
    %c0_16 = arith.constant 0 : index
    %c0_17 = arith.constant 0 : index
    %28 = vector.load %arg5[%c0_14, %c0_15, %c0_16, %c0_17] : memref<1x8x8x8192xf32, #tpu.memory_space<vmem>>, vector<1x1x8x1024xf32>
    %29 = vector.shape_cast %28 : vector<1x1x8x1024xf32> to vector<8x1024xf32>
    %30 = vector.shape_cast %27 : vector<8x1024xf32> to vector<1x1x8x1024xf32>
    tpu.vector_store %arg5[%c0_14, %c0_15, %c0_16, %c0_17], %30 {strides = array<i32>} : memref<1x8x8x8192xf32, #tpu.memory_space<vmem>>, vector<1x1x8x1024xf32>,
    %c0_18 = arith.constant 0 : index
    %c1_19 = arith.constant 1 : index
    %31 = vector.load %arg4[%c0_18, %c1_19] : memref<8x8xf32, #tpu.memory_space<vmem>>, vector<8x1xf32>
    %c0_20 = arith.constant 0 : index
    %c3 = arith.constant 3 : index
    %32 = vector.load %arg3[%c0_20, %c3] : memref<8x24xf32, #tpu.memory_space<vmem>>, vector<8x1xf32>
    %33 = vector.broadcast %32 : vector<8x1xf32> to vector<8x1024xf32>
    %34 = arith.mulf %33, %3 : vector<8x1024xf32>
    %35 = vector.broadcast %31 : vector<8x1xf32> to vector<8x1024xf32>
    %36 = arith.addf %35, %34 : vector<8x1024xf32>
    %c0_21 = arith.constant 0 : index
    %c4 = arith.constant 4 : index
    %37 = vector.load %arg3[%c0_21, %c4] : memref<8x24xf32, #tpu.memory_space<vmem>>, vector<8x1xf32>
    %38 = vector.broadcast %37 : vector<8x1xf32> to vector<8x1024xf32>
    %39 = arith.mulf %38, %7 : vector<8x1024xf32>
    %40 = arith.addf %36, %39 : vector<8x1024xf32>
    %c0_22 = arith.constant 0 : index
    %c5 = arith.constant 5 : index
    %41 = vector.load %arg3[%c0_22, %c5] : memref<8x24xf32, #tpu.memory_space<vmem>>, vector<8x1xf32>
    %42 = vector.broadcast %41 : vector<8x1xf32> to vector<8x1024xf32>
    %43 = arith.mulf %42, %11 : vector<8x1024xf32>
    %44 = arith.addf %40, %43 : vector<8x1024xf32>
    %cst_23 = arith.constant 0.000000e+00 : f32
    %45 = vector.broadcast %cst_23 : f32 to vector<8x1024xf32>
    %46 = arith.maximumf %44, %45 : vector<8x1024xf32>
    %c0_24 = arith.constant 0 : index
    %c1_25 = arith.constant 1 : index
    %c0_26 = arith.constant 0 : index
    %c0_27 = arith.constant 0 : index
    %47 = vector.load %arg5[%c0_24, %c1_25, %c0_26, %c0_27] : memref<1x8x8x8192xf32, #tpu.memory_space<vmem>>, vector<1x1x8x1024xf32>
    %48 = vector.shape_cast %47 : vector<1x1x8x1024xf32> to vector<8x1024xf32>
    %49 = vector.shape_cast %46 : vector<8x1024xf32> to vector<1x1x8x1024xf32>
    tpu.vector_store %arg5[%c0_24, %c1_25, %c0_26, %c0_27], %49 {strides = array<i32>} : memref<1x8x8x8192xf32, #tpu.memory_space<vmem>>, vector<1x1x8x1024xf32>,
    %c0_28 = arith.constant 0 : index
    %c2_29 = arith.constant 2 : index
    %50 = vector.load %arg4[%c0_28, %c2_29] : memref<8x8xf32, #tpu.memory_space<vmem>>, vector<8x1xf32>
    %c0_30 = arith.constant 0 : index
    %c6 = arith.constant 6 : index
    %51 = vector.load %arg3[%c0_30, %c6] : memref<8x24xf32, #tpu.memory_space<vmem>>, vector<8x1xf32>
    %52 = vector.broadcast %51 : vector<8x1xf32> to vector<8x1024xf32>
    %53 = arith.mulf %52, %3 : vector<8x1024xf32>
    %54 = vector.broadcast %50 : vector<8x1xf32> to vector<8x1024xf32>
    %55 = arith.addf %54, %53 : vector<8x1024xf32>
    %c0_31 = arith.constant 0 : index
    %c7 = arith.constant 7 : index
    %56 = vector.load %arg3[%c0_31, %c7] : memref<8x24xf32, #tpu.memory_space<vmem>>, vector<8x1xf32>
    %57 = vector.broadcast %56 : vector<8x1xf32> to vector<8x1024xf32>
    %58 = arith.mulf %57, %7 : vector<8x1024xf32>
    %59 = arith.addf %55, %58 : vector<8x1024xf32>
    %c0_32 = arith.constant 0 : index
    %c8 = arith.constant 8 : index
    %60 = vector.load %arg3[%c0_32, %c8] : memref<8x24xf32, #tpu.memory_space<vmem>>, vector<8x1xf32>
    %61 = vector.broadcast %60 : vector<8x1xf32> to vector<8x1024xf32>
    %62 = arith.mulf %61, %11 : vector<8x1024xf32>
    %63 = arith.addf %59, %62 : vector<8x1024xf32>
    %cst_33 = arith.constant 0.000000e+00 : f32
    %64 = vector.broadcast %cst_33 : f32 to vector<8x1024xf32>
    %65 = arith.maximumf %63, %64 : vector<8x1024xf32>
    %c0_34 = arith.constant 0 : index
    %c2_35 = arith.constant 2 : index
    %c0_36 = arith.constant 0 : index
    %c0_37 = arith.constant 0 : index
    %66 = vector.load %arg5[%c0_34, %c2_35, %c0_36, %c0_37] : memref<1x8x8x8192xf32, #tpu.memory_space<vmem>>, vector<1x1x8x1024xf32>
    %67 = vector.shape_cast %66 : vector<1x1x8x1024xf32> to vector<8x1024xf32>
    %68 = vector.shape_cast %65 : vector<8x1024xf32> to vector<1x1x8x1024xf32>
    tpu.vector_store %arg5[%c0_34, %c2_35, %c0_36, %c0_37], %68 {strides = array<i32>} : memref<1x8x8x8192xf32, #tpu.memory_space<vmem>>, vector<1x1x8x1024xf32>,
    %c0_38 = arith.constant 0 : index
    %c3_39 = arith.constant 3 : index
    %69 = vector.load %arg4[%c0_38, %c3_39] : memref<8x8xf32, #tpu.memory_space<vmem>>, vector<8x1xf32>
    %c0_40 = arith.constant 0 : index
    %c9 = arith.constant 9 : index
    %70 = vector.load %arg3[%c0_40, %c9] : memref<8x24xf32, #tpu.memory_space<vmem>>, vector<8x1xf32>
    %71 = vector.broadcast %70 : vector<8x1xf32> to vector<8x1024xf32>
    %72 = arith.mulf %71, %3 : vector<8x1024xf32>
    %73 = vector.broadcast %69 : vector<8x1xf32> to vector<8x1024xf32>
    %74 = arith.addf %73, %72 : vector<8x1024xf32>
    %c0_41 = arith.constant 0 : index
    %c10 = arith.constant 10 : index
    %75 = vector.load %arg3[%c0_41, %c10] : memref<8x24xf32, #tpu.memory_space<vmem>>, vector<8x1xf32>
    %76 = vector.broadcast %75 : vector<8x1xf32> to vector<8x1024xf32>
    %77 = arith.mulf %76, %7 : vector<8x1024xf32>
    %78 = arith.addf %74, %77 : vector<8x1024xf32>
    %c0_42 = arith.constant 0 : index
    %c11 = arith.constant 11 : index
    %79 = vector.load %arg3[%c0_42, %c11] : memref<8x24xf32, #tpu.memory_space<vmem>>, vector<8x1xf32>
    %80 = vector.broadcast %79 : vector<8x1xf32> to vector<8x1024xf32>
    %81 = arith.mulf %80, %11 : vector<8x1024xf32>
    %82 = arith.addf %78, %81 : vector<8x1024xf32>
    %cst_43 = arith.constant 0.000000e+00 : f32
    %83 = vector.broadcast %cst_43 : f32 to vector<8x1024xf32>
    %84 = arith.maximumf %82, %83 : vector<8x1024xf32>
    %c0_44 = arith.constant 0 : index
    %c3_45 = arith.constant 3 : index
    %c0_46 = arith.constant 0 : index
    %c0_47 = arith.constant 0 : index
    %85 = vector.load %arg5[%c0_44, %c3_45, %c0_46, %c0_47] : memref<1x8x8x8192xf32, #tpu.memory_space<vmem>>, vector<1x1x8x1024xf32>
    %86 = vector.shape_cast %85 : vector<1x1x8x1024xf32> to vector<8x1024xf32>
    %87 = vector.shape_cast %84 : vector<8x1024xf32> to vector<1x1x8x1024xf32>
    tpu.vector_store %arg5[%c0_44, %c3_45, %c0_46, %c0_47], %87 {strides = array<i32>} : memref<1x8x8x8192xf32, #tpu.memory_space<vmem>>, vector<1x1x8x1024xf32>,
    %c0_48 = arith.constant 0 : index
    %c4_49 = arith.constant 4 : index
    %88 = vector.load %arg4[%c0_48, %c4_49] : memref<8x8xf32, #tpu.memory_space<vmem>>, vector<8x1xf32>
    %c0_50 = arith.constant 0 : index
    %c12 = arith.constant 12 : index
    %89 = vector.load %arg3[%c0_50, %c12] : memref<8x24xf32, #tpu.memory_space<vmem>>, vector<8x1xf32>
    %90 = vector.broadcast %89 : vector<8x1xf32> to vector<8x1024xf32>
    %91 = arith.mulf %90, %3 : vector<8x1024xf32>
    %92 = vector.broadcast %88 : vector<8x1xf32> to vector<8x1024xf32>
    %93 = arith.addf %92, %91 : vector<8x1024xf32>
    %c0_51 = arith.constant 0 : index
    %c13 = arith.constant 13 : index
    %94 = vector.load %arg3[%c0_51, %c13] : memref<8x24xf32, #tpu.memory_space<vmem>>, vector<8x1xf32>
    %95 = vector.broadcast %94 : vector<8x1xf32> to vector<8x1024xf32>
    %96 = arith.mulf %95, %7 : vector<8x1024xf32>
    %97 = arith.addf %93, %96 : vector<8x1024xf32>
    %c0_52 = arith.constant 0 : index
    %c14 = arith.constant 14 : index
    %98 = vector.load %arg3[%c0_52, %c14] : memref<8x24xf32, #tpu.memory_space<vmem>>, vector<8x1xf32>
    %99 = vector.broadcast %98 : vector<8x1xf32> to vector<8x1024xf32>
    %100 = arith.mulf %99, %11 : vector<8x1024xf32>
    %101 = arith.addf %97, %100 : vector<8x1024xf32>
    %cst_53 = arith.constant 0.000000e+00 : f32
    %102 = vector.broadcast %cst_53 : f32 to vector<8x1024xf32>
    %103 = arith.maximumf %101, %102 : vector<8x1024xf32>
    %c0_54 = arith.constant 0 : index
    %c4_55 = arith.constant 4 : index
    %c0_56 = arith.constant 0 : index
    %c0_57 = arith.constant 0 : index
    %104 = vector.load %arg5[%c0_54, %c4_55, %c0_56, %c0_57] : memref<1x8x8x8192xf32, #tpu.memory_space<vmem>>, vector<1x1x8x1024xf32>
    %105 = vector.shape_cast %104 : vector<1x1x8x1024xf32> to vector<8x1024xf32>
    %106 = vector.shape_cast %103 : vector<8x1024xf32> to vector<1x1x8x1024xf32>
    tpu.vector_store %arg5[%c0_54, %c4_55, %c0_56, %c0_57], %106 {strides = array<i32>} : memref<1x8x8x8192xf32, #tpu.memory_space<vmem>>, vector<1x1x8x1024xf32>,
    %c0_58 = arith.constant 0 : index
    %c5_59 = arith.constant 5 : index
    %107 = vector.load %arg4[%c0_58, %c5_59] : memref<8x8xf32, #tpu.memory_space<vmem>>, vector<8x1xf32>
    %c0_60 = arith.constant 0 : index
    %c15 = arith.constant 15 : index
    %108 = vector.load %arg3[%c0_60, %c15] : memref<8x24xf32, #tpu.memory_space<vmem>>, vector<8x1xf32>
    %109 = vector.broadcast %108 : vector<8x1xf32> to vector<8x1024xf32>
    %110 = arith.mulf %109, %3 : vector<8x1024xf32>
    %111 = vector.broadcast %107 : vector<8x1xf32> to vector<8x1024xf32>
    %112 = arith.addf %111, %110 : vector<8x1024xf32>
    %c0_61 = arith.constant 0 : index
    %c16 = arith.constant 16 : index
    %113 = vector.load %arg3[%c0_61, %c16] : memref<8x24xf32, #tpu.memory_space<vmem>>, vector<8x1xf32>
    %114 = vector.broadcast %113 : vector<8x1xf32> to vector<8x1024xf32>
    %115 = arith.mulf %114, %7 : vector<8x1024xf32>
    %116 = arith.addf %112, %115 : vector<8x1024xf32>
    %c0_62 = arith.constant 0 : index
    %c17 = arith.constant 17 : index
    %117 = vector.load %arg3[%c0_62, %c17] : memref<8x24xf32, #tpu.memory_space<vmem>>, vector<8x1xf32>
    %118 = vector.broadcast %117 : vector<8x1xf32> to vector<8x1024xf32>
    %119 = arith.mulf %118, %11 : vector<8x1024xf32>
    %120 = arith.addf %116, %119 : vector<8x1024xf32>
    %cst_63 = arith.constant 0.000000e+00 : f32
    %121 = vector.broadcast %cst_63 : f32 to vector<8x1024xf32>
    %122 = arith.maximumf %120, %121 : vector<8x1024xf32>
    %c0_64 = arith.constant 0 : index
    %c5_65 = arith.constant 5 : index
    %c0_66 = arith.constant 0 : index
    %c0_67 = arith.constant 0 : index
    %123 = vector.load %arg5[%c0_64, %c5_65, %c0_66, %c0_67] : memref<1x8x8x8192xf32, #tpu.memory_space<vmem>>, vector<1x1x8x1024xf32>
    %124 = vector.shape_cast %123 : vector<1x1x8x1024xf32> to vector<8x1024xf32>
    %125 = vector.shape_cast %122 : vector<8x1024xf32> to vector<1x1x8x1024xf32>
    tpu.vector_store %arg5[%c0_64, %c5_65, %c0_66, %c0_67], %125 {strides = array<i32>} : memref<1x8x8x8192xf32, #tpu.memory_space<vmem>>, vector<1x1x8x1024xf32>,
    %c0_68 = arith.constant 0 : index
    %c6_69 = arith.constant 6 : index
    %126 = vector.load %arg4[%c0_68, %c6_69] : memref<8x8xf32, #tpu.memory_space<vmem>>, vector<8x1xf32>
    %c0_70 = arith.constant 0 : index
    %c18 = arith.constant 18 : index
    %127 = vector.load %arg3[%c0_70, %c18] : memref<8x24xf32, #tpu.memory_space<vmem>>, vector<8x1xf32>
    %128 = vector.broadcast %127 : vector<8x1xf32> to vector<8x1024xf32>
    %129 = arith.mulf %128, %3 : vector<8x1024xf32>
    %130 = vector.broadcast %126 : vector<8x1xf32> to vector<8x1024xf32>
    %131 = arith.addf %130, %129 : vector<8x1024xf32>
    %c0_71 = arith.constant 0 : index
    %c19 = arith.constant 19 : index
    %132 = vector.load %arg3[%c0_71, %c19] : memref<8x24xf32, #tpu.memory_space<vmem>>, vector<8x1xf32>
    %133 = vector.broadcast %132 : vector<8x1xf32> to vector<8x1024xf32>
    %134 = arith.mulf %133, %7 : vector<8x1024xf32>
    %135 = arith.addf %131, %134 : vector<8x1024xf32>
    %c0_72 = arith.constant 0 : index
    %c20 = arith.constant 20 : index
    %136 = vector.load %arg3[%c0_72, %c20] : memref<8x24xf32, #tpu.memory_space<vmem>>, vector<8x1xf32>
    %137 = vector.broadcast %136 : vector<8x1xf32> to vector<8x1024xf32>
    %138 = arith.mulf %137, %11 : vector<8x1024xf32>
    %139 = arith.addf %135, %138 : vector<8x1024xf32>
    %cst_73 = arith.constant 0.000000e+00 : f32
    %140 = vector.broadcast %cst_73 : f32 to vector<8x1024xf32>
    %141 = arith.maximumf %139, %140 : vector<8x1024xf32>
    %c0_74 = arith.constant 0 : index
    %c6_75 = arith.constant 6 : index
    %c0_76 = arith.constant 0 : index
    %c0_77 = arith.constant 0 : index
    %142 = vector.load %arg5[%c0_74, %c6_75, %c0_76, %c0_77] : memref<1x8x8x8192xf32, #tpu.memory_space<vmem>>, vector<1x1x8x1024xf32>
    %143 = vector.shape_cast %142 : vector<1x1x8x1024xf32> to vector<8x1024xf32>
    %144 = vector.shape_cast %141 : vector<8x1024xf32> to vector<1x1x8x1024xf32>
    tpu.vector_store %arg5[%c0_74, %c6_75, %c0_76, %c0_77], %144 {strides = array<i32>} : memref<1x8x8x8192xf32, #tpu.memory_space<vmem>>, vector<1x1x8x1024xf32>,
    %c0_78 = arith.constant 0 : index
    %c7_79 = arith.constant 7 : index
    %145 = vector.load %arg4[%c0_78, %c7_79] : memref<8x8xf32, #tpu.memory_space<vmem>>, vector<8x1xf32>
    %c0_80 = arith.constant 0 : index
    %c21 = arith.constant 21 : index
    %146 = vector.load %arg3[%c0_80, %c21] : memref<8x24xf32, #tpu.memory_space<vmem>>, vector<8x1xf32>
    %147 = vector.broadcast %146 : vector<8x1xf32> to vector<8x1024xf32>
    %148 = arith.mulf %147, %3 : vector<8x1024xf32>
    %149 = vector.broadcast %145 : vector<8x1xf32> to vector<8x1024xf32>
    %150 = arith.addf %149, %148 : vector<8x1024xf32>
    %c0_81 = arith.constant 0 : index
    %c22 = arith.constant 22 : index
    %151 = vector.load %arg3[%c0_81, %c22] : memref<8x24xf32, #tpu.memory_space<vmem>>, vector<8x1xf32>
    %152 = vector.broadcast %151 : vector<8x1xf32> to vector<8x1024xf32>
    %153 = arith.mulf %152, %7 : vector<8x1024xf32>
    %154 = arith.addf %150, %153 : vector<8x1024xf32>
    %c0_82 = arith.constant 0 : index
    %c23 = arith.constant 23 : index
    %155 = vector.load %arg3[%c0_82, %c23] : memref<8x24xf32, #tpu.memory_space<vmem>>, vector<8x1xf32>
    %156 = vector.broadcast %155 : vector<8x1xf32> to vector<8x1024xf32>
    %157 = arith.mulf %156, %11 : vector<8x1024xf32>
    %158 = arith.addf %154, %157 : vector<8x1024xf32>
    %cst_83 = arith.constant 0.000000e+00 : f32
    %159 = vector.broadcast %cst_83 : f32 to vector<8x1024xf32>
    %160 = arith.maximumf %158, %159 : vector<8x1024xf32>
    %c0_84 = arith.constant 0 : index
    %c7_85 = arith.constant 7 : index
    %c0_86 = arith.constant 0 : index
    %c0_87 = arith.constant 0 : index
    %161 = vector.load %arg5[%c0_84, %c7_85, %c0_86, %c0_87] : memref<1x8x8x8192xf32, #tpu.memory_space<vmem>>, vector<1x1x8x1024xf32>
    %162 = vector.shape_cast %161 : vector<1x1x8x1024xf32> to vector<8x1024xf32>
    %163 = vector.shape_cast %160 : vector<8x1024xf32> to vector<1x1x8x1024xf32>
    tpu.vector_store %arg5[%c0_84, %c7_85, %c0_86, %c0_87], %163 {strides = array<i32>} : memref<1x8x8x8192xf32, #tpu.memory_space<vmem>>, vector<1x1x8x1024xf32>,
    %c0_88 = arith.constant 0 : index
    %c0_89 = arith.constant 0 : index
    %c1024 = arith.constant 1024 : index
    %164 = vector.load %arg2[%c0_88, %c0_89, %c1024] : memref<1x3x8192xf32, #tpu.memory_space<vmem>>, vector<1x1x1024xf32>
    %165 = vector.shape_cast %164 : vector<1x1x1024xf32> to vector<1x1024xf32>
    %166 = vector.shape_cast %165 : vector<1x1024xf32> to vector<1x1024xf32>
    %167 = vector.broadcast %166 : vector<1x1024xf32> to vector<8x1024xf32>
    %c0_90 = arith.constant 0 : index
    %c1_91 = arith.constant 1 : index
    %c1024_92 = arith.constant 1024 : index
    %168 = vector.load %arg2[%c0_90, %c1_91, %c1024_92] : memref<1x3x8192xf32, #tpu.memory_space<vmem>>, vector<1x1x1024xf32>
    %169 = vector.shape_cast %168 : vector<1x1x1024xf32> to vector<1x1024xf32>
    %170 = vector.shape_cast %169 : vector<1x1024xf32> to vector<1x1024xf32>
    %171 = vector.broadcast %170 : vector<1x1024xf32> to vector<8x1024xf32>
    %c0_93 = arith.constant 0 : index
    %c2_94 = arith.constant 2 : index
    %c1024_95 = arith.constant 1024 : index
    %172 = vector.load %arg2[%c0_93, %c2_94, %c1024_95] : memref<1x3x8192xf32, #tpu.memory_space<vmem>>, vector<1x1x1024xf32>
    %173 = vector.shape_cast %172 : vector<1x1x1024xf32> to vector<1x1024xf32>
    %174 = vector.shape_cast %173 : vector<1x1024xf32> to vector<1x1024xf32>
    %175 = vector.broadcast %174 : vector<1x1024xf32> to vector<8x1024xf32>
    %c0_96 = arith.constant 0 : index
    %c0_97 = arith.constant 0 : index
    %176 = vector.load %arg4[%c0_96, %c0_97] : memref<8x8xf32, #tpu.memory_space<vmem>>, vector<8x1xf32>
    %c0_98 = arith.constant 0 : index
    %c0_99 = arith.constant 0 : index
    %177 = vector.load %arg3[%c0_98, %c0_99] : memref<8x24xf32, #tpu.memory_space<vmem>>, vector<8x1xf32>
    %178 = vector.broadcast %177 : vector<8x1xf32> to vector<8x1024xf32>
    %179 = arith.mulf %178, %167 : vector<8x1024xf32>
    %180 = vector.broadcast %176 : vector<8x1xf32> to vector<8x1024xf32>
    %181 = arith.addf %180, %179 : vector<8x1024xf32>
    %c0_100 = arith.constant 0 : index
    %c1_101 = arith.constant 1 : index
    %182 = vector.load %arg3[%c0_100, %c1_101] : memref<8x24xf32, #tpu.memory_space<vmem>>, vector<8x1xf32>
    %183 = vector.broadcast %182 : vector<8x1xf32> to vector<8x1024xf32>
    %184 = arith.mulf %183, %171 : vector<8x1024xf32>
    %185 = arith.addf %181, %184 : vector<8x1024xf32>
    %c0_102 = arith.constant 0 : index
    %c2_103 = arith.constant 2 : index
    %186 = vector.load %arg3[%c0_102, %c2_103] : memref<8x24xf32, #tpu.memory_space<vmem>>, vector<8x1xf32>
    %187 = vector.broadcast %186 : vector<8x1xf32> to vector<8x1024xf32>
    %188 = arith.mulf %187, %175 : vector<8x1024xf32>
    %189 = arith.addf %185, %188 : vector<8x1024xf32>
    %cst_104 = arith.constant 0.000000e+00 : f32
    %190 = vector.broadcast %cst_104 : f32 to vector<8x1024xf32>
    %191 = arith.maximumf %189, %190 : vector<8x1024xf32>
    %c0_105 = arith.constant 0 : index
    %c0_106 = arith.constant 0 : index
    %c0_107 = arith.constant 0 : index
    %c1024_108 = arith.constant 1024 : index
    %192 = vector.load %arg5[%c0_105, %c0_106, %c0_107, %c1024_108] : memref<1x8x8x8192xf32, #tpu.memory_space<vmem>>, vector<1x1x8x1024xf32>
    %193 = vector.shape_cast %192 : vector<1x1x8x1024xf32> to vector<8x1024xf32>
    %194 = vector.shape_cast %191 : vector<8x1024xf32> to vector<1x1x8x1024xf32>
    tpu.vector_store %arg5[%c0_105, %c0_106, %c0_107, %c1024_108], %194 {strides = array<i32>} : memref<1x8x8x8192xf32, #tpu.memory_space<vmem>>, vector<1x1x8x1024xf32>,
    %c0_109 = arith.constant 0 : index
    %c1_110 = arith.constant 1 : index
    %195 = vector.load %arg4[%c0_109, %c1_110] : memref<8x8xf32, #tpu.memory_space<vmem>>, vector<8x1xf32>
    %c0_111 = arith.constant 0 : index
    %c3_112 = arith.constant 3 : index
    %196 = vector.load %arg3[%c0_111, %c3_112] : memref<8x24xf32, #tpu.memory_space<vmem>>, vector<8x1xf32>
    %197 = vector.broadcast %196 : vector<8x1xf32> to vector<8x1024xf32>
    %198 = arith.mulf %197, %167 : vector<8x1024xf32>
    %199 = vector.broadcast %195 : vector<8x1xf32> to vector<8x1024xf32>
    %200 = arith.addf %199, %198 : vector<8x1024xf32>
    %c0_113 = arith.constant 0 : index
    %c4_114 = arith.constant 4 : index
    %201 = vector.load %arg3[%c0_113, %c4_114] : memref<8x24xf32, #tpu.memory_space<vmem>>, vector<8x1xf32>
    %202 = vector.broadcast %201 : vector<8x1xf32> to vector<8x1024xf32>
    %203 = arith.mulf %202, %171 : vector<8x1024xf32>
    %204 = arith.addf %200, %203 : vector<8x1024xf32>
    %c0_115 = arith.constant 0 : index
    %c5_116 = arith.constant 5 : index
    %205 = vector.load %arg3[%c0_115, %c5_116] : memref<8x24xf32, #tpu.memory_space<vmem>>, vector<8x1xf32>
    %206 = vector.broadcast %205 : vector<8x1xf32> to vector<8x1024xf32>
    %207 = arith.mulf %206, %175 : vector<8x1024xf32>
    %208 = arith.addf %204, %207 : vector<8x1024xf32>
    %cst_117 = arith.constant 0.000000e+00 : f32
    %209 = vector.broadcast %cst_117 : f32 to vector<8x1024xf32>
    %210 = arith.maximumf %208, %209 : vector<8x1024xf32>
    %c0_118 = arith.constant 0 : index
    %c1_119 = arith.constant 1 : index
    %c0_120 = arith.constant 0 : index
    %c1024_121 = arith.constant 1024 : index
    %211 = vector.load %arg5[%c0_118, %c1_119, %c0_120, %c1024_121] : memref<1x8x8x8192xf32, #tpu.memory_space<vmem>>, vector<1x1x8x1024xf32>
    %212 = vector.shape_cast %211 : vector<1x1x8x1024xf32> to vector<8x1024xf32>
    %213 = vector.shape_cast %210 : vector<8x1024xf32> to vector<1x1x8x1024xf32>
    tpu.vector_store %arg5[%c0_118, %c1_119, %c0_120, %c1024_121], %213 {strides = array<i32>} : memref<1x8x8x8192xf32, #tpu.memory_space<vmem>>, vector<1x1x8x1024xf32>,
    %c0_122 = arith.constant 0 : index
    %c2_123 = arith.constant 2 : index
    %214 = vector.load %arg4[%c0_122, %c2_123] : memref<8x8xf32, #tpu.memory_space<vmem>>, vector<8x1xf32>
    %c0_124 = arith.constant 0 : index
    %c6_125 = arith.constant 6 : index
    %215 = vector.load %arg3[%c0_124, %c6_125] : memref<8x24xf32, #tpu.memory_space<vmem>>, vector<8x1xf32>
    %216 = vector.broadcast %215 : vector<8x1xf32> to vector<8x1024xf32>
    %217 = arith.mulf %216, %167 : vector<8x1024xf32>
    %218 = vector.broadcast %214 : vector<8x1xf32> to vector<8x1024xf32>
    %219 = arith.addf %218, %217 : vector<8x1024xf32>
    %c0_126 = arith.constant 0 : index
    %c7_127 = arith.constant 7 : index
    %220 = vector.load %arg3[%c0_126, %c7_127] : memref<8x24xf32, #tpu.memory_space<vmem>>, vector<8x1xf32>
    %221 = vector.broadcast %220 : vector<8x1xf32> to vector<8x1024xf32>
    %222 = arith.mulf %221, %171 : vector<8x1024xf32>
    %223 = arith.addf %219, %222 : vector<8x1024xf32>
    %c0_128 = arith.constant 0 : index
    %c8_129 = arith.constant 8 : index
    %224 = vector.load %arg3[%c0_128, %c8_129] : memref<8x24xf32, #tpu.memory_space<vmem>>, vector<8x1xf32>
    %225 = vector.broadcast %224 : vector<8x1xf32> to vector<8x1024xf32>
    %226 = arith.mulf %225, %175 : vector<8x1024xf32>
    %227 = arith.addf %223, %226 : vector<8x1024xf32>
    %cst_130 = arith.constant 0.000000e+00 : f32
    %228 = vector.broadcast %cst_130 : f32 to vector<8x1024xf32>
    %229 = arith.maximumf %227, %228 : vector<8x1024xf32>
    %c0_131 = arith.constant 0 : index
    %c2_132 = arith.constant 2 : index
    %c0_133 = arith.constant 0 : index
    %c1024_134 = arith.constant 1024 : index
    %230 = vector.load %arg5[%c0_131, %c2_132, %c0_133, %c1024_134] : memref<1x8x8x8192xf32, #tpu.memory_space<vmem>>, vector<1x1x8x1024xf32>
    %231 = vector.shape_cast %230 : vector<1x1x8x1024xf32> to vector<8x1024xf32>
    %232 = vector.shape_cast %229 : vector<8x1024xf32> to vector<1x1x8x1024xf32>
    tpu.vector_store %arg5[%c0_131, %c2_132, %c0_133, %c1024_134], %232 {strides = array<i32>} : memref<1x8x8x8192xf32, #tpu.memory_space<vmem>>, vector<1x1x8x1024xf32>,
    %c0_135 = arith.constant 0 : index
    %c3_136 = arith.constant 3 : index
    %233 = vector.load %arg4[%c0_135, %c3_136] : memref<8x8xf32, #tpu.memory_space<vmem>>, vector<8x1xf32>
    %c0_137 = arith.constant 0 : index
    %c9_138 = arith.constant 9 : index
    %234 = vector.load %arg3[%c0_137, %c9_138] : memref<8x24xf32, #tpu.memory_space<vmem>>, vector<8x1xf32>
    %235 = vector.broadcast %234 : vector<8x1xf32> to vector<8x1024xf32>
    %236 = arith.mulf %235, %167 : vector<8x1024xf32>
    %237 = vector.broadcast %233 : vector<8x1xf32> to vector<8x1024xf32>
    %238 = arith.addf %237, %236 : vector<8x1024xf32>
    %c0_139 = arith.constant 0 : index
    %c10_140 = arith.constant 10 : index
    %239 = vector.load %arg3[%c0_139, %c10_140] : memref<8x24xf32, #tpu.memory_space<vmem>>, vector<8x1xf32>
    %240 = vector.broadcast %239 : vector<8x1xf32> to vector<8x1024xf32>
    %241 = arith.mulf %240, %171 : vector<8x1024xf32>
    %242 = arith.addf %238, %241 : vector<8x1024xf32>
    %c0_141 = arith.constant 0 : index
    %c11_142 = arith.constant 11 : index
    %243 = vector.load %arg3[%c0_141, %c11_142] : memref<8x24xf32, #tpu.memory_space<vmem>>, vector<8x1xf32>
    %244 = vector.broadcast %243 : vector<8x1xf32> to vector<8x1024xf32>
    %245 = arith.mulf %244, %175 : vector<8x1024xf32>
    %246 = arith.addf %242, %245 : vector<8x1024xf32>
    %cst_143 = arith.constant 0.000000e+00 : f32
    %247 = vector.broadcast %cst_143 : f32 to vector<8x1024xf32>
    %248 = arith.maximumf %246, %247 : vector<8x1024xf32>
    %c0_144 = arith.constant 0 : index
    %c3_145 = arith.constant 3 : index
    %c0_146 = arith.constant 0 : index
    %c1024_147 = arith.constant 1024 : index
    %249 = vector.load %arg5[%c0_144, %c3_145, %c0_146, %c1024_147] : memref<1x8x8x8192xf32, #tpu.memory_space<vmem>>, vector<1x1x8x1024xf32>
    %250 = vector.shape_cast %249 : vector<1x1x8x1024xf32> to vector<8x1024xf32>
    %251 = vector.shape_cast %248 : vector<8x1024xf32> to vector<1x1x8x1024xf32>
    tpu.vector_store %arg5[%c0_144, %c3_145, %c0_146, %c1024_147], %251 {strides = array<i32>} : memref<1x8x8x8192xf32, #tpu.memory_space<vmem>>, vector<1x1x8x1024xf32>,
    %c0_148 = arith.constant 0 : index
    %c4_149 = arith.constant 4 : index
    %252 = vector.load %arg4[%c0_148, %c4_149] : memref<8x8xf32, #tpu.memory_space<vmem>>, vector<8x1xf32>
    %c0_150 = arith.constant 0 : index
    %c12_151 = arith.constant 12 : index
    %253 = vector.load %arg3[%c0_150, %c12_151] : memref<8x24xf32, #tpu.memory_space<vmem>>, vector<8x1xf32>
    %254 = vector.broadcast %253 : vector<8x1xf32> to vector<8x1024xf32>
    %255 = arith.mulf %254, %167 : vector<8x1024xf32>
    %256 = vector.broadcast %252 : vector<8x1xf32> to vector<8x1024xf32>
    %257 = arith.addf %256, %255 : vector<8x1024xf32>
    %c0_152 = arith.constant 0 : index
    %c13_153 = arith.constant 13 : index
    %258 = vector.load %arg3[%c0_152, %c13_153] : memref<8x24xf32, #tpu.memory_space<vmem>>, vector<8x1xf32>
    %259 = vector.broadcast %258 : vector<8x1xf32> to vector<8x1024xf32>
    %260 = arith.mulf %259, %171 : vector<8x1024xf32>
    %261 = arith.addf %257, %260 : vector<8x1024xf32>
    %c0_154 = arith.constant 0 : index
    %c14_155 = arith.constant 14 : index
    %262 = vector.load %arg3[%c0_154, %c14_155] : memref<8x24xf32, #tpu.memory_space<vmem>>, vector<8x1xf32>
    %263 = vector.broadcast %262 : vector<8x1xf32> to vector<8x1024xf32>
    %264 = arith.mulf %263, %175 : vector<8x1024xf32>
    %265 = arith.addf %261, %264 : vector<8x1024xf32>
    %cst_156 = arith.constant 0.000000e+00 : f32
    %266 = vector.broadcast %cst_156 : f32 to vector<8x1024xf32>
    %267 = arith.maximumf %265, %266 : vector<8x1024xf32>
    %c0_157 = arith.constant 0 : index
    %c4_158 = arith.constant 4 : index
    %c0_159 = arith.constant 0 : index
    %c1024_160 = arith.constant 1024 : index
    %268 = vector.load %arg5[%c0_157, %c4_158, %c0_159, %c1024_160] : memref<1x8x8x8192xf32, #tpu.memory_space<vmem>>, vector<1x1x8x1024xf32>
    %269 = vector.shape_cast %268 : vector<1x1x8x1024xf32> to vector<8x1024xf32>
    %270 = vector.shape_cast %267 : vector<8x1024xf32> to vector<1x1x8x1024xf32>
    tpu.vector_store %arg5[%c0_157, %c4_158, %c0_159, %c1024_160], %270 {strides = array<i32>} : memref<1x8x8x8192xf32, #tpu.memory_space<vmem>>, vector<1x1x8x1024xf32>,
    %c0_161 = arith.constant 0 : index
    %c5_162 = arith.constant 5 : index
    %271 = vector.load %arg4[%c0_161, %c5_162] : memref<8x8xf32, #tpu.memory_space<vmem>>, vector<8x1xf32>
    %c0_163 = arith.constant 0 : index
    %c15_164 = arith.constant 15 : index
    %272 = vector.load %arg3[%c0_163, %c15_164] : memref<8x24xf32, #tpu.memory_space<vmem>>, vector<8x1xf32>
    %273 = vector.broadcast %272 : vector<8x1xf32> to vector<8x1024xf32>
    %274 = arith.mulf %273, %167 : vector<8x1024xf32>
    %275 = vector.broadcast %271 : vector<8x1xf32> to vector<8x1024xf32>
    %276 = arith.addf %275, %274 : vector<8x1024xf32>
    %c0_165 = arith.constant 0 : index
    %c16_166 = arith.constant 16 : index
    %277 = vector.load %arg3[%c0_165, %c16_166] : memref<8x24xf32, #tpu.memory_space<vmem>>, vector<8x1xf32>
    %278 = vector.broadcast %277 : vector<8x1xf32> to vector<8x1024xf32>
    %279 = arith.mulf %278, %171 : vector<8x1024xf32>
    %280 = arith.addf %276, %279 : vector<8x1024xf32>
    %c0_167 = arith.constant 0 : index
    %c17_168 = arith.constant 17 : index
    %281 = vector.load %arg3[%c0_167, %c17_168] : memref<8x24xf32, #tpu.memory_space<vmem>>, vector<8x1xf32>
    %282 = vector.broadcast %281 : vector<8x1xf32> to vector<8x1024xf32>
    %283 = arith.mulf %282, %175 : vector<8x1024xf32>
    %284 = arith.addf %280, %283 : vector<8x1024xf32>
    %cst_169 = arith.constant 0.000000e+00 : f32
    %285 = vector.broadcast %cst_169 : f32 to vector<8x1024xf32>
    %286 = arith.maximumf %284, %285 : vector<8x1024xf32>
    %c0_170 = arith.constant 0 : index
    %c5_171 = arith.constant 5 : index
    %c0_172 = arith.constant 0 : index
    %c1024_173 = arith.constant 1024 : index
    %287 = vector.load %arg5[%c0_170, %c5_171, %c0_172, %c1024_173] : memref<1x8x8x8192xf32, #tpu.memory_space<vmem>>, vector<1x1x8x1024xf32>
    %288 = vector.shape_cast %287 : vector<1x1x8x1024xf32> to vector<8x1024xf32>
    %289 = vector.shape_cast %286 : vector<8x1024xf32> to vector<1x1x8x1024xf32>
    tpu.vector_store %arg5[%c0_170, %c5_171, %c0_172, %c1024_173], %289 {strides = array<i32>} : memref<1x8x8x8192xf32, #tpu.memory_space<vmem>>, vector<1x1x8x1024xf32>,
    %c0_174 = arith.constant 0 : index
    %c6_175 = arith.constant 6 : index
    %290 = vector.load %arg4[%c0_174, %c6_175] : memref<8x8xf32, #tpu.memory_space<vmem>>, vector<8x1xf32>
    %c0_176 = arith.constant 0 : index
    %c18_177 = arith.constant 18 : index
    %291 = vector.load %arg3[%c0_176, %c18_177] : memref<8x24xf32, #tpu.memory_space<vmem>>, vector<8x1xf32>
    %292 = vector.broadcast %291 : vector<8x1xf32> to vector<8x1024xf32>
    %293 = arith.mulf %292, %167 : vector<8x1024xf32>
    %294 = vector.broadcast %290 : vector<8x1xf32> to vector<8x1024xf32>
    %295 = arith.addf %294, %293 : vector<8x1024xf32>
    %c0_178 = arith.constant 0 : index
    %c19_179 = arith.constant 19 : index
    %296 = vector.load %arg3[%c0_178, %c19_179] : memref<8x24xf32, #tpu.memory_space<vmem>>, vector<8x1xf32>
    %297 = vector.broadcast %296 : vector<8x1xf32> to vector<8x1024xf32>
    %298 = arith.mulf %297, %171 : vector<8x1024xf32>
    %299 = arith.addf %295, %298 : vector<8x1024xf32>
    %c0_180 = arith.constant 0 : index
    %c20_181 = arith.constant 20 : index
    %300 = vector.load %arg3[%c0_180, %c20_181] : memref<8x24xf32, #tpu.memory_space<vmem>>, vector<8x1xf32>
    %301 = vector.broadcast %300 : vector<8x1xf32> to vector<8x1024xf32>
    %302 = arith.mulf %301, %175 : vector<8x1024xf32>
    %303 = arith.addf %299, %302 : vector<8x1024xf32>
    %cst_182 = arith.constant 0.000000e+00 : f32
    %304 = vector.broadcast %cst_182 : f32 to vector<8x1024xf32>
    %305 = arith.maximumf %303, %304 : vector<8x1024xf32>
    %c0_183 = arith.constant 0 : index
    %c6_184 = arith.constant 6 : index
    %c0_185 = arith.constant 0 : index
    %c1024_186 = arith.constant 1024 : index
    %306 = vector.load %arg5[%c0_183, %c6_184, %c0_185, %c1024_186] : memref<1x8x8x8192xf32, #tpu.memory_space<vmem>>, vector<1x1x8x1024xf32>
    %307 = vector.shape_cast %306 : vector<1x1x8x1024xf32> to vector<8x1024xf32>
    %308 = vector.shape_cast %305 : vector<8x1024xf32> to vector<1x1x8x1024xf32>
    tpu.vector_store %arg5[%c0_183, %c6_184, %c0_185, %c1024_186], %308 {strides = array<i32>} : memref<1x8x8x8192xf32, #tpu.memory_space<vmem>>, vector<1x1x8x1024xf32>,
    %c0_187 = arith.constant 0 : index
    %c7_188 = arith.constant 7 : index
    %309 = vector.load %arg4[%c0_187, %c7_188] : memref<8x8xf32, #tpu.memory_space<vmem>>, vector<8x1xf32>
    %c0_189 = arith.constant 0 : index
    %c21_190 = arith.constant 21 : index
    %310 = vector.load %arg3[%c0_189, %c21_190] : memref<8x24xf32, #tpu.memory_space<vmem>>, vector<8x1xf32>
    %311 = vector.broadcast %310 : vector<8x1xf32> to vector<8x1024xf32>
    %312 = arith.mulf %311, %167 : vector<8x1024xf32>
    %313 = vector.broadcast %309 : vector<8x1xf32> to vector<8x1024xf32>
    %314 = arith.addf %313, %312 : vector<8x1024xf32>
    %c0_191 = arith.constant 0 : index
    %c22_192 = arith.constant 22 : index
    %315 = vector.load %arg3[%c0_191, %c22_192] : memref<8x24xf32, #tpu.memory_space<vmem>>, vector<8x1xf32>
    %316 = vector.broadcast %315 : vector<8x1xf32> to vector<8x1024xf32>
    %317 = arith.mulf %316, %171 : vector<8x1024xf32>
    %318 = arith.addf %314, %317 : vector<8x1024xf32>
    %c0_193 = arith.constant 0 : index
    %c23_194 = arith.constant 23 : index
    %319 = vector.load %arg3[%c0_193, %c23_194] : memref<8x24xf32, #tpu.memory_space<vmem>>, vector<8x1xf32>
    %320 = vector.broadcast %319 : vector<8x1xf32> to vector<8x1024xf32>
    %321 = arith.mulf %320, %175 : vector<8x1024xf32>
    %322 = arith.addf %318, %321 : vector<8x1024xf32>
    %cst_195 = arith.constant 0.000000e+00 : f32
    %323 = vector.broadcast %cst_195 : f32 to vector<8x1024xf32>
    %324 = arith.maximumf %322, %323 : vector<8x1024xf32>
    %c0_196 = arith.constant 0 : index
    %c7_197 = arith.constant 7 : index
    %c0_198 = arith.constant 0 : index
    %c1024_199 = arith.constant 1024 : index
    %325 = vector.load %arg5[%c0_196, %c7_197, %c0_198, %c1024_199] : memref<1x8x8x8192xf32, #tpu.memory_space<vmem>>, vector<1x1x8x1024xf32>
    %326 = vector.shape_cast %325 : vector<1x1x8x1024xf32> to vector<8x1024xf32>
    %327 = vector.shape_cast %324 : vector<8x1024xf32> to vector<1x1x8x1024xf32>
    tpu.vector_store %arg5[%c0_196, %c7_197, %c0_198, %c1024_199], %327 {strides = array<i32>} : memref<1x8x8x8192xf32, #tpu.memory_space<vmem>>, vector<1x1x8x1024xf32>,
    %c0_200 = arith.constant 0 : index
    %c0_201 = arith.constant 0 : index
    %c2048 = arith.constant 2048 : index
    %328 = vector.load %arg2[%c0_200, %c0_201, %c2048] : memref<1x3x8192xf32, #tpu.memory_space<vmem>>, vector<1x1x1024xf32>
    %329 = vector.shape_cast %328 : vector<1x1x1024xf32> to vector<1x1024xf32>
    %330 = vector.shape_cast %329 : vector<1x1024xf32> to vector<1x1024xf32>
    %331 = vector.broadcast %330 : vector<1x1024xf32> to vector<8x1024xf32>
    %c0_202 = arith.constant 0 : index
    %c1_203 = arith.constant 1 : index
    %c2048_204 = arith.constant 2048 : index
    %332 = vector.load %arg2[%c0_202, %c1_203, %c2048_204] : memref<1x3x8192xf32, #tpu.memory_space<vmem>>, vector<1x1x1024xf32>
    %333 = vector.shape_cast %332 : vector<1x1x1024xf32> to vector<1x1024xf32>
    %334 = vector.shape_cast %333 : vector<1x1024xf32> to vector<1x1024xf32>
    %335 = vector.broadcast %334 : vector<1x1024xf32> to vector<8x1024xf32>
    %c0_205 = arith.constant 0 : index
    %c2_206 = arith.constant 2 : index
    %c2048_207 = arith.constant 2048 : index
    %336 = vector.load %arg2[%c0_205, %c2_206, %c2048_207] : memref<1x3x8192xf32, #tpu.memory_space<vmem>>, vector<1x1x1024xf32>
    %337 = vector.shape_cast %336 : vector<1x1x1024xf32> to vector<1x1024xf32>
    %338 = vector.shape_cast %337 : vector<1x1024xf32> to vector<1x1024xf32>
    %339 = vector.broadcast %338 : vector<1x1024xf32> to vector<8x1024xf32>
    %c0_208 = arith.constant 0 : index
    %c0_209 = arith.constant 0 : index
    %340 = vector.load %arg4[%c0_208, %c0_209] : memref<8x8xf32, #tpu.memory_space<vmem>>, vector<8x1xf32>
    %c0_210 = arith.constant 0 : index
    %c0_211 = arith.constant 0 : index
    %341 = vector.load %arg3[%c0_210, %c0_211] : memref<8x24xf32, #tpu.memory_space<vmem>>, vector<8x1xf32>
    %342 = vector.broadcast %341 : vector<8x1xf32> to vector<8x1024xf32>
    %343 = arith.mulf %342, %331 : vector<8x1024xf32>
    %344 = vector.broadcast %340 : vector<8x1xf32> to vector<8x1024xf32>
    %345 = arith.addf %344, %343 : vector<8x1024xf32>
    %c0_212 = arith.constant 0 : index
    %c1_213 = arith.constant 1 : index
    %346 = vector.load %arg3[%c0_212, %c1_213] : memref<8x24xf32, #tpu.memory_space<vmem>>, vector<8x1xf32>
    %347 = vector.broadcast %346 : vector<8x1xf32> to vector<8x1024xf32>
    %348 = arith.mulf %347, %335 : vector<8x1024xf32>
    %349 = arith.addf %345, %348 : vector<8x1024xf32>
    %c0_214 = arith.constant 0 : index
    %c2_215 = arith.constant 2 : index
    %350 = vector.load %arg3[%c0_214, %c2_215] : memref<8x24xf32, #tpu.memory_space<vmem>>, vector<8x1xf32>
    %351 = vector.broadcast %350 : vector<8x1xf32> to vector<8x1024xf32>
    %352 = arith.mulf %351, %339 : vector<8x1024xf32>
    %353 = arith.addf %349, %352 : vector<8x1024xf32>
    %cst_216 = arith.constant 0.000000e+00 : f32
    %354 = vector.broadcast %cst_216 : f32 to vector<8x1024xf32>
    %355 = arith.maximumf %353, %354 : vector<8x1024xf32>
    %c0_217 = arith.constant 0 : index
    %c0_218 = arith.constant 0 : index
    %c0_219 = arith.constant 0 : index
    %c2048_220 = arith.constant 2048 : index
    %356 = vector.load %arg5[%c0_217, %c0_218, %c0_219, %c2048_220] : memref<1x8x8x8192xf32, #tpu.memory_space<vmem>>, vector<1x1x8x1024xf32>
    %357 = vector.shape_cast %356 : vector<1x1x8x1024xf32> to vector<8x1024xf32>
    %358 = vector.shape_cast %355 : vector<8x1024xf32> to vector<1x1x8x1024xf32>
    tpu.vector_store %arg5[%c0_217, %c0_218, %c0_219, %c2048_220], %358 {strides = array<i32>} : memref<1x8x8x8192xf32, #tpu.memory_space<vmem>>, vector<1x1x8x1024xf32>,
    %c0_221 = arith.constant 0 : index
    %c1_222 = arith.constant 1 : index
    %359 = vector.load %arg4[%c0_221, %c1_222] : memref<8x8xf32, #tpu.memory_space<vmem>>, vector<8x1xf32>
    %c0_223 = arith.constant 0 : index
    %c3_224 = arith.constant 3 : index
    %360 = vector.load %arg3[%c0_223, %c3_224] : memref<8x24xf32, #tpu.memory_space<vmem>>, vector<8x1xf32>
    %361 = vector.broadcast %360 : vector<8x1xf32> to vector<8x1024xf32>
    %362 = arith.mulf %361, %331 : vector<8x1024xf32>
    %363 = vector.broadcast %359 : vector<8x1xf32> to vector<8x1024xf32>
    %364 = arith.addf %363, %362 : vector<8x1024xf32>
    %c0_225 = arith.constant 0 : index
    %c4_226 = arith.constant 4 : index
    %365 = vector.load %arg3[%c0_225, %c4_226] : memref<8x24xf32, #tpu.memory_space<vmem>>, vector<8x1xf32>
    %366 = vector.broadcast %365 : vector<8x1xf32> to vector<8x1024xf32>
    %367 = arith.mulf %366, %335 : vector<8x1024xf32>
    %368 = arith.addf %364, %367 : vector<8x1024xf32>
    %c0_227 = arith.constant 0 : index
    %c5_228 = arith.constant 5 : index
    %369 = vector.load %arg3[%c0_227, %c5_228] : memref<8x24xf32, #tpu.memory_space<vmem>>, vector<8x1xf32>
    %370 = vector.broadcast %369 : vector<8x1xf32> to vector<8x1024xf32>
    %371 = arith.mulf %370, %339 : vector<8x1024xf32>
    %372 = arith.addf %368, %371 : vector<8x1024xf32>
    %cst_229 = arith.constant 0.000000e+00 : f32
    %373 = vector.broadcast %cst_229 : f32 to vector<8x1024xf32>
    %374 = arith.maximumf %372, %373 : vector<8x1024xf32>
    %c0_230 = arith.constant 0 : index
    %c1_231 = arith.constant 1 : index
    %c0_232 = arith.constant 0 : index
    %c2048_233 = arith.constant 2048 : index
    %375 = vector.load %arg5[%c0_230, %c1_231, %c0_232, %c2048_233] : memref<1x8x8x8192xf32, #tpu.memory_space<vmem>>, vector<1x1x8x1024xf32>
    %376 = vector.shape_cast %375 : vector<1x1x8x1024xf32> to vector<8x1024xf32>
    %377 = vector.shape_cast %374 : vector<8x1024xf32> to vector<1x1x8x1024xf32>
    tpu.vector_store %arg5[%c0_230, %c1_231, %c0_232, %c2048_233], %377 {strides = array<i32>} : memref<1x8x8x8192xf32, #tpu.memory_space<vmem>>, vector<1x1x8x1024xf32>,
    %c0_234 = arith.constant 0 : index
    %c2_235 = arith.constant 2 : index
    %378 = vector.load %arg4[%c0_234, %c2_235] : memref<8x8xf32, #tpu.memory_space<vmem>>, vector<8x1xf32>
    %c0_236 = arith.constant 0 : index
    %c6_237 = arith.constant 6 : index
    %379 = vector.load %arg3[%c0_236, %c6_237] : memref<8x24xf32, #tpu.memory_space<vmem>>, vector<8x1xf32>
    %380 = vector.broadcast %379 : vector<8x1xf32> to vector<8x1024xf32>
    %381 = arith.mulf %380, %331 : vector<8x1024xf32>
    %382 = vector.broadcast %378 : vector<8x1xf32> to vector<8x1024xf32>
    %383 = arith.addf %382, %381 : vector<8x1024xf32>
    %c0_238 = arith.constant 0 : index
    %c7_239 = arith.constant 7 : index
    %384 = vector.load %arg3[%c0_238, %c7_239] : memref<8x24xf32, #tpu.memory_space<vmem>>, vector<8x1xf32>
    %385 = vector.broadcast %384 : vector<8x1xf32> to vector<8x1024xf32>
    %386 = arith.mulf %385, %335 : vector<8x1024xf32>
    %387 = arith.addf %383, %386 : vector<8x1024xf32>
    %c0_240 = arith.constant 0 : index
    %c8_241 = arith.constant 8 : index
    %388 = vector.load %arg3[%c0_240, %c8_241] : memref<8x24xf32, #tpu.memory_space<vmem>>, vector<8x1xf32>
    %389 = vector.broadcast %388 : vector<8x1xf32> to vector<8x1024xf32>
    %390 = arith.mulf %389, %339 : vector<8x1024xf32>
    %391 = arith.addf %387, %390 : vector<8x1024xf32>
    %cst_242 = arith.constant 0.000000e+00 : f32
    %392 = vector.broadcast %cst_242 : f32 to vector<8x1024xf32>
    %393 = arith.maximumf %391, %392 : vector<8x1024xf32>
    %c0_243 = arith.constant 0 : index
    %c2_244 = arith.constant 2 : index
    %c0_245 = arith.constant 0 : index
    %c2048_246 = arith.constant 2048 : index
    %394 = vector.load %arg5[%c0_243, %c2_244, %c0_245, %c2048_246] : memref<1x8x8x8192xf32, #tpu.memory_space<vmem>>, vector<1x1x8x1024xf32>
    %395 = vector.shape_cast %394 : vector<1x1x8x1024xf32> to vector<8x1024xf32>
    %396 = vector.shape_cast %393 : vector<8x1024xf32> to vector<1x1x8x1024xf32>
    tpu.vector_store %arg5[%c0_243, %c2_244, %c0_245, %c2048_246], %396 {strides = array<i32>} : memref<1x8x8x8192xf32, #tpu.memory_space<vmem>>, vector<1x1x8x1024xf32>,
    %c0_247 = arith.constant 0 : index
    %c3_248 = arith.constant 3 : index
    %397 = vector.load %arg4[%c0_247, %c3_248] : memref<8x8xf32, #tpu.memory_space<vmem>>, vector<8x1xf32>
    %c0_249 = arith.constant 0 : index
    %c9_250 = arith.constant 9 : index
    %398 = vector.load %arg3[%c0_249, %c9_250] : memref<8x24xf32, #tpu.memory_space<vmem>>, vector<8x1xf32>
    %399 = vector.broadcast %398 : vector<8x1xf32> to vector<8x1024xf32>
    %400 = arith.mulf %399, %331 : vector<8x1024xf32>
    %401 = vector.broadcast %397 : vector<8x1xf32> to vector<8x1024xf32>
    %402 = arith.addf %401, %400 : vector<8x1024xf32>
    %c0_251 = arith.constant 0 : index
    %c10_252 = arith.constant 10 : index
    %403 = vector.load %arg3[%c0_251, %c10_252] : memref<8x24xf32, #tpu.memory_space<vmem>>, vector<8x1xf32>
    %404 = vector.broadcast %403 : vector<8x1xf32> to vector<8x1024xf32>
    %405 = arith.mulf %404, %335 : vector<8x1024xf32>
    %406 = arith.addf %402, %405 : vector<8x1024xf32>
    %c0_253 = arith.constant 0 : index
    %c11_254 = arith.constant 11 : index
    %407 = vector.load %arg3[%c0_253, %c11_254] : memref<8x24xf32, #tpu.memory_space<vmem>>, vector<8x1xf32>
    %408 = vector.broadcast %407 : vector<8x1xf32> to vector<8x1024xf32>
    %409 = arith.mulf %408, %339 : vector<8x1024xf32>
    %410 = arith.addf %406, %409 : vector<8x1024xf32>
    %cst_255 = arith.constant 0.000000e+00 : f32
    %411 = vector.broadcast %cst_255 : f32 to vector<8x1024xf32>
    %412 = arith.maximumf %410, %411 : vector<8x1024xf32>
    %c0_256 = arith.constant 0 : index
    %c3_257 = arith.constant 3 : index
    %c0_258 = arith.constant 0 : index
    %c2048_259 = arith.constant 2048 : index
    %413 = vector.load %arg5[%c0_256, %c3_257, %c0_258, %c2048_259] : memref<1x8x8x8192xf32, #tpu.memory_space<vmem>>, vector<1x1x8x1024xf32>
    %414 = vector.shape_cast %413 : vector<1x1x8x1024xf32> to vector<8x1024xf32>
    %415 = vector.shape_cast %412 : vector<8x1024xf32> to vector<1x1x8x1024xf32>
    tpu.vector_store %arg5[%c0_256, %c3_257, %c0_258, %c2048_259], %415 {strides = array<i32>} : memref<1x8x8x8192xf32, #tpu.memory_space<vmem>>, vector<1x1x8x1024xf32>,
    %c0_260 = arith.constant 0 : index
    %c4_261 = arith.constant 4 : index
    %416 = vector.load %arg4[%c0_260, %c4_261] : memref<8x8xf32, #tpu.memory_space<vmem>>, vector<8x1xf32>
    %c0_262 = arith.constant 0 : index
    %c12_263 = arith.constant 12 : index
    %417 = vector.load %arg3[%c0_262, %c12_263] : memref<8x24xf32, #tpu.memory_space<vmem>>, vector<8x1xf32>
    %418 = vector.broadcast %417 : vector<8x1xf32> to vector<8x1024xf32>
    %419 = arith.mulf %418, %331 : vector<8x1024xf32>
    %420 = vector.broadcast %416 : vector<8x1xf32> to vector<8x1024xf32>
    %421 = arith.addf %420, %419 : vector<8x1024xf32>
    %c0_264 = arith.constant 0 : index
    %c13_265 = arith.constant 13 : index
    %422 = vector.load %arg3[%c0_264, %c13_265] : memref<8x24xf32, #tpu.memory_space<vmem>>, vector<8x1xf32>
    %423 = vector.broadcast %422 : vector<8x1xf32> to vector<8x1024xf32>
    %424 = arith.mulf %423, %335 : vector<8x1024xf32>
    %425 = arith.addf %421, %424 : vector<8x1024xf32>
    %c0_266 = arith.constant 0 : index
    %c14_267 = arith.constant 14 : index
    %426 = vector.load %arg3[%c0_266, %c14_267] : memref<8x24xf32, #tpu.memory_space<vmem>>, vector<8x1xf32>
    %427 = vector.broadcast %426 : vector<8x1xf32> to vector<8x1024xf32>
    %428 = arith.mulf %427, %339 : vector<8x1024xf32>
    %429 = arith.addf %425, %428 : vector<8x1024xf32>
    %cst_268 = arith.constant 0.000000e+00 : f32
    %430 = vector.broadcast %cst_268 : f32 to vector<8x1024xf32>
    %431 = arith.maximumf %429, %430 : vector<8x1024xf32>
    %c0_269 = arith.constant 0 : index
    %c4_270 = arith.constant 4 : index
    %c0_271 = arith.constant 0 : index
    %c2048_272 = arith.constant 2048 : index
    %432 = vector.load %arg5[%c0_269, %c4_270, %c0_271, %c2048_272] : memref<1x8x8x8192xf32, #tpu.memory_space<vmem>>, vector<1x1x8x1024xf32>
    %433 = vector.shape_cast %432 : vector<1x1x8x1024xf32> to vector<8x1024xf32>
    %434 = vector.shape_cast %431 : vector<8x1024xf32> to vector<1x1x8x1024xf32>
    tpu.vector_store %arg5[%c0_269, %c4_270, %c0_271, %c2048_272], %434 {strides = array<i32>} : memref<1x8x8x8192xf32, #tpu.memory_space<vmem>>, vector<1x1x8x1024xf32>,
    %c0_273 = arith.constant 0 : index
    %c5_274 = arith.constant 5 : index
    %435 = vector.load %arg4[%c0_273, %c5_274] : memref<8x8xf32, #tpu.memory_space<vmem>>, vector<8x1xf32>
    %c0_275 = arith.constant 0 : index
    %c15_276 = arith.constant 15 : index
    %436 = vector.load %arg3[%c0_275, %c15_276] : memref<8x24xf32, #tpu.memory_space<vmem>>, vector<8x1xf32>
    %437 = vector.broadcast %436 : vector<8x1xf32> to vector<8x1024xf32>
    %438 = arith.mulf %437, %331 : vector<8x1024xf32>
    %439 = vector.broadcast %435 : vector<8x1xf32> to vector<8x1024xf32>
    %440 = arith.addf %439, %438 : vector<8x1024xf32>
    %c0_277 = arith.constant 0 : index
    %c16_278 = arith.constant 16 : index
    %441 = vector.load %arg3[%c0_277, %c16_278] : memref<8x24xf32, #tpu.memory_space<vmem>>, vector<8x1xf32>
    %442 = vector.broadcast %441 : vector<8x1xf32> to vector<8x1024xf32>
    %443 = arith.mulf %442, %335 : vector<8x1024xf32>
    %444 = arith.addf %440, %443 : vector<8x1024xf32>
    %c0_279 = arith.constant 0 : index
    %c17_280 = arith.constant 17 : index
    %445 = vector.load %arg3[%c0_279, %c17_280] : memref<8x24xf32, #tpu.memory_space<vmem>>, vector<8x1xf32>
    %446 = vector.broadcast %445 : vector<8x1xf32> to vector<8x1024xf32>
    %447 = arith.mulf %446, %339 : vector<8x1024xf32>
    %448 = arith.addf %444, %447 : vector<8x1024xf32>
    %cst_281 = arith.constant 0.000000e+00 : f32
    %449 = vector.broadcast %cst_281 : f32 to vector<8x1024xf32>
    %450 = arith.maximumf %448, %449 : vector<8x1024xf32>
    %c0_282 = arith.constant 0 : index
    %c5_283 = arith.constant 5 : index
    %c0_284 = arith.constant 0 : index
    %c2048_285 = arith.constant 2048 : index
    %451 = vector.load %arg5[%c0_282, %c5_283, %c0_284, %c2048_285] : memref<1x8x8x8192xf32, #tpu.memory_space<vmem>>, vector<1x1x8x1024xf32>
    %452 = vector.shape_cast %451 : vector<1x1x8x1024xf32> to vector<8x1024xf32>
    %453 = vector.shape_cast %450 : vector<8x1024xf32> to vector<1x1x8x1024xf32>
    tpu.vector_store %arg5[%c0_282, %c5_283, %c0_284, %c2048_285], %453 {strides = array<i32>} : memref<1x8x8x8192xf32, #tpu.memory_space<vmem>>, vector<1x1x8x1024xf32>,
    %c0_286 = arith.constant 0 : index
    %c6_287 = arith.constant 6 : index
    %454 = vector.load %arg4[%c0_286, %c6_287] : memref<8x8xf32, #tpu.memory_space<vmem>>, vector<8x1xf32>
    %c0_288 = arith.constant 0 : index
    %c18_289 = arith.constant 18 : index
    %455 = vector.load %arg3[%c0_288, %c18_289] : memref<8x24xf32, #tpu.memory_space<vmem>>, vector<8x1xf32>
    %456 = vector.broadcast %455 : vector<8x1xf32> to vector<8x1024xf32>
    %457 = arith.mulf %456, %331 : vector<8x1024xf32>
    %458 = vector.broadcast %454 : vector<8x1xf32> to vector<8x1024xf32>
    %459 = arith.addf %458, %457 : vector<8x1024xf32>
    %c0_290 = arith.constant 0 : index
    %c19_291 = arith.constant 19 : index
    %460 = vector.load %arg3[%c0_290, %c19_291] : memref<8x24xf32, #tpu.memory_space<vmem>>, vector<8x1xf32>
    %461 = vector.broadcast %460 : vector<8x1xf32> to vector<8x1024xf32>
    %462 = arith.mulf %461, %335 : vector<8x1024xf32>
    %463 = arith.addf %459, %462 : vector<8x1024xf32>
    %c0_292 = arith.constant 0 : index
    %c20_293 = arith.constant 20 : index
    %464 = vector.load %arg3[%c0_292, %c20_293] : memref<8x24xf32, #tpu.memory_space<vmem>>, vector<8x1xf32>
    %465 = vector.broadcast %464 : vector<8x1xf32> to vector<8x1024xf32>
    %466 = arith.mulf %465, %339 : vector<8x1024xf32>
    %467 = arith.addf %463, %466 : vector<8x1024xf32>
    %cst_294 = arith.constant 0.000000e+00 : f32
    %468 = vector.broadcast %cst_294 : f32 to vector<8x1024xf32>
    %469 = arith.maximumf %467, %468 : vector<8x1024xf32>
    %c0_295 = arith.constant 0 : index
    %c6_296 = arith.constant 6 : index
    %c0_297 = arith.constant 0 : index
    %c2048_298 = arith.constant 2048 : index
    %470 = vector.load %arg5[%c0_295, %c6_296, %c0_297, %c2048_298] : memref<1x8x8x8192xf32, #tpu.memory_space<vmem>>, vector<1x1x8x1024xf32>
    %471 = vector.shape_cast %470 : vector<1x1x8x1024xf32> to vector<8x1024xf32>
    %472 = vector.shape_cast %469 : vector<8x1024xf32> to vector<1x1x8x1024xf32>
    tpu.vector_store %arg5[%c0_295, %c6_296, %c0_297, %c2048_298], %472 {strides = array<i32>} : memref<1x8x8x8192xf32, #tpu.memory_space<vmem>>, vector<1x1x8x1024xf32>,
    %c0_299 = arith.constant 0 : index
    %c7_300 = arith.constant 7 : index
    %473 = vector.load %arg4[%c0_299, %c7_300] : memref<8x8xf32, #tpu.memory_space<vmem>>, vector<8x1xf32>
    %c0_301 = arith.constant 0 : index
    %c21_302 = arith.constant 21 : index
    %474 = vector.load %arg3[%c0_301, %c21_302] : memref<8x24xf32, #tpu.memory_space<vmem>>, vector<8x1xf32>
    %475 = vector.broadcast %474 : vector<8x1xf32> to vector<8x1024xf32>
    %476 = arith.mulf %475, %331 : vector<8x1024xf32>
    %477 = vector.broadcast %473 : vector<8x1xf32> to vector<8x1024xf32>
    %478 = arith.addf %477, %476 : vector<8x1024xf32>
    %c0_303 = arith.constant 0 : index
    %c22_304 = arith.constant 22 : index
    %479 = vector.load %arg3[%c0_303, %c22_304] : memref<8x24xf32, #tpu.memory_space<vmem>>, vector<8x1xf32>
    %480 = vector.broadcast %479 : vector<8x1xf32> to vector<8x1024xf32>
    %481 = arith.mulf %480, %335 : vector<8x1024xf32>
    %482 = arith.addf %478, %481 : vector<8x1024xf32>
    %c0_305 = arith.constant 0 : index
    %c23_306 = arith.constant 23 : index
    %483 = vector.load %arg3[%c0_305, %c23_306] : memref<8x24xf32, #tpu.memory_space<vmem>>, vector<8x1xf32>
    %484 = vector.broadcast %483 : vector<8x1xf32> to vector<8x1024xf32>
    %485 = arith.mulf %484, %339 : vector<8x1024xf32>
    %486 = arith.addf %482, %485 : vector<8x1024xf32>
    %cst_307 = arith.constant 0.000000e+00 : f32
    %487 = vector.broadcast %cst_307 : f32 to vector<8x1024xf32>
    %488 = arith.maximumf %486, %487 : vector<8x1024xf32>
    %c0_308 = arith.constant 0 : index
    %c7_309 = arith.constant 7 : index
    %c0_310 = arith.constant 0 : index
    %c2048_311 = arith.constant 2048 : index
    %489 = vector.load %arg5[%c0_308, %c7_309, %c0_310, %c2048_311] : memref<1x8x8x8192xf32, #tpu.memory_space<vmem>>, vector<1x1x8x1024xf32>
    %490 = vector.shape_cast %489 : vector<1x1x8x1024xf32> to vector<8x1024xf32>
    %491 = vector.shape_cast %488 : vector<8x1024xf32> to vector<1x1x8x1024xf32>
    tpu.vector_store %arg5[%c0_308, %c7_309, %c0_310, %c2048_311], %491 {strides = array<i32>} : memref<1x8x8x8192xf32, #tpu.memory_space<vmem>>, vector<1x1x8x1024xf32>,
    %c0_312 = arith.constant 0 : index
    %c0_313 = arith.constant 0 : index
    %c3072 = arith.constant 3072 : index
    %492 = vector.load %arg2[%c0_312, %c0_313, %c3072] : memref<1x3x8192xf32, #tpu.memory_space<vmem>>, vector<1x1x1024xf32>
    %493 = vector.shape_cast %492 : vector<1x1x1024xf32> to vector<1x1024xf32>
    %494 = vector.shape_cast %493 : vector<1x1024xf32> to vector<1x1024xf32>
    %495 = vector.broadcast %494 : vector<1x1024xf32> to vector<8x1024xf32>
    %c0_314 = arith.constant 0 : index
    %c1_315 = arith.constant 1 : index
    %c3072_316 = arith.constant 3072 : index
    %496 = vector.load %arg2[%c0_314, %c1_315, %c3072_316] : memref<1x3x8192xf32, #tpu.memory_space<vmem>>, vector<1x1x1024xf32>
    %497 = vector.shape_cast %496 : vector<1x1x1024xf32> to vector<1x1024xf32>
    %498 = vector.shape_cast %497 : vector<1x1024xf32> to vector<1x1024xf32>
    %499 = vector.broadcast %498 : vector<1x1024xf32> to vector<8x1024xf32>
    %c0_317 = arith.constant 0 : index
    %c2_318 = arith.constant 2 : index
    %c3072_319 = arith.constant 3072 : index
    %500 = vector.load %arg2[%c0_317, %c2_318, %c3072_319] : memref<1x3x8192xf32, #tpu.memory_space<vmem>>, vector<1x1x1024xf32>
    %501 = vector.shape_cast %500 : vector<1x1x1024xf32> to vector<1x1024xf32>
    %502 = vector.shape_cast %501 : vector<1x1024xf32> to vector<1x1024xf32>
    %503 = vector.broadcast %502 : vector<1x1024xf32> to vector<8x1024xf32>
    %c0_320 = arith.constant 0 : index
    %c0_321 = arith.constant 0 : index
    %504 = vector.load %arg4[%c0_320, %c0_321] : memref<8x8xf32, #tpu.memory_space<vmem>>, vector<8x1xf32>
    %c0_322 = arith.constant 0 : index
    %c0_323 = arith.constant 0 : index
    %505 = vector.load %arg3[%c0_322, %c0_323] : memref<8x24xf32, #tpu.memory_space<vmem>>, vector<8x1xf32>
    %506 = vector.broadcast %505 : vector<8x1xf32> to vector<8x1024xf32>
    %507 = arith.mulf %506, %495 : vector<8x1024xf32>
    %508 = vector.broadcast %504 : vector<8x1xf32> to vector<8x1024xf32>
    %509 = arith.addf %508, %507 : vector<8x1024xf32>
    %c0_324 = arith.constant 0 : index
    %c1_325 = arith.constant 1 : index
    %510 = vector.load %arg3[%c0_324, %c1_325] : memref<8x24xf32, #tpu.memory_space<vmem>>, vector<8x1xf32>
    %511 = vector.broadcast %510 : vector<8x1xf32> to vector<8x1024xf32>
    %512 = arith.mulf %511, %499 : vector<8x1024xf32>
    %513 = arith.addf %509, %512 : vector<8x1024xf32>
    %c0_326 = arith.constant 0 : index
    %c2_327 = arith.constant 2 : index
    %514 = vector.load %arg3[%c0_326, %c2_327] : memref<8x24xf32, #tpu.memory_space<vmem>>, vector<8x1xf32>
    %515 = vector.broadcast %514 : vector<8x1xf32> to vector<8x1024xf32>
    %516 = arith.mulf %515, %503 : vector<8x1024xf32>
    %517 = arith.addf %513, %516 : vector<8x1024xf32>
    %cst_328 = arith.constant 0.000000e+00 : f32
    %518 = vector.broadcast %cst_328 : f32 to vector<8x1024xf32>
    %519 = arith.maximumf %517, %518 : vector<8x1024xf32>
    %c0_329 = arith.constant 0 : index
    %c0_330 = arith.constant 0 : index
    %c0_331 = arith.constant 0 : index
    %c3072_332 = arith.constant 3072 : index
    %520 = vector.load %arg5[%c0_329, %c0_330, %c0_331, %c3072_332] : memref<1x8x8x8192xf32, #tpu.memory_space<vmem>>, vector<1x1x8x1024xf32>
    %521 = vector.shape_cast %520 : vector<1x1x8x1024xf32> to vector<8x1024xf32>
    %522 = vector.shape_cast %519 : vector<8x1024xf32> to vector<1x1x8x1024xf32>
    tpu.vector_store %arg5[%c0_329, %c0_330, %c0_331, %c3072_332], %522 {strides = array<i32>} : memref<1x8x8x8192xf32, #tpu.memory_space<vmem>>, vector<1x1x8x1024xf32>,
    %c0_333 = arith.constant 0 : index
    %c1_334 = arith.constant 1 : index
    %523 = vector.load %arg4[%c0_333, %c1_334] : memref<8x8xf32, #tpu.memory_space<vmem>>, vector<8x1xf32>
    %c0_335 = arith.constant 0 : index
    %c3_336 = arith.constant 3 : index
    %524 = vector.load %arg3[%c0_335, %c3_336] : memref<8x24xf32, #tpu.memory_space<vmem>>, vector<8x1xf32>
    %525 = vector.broadcast %524 : vector<8x1xf32> to vector<8x1024xf32>
    %526 = arith.mulf %525, %495 : vector<8x1024xf32>
    %527 = vector.broadcast %523 : vector<8x1xf32> to vector<8x1024xf32>
    %528 = arith.addf %527, %526 : vector<8x1024xf32>
    %c0_337 = arith.constant 0 : index
    %c4_338 = arith.constant 4 : index
    %529 = vector.load %arg3[%c0_337, %c4_338] : memref<8x24xf32, #tpu.memory_space<vmem>>, vector<8x1xf32>
    %530 = vector.broadcast %529 : vector<8x1xf32> to vector<8x1024xf32>
    %531 = arith.mulf %530, %499 : vector<8x1024xf32>
    %532 = arith.addf %528, %531 : vector<8x1024xf32>
    %c0_339 = arith.constant 0 : index
    %c5_340 = arith.constant 5 : index
    %533 = vector.load %arg3[%c0_339, %c5_340] : memref<8x24xf32, #tpu.memory_space<vmem>>, vector<8x1xf32>
    %534 = vector.broadcast %533 : vector<8x1xf32> to vector<8x1024xf32>
    %535 = arith.mulf %534, %503 : vector<8x1024xf32>
    %536 = arith.addf %532, %535 : vector<8x1024xf32>
    %cst_341 = arith.constant 0.000000e+00 : f32
    %537 = vector.broadcast %cst_341 : f32 to vector<8x1024xf32>
    %538 = arith.maximumf %536, %537 : vector<8x1024xf32>
    %c0_342 = arith.constant 0 : index
    %c1_343 = arith.constant 1 : index
    %c0_344 = arith.constant 0 : index
    %c3072_345 = arith.constant 3072 : index
    %539 = vector.load %arg5[%c0_342, %c1_343, %c0_344, %c3072_345] : memref<1x8x8x8192xf32, #tpu.memory_space<vmem>>, vector<1x1x8x1024xf32>
    %540 = vector.shape_cast %539 : vector<1x1x8x1024xf32> to vector<8x1024xf32>
    %541 = vector.shape_cast %538 : vector<8x1024xf32> to vector<1x1x8x1024xf32>
    tpu.vector_store %arg5[%c0_342, %c1_343, %c0_344, %c3072_345], %541 {strides = array<i32>} : memref<1x8x8x8192xf32, #tpu.memory_space<vmem>>, vector<1x1x8x1024xf32>,
    %c0_346 = arith.constant 0 : index
    %c2_347 = arith.constant 2 : index
    %542 = vector.load %arg4[%c0_346, %c2_347] : memref<8x8xf32, #tpu.memory_space<vmem>>, vector<8x1xf32>
    %c0_348 = arith.constant 0 : index
    %c6_349 = arith.constant 6 : index
    %543 = vector.load %arg3[%c0_348, %c6_349] : memref<8x24xf32, #tpu.memory_space<vmem>>, vector<8x1xf32>
    %544 = vector.broadcast %543 : vector<8x1xf32> to vector<8x1024xf32>
    %545 = arith.mulf %544, %495 : vector<8x1024xf32>
    %546 = vector.broadcast %542 : vector<8x1xf32> to vector<8x1024xf32>
    %547 = arith.addf %546, %545 : vector<8x1024xf32>
    %c0_350 = arith.constant 0 : index
    %c7_351 = arith.constant 7 : index
    %548 = vector.load %arg3[%c0_350, %c7_351] : memref<8x24xf32, #tpu.memory_space<vmem>>, vector<8x1xf32>
    %549 = vector.broadcast %548 : vector<8x1xf32> to vector<8x1024xf32>
    %550 = arith.mulf %549, %499 : vector<8x1024xf32>
    %551 = arith.addf %547, %550 : vector<8x1024xf32>
    %c0_352 = arith.constant 0 : index
    %c8_353 = arith.constant 8 : index
    %552 = vector.load %arg3[%c0_352, %c8_353] : memref<8x24xf32, #tpu.memory_space<vmem>>, vector<8x1xf32>
    %553 = vector.broadcast %552 : vector<8x1xf32> to vector<8x1024xf32>
    %554 = arith.mulf %553, %503 : vector<8x1024xf32>
    %555 = arith.addf %551, %554 : vector<8x1024xf32>
    %cst_354 = arith.constant 0.000000e+00 : f32
    %556 = vector.broadcast %cst_354 : f32 to vector<8x1024xf32>
    %557 = arith.maximumf %555, %556 : vector<8x1024xf32>
    %c0_355 = arith.constant 0 : index
    %c2_356 = arith.constant 2 : index
    %c0_357 = arith.constant 0 : index
    %c3072_358 = arith.constant 3072 : index
    %558 = vector.load %arg5[%c0_355, %c2_356, %c0_357, %c3072_358] : memref<1x8x8x8192xf32, #tpu.memory_space<vmem>>, vector<1x1x8x1024xf32>
    %559 = vector.shape_cast %558 : vector<1x1x8x1024xf32> to vector<8x1024xf32>
    %560 = vector.shape_cast %557 : vector<8x1024xf32> to vector<1x1x8x1024xf32>
    tpu.vector_store %arg5[%c0_355, %c2_356, %c0_357, %c3072_358], %560 {strides = array<i32>} : memref<1x8x8x8192xf32, #tpu.memory_space<vmem>>, vector<1x1x8x1024xf32>,
    %c0_359 = arith.constant 0 : index
    %c3_360 = arith.constant 3 : index
    %561 = vector.load %arg4[%c0_359, %c3_360] : memref<8x8xf32, #tpu.memory_space<vmem>>, vector<8x1xf32>
    %c0_361 = arith.constant 0 : index
    %c9_362 = arith.constant 9 : index
    %562 = vector.load %arg3[%c0_361, %c9_362] : memref<8x24xf32, #tpu.memory_space<vmem>>, vector<8x1xf32>
    %563 = vector.broadcast %562 : vector<8x1xf32> to vector<8x1024xf32>
    %564 = arith.mulf %563, %495 : vector<8x1024xf32>
    %565 = vector.broadcast %561 : vector<8x1xf32> to vector<8x1024xf32>
    %566 = arith.addf %565, %564 : vector<8x1024xf32>
    %c0_363 = arith.constant 0 : index
    %c10_364 = arith.constant 10 : index
    %567 = vector.load %arg3[%c0_363, %c10_364] : memref<8x24xf32, #tpu.memory_space<vmem>>, vector<8x1xf32>
    %568 = vector.broadcast %567 : vector<8x1xf32> to vector<8x1024xf32>
    %569 = arith.mulf %568, %499 : vector<8x1024xf32>
    %570 = arith.addf %566, %569 : vector<8x1024xf32>
    %c0_365 = arith.constant 0 : index
    %c11_366 = arith.constant 11 : index
    %571 = vector.load %arg3[%c0_365, %c11_366] : memref<8x24xf32, #tpu.memory_space<vmem>>, vector<8x1xf32>
    %572 = vector.broadcast %571 : vector<8x1xf32> to vector<8x1024xf32>
    %573 = arith.mulf %572, %503 : vector<8x1024xf32>
    %574 = arith.addf %570, %573 : vector<8x1024xf32>
    %cst_367 = arith.constant 0.000000e+00 : f32
    %575 = vector.broadcast %cst_367 : f32 to vector<8x1024xf32>
    %576 = arith.maximumf %574, %575 : vector<8x1024xf32>
    %c0_368 = arith.constant 0 : index
    %c3_369 = arith.constant 3 : index
    %c0_370 = arith.constant 0 : index
    %c3072_371 = arith.constant 3072 : index
    %577 = vector.load %arg5[%c0_368, %c3_369, %c0_370, %c3072_371] : memref<1x8x8x8192xf32, #tpu.memory_space<vmem>>, vector<1x1x8x1024xf32>
    %578 = vector.shape_cast %577 : vector<1x1x8x1024xf32> to vector<8x1024xf32>
    %579 = vector.shape_cast %576 : vector<8x1024xf32> to vector<1x1x8x1024xf32>
    tpu.vector_store %arg5[%c0_368, %c3_369, %c0_370, %c3072_371], %579 {strides = array<i32>} : memref<1x8x8x8192xf32, #tpu.memory_space<vmem>>, vector<1x1x8x1024xf32>,
    %c0_372 = arith.constant 0 : index
    %c4_373 = arith.constant 4 : index
    %580 = vector.load %arg4[%c0_372, %c4_373] : memref<8x8xf32, #tpu.memory_space<vmem>>, vector<8x1xf32>
    %c0_374 = arith.constant 0 : index
    %c12_375 = arith.constant 12 : index
    %581 = vector.load %arg3[%c0_374, %c12_375] : memref<8x24xf32, #tpu.memory_space<vmem>>, vector<8x1xf32>
    %582 = vector.broadcast %581 : vector<8x1xf32> to vector<8x1024xf32>
    %583 = arith.mulf %582, %495 : vector<8x1024xf32>
    %584 = vector.broadcast %580 : vector<8x1xf32> to vector<8x1024xf32>
    %585 = arith.addf %584, %583 : vector<8x1024xf32>
    %c0_376 = arith.constant 0 : index
    %c13_377 = arith.constant 13 : index
    %586 = vector.load %arg3[%c0_376, %c13_377] : memref<8x24xf32, #tpu.memory_space<vmem>>, vector<8x1xf32>
    %587 = vector.broadcast %586 : vector<8x1xf32> to vector<8x1024xf32>
    %588 = arith.mulf %587, %499 : vector<8x1024xf32>
    %589 = arith.addf %585, %588 : vector<8x1024xf32>
    %c0_378 = arith.constant 0 : index
    %c14_379 = arith.constant 14 : index
    %590 = vector.load %arg3[%c0_378, %c14_379] : memref<8x24xf32, #tpu.memory_space<vmem>>, vector<8x1xf32>
    %591 = vector.broadcast %590 : vector<8x1xf32> to vector<8x1024xf32>
    %592 = arith.mulf %591, %503 : vector<8x1024xf32>
    %593 = arith.addf %589, %592 : vector<8x1024xf32>
    %cst_380 = arith.constant 0.000000e+00 : f32
    %594 = vector.broadcast %cst_380 : f32 to vector<8x1024xf32>
    %595 = arith.maximumf %593, %594 : vector<8x1024xf32>
    %c0_381 = arith.constant 0 : index
    %c4_382 = arith.constant 4 : index
    %c0_383 = arith.constant 0 : index
    %c3072_384 = arith.constant 3072 : index
    %596 = vector.load %arg5[%c0_381, %c4_382, %c0_383, %c3072_384] : memref<1x8x8x8192xf32, #tpu.memory_space<vmem>>, vector<1x1x8x1024xf32>
    %597 = vector.shape_cast %596 : vector<1x1x8x1024xf32> to vector<8x1024xf32>
    %598 = vector.shape_cast %595 : vector<8x1024xf32> to vector<1x1x8x1024xf32>
    tpu.vector_store %arg5[%c0_381, %c4_382, %c0_383, %c3072_384], %598 {strides = array<i32>} : memref<1x8x8x8192xf32, #tpu.memory_space<vmem>>, vector<1x1x8x1024xf32>,
    %c0_385 = arith.constant 0 : index
    %c5_386 = arith.constant 5 : index
    %599 = vector.load %arg4[%c0_385, %c5_386] : memref<8x8xf32, #tpu.memory_space<vmem>>, vector<8x1xf32>
    %c0_387 = arith.constant 0 : index
    %c15_388 = arith.constant 15 : index
    %600 = vector.load %arg3[%c0_387, %c15_388] : memref<8x24xf32, #tpu.memory_space<vmem>>, vector<8x1xf32>
    %601 = vector.broadcast %600 : vector<8x1xf32> to vector<8x1024xf32>
    %602 = arith.mulf %601, %495 : vector<8x1024xf32>
    %603 = vector.broadcast %599 : vector<8x1xf32> to vector<8x1024xf32>
    %604 = arith.addf %603, %602 : vector<8x1024xf32>
    %c0_389 = arith.constant 0 : index
    %c16_390 = arith.constant 16 : index
    %605 = vector.load %arg3[%c0_389, %c16_390] : memref<8x24xf32, #tpu.memory_space<vmem>>, vector<8x1xf32>
    %606 = vector.broadcast %605 : vector<8x1xf32> to vector<8x1024xf32>
    %607 = arith.mulf %606, %499 : vector<8x1024xf32>
    %608 = arith.addf %604, %607 : vector<8x1024xf32>
    %c0_391 = arith.constant 0 : index
    %c17_392 = arith.constant 17 : index
    %609 = vector.load %arg3[%c0_391, %c17_392] : memref<8x24xf32, #tpu.memory_space<vmem>>, vector<8x1xf32>
    %610 = vector.broadcast %609 : vector<8x1xf32> to vector<8x1024xf32>
    %611 = arith.mulf %610, %503 : vector<8x1024xf32>
    %612 = arith.addf %608, %611 : vector<8x1024xf32>
    %cst_393 = arith.constant 0.000000e+00 : f32
    %613 = vector.broadcast %cst_393 : f32 to vector<8x1024xf32>
    %614 = arith.maximumf %612, %613 : vector<8x1024xf32>
    %c0_394 = arith.constant 0 : index
    %c5_395 = arith.constant 5 : index
    %c0_396 = arith.constant 0 : index
    %c3072_397 = arith.constant 3072 : index
    %615 = vector.load %arg5[%c0_394, %c5_395, %c0_396, %c3072_397] : memref<1x8x8x8192xf32, #tpu.memory_space<vmem>>, vector<1x1x8x1024xf32>
    %616 = vector.shape_cast %615 : vector<1x1x8x1024xf32> to vector<8x1024xf32>
    %617 = vector.shape_cast %614 : vector<8x1024xf32> to vector<1x1x8x1024xf32>
    tpu.vector_store %arg5[%c0_394, %c5_395, %c0_396, %c3072_397], %617 {strides = array<i32>} : memref<1x8x8x8192xf32, #tpu.memory_space<vmem>>, vector<1x1x8x1024xf32>,
    %c0_398 = arith.constant 0 : index
    %c6_399 = arith.constant 6 : index
    %618 = vector.load %arg4[%c0_398, %c6_399] : memref<8x8xf32, #tpu.memory_space<vmem>>, vector<8x1xf32>
    %c0_400 = arith.constant 0 : index
    %c18_401 = arith.constant 18 : index
    %619 = vector.load %arg3[%c0_400, %c18_401] : memref<8x24xf32, #tpu.memory_space<vmem>>, vector<8x1xf32>
    %620 = vector.broadcast %619 : vector<8x1xf32> to vector<8x1024xf32>
    %621 = arith.mulf %620, %495 : vector<8x1024xf32>
    %622 = vector.broadcast %618 : vector<8x1xf32> to vector<8x1024xf32>
    %623 = arith.addf %622, %621 : vector<8x1024xf32>
    %c0_402 = arith.constant 0 : index
    %c19_403 = arith.constant 19 : index
    %624 = vector.load %arg3[%c0_402, %c19_403] : memref<8x24xf32, #tpu.memory_space<vmem>>, vector<8x1xf32>
    %625 = vector.broadcast %624 : vector<8x1xf32> to vector<8x1024xf32>
    %626 = arith.mulf %625, %499 : vector<8x1024xf32>
    %627 = arith.addf %623, %626 : vector<8x1024xf32>
    %c0_404 = arith.constant 0 : index
    %c20_405 = arith.constant 20 : index
    %628 = vector.load %arg3[%c0_404, %c20_405] : memref<8x24xf32, #tpu.memory_space<vmem>>, vector<8x1xf32>
    %629 = vector.broadcast %628 : vector<8x1xf32> to vector<8x1024xf32>
    %630 = arith.mulf %629, %503 : vector<8x1024xf32>
    %631 = arith.addf %627, %630 : vector<8x1024xf32>
    %cst_406 = arith.constant 0.000000e+00 : f32
    %632 = vector.broadcast %cst_406 : f32 to vector<8x1024xf32>
    %633 = arith.maximumf %631, %632 : vector<8x1024xf32>
    %c0_407 = arith.constant 0 : index
    %c6_408 = arith.constant 6 : index
    %c0_409 = arith.constant 0 : index
    %c3072_410 = arith.constant 3072 : index
    %634 = vector.load %arg5[%c0_407, %c6_408, %c0_409, %c3072_410] : memref<1x8x8x8192xf32, #tpu.memory_space<vmem>>, vector<1x1x8x1024xf32>
    %635 = vector.shape_cast %634 : vector<1x1x8x1024xf32> to vector<8x1024xf32>
    %636 = vector.shape_cast %633 : vector<8x1024xf32> to vector<1x1x8x1024xf32>
    tpu.vector_store %arg5[%c0_407, %c6_408, %c0_409, %c3072_410], %636 {strides = array<i32>} : memref<1x8x8x8192xf32, #tpu.memory_space<vmem>>, vector<1x1x8x1024xf32>,
    %c0_411 = arith.constant 0 : index
    %c7_412 = arith.constant 7 : index
    %637 = vector.load %arg4[%c0_411, %c7_412] : memref<8x8xf32, #tpu.memory_space<vmem>>, vector<8x1xf32>
    %c0_413 = arith.constant 0 : index
    %c21_414 = arith.constant 21 : index
    %638 = vector.load %arg3[%c0_413, %c21_414] : memref<8x24xf32, #tpu.memory_space<vmem>>, vector<8x1xf32>
    %639 = vector.broadcast %638 : vector<8x1xf32> to vector<8x1024xf32>
    %640 = arith.mulf %639, %495 : vector<8x1024xf32>
    %641 = vector.broadcast %637 : vector<8x1xf32> to vector<8x1024xf32>
    %642 = arith.addf %641, %640 : vector<8x1024xf32>
    %c0_415 = arith.constant 0 : index
    %c22_416 = arith.constant 22 : index
    %643 = vector.load %arg3[%c0_415, %c22_416] : memref<8x24xf32, #tpu.memory_space<vmem>>, vector<8x1xf32>
    %644 = vector.broadcast %643 : vector<8x1xf32> to vector<8x1024xf32>
    %645 = arith.mulf %644, %499 : vector<8x1024xf32>
    %646 = arith.addf %642, %645 : vector<8x1024xf32>
    %c0_417 = arith.constant 0 : index
    %c23_418 = arith.constant 23 : index
    %647 = vector.load %arg3[%c0_417, %c23_418] : memref<8x24xf32, #tpu.memory_space<vmem>>, vector<8x1xf32>
    %648 = vector.broadcast %647 : vector<8x1xf32> to vector<8x1024xf32>
    %649 = arith.mulf %648, %503 : vector<8x1024xf32>
    %650 = arith.addf %646, %649 : vector<8x1024xf32>
    %cst_419 = arith.constant 0.000000e+00 : f32
    %651 = vector.broadcast %cst_419 : f32 to vector<8x1024xf32>
    %652 = arith.maximumf %650, %651 : vector<8x1024xf32>
    %c0_420 = arith.constant 0 : index
    %c7_421 = arith.constant 7 : index
    %c0_422 = arith.constant 0 : index
    %c3072_423 = arith.constant 3072 : index
    %653 = vector.load %arg5[%c0_420, %c7_421, %c0_422, %c3072_423] : memref<1x8x8x8192xf32, #tpu.memory_space<vmem>>, vector<1x1x8x1024xf32>
    %654 = vector.shape_cast %653 : vector<1x1x8x1024xf32> to vector<8x1024xf32>
    %655 = vector.shape_cast %652 : vector<8x1024xf32> to vector<1x1x8x1024xf32>
    tpu.vector_store %arg5[%c0_420, %c7_421, %c0_422, %c3072_423], %655 {strides = array<i32>} : memref<1x8x8x8192xf32, #tpu.memory_space<vmem>>, vector<1x1x8x1024xf32>,
    %c0_424 = arith.constant 0 : index
    %c0_425 = arith.constant 0 : index
    %c4096 = arith.constant 4096 : index
    %656 = vector.load %arg2[%c0_424, %c0_425, %c4096] : memref<1x3x8192xf32, #tpu.memory_space<vmem>>, vector<1x1x1024xf32>
    %657 = vector.shape_cast %656 : vector<1x1x1024xf32> to vector<1x1024xf32>
    %658 = vector.shape_cast %657 : vector<1x1024xf32> to vector<1x1024xf32>
    %659 = vector.broadcast %658 : vector<1x1024xf32> to vector<8x1024xf32>
    %c0_426 = arith.constant 0 : index
    %c1_427 = arith.constant 1 : index
    %c4096_428 = arith.constant 4096 : index
    %660 = vector.load %arg2[%c0_426, %c1_427, %c4096_428] : memref<1x3x8192xf32, #tpu.memory_space<vmem>>, vector<1x1x1024xf32>
    %661 = vector.shape_cast %660 : vector<1x1x1024xf32> to vector<1x1024xf32>
    %662 = vector.shape_cast %661 : vector<1x1024xf32> to vector<1x1024xf32>
    %663 = vector.broadcast %662 : vector<1x1024xf32> to vector<8x1024xf32>
    %c0_429 = arith.constant 0 : index
    %c2_430 = arith.constant 2 : index
    %c4096_431 = arith.constant 4096 : index
    %664 = vector.load %arg2[%c0_429, %c2_430, %c4096_431] : memref<1x3x8192xf32, #tpu.memory_space<vmem>>, vector<1x1x1024xf32>
    %665 = vector.shape_cast %664 : vector<1x1x1024xf32> to vector<1x1024xf32>
    %666 = vector.shape_cast %665 : vector<1x1024xf32> to vector<1x1024xf32>
    %667 = vector.broadcast %666 : vector<1x1024xf32> to vector<8x1024xf32>
    %c0_432 = arith.constant 0 : index
    %c0_433 = arith.constant 0 : index
    %668 = vector.load %arg4[%c0_432, %c0_433] : memref<8x8xf32, #tpu.memory_space<vmem>>, vector<8x1xf32>
    %c0_434 = arith.constant 0 : index
    %c0_435 = arith.constant 0 : index
    %669 = vector.load %arg3[%c0_434, %c0_435] : memref<8x24xf32, #tpu.memory_space<vmem>>, vector<8x1xf32>
    %670 = vector.broadcast %669 : vector<8x1xf32> to vector<8x1024xf32>
    %671 = arith.mulf %670, %659 : vector<8x1024xf32>
    %672 = vector.broadcast %668 : vector<8x1xf32> to vector<8x1024xf32>
    %673 = arith.addf %672, %671 : vector<8x1024xf32>
    %c0_436 = arith.constant 0 : index
    %c1_437 = arith.constant 1 : index
    %674 = vector.load %arg3[%c0_436, %c1_437] : memref<8x24xf32, #tpu.memory_space<vmem>>, vector<8x1xf32>
    %675 = vector.broadcast %674 : vector<8x1xf32> to vector<8x1024xf32>
    %676 = arith.mulf %675, %663 : vector<8x1024xf32>
    %677 = arith.addf %673, %676 : vector<8x1024xf32>
    %c0_438 = arith.constant 0 : index
    %c2_439 = arith.constant 2 : index
    %678 = vector.load %arg3[%c0_438, %c2_439] : memref<8x24xf32, #tpu.memory_space<vmem>>, vector<8x1xf32>
    %679 = vector.broadcast %678 : vector<8x1xf32> to vector<8x1024xf32>
    %680 = arith.mulf %679, %667 : vector<8x1024xf32>
    %681 = arith.addf %677, %680 : vector<8x1024xf32>
    %cst_440 = arith.constant 0.000000e+00 : f32
    %682 = vector.broadcast %cst_440 : f32 to vector<8x1024xf32>
    %683 = arith.maximumf %681, %682 : vector<8x1024xf32>
    %c0_441 = arith.constant 0 : index
    %c0_442 = arith.constant 0 : index
    %c0_443 = arith.constant 0 : index
    %c4096_444 = arith.constant 4096 : index
    %684 = vector.load %arg5[%c0_441, %c0_442, %c0_443, %c4096_444] : memref<1x8x8x8192xf32, #tpu.memory_space<vmem>>, vector<1x1x8x1024xf32>
    %685 = vector.shape_cast %684 : vector<1x1x8x1024xf32> to vector<8x1024xf32>
    %686 = vector.shape_cast %683 : vector<8x1024xf32> to vector<1x1x8x1024xf32>
    tpu.vector_store %arg5[%c0_441, %c0_442, %c0_443, %c4096_444], %686 {strides = array<i32>} : memref<1x8x8x8192xf32, #tpu.memory_space<vmem>>, vector<1x1x8x1024xf32>,
    %c0_445 = arith.constant 0 : index
    %c1_446 = arith.constant 1 : index
    %687 = vector.load %arg4[%c0_445, %c1_446] : memref<8x8xf32, #tpu.memory_space<vmem>>, vector<8x1xf32>
    %c0_447 = arith.constant 0 : index
    %c3_448 = arith.constant 3 : index
    %688 = vector.load %arg3[%c0_447, %c3_448] : memref<8x24xf32, #tpu.memory_space<vmem>>, vector<8x1xf32>
    %689 = vector.broadcast %688 : vector<8x1xf32> to vector<8x1024xf32>
    %690 = arith.mulf %689, %659 : vector<8x1024xf32>
    %691 = vector.broadcast %687 : vector<8x1xf32> to vector<8x1024xf32>
    %692 = arith.addf %691, %690 : vector<8x1024xf32>
    %c0_449 = arith.constant 0 : index
    %c4_450 = arith.constant 4 : index
    %693 = vector.load %arg3[%c0_449, %c4_450] : memref<8x24xf32, #tpu.memory_space<vmem>>, vector<8x1xf32>
    %694 = vector.broadcast %693 : vector<8x1xf32> to vector<8x1024xf32>
    %695 = arith.mulf %694, %663 : vector<8x1024xf32>
    %696 = arith.addf %692, %695 : vector<8x1024xf32>
    %c0_451 = arith.constant 0 : index
    %c5_452 = arith.constant 5 : index
    %697 = vector.load %arg3[%c0_451, %c5_452] : memref<8x24xf32, #tpu.memory_space<vmem>>, vector<8x1xf32>
    %698 = vector.broadcast %697 : vector<8x1xf32> to vector<8x1024xf32>
    %699 = arith.mulf %698, %667 : vector<8x1024xf32>
    %700 = arith.addf %696, %699 : vector<8x1024xf32>
    %cst_453 = arith.constant 0.000000e+00 : f32
    %701 = vector.broadcast %cst_453 : f32 to vector<8x1024xf32>
    %702 = arith.maximumf %700, %701 : vector<8x1024xf32>
    %c0_454 = arith.constant 0 : index
    %c1_455 = arith.constant 1 : index
    %c0_456 = arith.constant 0 : index
    %c4096_457 = arith.constant 4096 : index
    %703 = vector.load %arg5[%c0_454, %c1_455, %c0_456, %c4096_457] : memref<1x8x8x8192xf32, #tpu.memory_space<vmem>>, vector<1x1x8x1024xf32>
    %704 = vector.shape_cast %703 : vector<1x1x8x1024xf32> to vector<8x1024xf32>
    %705 = vector.shape_cast %702 : vector<8x1024xf32> to vector<1x1x8x1024xf32>
    tpu.vector_store %arg5[%c0_454, %c1_455, %c0_456, %c4096_457], %705 {strides = array<i32>} : memref<1x8x8x8192xf32, #tpu.memory_space<vmem>>, vector<1x1x8x1024xf32>,
    %c0_458 = arith.constant 0 : index
    %c2_459 = arith.constant 2 : index
    %706 = vector.load %arg4[%c0_458, %c2_459] : memref<8x8xf32, #tpu.memory_space<vmem>>, vector<8x1xf32>
    %c0_460 = arith.constant 0 : index
    %c6_461 = arith.constant 6 : index
    %707 = vector.load %arg3[%c0_460, %c6_461] : memref<8x24xf32, #tpu.memory_space<vmem>>, vector<8x1xf32>
    %708 = vector.broadcast %707 : vector<8x1xf32> to vector<8x1024xf32>
    %709 = arith.mulf %708, %659 : vector<8x1024xf32>
    %710 = vector.broadcast %706 : vector<8x1xf32> to vector<8x1024xf32>
    %711 = arith.addf %710, %709 : vector<8x1024xf32>
    %c0_462 = arith.constant 0 : index
    %c7_463 = arith.constant 7 : index
    %712 = vector.load %arg3[%c0_462, %c7_463] : memref<8x24xf32, #tpu.memory_space<vmem>>, vector<8x1xf32>
    %713 = vector.broadcast %712 : vector<8x1xf32> to vector<8x1024xf32>
    %714 = arith.mulf %713, %663 : vector<8x1024xf32>
    %715 = arith.addf %711, %714 : vector<8x1024xf32>
    %c0_464 = arith.constant 0 : index
    %c8_465 = arith.constant 8 : index
    %716 = vector.load %arg3[%c0_464, %c8_465] : memref<8x24xf32, #tpu.memory_space<vmem>>, vector<8x1xf32>
    %717 = vector.broadcast %716 : vector<8x1xf32> to vector<8x1024xf32>
    %718 = arith.mulf %717, %667 : vector<8x1024xf32>
    %719 = arith.addf %715, %718 : vector<8x1024xf32>
    %cst_466 = arith.constant 0.000000e+00 : f32
    %720 = vector.broadcast %cst_466 : f32 to vector<8x1024xf32>
    %721 = arith.maximumf %719, %720 : vector<8x1024xf32>
    %c0_467 = arith.constant 0 : index
    %c2_468 = arith.constant 2 : index
    %c0_469 = arith.constant 0 : index
    %c4096_470 = arith.constant 4096 : index
    %722 = vector.load %arg5[%c0_467, %c2_468, %c0_469, %c4096_470] : memref<1x8x8x8192xf32, #tpu.memory_space<vmem>>, vector<1x1x8x1024xf32>
    %723 = vector.shape_cast %722 : vector<1x1x8x1024xf32> to vector<8x1024xf32>
    %724 = vector.shape_cast %721 : vector<8x1024xf32> to vector<1x1x8x1024xf32>
    tpu.vector_store %arg5[%c0_467, %c2_468, %c0_469, %c4096_470], %724 {strides = array<i32>} : memref<1x8x8x8192xf32, #tpu.memory_space<vmem>>, vector<1x1x8x1024xf32>,
    %c0_471 = arith.constant 0 : index
    %c3_472 = arith.constant 3 : index
    %725 = vector.load %arg4[%c0_471, %c3_472] : memref<8x8xf32, #tpu.memory_space<vmem>>, vector<8x1xf32>
    %c0_473 = arith.constant 0 : index
    %c9_474 = arith.constant 9 : index
    %726 = vector.load %arg3[%c0_473, %c9_474] : memref<8x24xf32, #tpu.memory_space<vmem>>, vector<8x1xf32>
    %727 = vector.broadcast %726 : vector<8x1xf32> to vector<8x1024xf32>
    %728 = arith.mulf %727, %659 : vector<8x1024xf32>
    %729 = vector.broadcast %725 : vector<8x1xf32> to vector<8x1024xf32>
    %730 = arith.addf %729, %728 : vector<8x1024xf32>
    %c0_475 = arith.constant 0 : index
    %c10_476 = arith.constant 10 : index
    %731 = vector.load %arg3[%c0_475, %c10_476] : memref<8x24xf32, #tpu.memory_space<vmem>>, vector<8x1xf32>
    %732 = vector.broadcast %731 : vector<8x1xf32> to vector<8x1024xf32>
    %733 = arith.mulf %732, %663 : vector<8x1024xf32>
    %734 = arith.addf %730, %733 : vector<8x1024xf32>
    %c0_477 = arith.constant 0 : index
    %c11_478 = arith.constant 11 : index
    %735 = vector.load %arg3[%c0_477, %c11_478] : memref<8x24xf32, #tpu.memory_space<vmem>>, vector<8x1xf32>
    %736 = vector.broadcast %735 : vector<8x1xf32> to vector<8x1024xf32>
    %737 = arith.mulf %736, %667 : vector<8x1024xf32>
    %738 = arith.addf %734, %737 : vector<8x1024xf32>
    %cst_479 = arith.constant 0.000000e+00 : f32
    %739 = vector.broadcast %cst_479 : f32 to vector<8x1024xf32>
    %740 = arith.maximumf %738, %739 : vector<8x1024xf32>
    %c0_480 = arith.constant 0 : index
    %c3_481 = arith.constant 3 : index
    %c0_482 = arith.constant 0 : index
    %c4096_483 = arith.constant 4096 : index
    %741 = vector.load %arg5[%c0_480, %c3_481, %c0_482, %c4096_483] : memref<1x8x8x8192xf32, #tpu.memory_space<vmem>>, vector<1x1x8x1024xf32>
    %742 = vector.shape_cast %741 : vector<1x1x8x1024xf32> to vector<8x1024xf32>
    %743 = vector.shape_cast %740 : vector<8x1024xf32> to vector<1x1x8x1024xf32>
    tpu.vector_store %arg5[%c0_480, %c3_481, %c0_482, %c4096_483], %743 {strides = array<i32>} : memref<1x8x8x8192xf32, #tpu.memory_space<vmem>>, vector<1x1x8x1024xf32>,
    %c0_484 = arith.constant 0 : index
    %c4_485 = arith.constant 4 : index
    %744 = vector.load %arg4[%c0_484, %c4_485] : memref<8x8xf32, #tpu.memory_space<vmem>>, vector<8x1xf32>
    %c0_486 = arith.constant 0 : index
    %c12_487 = arith.constant 12 : index
    %745 = vector.load %arg3[%c0_486, %c12_487] : memref<8x24xf32, #tpu.memory_space<vmem>>, vector<8x1xf32>
    %746 = vector.broadcast %745 : vector<8x1xf32> to vector<8x1024xf32>
    %747 = arith.mulf %746, %659 : vector<8x1024xf32>
    %748 = vector.broadcast %744 : vector<8x1xf32> to vector<8x1024xf32>
    %749 = arith.addf %748, %747 : vector<8x1024xf32>
    %c0_488 = arith.constant 0 : index
    %c13_489 = arith.constant 13 : index
    %750 = vector.load %arg3[%c0_488, %c13_489] : memref<8x24xf32, #tpu.memory_space<vmem>>, vector<8x1xf32>
    %751 = vector.broadcast %750 : vector<8x1xf32> to vector<8x1024xf32>
    %752 = arith.mulf %751, %663 : vector<8x1024xf32>
    %753 = arith.addf %749, %752 : vector<8x1024xf32>
    %c0_490 = arith.constant 0 : index
    %c14_491 = arith.constant 14 : index
    %754 = vector.load %arg3[%c0_490, %c14_491] : memref<8x24xf32, #tpu.memory_space<vmem>>, vector<8x1xf32>
    %755 = vector.broadcast %754 : vector<8x1xf32> to vector<8x1024xf32>
    %756 = arith.mulf %755, %667 : vector<8x1024xf32>
    %757 = arith.addf %753, %756 : vector<8x1024xf32>
    %cst_492 = arith.constant 0.000000e+00 : f32
    %758 = vector.broadcast %cst_492 : f32 to vector<8x1024xf32>
    %759 = arith.maximumf %757, %758 : vector<8x1024xf32>
    %c0_493 = arith.constant 0 : index
    %c4_494 = arith.constant 4 : index
    %c0_495 = arith.constant 0 : index
    %c4096_496 = arith.constant 4096 : index
    %760 = vector.load %arg5[%c0_493, %c4_494, %c0_495, %c4096_496] : memref<1x8x8x8192xf32, #tpu.memory_space<vmem>>, vector<1x1x8x1024xf32>
    %761 = vector.shape_cast %760 : vector<1x1x8x1024xf32> to vector<8x1024xf32>
    %762 = vector.shape_cast %759 : vector<8x1024xf32> to vector<1x1x8x1024xf32>
    tpu.vector_store %arg5[%c0_493, %c4_494, %c0_495, %c4096_496], %762 {strides = array<i32>} : memref<1x8x8x8192xf32, #tpu.memory_space<vmem>>, vector<1x1x8x1024xf32>,
    %c0_497 = arith.constant 0 : index
    %c5_498 = arith.constant 5 : index
    %763 = vector.load %arg4[%c0_497, %c5_498] : memref<8x8xf32, #tpu.memory_space<vmem>>, vector<8x1xf32>
    %c0_499 = arith.constant 0 : index
    %c15_500 = arith.constant 15 : index
    %764 = vector.load %arg3[%c0_499, %c15_500] : memref<8x24xf32, #tpu.memory_space<vmem>>, vector<8x1xf32>
    %765 = vector.broadcast %764 : vector<8x1xf32> to vector<8x1024xf32>
    %766 = arith.mulf %765, %659 : vector<8x1024xf32>
    %767 = vector.broadcast %763 : vector<8x1xf32> to vector<8x1024xf32>
    %768 = arith.addf %767, %766 : vector<8x1024xf32>
    %c0_501 = arith.constant 0 : index
    %c16_502 = arith.constant 16 : index
    %769 = vector.load %arg3[%c0_501, %c16_502] : memref<8x24xf32, #tpu.memory_space<vmem>>, vector<8x1xf32>
    %770 = vector.broadcast %769 : vector<8x1xf32> to vector<8x1024xf32>
    %771 = arith.mulf %770, %663 : vector<8x1024xf32>
    %772 = arith.addf %768, %771 : vector<8x1024xf32>
    %c0_503 = arith.constant 0 : index
    %c17_504 = arith.constant 17 : index
    %773 = vector.load %arg3[%c0_503, %c17_504] : memref<8x24xf32, #tpu.memory_space<vmem>>, vector<8x1xf32>
    %774 = vector.broadcast %773 : vector<8x1xf32> to vector<8x1024xf32>
    %775 = arith.mulf %774, %667 : vector<8x1024xf32>
    %776 = arith.addf %772, %775 : vector<8x1024xf32>
    %cst_505 = arith.constant 0.000000e+00 : f32
    %777 = vector.broadcast %cst_505 : f32 to vector<8x1024xf32>
    %778 = arith.maximumf %776, %777 : vector<8x1024xf32>
    %c0_506 = arith.constant 0 : index
    %c5_507 = arith.constant 5 : index
    %c0_508 = arith.constant 0 : index
    %c4096_509 = arith.constant 4096 : index
    %779 = vector.load %arg5[%c0_506, %c5_507, %c0_508, %c4096_509] : memref<1x8x8x8192xf32, #tpu.memory_space<vmem>>, vector<1x1x8x1024xf32>
    %780 = vector.shape_cast %779 : vector<1x1x8x1024xf32> to vector<8x1024xf32>
    %781 = vector.shape_cast %778 : vector<8x1024xf32> to vector<1x1x8x1024xf32>
    tpu.vector_store %arg5[%c0_506, %c5_507, %c0_508, %c4096_509], %781 {strides = array<i32>} : memref<1x8x8x8192xf32, #tpu.memory_space<vmem>>, vector<1x1x8x1024xf32>,
    %c0_510 = arith.constant 0 : index
    %c6_511 = arith.constant 6 : index
    %782 = vector.load %arg4[%c0_510, %c6_511] : memref<8x8xf32, #tpu.memory_space<vmem>>, vector<8x1xf32>
    %c0_512 = arith.constant 0 : index
    %c18_513 = arith.constant 18 : index
    %783 = vector.load %arg3[%c0_512, %c18_513] : memref<8x24xf32, #tpu.memory_space<vmem>>, vector<8x1xf32>
    %784 = vector.broadcast %783 : vector<8x1xf32> to vector<8x1024xf32>
    %785 = arith.mulf %784, %659 : vector<8x1024xf32>
    %786 = vector.broadcast %782 : vector<8x1xf32> to vector<8x1024xf32>
    %787 = arith.addf %786, %785 : vector<8x1024xf32>
    %c0_514 = arith.constant 0 : index
    %c19_515 = arith.constant 19 : index
    %788 = vector.load %arg3[%c0_514, %c19_515] : memref<8x24xf32, #tpu.memory_space<vmem>>, vector<8x1xf32>
    %789 = vector.broadcast %788 : vector<8x1xf32> to vector<8x1024xf32>
    %790 = arith.mulf %789, %663 : vector<8x1024xf32>
    %791 = arith.addf %787, %790 : vector<8x1024xf32>
    %c0_516 = arith.constant 0 : index
    %c20_517 = arith.constant 20 : index
    %792 = vector.load %arg3[%c0_516, %c20_517] : memref<8x24xf32, #tpu.memory_space<vmem>>, vector<8x1xf32>
    %793 = vector.broadcast %792 : vector<8x1xf32> to vector<8x1024xf32>
    %794 = arith.mulf %793, %667 : vector<8x1024xf32>
    %795 = arith.addf %791, %794 : vector<8x1024xf32>
    %cst_518 = arith.constant 0.000000e+00 : f32
    %796 = vector.broadcast %cst_518 : f32 to vector<8x1024xf32>
    %797 = arith.maximumf %795, %796 : vector<8x1024xf32>
    %c0_519 = arith.constant 0 : index
    %c6_520 = arith.constant 6 : index
    %c0_521 = arith.constant 0 : index
    %c4096_522 = arith.constant 4096 : index
    %798 = vector.load %arg5[%c0_519, %c6_520, %c0_521, %c4096_522] : memref<1x8x8x8192xf32, #tpu.memory_space<vmem>>, vector<1x1x8x1024xf32>
    %799 = vector.shape_cast %798 : vector<1x1x8x1024xf32> to vector<8x1024xf32>
    %800 = vector.shape_cast %797 : vector<8x1024xf32> to vector<1x1x8x1024xf32>
    tpu.vector_store %arg5[%c0_519, %c6_520, %c0_521, %c4096_522], %800 {strides = array<i32>} : memref<1x8x8x8192xf32, #tpu.memory_space<vmem>>, vector<1x1x8x1024xf32>,
    %c0_523 = arith.constant 0 : index
    %c7_524 = arith.constant 7 : index
    %801 = vector.load %arg4[%c0_523, %c7_524] : memref<8x8xf32, #tpu.memory_space<vmem>>, vector<8x1xf32>
    %c0_525 = arith.constant 0 : index
    %c21_526 = arith.constant 21 : index
    %802 = vector.load %arg3[%c0_525, %c21_526] : memref<8x24xf32, #tpu.memory_space<vmem>>, vector<8x1xf32>
    %803 = vector.broadcast %802 : vector<8x1xf32> to vector<8x1024xf32>
    %804 = arith.mulf %803, %659 : vector<8x1024xf32>
    %805 = vector.broadcast %801 : vector<8x1xf32> to vector<8x1024xf32>
    %806 = arith.addf %805, %804 : vector<8x1024xf32>
    %c0_527 = arith.constant 0 : index
    %c22_528 = arith.constant 22 : index
    %807 = vector.load %arg3[%c0_527, %c22_528] : memref<8x24xf32, #tpu.memory_space<vmem>>, vector<8x1xf32>
    %808 = vector.broadcast %807 : vector<8x1xf32> to vector<8x1024xf32>
    %809 = arith.mulf %808, %663 : vector<8x1024xf32>
    %810 = arith.addf %806, %809 : vector<8x1024xf32>
    %c0_529 = arith.constant 0 : index
    %c23_530 = arith.constant 23 : index
    %811 = vector.load %arg3[%c0_529, %c23_530] : memref<8x24xf32, #tpu.memory_space<vmem>>, vector<8x1xf32>
    %812 = vector.broadcast %811 : vector<8x1xf32> to vector<8x1024xf32>
    %813 = arith.mulf %812, %667 : vector<8x1024xf32>
    %814 = arith.addf %810, %813 : vector<8x1024xf32>
    %cst_531 = arith.constant 0.000000e+00 : f32
    %815 = vector.broadcast %cst_531 : f32 to vector<8x1024xf32>
    %816 = arith.maximumf %814, %815 : vector<8x1024xf32>
    %c0_532 = arith.constant 0 : index
    %c7_533 = arith.constant 7 : index
    %c0_534 = arith.constant 0 : index
    %c4096_535 = arith.constant 4096 : index
    %817 = vector.load %arg5[%c0_532, %c7_533, %c0_534, %c4096_535] : memref<1x8x8x8192xf32, #tpu.memory_space<vmem>>, vector<1x1x8x1024xf32>
    %818 = vector.shape_cast %817 : vector<1x1x8x1024xf32> to vector<8x1024xf32>
    %819 = vector.shape_cast %816 : vector<8x1024xf32> to vector<1x1x8x1024xf32>
    tpu.vector_store %arg5[%c0_532, %c7_533, %c0_534, %c4096_535], %819 {strides = array<i32>} : memref<1x8x8x8192xf32, #tpu.memory_space<vmem>>, vector<1x1x8x1024xf32>,
    %c0_536 = arith.constant 0 : index
    %c0_537 = arith.constant 0 : index
    %c5120 = arith.constant 5120 : index
    %820 = vector.load %arg2[%c0_536, %c0_537, %c5120] : memref<1x3x8192xf32, #tpu.memory_space<vmem>>, vector<1x1x1024xf32>
    %821 = vector.shape_cast %820 : vector<1x1x1024xf32> to vector<1x1024xf32>
    %822 = vector.shape_cast %821 : vector<1x1024xf32> to vector<1x1024xf32>
    %823 = vector.broadcast %822 : vector<1x1024xf32> to vector<8x1024xf32>
    %c0_538 = arith.constant 0 : index
    %c1_539 = arith.constant 1 : index
    %c5120_540 = arith.constant 5120 : index
    %824 = vector.load %arg2[%c0_538, %c1_539, %c5120_540] : memref<1x3x8192xf32, #tpu.memory_space<vmem>>, vector<1x1x1024xf32>
    %825 = vector.shape_cast %824 : vector<1x1x1024xf32> to vector<1x1024xf32>
    %826 = vector.shape_cast %825 : vector<1x1024xf32> to vector<1x1024xf32>
    %827 = vector.broadcast %826 : vector<1x1024xf32> to vector<8x1024xf32>
    %c0_541 = arith.constant 0 : index
    %c2_542 = arith.constant 2 : index
    %c5120_543 = arith.constant 5120 : index
    %828 = vector.load %arg2[%c0_541, %c2_542, %c5120_543] : memref<1x3x8192xf32, #tpu.memory_space<vmem>>, vector<1x1x1024xf32>
    %829 = vector.shape_cast %828 : vector<1x1x1024xf32> to vector<1x1024xf32>
    %830 = vector.shape_cast %829 : vector<1x1024xf32> to vector<1x1024xf32>
    %831 = vector.broadcast %830 : vector<1x1024xf32> to vector<8x1024xf32>
    %c0_544 = arith.constant 0 : index
    %c0_545 = arith.constant 0 : index
    %832 = vector.load %arg4[%c0_544, %c0_545] : memref<8x8xf32, #tpu.memory_space<vmem>>, vector<8x1xf32>
    %c0_546 = arith.constant 0 : index
    %c0_547 = arith.constant 0 : index
    %833 = vector.load %arg3[%c0_546, %c0_547] : memref<8x24xf32, #tpu.memory_space<vmem>>, vector<8x1xf32>
    %834 = vector.broadcast %833 : vector<8x1xf32> to vector<8x1024xf32>
    %835 = arith.mulf %834, %823 : vector<8x1024xf32>
    %836 = vector.broadcast %832 : vector<8x1xf32> to vector<8x1024xf32>
    %837 = arith.addf %836, %835 : vector<8x1024xf32>
    %c0_548 = arith.constant 0 : index
    %c1_549 = arith.constant 1 : index
    %838 = vector.load %arg3[%c0_548, %c1_549] : memref<8x24xf32, #tpu.memory_space<vmem>>, vector<8x1xf32>
    %839 = vector.broadcast %838 : vector<8x1xf32> to vector<8x1024xf32>
    %840 = arith.mulf %839, %827 : vector<8x1024xf32>
    %841 = arith.addf %837, %840 : vector<8x1024xf32>
    %c0_550 = arith.constant 0 : index
    %c2_551 = arith.constant 2 : index
    %842 = vector.load %arg3[%c0_550, %c2_551] : memref<8x24xf32, #tpu.memory_space<vmem>>, vector<8x1xf32>
    %843 = vector.broadcast %842 : vector<8x1xf32> to vector<8x1024xf32>
    %844 = arith.mulf %843, %831 : vector<8x1024xf32>
    %845 = arith.addf %841, %844 : vector<8x1024xf32>
    %cst_552 = arith.constant 0.000000e+00 : f32
    %846 = vector.broadcast %cst_552 : f32 to vector<8x1024xf32>
    %847 = arith.maximumf %845, %846 : vector<8x1024xf32>
    %c0_553 = arith.constant 0 : index
    %c0_554 = arith.constant 0 : index
    %c0_555 = arith.constant 0 : index
    %c5120_556 = arith.constant 5120 : index
    %848 = vector.load %arg5[%c0_553, %c0_554, %c0_555, %c5120_556] : memref<1x8x8x8192xf32, #tpu.memory_space<vmem>>, vector<1x1x8x1024xf32>
    %849 = vector.shape_cast %848 : vector<1x1x8x1024xf32> to vector<8x1024xf32>
    %850 = vector.shape_cast %847 : vector<8x1024xf32> to vector<1x1x8x1024xf32>
    tpu.vector_store %arg5[%c0_553, %c0_554, %c0_555, %c5120_556], %850 {strides = array<i32>} : memref<1x8x8x8192xf32, #tpu.memory_space<vmem>>, vector<1x1x8x1024xf32>,
    %c0_557 = arith.constant 0 : index
    %c1_558 = arith.constant 1 : index
    %851 = vector.load %arg4[%c0_557, %c1_558] : memref<8x8xf32, #tpu.memory_space<vmem>>, vector<8x1xf32>
    %c0_559 = arith.constant 0 : index
    %c3_560 = arith.constant 3 : index
    %852 = vector.load %arg3[%c0_559, %c3_560] : memref<8x24xf32, #tpu.memory_space<vmem>>, vector<8x1xf32>
    %853 = vector.broadcast %852 : vector<8x1xf32> to vector<8x1024xf32>
    %854 = arith.mulf %853, %823 : vector<8x1024xf32>
    %855 = vector.broadcast %851 : vector<8x1xf32> to vector<8x1024xf32>
    %856 = arith.addf %855, %854 : vector<8x1024xf32>
    %c0_561 = arith.constant 0 : index
    %c4_562 = arith.constant 4 : index
    %857 = vector.load %arg3[%c0_561, %c4_562] : memref<8x24xf32, #tpu.memory_space<vmem>>, vector<8x1xf32>
    %858 = vector.broadcast %857 : vector<8x1xf32> to vector<8x1024xf32>
    %859 = arith.mulf %858, %827 : vector<8x1024xf32>
    %860 = arith.addf %856, %859 : vector<8x1024xf32>
    %c0_563 = arith.constant 0 : index
    %c5_564 = arith.constant 5 : index
    %861 = vector.load %arg3[%c0_563, %c5_564] : memref<8x24xf32, #tpu.memory_space<vmem>>, vector<8x1xf32>
    %862 = vector.broadcast %861 : vector<8x1xf32> to vector<8x1024xf32>
    %863 = arith.mulf %862, %831 : vector<8x1024xf32>
    %864 = arith.addf %860, %863 : vector<8x1024xf32>
    %cst_565 = arith.constant 0.000000e+00 : f32
    %865 = vector.broadcast %cst_565 : f32 to vector<8x1024xf32>
    %866 = arith.maximumf %864, %865 : vector<8x1024xf32>
    %c0_566 = arith.constant 0 : index
    %c1_567 = arith.constant 1 : index
    %c0_568 = arith.constant 0 : index
    %c5120_569 = arith.constant 5120 : index
    %867 = vector.load %arg5[%c0_566, %c1_567, %c0_568, %c5120_569] : memref<1x8x8x8192xf32, #tpu.memory_space<vmem>>, vector<1x1x8x1024xf32>
    %868 = vector.shape_cast %867 : vector<1x1x8x1024xf32> to vector<8x1024xf32>
    %869 = vector.shape_cast %866 : vector<8x1024xf32> to vector<1x1x8x1024xf32>
    tpu.vector_store %arg5[%c0_566, %c1_567, %c0_568, %c5120_569], %869 {strides = array<i32>} : memref<1x8x8x8192xf32, #tpu.memory_space<vmem>>, vector<1x1x8x1024xf32>,
    %c0_570 = arith.constant 0 : index
    %c2_571 = arith.constant 2 : index
    %870 = vector.load %arg4[%c0_570, %c2_571] : memref<8x8xf32, #tpu.memory_space<vmem>>, vector<8x1xf32>
    %c0_572 = arith.constant 0 : index
    %c6_573 = arith.constant 6 : index
    %871 = vector.load %arg3[%c0_572, %c6_573] : memref<8x24xf32, #tpu.memory_space<vmem>>, vector<8x1xf32>
    %872 = vector.broadcast %871 : vector<8x1xf32> to vector<8x1024xf32>
    %873 = arith.mulf %872, %823 : vector<8x1024xf32>
    %874 = vector.broadcast %870 : vector<8x1xf32> to vector<8x1024xf32>
    %875 = arith.addf %874, %873 : vector<8x1024xf32>
    %c0_574 = arith.constant 0 : index
    %c7_575 = arith.constant 7 : index
    %876 = vector.load %arg3[%c0_574, %c7_575] : memref<8x24xf32, #tpu.memory_space<vmem>>, vector<8x1xf32>
    %877 = vector.broadcast %876 : vector<8x1xf32> to vector<8x1024xf32>
    %878 = arith.mulf %877, %827 : vector<8x1024xf32>
    %879 = arith.addf %875, %878 : vector<8x1024xf32>
    %c0_576 = arith.constant 0 : index
    %c8_577 = arith.constant 8 : index
    %880 = vector.load %arg3[%c0_576, %c8_577] : memref<8x24xf32, #tpu.memory_space<vmem>>, vector<8x1xf32>
    %881 = vector.broadcast %880 : vector<8x1xf32> to vector<8x1024xf32>
    %882 = arith.mulf %881, %831 : vector<8x1024xf32>
    %883 = arith.addf %879, %882 : vector<8x1024xf32>
    %cst_578 = arith.constant 0.000000e+00 : f32
    %884 = vector.broadcast %cst_578 : f32 to vector<8x1024xf32>
    %885 = arith.maximumf %883, %884 : vector<8x1024xf32>
    %c0_579 = arith.constant 0 : index
    %c2_580 = arith.constant 2 : index
    %c0_581 = arith.constant 0 : index
    %c5120_582 = arith.constant 5120 : index
    %886 = vector.load %arg5[%c0_579, %c2_580, %c0_581, %c5120_582] : memref<1x8x8x8192xf32, #tpu.memory_space<vmem>>, vector<1x1x8x1024xf32>
    %887 = vector.shape_cast %886 : vector<1x1x8x1024xf32> to vector<8x1024xf32>
    %888 = vector.shape_cast %885 : vector<8x1024xf32> to vector<1x1x8x1024xf32>
    tpu.vector_store %arg5[%c0_579, %c2_580, %c0_581, %c5120_582], %888 {strides = array<i32>} : memref<1x8x8x8192xf32, #tpu.memory_space<vmem>>, vector<1x1x8x1024xf32>,
    %c0_583 = arith.constant 0 : index
    %c3_584 = arith.constant 3 : index
    %889 = vector.load %arg4[%c0_583, %c3_584] : memref<8x8xf32, #tpu.memory_space<vmem>>, vector<8x1xf32>
    %c0_585 = arith.constant 0 : index
    %c9_586 = arith.constant 9 : index
    %890 = vector.load %arg3[%c0_585, %c9_586] : memref<8x24xf32, #tpu.memory_space<vmem>>, vector<8x1xf32>
    %891 = vector.broadcast %890 : vector<8x1xf32> to vector<8x1024xf32>
    %892 = arith.mulf %891, %823 : vector<8x1024xf32>
    %893 = vector.broadcast %889 : vector<8x1xf32> to vector<8x1024xf32>
    %894 = arith.addf %893, %892 : vector<8x1024xf32>
    %c0_587 = arith.constant 0 : index
    %c10_588 = arith.constant 10 : index
    %895 = vector.load %arg3[%c0_587, %c10_588] : memref<8x24xf32, #tpu.memory_space<vmem>>, vector<8x1xf32>
    %896 = vector.broadcast %895 : vector<8x1xf32> to vector<8x1024xf32>
    %897 = arith.mulf %896, %827 : vector<8x1024xf32>
    %898 = arith.addf %894, %897 : vector<8x1024xf32>
    %c0_589 = arith.constant 0 : index
    %c11_590 = arith.constant 11 : index
    %899 = vector.load %arg3[%c0_589, %c11_590] : memref<8x24xf32, #tpu.memory_space<vmem>>, vector<8x1xf32>
    %900 = vector.broadcast %899 : vector<8x1xf32> to vector<8x1024xf32>
    %901 = arith.mulf %900, %831 : vector<8x1024xf32>
    %902 = arith.addf %898, %901 : vector<8x1024xf32>
    %cst_591 = arith.constant 0.000000e+00 : f32
    %903 = vector.broadcast %cst_591 : f32 to vector<8x1024xf32>
    %904 = arith.maximumf %902, %903 : vector<8x1024xf32>
    %c0_592 = arith.constant 0 : index
    %c3_593 = arith.constant 3 : index
    %c0_594 = arith.constant 0 : index
    %c5120_595 = arith.constant 5120 : index
    %905 = vector.load %arg5[%c0_592, %c3_593, %c0_594, %c5120_595] : memref<1x8x8x8192xf32, #tpu.memory_space<vmem>>, vector<1x1x8x1024xf32>
    %906 = vector.shape_cast %905 : vector<1x1x8x1024xf32> to vector<8x1024xf32>
    %907 = vector.shape_cast %904 : vector<8x1024xf32> to vector<1x1x8x1024xf32>
    tpu.vector_store %arg5[%c0_592, %c3_593, %c0_594, %c5120_595], %907 {strides = array<i32>} : memref<1x8x8x8192xf32, #tpu.memory_space<vmem>>, vector<1x1x8x1024xf32>,
    %c0_596 = arith.constant 0 : index
    %c4_597 = arith.constant 4 : index
    %908 = vector.load %arg4[%c0_596, %c4_597] : memref<8x8xf32, #tpu.memory_space<vmem>>, vector<8x1xf32>
    %c0_598 = arith.constant 0 : index
    %c12_599 = arith.constant 12 : index
    %909 = vector.load %arg3[%c0_598, %c12_599] : memref<8x24xf32, #tpu.memory_space<vmem>>, vector<8x1xf32>
    %910 = vector.broadcast %909 : vector<8x1xf32> to vector<8x1024xf32>
    %911 = arith.mulf %910, %823 : vector<8x1024xf32>
    %912 = vector.broadcast %908 : vector<8x1xf32> to vector<8x1024xf32>
    %913 = arith.addf %912, %911 : vector<8x1024xf32>
    %c0_600 = arith.constant 0 : index
    %c13_601 = arith.constant 13 : index
    %914 = vector.load %arg3[%c0_600, %c13_601] : memref<8x24xf32, #tpu.memory_space<vmem>>, vector<8x1xf32>
    %915 = vector.broadcast %914 : vector<8x1xf32> to vector<8x1024xf32>
    %916 = arith.mulf %915, %827 : vector<8x1024xf32>
    %917 = arith.addf %913, %916 : vector<8x1024xf32>
    %c0_602 = arith.constant 0 : index
    %c14_603 = arith.constant 14 : index
    %918 = vector.load %arg3[%c0_602, %c14_603] : memref<8x24xf32, #tpu.memory_space<vmem>>, vector<8x1xf32>
    %919 = vector.broadcast %918 : vector<8x1xf32> to vector<8x1024xf32>
    %920 = arith.mulf %919, %831 : vector<8x1024xf32>
    %921 = arith.addf %917, %920 : vector<8x1024xf32>
    %cst_604 = arith.constant 0.000000e+00 : f32
    %922 = vector.broadcast %cst_604 : f32 to vector<8x1024xf32>
    %923 = arith.maximumf %921, %922 : vector<8x1024xf32>
    %c0_605 = arith.constant 0 : index
    %c4_606 = arith.constant 4 : index
    %c0_607 = arith.constant 0 : index
    %c5120_608 = arith.constant 5120 : index
    %924 = vector.load %arg5[%c0_605, %c4_606, %c0_607, %c5120_608] : memref<1x8x8x8192xf32, #tpu.memory_space<vmem>>, vector<1x1x8x1024xf32>
    %925 = vector.shape_cast %924 : vector<1x1x8x1024xf32> to vector<8x1024xf32>
    %926 = vector.shape_cast %923 : vector<8x1024xf32> to vector<1x1x8x1024xf32>
    tpu.vector_store %arg5[%c0_605, %c4_606, %c0_607, %c5120_608], %926 {strides = array<i32>} : memref<1x8x8x8192xf32, #tpu.memory_space<vmem>>, vector<1x1x8x1024xf32>,
    %c0_609 = arith.constant 0 : index
    %c5_610 = arith.constant 5 : index
    %927 = vector.load %arg4[%c0_609, %c5_610] : memref<8x8xf32, #tpu.memory_space<vmem>>, vector<8x1xf32>
    %c0_611 = arith.constant 0 : index
    %c15_612 = arith.constant 15 : index
    %928 = vector.load %arg3[%c0_611, %c15_612] : memref<8x24xf32, #tpu.memory_space<vmem>>, vector<8x1xf32>
    %929 = vector.broadcast %928 : vector<8x1xf32> to vector<8x1024xf32>
    %930 = arith.mulf %929, %823 : vector<8x1024xf32>
    %931 = vector.broadcast %927 : vector<8x1xf32> to vector<8x1024xf32>
    %932 = arith.addf %931, %930 : vector<8x1024xf32>
    %c0_613 = arith.constant 0 : index
    %c16_614 = arith.constant 16 : index
    %933 = vector.load %arg3[%c0_613, %c16_614] : memref<8x24xf32, #tpu.memory_space<vmem>>, vector<8x1xf32>
    %934 = vector.broadcast %933 : vector<8x1xf32> to vector<8x1024xf32>
    %935 = arith.mulf %934, %827 : vector<8x1024xf32>
    %936 = arith.addf %932, %935 : vector<8x1024xf32>
    %c0_615 = arith.constant 0 : index
    %c17_616 = arith.constant 17 : index
    %937 = vector.load %arg3[%c0_615, %c17_616] : memref<8x24xf32, #tpu.memory_space<vmem>>, vector<8x1xf32>
    %938 = vector.broadcast %937 : vector<8x1xf32> to vector<8x1024xf32>
    %939 = arith.mulf %938, %831 : vector<8x1024xf32>
    %940 = arith.addf %936, %939 : vector<8x1024xf32>
    %cst_617 = arith.constant 0.000000e+00 : f32
    %941 = vector.broadcast %cst_617 : f32 to vector<8x1024xf32>
    %942 = arith.maximumf %940, %941 : vector<8x1024xf32>
    %c0_618 = arith.constant 0 : index
    %c5_619 = arith.constant 5 : index
    %c0_620 = arith.constant 0 : index
    %c5120_621 = arith.constant 5120 : index
    %943 = vector.load %arg5[%c0_618, %c5_619, %c0_620, %c5120_621] : memref<1x8x8x8192xf32, #tpu.memory_space<vmem>>, vector<1x1x8x1024xf32>
    %944 = vector.shape_cast %943 : vector<1x1x8x1024xf32> to vector<8x1024xf32>
    %945 = vector.shape_cast %942 : vector<8x1024xf32> to vector<1x1x8x1024xf32>
    tpu.vector_store %arg5[%c0_618, %c5_619, %c0_620, %c5120_621], %945 {strides = array<i32>} : memref<1x8x8x8192xf32, #tpu.memory_space<vmem>>, vector<1x1x8x1024xf32>,
    %c0_622 = arith.constant 0 : index
    %c6_623 = arith.constant 6 : index
    %946 = vector.load %arg4[%c0_622, %c6_623] : memref<8x8xf32, #tpu.memory_space<vmem>>, vector<8x1xf32>
    %c0_624 = arith.constant 0 : index
    %c18_625 = arith.constant 18 : index
    %947 = vector.load %arg3[%c0_624, %c18_625] : memref<8x24xf32, #tpu.memory_space<vmem>>, vector<8x1xf32>
    %948 = vector.broadcast %947 : vector<8x1xf32> to vector<8x1024xf32>
    %949 = arith.mulf %948, %823 : vector<8x1024xf32>
    %950 = vector.broadcast %946 : vector<8x1xf32> to vector<8x1024xf32>
    %951 = arith.addf %950, %949 : vector<8x1024xf32>
    %c0_626 = arith.constant 0 : index
    %c19_627 = arith.constant 19 : index
    %952 = vector.load %arg3[%c0_626, %c19_627] : memref<8x24xf32, #tpu.memory_space<vmem>>, vector<8x1xf32>
    %953 = vector.broadcast %952 : vector<8x1xf32> to vector<8x1024xf32>
    %954 = arith.mulf %953, %827 : vector<8x1024xf32>
    %955 = arith.addf %951, %954 : vector<8x1024xf32>
    %c0_628 = arith.constant 0 : index
    %c20_629 = arith.constant 20 : index
    %956 = vector.load %arg3[%c0_628, %c20_629] : memref<8x24xf32, #tpu.memory_space<vmem>>, vector<8x1xf32>
    %957 = vector.broadcast %956 : vector<8x1xf32> to vector<8x1024xf32>
    %958 = arith.mulf %957, %831 : vector<8x1024xf32>
    %959 = arith.addf %955, %958 : vector<8x1024xf32>
    %cst_630 = arith.constant 0.000000e+00 : f32
    %960 = vector.broadcast %cst_630 : f32 to vector<8x1024xf32>
    %961 = arith.maximumf %959, %960 : vector<8x1024xf32>
    %c0_631 = arith.constant 0 : index
    %c6_632 = arith.constant 6 : index
    %c0_633 = arith.constant 0 : index
    %c5120_634 = arith.constant 5120 : index
    %962 = vector.load %arg5[%c0_631, %c6_632, %c0_633, %c5120_634] : memref<1x8x8x8192xf32, #tpu.memory_space<vmem>>, vector<1x1x8x1024xf32>
    %963 = vector.shape_cast %962 : vector<1x1x8x1024xf32> to vector<8x1024xf32>
    %964 = vector.shape_cast %961 : vector<8x1024xf32> to vector<1x1x8x1024xf32>
    tpu.vector_store %arg5[%c0_631, %c6_632, %c0_633, %c5120_634], %964 {strides = array<i32>} : memref<1x8x8x8192xf32, #tpu.memory_space<vmem>>, vector<1x1x8x1024xf32>,
    %c0_635 = arith.constant 0 : index
    %c7_636 = arith.constant 7 : index
    %965 = vector.load %arg4[%c0_635, %c7_636] : memref<8x8xf32, #tpu.memory_space<vmem>>, vector<8x1xf32>
    %c0_637 = arith.constant 0 : index
    %c21_638 = arith.constant 21 : index
    %966 = vector.load %arg3[%c0_637, %c21_638] : memref<8x24xf32, #tpu.memory_space<vmem>>, vector<8x1xf32>
    %967 = vector.broadcast %966 : vector<8x1xf32> to vector<8x1024xf32>
    %968 = arith.mulf %967, %823 : vector<8x1024xf32>
    %969 = vector.broadcast %965 : vector<8x1xf32> to vector<8x1024xf32>
    %970 = arith.addf %969, %968 : vector<8x1024xf32>
    %c0_639 = arith.constant 0 : index
    %c22_640 = arith.constant 22 : index
    %971 = vector.load %arg3[%c0_639, %c22_640] : memref<8x24xf32, #tpu.memory_space<vmem>>, vector<8x1xf32>
    %972 = vector.broadcast %971 : vector<8x1xf32> to vector<8x1024xf32>
    %973 = arith.mulf %972, %827 : vector<8x1024xf32>
    %974 = arith.addf %970, %973 : vector<8x1024xf32>
    %c0_641 = arith.constant 0 : index
    %c23_642 = arith.constant 23 : index
    %975 = vector.load %arg3[%c0_641, %c23_642] : memref<8x24xf32, #tpu.memory_space<vmem>>, vector<8x1xf32>
    %976 = vector.broadcast %975 : vector<8x1xf32> to vector<8x1024xf32>
    %977 = arith.mulf %976, %831 : vector<8x1024xf32>
    %978 = arith.addf %974, %977 : vector<8x1024xf32>
    %cst_643 = arith.constant 0.000000e+00 : f32
    %979 = vector.broadcast %cst_643 : f32 to vector<8x1024xf32>
    %980 = arith.maximumf %978, %979 : vector<8x1024xf32>
    %c0_644 = arith.constant 0 : index
    %c7_645 = arith.constant 7 : index
    %c0_646 = arith.constant 0 : index
    %c5120_647 = arith.constant 5120 : index
    %981 = vector.load %arg5[%c0_644, %c7_645, %c0_646, %c5120_647] : memref<1x8x8x8192xf32, #tpu.memory_space<vmem>>, vector<1x1x8x1024xf32>
    %982 = vector.shape_cast %981 : vector<1x1x8x1024xf32> to vector<8x1024xf32>
    %983 = vector.shape_cast %980 : vector<8x1024xf32> to vector<1x1x8x1024xf32>
    tpu.vector_store %arg5[%c0_644, %c7_645, %c0_646, %c5120_647], %983 {strides = array<i32>} : memref<1x8x8x8192xf32, #tpu.memory_space<vmem>>, vector<1x1x8x1024xf32>,
    %c0_648 = arith.constant 0 : index
    %c0_649 = arith.constant 0 : index
    %c6144 = arith.constant 6144 : index
    %984 = vector.load %arg2[%c0_648, %c0_649, %c6144] : memref<1x3x8192xf32, #tpu.memory_space<vmem>>, vector<1x1x1024xf32>
    %985 = vector.shape_cast %984 : vector<1x1x1024xf32> to vector<1x1024xf32>
    %986 = vector.shape_cast %985 : vector<1x1024xf32> to vector<1x1024xf32>
    %987 = vector.broadcast %986 : vector<1x1024xf32> to vector<8x1024xf32>
    %c0_650 = arith.constant 0 : index
    %c1_651 = arith.constant 1 : index
    %c6144_652 = arith.constant 6144 : index
    %988 = vector.load %arg2[%c0_650, %c1_651, %c6144_652] : memref<1x3x8192xf32, #tpu.memory_space<vmem>>, vector<1x1x1024xf32>
    %989 = vector.shape_cast %988 : vector<1x1x1024xf32> to vector<1x1024xf32>
    %990 = vector.shape_cast %989 : vector<1x1024xf32> to vector<1x1024xf32>
    %991 = vector.broadcast %990 : vector<1x1024xf32> to vector<8x1024xf32>
    %c0_653 = arith.constant 0 : index
    %c2_654 = arith.constant 2 : index
    %c6144_655 = arith.constant 6144 : index
    %992 = vector.load %arg2[%c0_653, %c2_654, %c6144_655] : memref<1x3x8192xf32, #tpu.memory_space<vmem>>, vector<1x1x1024xf32>
    %993 = vector.shape_cast %992 : vector<1x1x1024xf32> to vector<1x1024xf32>
    %994 = vector.shape_cast %993 : vector<1x1024xf32> to vector<1x1024xf32>
    %995 = vector.broadcast %994 : vector<1x1024xf32> to vector<8x1024xf32>
    %c0_656 = arith.constant 0 : index
    %c0_657 = arith.constant 0 : index
    %996 = vector.load %arg4[%c0_656, %c0_657] : memref<8x8xf32, #tpu.memory_space<vmem>>, vector<8x1xf32>
    %c0_658 = arith.constant 0 : index
    %c0_659 = arith.constant 0 : index
    %997 = vector.load %arg3[%c0_658, %c0_659] : memref<8x24xf32, #tpu.memory_space<vmem>>, vector<8x1xf32>
    %998 = vector.broadcast %997 : vector<8x1xf32> to vector<8x1024xf32>
    %999 = arith.mulf %998, %987 : vector<8x1024xf32>
    %1000 = vector.broadcast %996 : vector<8x1xf32> to vector<8x1024xf32>
    %1001 = arith.addf %1000, %999 : vector<8x1024xf32>
    %c0_660 = arith.constant 0 : index
    %c1_661 = arith.constant 1 : index
    %1002 = vector.load %arg3[%c0_660, %c1_661] : memref<8x24xf32, #tpu.memory_space<vmem>>, vector<8x1xf32>
    %1003 = vector.broadcast %1002 : vector<8x1xf32> to vector<8x1024xf32>
    %1004 = arith.mulf %1003, %991 : vector<8x1024xf32>
    %1005 = arith.addf %1001, %1004 : vector<8x1024xf32>
    %c0_662 = arith.constant 0 : index
    %c2_663 = arith.constant 2 : index
    %1006 = vector.load %arg3[%c0_662, %c2_663] : memref<8x24xf32, #tpu.memory_space<vmem>>, vector<8x1xf32>
    %1007 = vector.broadcast %1006 : vector<8x1xf32> to vector<8x1024xf32>
    %1008 = arith.mulf %1007, %995 : vector<8x1024xf32>
    %1009 = arith.addf %1005, %1008 : vector<8x1024xf32>
    %cst_664 = arith.constant 0.000000e+00 : f32
    %1010 = vector.broadcast %cst_664 : f32 to vector<8x1024xf32>
    %1011 = arith.maximumf %1009, %1010 : vector<8x1024xf32>
    %c0_665 = arith.constant 0 : index
    %c0_666 = arith.constant 0 : index
    %c0_667 = arith.constant 0 : index
    %c6144_668 = arith.constant 6144 : index
    %1012 = vector.load %arg5[%c0_665, %c0_666, %c0_667, %c6144_668] : memref<1x8x8x8192xf32, #tpu.memory_space<vmem>>, vector<1x1x8x1024xf32>
    %1013 = vector.shape_cast %1012 : vector<1x1x8x1024xf32> to vector<8x1024xf32>
    %1014 = vector.shape_cast %1011 : vector<8x1024xf32> to vector<1x1x8x1024xf32>
    tpu.vector_store %arg5[%c0_665, %c0_666, %c0_667, %c6144_668], %1014 {strides = array<i32>} : memref<1x8x8x8192xf32, #tpu.memory_space<vmem>>, vector<1x1x8x1024xf32>,
    %c0_669 = arith.constant 0 : index
    %c1_670 = arith.constant 1 : index
    %1015 = vector.load %arg4[%c0_669, %c1_670] : memref<8x8xf32, #tpu.memory_space<vmem>>, vector<8x1xf32>
    %c0_671 = arith.constant 0 : index
    %c3_672 = arith.constant 3 : index
    %1016 = vector.load %arg3[%c0_671, %c3_672] : memref<8x24xf32, #tpu.memory_space<vmem>>, vector<8x1xf32>
    %1017 = vector.broadcast %1016 : vector<8x1xf32> to vector<8x1024xf32>
    %1018 = arith.mulf %1017, %987 : vector<8x1024xf32>
    %1019 = vector.broadcast %1015 : vector<8x1xf32> to vector<8x1024xf32>
    %1020 = arith.addf %1019, %1018 : vector<8x1024xf32>
    %c0_673 = arith.constant 0 : index
    %c4_674 = arith.constant 4 : index
    %1021 = vector.load %arg3[%c0_673, %c4_674] : memref<8x24xf32, #tpu.memory_space<vmem>>, vector<8x1xf32>
    %1022 = vector.broadcast %1021 : vector<8x1xf32> to vector<8x1024xf32>
    %1023 = arith.mulf %1022, %991 : vector<8x1024xf32>
    %1024 = arith.addf %1020, %1023 : vector<8x1024xf32>
    %c0_675 = arith.constant 0 : index
    %c5_676 = arith.constant 5 : index
    %1025 = vector.load %arg3[%c0_675, %c5_676] : memref<8x24xf32, #tpu.memory_space<vmem>>, vector<8x1xf32>
    %1026 = vector.broadcast %1025 : vector<8x1xf32> to vector<8x1024xf32>
    %1027 = arith.mulf %1026, %995 : vector<8x1024xf32>
    %1028 = arith.addf %1024, %1027 : vector<8x1024xf32>
    %cst_677 = arith.constant 0.000000e+00 : f32
    %1029 = vector.broadcast %cst_677 : f32 to vector<8x1024xf32>
    %1030 = arith.maximumf %1028, %1029 : vector<8x1024xf32>
    %c0_678 = arith.constant 0 : index
    %c1_679 = arith.constant 1 : index
    %c0_680 = arith.constant 0 : index
    %c6144_681 = arith.constant 6144 : index
    %1031 = vector.load %arg5[%c0_678, %c1_679, %c0_680, %c6144_681] : memref<1x8x8x8192xf32, #tpu.memory_space<vmem>>, vector<1x1x8x1024xf32>
    %1032 = vector.shape_cast %1031 : vector<1x1x8x1024xf32> to vector<8x1024xf32>
    %1033 = vector.shape_cast %1030 : vector<8x1024xf32> to vector<1x1x8x1024xf32>
    tpu.vector_store %arg5[%c0_678, %c1_679, %c0_680, %c6144_681], %1033 {strides = array<i32>} : memref<1x8x8x8192xf32, #tpu.memory_space<vmem>>, vector<1x1x8x1024xf32>,
    %c0_682 = arith.constant 0 : index
    %c2_683 = arith.constant 2 : index
    %1034 = vector.load %arg4[%c0_682, %c2_683] : memref<8x8xf32, #tpu.memory_space<vmem>>, vector<8x1xf32>
    %c0_684 = arith.constant 0 : index
    %c6_685 = arith.constant 6 : index
    %1035 = vector.load %arg3[%c0_684, %c6_685] : memref<8x24xf32, #tpu.memory_space<vmem>>, vector<8x1xf32>
    %1036 = vector.broadcast %1035 : vector<8x1xf32> to vector<8x1024xf32>
    %1037 = arith.mulf %1036, %987 : vector<8x1024xf32>
    %1038 = vector.broadcast %1034 : vector<8x1xf32> to vector<8x1024xf32>
    %1039 = arith.addf %1038, %1037 : vector<8x1024xf32>
    %c0_686 = arith.constant 0 : index
    %c7_687 = arith.constant 7 : index
    %1040 = vector.load %arg3[%c0_686, %c7_687] : memref<8x24xf32, #tpu.memory_space<vmem>>, vector<8x1xf32>
    %1041 = vector.broadcast %1040 : vector<8x1xf32> to vector<8x1024xf32>
    %1042 = arith.mulf %1041, %991 : vector<8x1024xf32>
    %1043 = arith.addf %1039, %1042 : vector<8x1024xf32>
    %c0_688 = arith.constant 0 : index
    %c8_689 = arith.constant 8 : index
    %1044 = vector.load %arg3[%c0_688, %c8_689] : memref<8x24xf32, #tpu.memory_space<vmem>>, vector<8x1xf32>
    %1045 = vector.broadcast %1044 : vector<8x1xf32> to vector<8x1024xf32>
    %1046 = arith.mulf %1045, %995 : vector<8x1024xf32>
    %1047 = arith.addf %1043, %1046 : vector<8x1024xf32>
    %cst_690 = arith.constant 0.000000e+00 : f32
    %1048 = vector.broadcast %cst_690 : f32 to vector<8x1024xf32>
    %1049 = arith.maximumf %1047, %1048 : vector<8x1024xf32>
    %c0_691 = arith.constant 0 : index
    %c2_692 = arith.constant 2 : index
    %c0_693 = arith.constant 0 : index
    %c6144_694 = arith.constant 6144 : index
    %1050 = vector.load %arg5[%c0_691, %c2_692, %c0_693, %c6144_694] : memref<1x8x8x8192xf32, #tpu.memory_space<vmem>>, vector<1x1x8x1024xf32>
    %1051 = vector.shape_cast %1050 : vector<1x1x8x1024xf32> to vector<8x1024xf32>
    %1052 = vector.shape_cast %1049 : vector<8x1024xf32> to vector<1x1x8x1024xf32>
    tpu.vector_store %arg5[%c0_691, %c2_692, %c0_693, %c6144_694], %1052 {strides = array<i32>} : memref<1x8x8x8192xf32, #tpu.memory_space<vmem>>, vector<1x1x8x1024xf32>,
    %c0_695 = arith.constant 0 : index
    %c3_696 = arith.constant 3 : index
    %1053 = vector.load %arg4[%c0_695, %c3_696] : memref<8x8xf32, #tpu.memory_space<vmem>>, vector<8x1xf32>
    %c0_697 = arith.constant 0 : index
    %c9_698 = arith.constant 9 : index
    %1054 = vector.load %arg3[%c0_697, %c9_698] : memref<8x24xf32, #tpu.memory_space<vmem>>, vector<8x1xf32>
    %1055 = vector.broadcast %1054 : vector<8x1xf32> to vector<8x1024xf32>
    %1056 = arith.mulf %1055, %987 : vector<8x1024xf32>
    %1057 = vector.broadcast %1053 : vector<8x1xf32> to vector<8x1024xf32>
    %1058 = arith.addf %1057, %1056 : vector<8x1024xf32>
    %c0_699 = arith.constant 0 : index
    %c10_700 = arith.constant 10 : index
    %1059 = vector.load %arg3[%c0_699, %c10_700] : memref<8x24xf32, #tpu.memory_space<vmem>>, vector<8x1xf32>
    %1060 = vector.broadcast %1059 : vector<8x1xf32> to vector<8x1024xf32>
    %1061 = arith.mulf %1060, %991 : vector<8x1024xf32>
    %1062 = arith.addf %1058, %1061 : vector<8x1024xf32>
    %c0_701 = arith.constant 0 : index
    %c11_702 = arith.constant 11 : index
    %1063 = vector.load %arg3[%c0_701, %c11_702] : memref<8x24xf32, #tpu.memory_space<vmem>>, vector<8x1xf32>
    %1064 = vector.broadcast %1063 : vector<8x1xf32> to vector<8x1024xf32>
    %1065 = arith.mulf %1064, %995 : vector<8x1024xf32>
    %1066 = arith.addf %1062, %1065 : vector<8x1024xf32>
    %cst_703 = arith.constant 0.000000e+00 : f32
    %1067 = vector.broadcast %cst_703 : f32 to vector<8x1024xf32>
    %1068 = arith.maximumf %1066, %1067 : vector<8x1024xf32>
    %c0_704 = arith.constant 0 : index
    %c3_705 = arith.constant 3 : index
    %c0_706 = arith.constant 0 : index
    %c6144_707 = arith.constant 6144 : index
    %1069 = vector.load %arg5[%c0_704, %c3_705, %c0_706, %c6144_707] : memref<1x8x8x8192xf32, #tpu.memory_space<vmem>>, vector<1x1x8x1024xf32>
    %1070 = vector.shape_cast %1069 : vector<1x1x8x1024xf32> to vector<8x1024xf32>
    %1071 = vector.shape_cast %1068 : vector<8x1024xf32> to vector<1x1x8x1024xf32>
    tpu.vector_store %arg5[%c0_704, %c3_705, %c0_706, %c6144_707], %1071 {strides = array<i32>} : memref<1x8x8x8192xf32, #tpu.memory_space<vmem>>, vector<1x1x8x1024xf32>,
    %c0_708 = arith.constant 0 : index
    %c4_709 = arith.constant 4 : index
    %1072 = vector.load %arg4[%c0_708, %c4_709] : memref<8x8xf32, #tpu.memory_space<vmem>>, vector<8x1xf32>
    %c0_710 = arith.constant 0 : index
    %c12_711 = arith.constant 12 : index
    %1073 = vector.load %arg3[%c0_710, %c12_711] : memref<8x24xf32, #tpu.memory_space<vmem>>, vector<8x1xf32>
    %1074 = vector.broadcast %1073 : vector<8x1xf32> to vector<8x1024xf32>
    %1075 = arith.mulf %1074, %987 : vector<8x1024xf32>
    %1076 = vector.broadcast %1072 : vector<8x1xf32> to vector<8x1024xf32>
    %1077 = arith.addf %1076, %1075 : vector<8x1024xf32>
    %c0_712 = arith.constant 0 : index
    %c13_713 = arith.constant 13 : index
    %1078 = vector.load %arg3[%c0_712, %c13_713] : memref<8x24xf32, #tpu.memory_space<vmem>>, vector<8x1xf32>
    %1079 = vector.broadcast %1078 : vector<8x1xf32> to vector<8x1024xf32>
    %1080 = arith.mulf %1079, %991 : vector<8x1024xf32>
    %1081 = arith.addf %1077, %1080 : vector<8x1024xf32>
    %c0_714 = arith.constant 0 : index
    %c14_715 = arith.constant 14 : index
    %1082 = vector.load %arg3[%c0_714, %c14_715] : memref<8x24xf32, #tpu.memory_space<vmem>>, vector<8x1xf32>
    %1083 = vector.broadcast %1082 : vector<8x1xf32> to vector<8x1024xf32>
    %1084 = arith.mulf %1083, %995 : vector<8x1024xf32>
    %1085 = arith.addf %1081, %1084 : vector<8x1024xf32>
    %cst_716 = arith.constant 0.000000e+00 : f32
    %1086 = vector.broadcast %cst_716 : f32 to vector<8x1024xf32>
    %1087 = arith.maximumf %1085, %1086 : vector<8x1024xf32>
    %c0_717 = arith.constant 0 : index
    %c4_718 = arith.constant 4 : index
    %c0_719 = arith.constant 0 : index
    %c6144_720 = arith.constant 6144 : index
    %1088 = vector.load %arg5[%c0_717, %c4_718, %c0_719, %c6144_720] : memref<1x8x8x8192xf32, #tpu.memory_space<vmem>>, vector<1x1x8x1024xf32>
    %1089 = vector.shape_cast %1088 : vector<1x1x8x1024xf32> to vector<8x1024xf32>
    %1090 = vector.shape_cast %1087 : vector<8x1024xf32> to vector<1x1x8x1024xf32>
    tpu.vector_store %arg5[%c0_717, %c4_718, %c0_719, %c6144_720], %1090 {strides = array<i32>} : memref<1x8x8x8192xf32, #tpu.memory_space<vmem>>, vector<1x1x8x1024xf32>,
    %c0_721 = arith.constant 0 : index
    %c5_722 = arith.constant 5 : index
    %1091 = vector.load %arg4[%c0_721, %c5_722] : memref<8x8xf32, #tpu.memory_space<vmem>>, vector<8x1xf32>
    %c0_723 = arith.constant 0 : index
    %c15_724 = arith.constant 15 : index
    %1092 = vector.load %arg3[%c0_723, %c15_724] : memref<8x24xf32, #tpu.memory_space<vmem>>, vector<8x1xf32>
    %1093 = vector.broadcast %1092 : vector<8x1xf32> to vector<8x1024xf32>
    %1094 = arith.mulf %1093, %987 : vector<8x1024xf32>
    %1095 = vector.broadcast %1091 : vector<8x1xf32> to vector<8x1024xf32>
    %1096 = arith.addf %1095, %1094 : vector<8x1024xf32>
    %c0_725 = arith.constant 0 : index
    %c16_726 = arith.constant 16 : index
    %1097 = vector.load %arg3[%c0_725, %c16_726] : memref<8x24xf32, #tpu.memory_space<vmem>>, vector<8x1xf32>
    %1098 = vector.broadcast %1097 : vector<8x1xf32> to vector<8x1024xf32>
    %1099 = arith.mulf %1098, %991 : vector<8x1024xf32>
    %1100 = arith.addf %1096, %1099 : vector<8x1024xf32>
    %c0_727 = arith.constant 0 : index
    %c17_728 = arith.constant 17 : index
    %1101 = vector.load %arg3[%c0_727, %c17_728] : memref<8x24xf32, #tpu.memory_space<vmem>>, vector<8x1xf32>
    %1102 = vector.broadcast %1101 : vector<8x1xf32> to vector<8x1024xf32>
    %1103 = arith.mulf %1102, %995 : vector<8x1024xf32>
    %1104 = arith.addf %1100, %1103 : vector<8x1024xf32>
    %cst_729 = arith.constant 0.000000e+00 : f32
    %1105 = vector.broadcast %cst_729 : f32 to vector<8x1024xf32>
    %1106 = arith.maximumf %1104, %1105 : vector<8x1024xf32>
    %c0_730 = arith.constant 0 : index
    %c5_731 = arith.constant 5 : index
    %c0_732 = arith.constant 0 : index
    %c6144_733 = arith.constant 6144 : index
    %1107 = vector.load %arg5[%c0_730, %c5_731, %c0_732, %c6144_733] : memref<1x8x8x8192xf32, #tpu.memory_space<vmem>>, vector<1x1x8x1024xf32>
    %1108 = vector.shape_cast %1107 : vector<1x1x8x1024xf32> to vector<8x1024xf32>
    %1109 = vector.shape_cast %1106 : vector<8x1024xf32> to vector<1x1x8x1024xf32>
    tpu.vector_store %arg5[%c0_730, %c5_731, %c0_732, %c6144_733], %1109 {strides = array<i32>} : memref<1x8x8x8192xf32, #tpu.memory_space<vmem>>, vector<1x1x8x1024xf32>,
    %c0_734 = arith.constant 0 : index
    %c6_735 = arith.constant 6 : index
    %1110 = vector.load %arg4[%c0_734, %c6_735] : memref<8x8xf32, #tpu.memory_space<vmem>>, vector<8x1xf32>
    %c0_736 = arith.constant 0 : index
    %c18_737 = arith.constant 18 : index
    %1111 = vector.load %arg3[%c0_736, %c18_737] : memref<8x24xf32, #tpu.memory_space<vmem>>, vector<8x1xf32>
    %1112 = vector.broadcast %1111 : vector<8x1xf32> to vector<8x1024xf32>
    %1113 = arith.mulf %1112, %987 : vector<8x1024xf32>
    %1114 = vector.broadcast %1110 : vector<8x1xf32> to vector<8x1024xf32>
    %1115 = arith.addf %1114, %1113 : vector<8x1024xf32>
    %c0_738 = arith.constant 0 : index
    %c19_739 = arith.constant 19 : index
    %1116 = vector.load %arg3[%c0_738, %c19_739] : memref<8x24xf32, #tpu.memory_space<vmem>>, vector<8x1xf32>
    %1117 = vector.broadcast %1116 : vector<8x1xf32> to vector<8x1024xf32>
    %1118 = arith.mulf %1117, %991 : vector<8x1024xf32>
    %1119 = arith.addf %1115, %1118 : vector<8x1024xf32>
    %c0_740 = arith.constant 0 : index
    %c20_741 = arith.constant 20 : index
    %1120 = vector.load %arg3[%c0_740, %c20_741] : memref<8x24xf32, #tpu.memory_space<vmem>>, vector<8x1xf32>
    %1121 = vector.broadcast %1120 : vector<8x1xf32> to vector<8x1024xf32>
    %1122 = arith.mulf %1121, %995 : vector<8x1024xf32>
    %1123 = arith.addf %1119, %1122 : vector<8x1024xf32>
    %cst_742 = arith.constant 0.000000e+00 : f32
    %1124 = vector.broadcast %cst_742 : f32 to vector<8x1024xf32>
    %1125 = arith.maximumf %1123, %1124 : vector<8x1024xf32>
    %c0_743 = arith.constant 0 : index
    %c6_744 = arith.constant 6 : index
    %c0_745 = arith.constant 0 : index
    %c6144_746 = arith.constant 6144 : index
    %1126 = vector.load %arg5[%c0_743, %c6_744, %c0_745, %c6144_746] : memref<1x8x8x8192xf32, #tpu.memory_space<vmem>>, vector<1x1x8x1024xf32>
    %1127 = vector.shape_cast %1126 : vector<1x1x8x1024xf32> to vector<8x1024xf32>
    %1128 = vector.shape_cast %1125 : vector<8x1024xf32> to vector<1x1x8x1024xf32>
    tpu.vector_store %arg5[%c0_743, %c6_744, %c0_745, %c6144_746], %1128 {strides = array<i32>} : memref<1x8x8x8192xf32, #tpu.memory_space<vmem>>, vector<1x1x8x1024xf32>,
    %c0_747 = arith.constant 0 : index
    %c7_748 = arith.constant 7 : index
    %1129 = vector.load %arg4[%c0_747, %c7_748] : memref<8x8xf32, #tpu.memory_space<vmem>>, vector<8x1xf32>
    %c0_749 = arith.constant 0 : index
    %c21_750 = arith.constant 21 : index
    %1130 = vector.load %arg3[%c0_749, %c21_750] : memref<8x24xf32, #tpu.memory_space<vmem>>, vector<8x1xf32>
    %1131 = vector.broadcast %1130 : vector<8x1xf32> to vector<8x1024xf32>
    %1132 = arith.mulf %1131, %987 : vector<8x1024xf32>
    %1133 = vector.broadcast %1129 : vector<8x1xf32> to vector<8x1024xf32>
    %1134 = arith.addf %1133, %1132 : vector<8x1024xf32>
    %c0_751 = arith.constant 0 : index
    %c22_752 = arith.constant 22 : index
    %1135 = vector.load %arg3[%c0_751, %c22_752] : memref<8x24xf32, #tpu.memory_space<vmem>>, vector<8x1xf32>
    %1136 = vector.broadcast %1135 : vector<8x1xf32> to vector<8x1024xf32>
    %1137 = arith.mulf %1136, %991 : vector<8x1024xf32>
    %1138 = arith.addf %1134, %1137 : vector<8x1024xf32>
    %c0_753 = arith.constant 0 : index
    %c23_754 = arith.constant 23 : index
    %1139 = vector.load %arg3[%c0_753, %c23_754] : memref<8x24xf32, #tpu.memory_space<vmem>>, vector<8x1xf32>
    %1140 = vector.broadcast %1139 : vector<8x1xf32> to vector<8x1024xf32>
    %1141 = arith.mulf %1140, %995 : vector<8x1024xf32>
    %1142 = arith.addf %1138, %1141 : vector<8x1024xf32>
    %cst_755 = arith.constant 0.000000e+00 : f32
    %1143 = vector.broadcast %cst_755 : f32 to vector<8x1024xf32>
    %1144 = arith.maximumf %1142, %1143 : vector<8x1024xf32>
    %c0_756 = arith.constant 0 : index
    %c7_757 = arith.constant 7 : index
    %c0_758 = arith.constant 0 : index
    %c6144_759 = arith.constant 6144 : index
    %1145 = vector.load %arg5[%c0_756, %c7_757, %c0_758, %c6144_759] : memref<1x8x8x8192xf32, #tpu.memory_space<vmem>>, vector<1x1x8x1024xf32>
    %1146 = vector.shape_cast %1145 : vector<1x1x8x1024xf32> to vector<8x1024xf32>
    %1147 = vector.shape_cast %1144 : vector<8x1024xf32> to vector<1x1x8x1024xf32>
    tpu.vector_store %arg5[%c0_756, %c7_757, %c0_758, %c6144_759], %1147 {strides = array<i32>} : memref<1x8x8x8192xf32, #tpu.memory_space<vmem>>, vector<1x1x8x1024xf32>,
    %c0_760 = arith.constant 0 : index
    %c0_761 = arith.constant 0 : index
    %c7168 = arith.constant 7168 : index
    %1148 = vector.load %arg2[%c0_760, %c0_761, %c7168] : memref<1x3x8192xf32, #tpu.memory_space<vmem>>, vector<1x1x1024xf32>
    %1149 = vector.shape_cast %1148 : vector<1x1x1024xf32> to vector<1x1024xf32>
    %1150 = vector.shape_cast %1149 : vector<1x1024xf32> to vector<1x1024xf32>
    %1151 = vector.broadcast %1150 : vector<1x1024xf32> to vector<8x1024xf32>
    %c0_762 = arith.constant 0 : index
    %c1_763 = arith.constant 1 : index
    %c7168_764 = arith.constant 7168 : index
    %1152 = vector.load %arg2[%c0_762, %c1_763, %c7168_764] : memref<1x3x8192xf32, #tpu.memory_space<vmem>>, vector<1x1x1024xf32>
    %1153 = vector.shape_cast %1152 : vector<1x1x1024xf32> to vector<1x1024xf32>
    %1154 = vector.shape_cast %1153 : vector<1x1024xf32> to vector<1x1024xf32>
    %1155 = vector.broadcast %1154 : vector<1x1024xf32> to vector<8x1024xf32>
    %c0_765 = arith.constant 0 : index
    %c2_766 = arith.constant 2 : index
    %c7168_767 = arith.constant 7168 : index
    %1156 = vector.load %arg2[%c0_765, %c2_766, %c7168_767] : memref<1x3x8192xf32, #tpu.memory_space<vmem>>, vector<1x1x1024xf32>
    %1157 = vector.shape_cast %1156 : vector<1x1x1024xf32> to vector<1x1024xf32>
    %1158 = vector.shape_cast %1157 : vector<1x1024xf32> to vector<1x1024xf32>
    %1159 = vector.broadcast %1158 : vector<1x1024xf32> to vector<8x1024xf32>
    %c0_768 = arith.constant 0 : index
    %c0_769 = arith.constant 0 : index
    %1160 = vector.load %arg4[%c0_768, %c0_769] : memref<8x8xf32, #tpu.memory_space<vmem>>, vector<8x1xf32>
    %c0_770 = arith.constant 0 : index
    %c0_771 = arith.constant 0 : index
    %1161 = vector.load %arg3[%c0_770, %c0_771] : memref<8x24xf32, #tpu.memory_space<vmem>>, vector<8x1xf32>
    %1162 = vector.broadcast %1161 : vector<8x1xf32> to vector<8x1024xf32>
    %1163 = arith.mulf %1162, %1151 : vector<8x1024xf32>
    %1164 = vector.broadcast %1160 : vector<8x1xf32> to vector<8x1024xf32>
    %1165 = arith.addf %1164, %1163 : vector<8x1024xf32>
    %c0_772 = arith.constant 0 : index
    %c1_773 = arith.constant 1 : index
    %1166 = vector.load %arg3[%c0_772, %c1_773] : memref<8x24xf32, #tpu.memory_space<vmem>>, vector<8x1xf32>
    %1167 = vector.broadcast %1166 : vector<8x1xf32> to vector<8x1024xf32>
    %1168 = arith.mulf %1167, %1155 : vector<8x1024xf32>
    %1169 = arith.addf %1165, %1168 : vector<8x1024xf32>
    %c0_774 = arith.constant 0 : index
    %c2_775 = arith.constant 2 : index
    %1170 = vector.load %arg3[%c0_774, %c2_775] : memref<8x24xf32, #tpu.memory_space<vmem>>, vector<8x1xf32>
    %1171 = vector.broadcast %1170 : vector<8x1xf32> to vector<8x1024xf32>
    %1172 = arith.mulf %1171, %1159 : vector<8x1024xf32>
    %1173 = arith.addf %1169, %1172 : vector<8x1024xf32>
    %cst_776 = arith.constant 0.000000e+00 : f32
    %1174 = vector.broadcast %cst_776 : f32 to vector<8x1024xf32>
    %1175 = arith.maximumf %1173, %1174 : vector<8x1024xf32>
    %c0_777 = arith.constant 0 : index
    %c0_778 = arith.constant 0 : index
    %c0_779 = arith.constant 0 : index
    %c7168_780 = arith.constant 7168 : index
    %1176 = vector.load %arg5[%c0_777, %c0_778, %c0_779, %c7168_780] : memref<1x8x8x8192xf32, #tpu.memory_space<vmem>>, vector<1x1x8x1024xf32>
    %1177 = vector.shape_cast %1176 : vector<1x1x8x1024xf32> to vector<8x1024xf32>
    %1178 = vector.shape_cast %1175 : vector<8x1024xf32> to vector<1x1x8x1024xf32>
    tpu.vector_store %arg5[%c0_777, %c0_778, %c0_779, %c7168_780], %1178 {strides = array<i32>} : memref<1x8x8x8192xf32, #tpu.memory_space<vmem>>, vector<1x1x8x1024xf32>,
    %c0_781 = arith.constant 0 : index
    %c1_782 = arith.constant 1 : index
    %1179 = vector.load %arg4[%c0_781, %c1_782] : memref<8x8xf32, #tpu.memory_space<vmem>>, vector<8x1xf32>
    %c0_783 = arith.constant 0 : index
    %c3_784 = arith.constant 3 : index
    %1180 = vector.load %arg3[%c0_783, %c3_784] : memref<8x24xf32, #tpu.memory_space<vmem>>, vector<8x1xf32>
    %1181 = vector.broadcast %1180 : vector<8x1xf32> to vector<8x1024xf32>
    %1182 = arith.mulf %1181, %1151 : vector<8x1024xf32>
    %1183 = vector.broadcast %1179 : vector<8x1xf32> to vector<8x1024xf32>
    %1184 = arith.addf %1183, %1182 : vector<8x1024xf32>
    %c0_785 = arith.constant 0 : index
    %c4_786 = arith.constant 4 : index
    %1185 = vector.load %arg3[%c0_785, %c4_786] : memref<8x24xf32, #tpu.memory_space<vmem>>, vector<8x1xf32>
    %1186 = vector.broadcast %1185 : vector<8x1xf32> to vector<8x1024xf32>
    %1187 = arith.mulf %1186, %1155 : vector<8x1024xf32>
    %1188 = arith.addf %1184, %1187 : vector<8x1024xf32>
    %c0_787 = arith.constant 0 : index
    %c5_788 = arith.constant 5 : index
    %1189 = vector.load %arg3[%c0_787, %c5_788] : memref<8x24xf32, #tpu.memory_space<vmem>>, vector<8x1xf32>
    %1190 = vector.broadcast %1189 : vector<8x1xf32> to vector<8x1024xf32>
    %1191 = arith.mulf %1190, %1159 : vector<8x1024xf32>
    %1192 = arith.addf %1188, %1191 : vector<8x1024xf32>
    %cst_789 = arith.constant 0.000000e+00 : f32
    %1193 = vector.broadcast %cst_789 : f32 to vector<8x1024xf32>
    %1194 = arith.maximumf %1192, %1193 : vector<8x1024xf32>
    %c0_790 = arith.constant 0 : index
    %c1_791 = arith.constant 1 : index
    %c0_792 = arith.constant 0 : index
    %c7168_793 = arith.constant 7168 : index
    %1195 = vector.load %arg5[%c0_790, %c1_791, %c0_792, %c7168_793] : memref<1x8x8x8192xf32, #tpu.memory_space<vmem>>, vector<1x1x8x1024xf32>
    %1196 = vector.shape_cast %1195 : vector<1x1x8x1024xf32> to vector<8x1024xf32>
    %1197 = vector.shape_cast %1194 : vector<8x1024xf32> to vector<1x1x8x1024xf32>
    tpu.vector_store %arg5[%c0_790, %c1_791, %c0_792, %c7168_793], %1197 {strides = array<i32>} : memref<1x8x8x8192xf32, #tpu.memory_space<vmem>>, vector<1x1x8x1024xf32>,
    %c0_794 = arith.constant 0 : index
    %c2_795 = arith.constant 2 : index
    %1198 = vector.load %arg4[%c0_794, %c2_795] : memref<8x8xf32, #tpu.memory_space<vmem>>, vector<8x1xf32>
    %c0_796 = arith.constant 0 : index
    %c6_797 = arith.constant 6 : index
    %1199 = vector.load %arg3[%c0_796, %c6_797] : memref<8x24xf32, #tpu.memory_space<vmem>>, vector<8x1xf32>
    %1200 = vector.broadcast %1199 : vector<8x1xf32> to vector<8x1024xf32>
    %1201 = arith.mulf %1200, %1151 : vector<8x1024xf32>
    %1202 = vector.broadcast %1198 : vector<8x1xf32> to vector<8x1024xf32>
    %1203 = arith.addf %1202, %1201 : vector<8x1024xf32>
    %c0_798 = arith.constant 0 : index
    %c7_799 = arith.constant 7 : index
    %1204 = vector.load %arg3[%c0_798, %c7_799] : memref<8x24xf32, #tpu.memory_space<vmem>>, vector<8x1xf32>
    %1205 = vector.broadcast %1204 : vector<8x1xf32> to vector<8x1024xf32>
    %1206 = arith.mulf %1205, %1155 : vector<8x1024xf32>
    %1207 = arith.addf %1203, %1206 : vector<8x1024xf32>
    %c0_800 = arith.constant 0 : index
    %c8_801 = arith.constant 8 : index
    %1208 = vector.load %arg3[%c0_800, %c8_801] : memref<8x24xf32, #tpu.memory_space<vmem>>, vector<8x1xf32>
    %1209 = vector.broadcast %1208 : vector<8x1xf32> to vector<8x1024xf32>
    %1210 = arith.mulf %1209, %1159 : vector<8x1024xf32>
    %1211 = arith.addf %1207, %1210 : vector<8x1024xf32>
    %cst_802 = arith.constant 0.000000e+00 : f32
    %1212 = vector.broadcast %cst_802 : f32 to vector<8x1024xf32>
    %1213 = arith.maximumf %1211, %1212 : vector<8x1024xf32>
    %c0_803 = arith.constant 0 : index
    %c2_804 = arith.constant 2 : index
    %c0_805 = arith.constant 0 : index
    %c7168_806 = arith.constant 7168 : index
    %1214 = vector.load %arg5[%c0_803, %c2_804, %c0_805, %c7168_806] : memref<1x8x8x8192xf32, #tpu.memory_space<vmem>>, vector<1x1x8x1024xf32>
    %1215 = vector.shape_cast %1214 : vector<1x1x8x1024xf32> to vector<8x1024xf32>
    %1216 = vector.shape_cast %1213 : vector<8x1024xf32> to vector<1x1x8x1024xf32>
    tpu.vector_store %arg5[%c0_803, %c2_804, %c0_805, %c7168_806], %1216 {strides = array<i32>} : memref<1x8x8x8192xf32, #tpu.memory_space<vmem>>, vector<1x1x8x1024xf32>,
    %c0_807 = arith.constant 0 : index
    %c3_808 = arith.constant 3 : index
    %1217 = vector.load %arg4[%c0_807, %c3_808] : memref<8x8xf32, #tpu.memory_space<vmem>>, vector<8x1xf32>
    %c0_809 = arith.constant 0 : index
    %c9_810 = arith.constant 9 : index
    %1218 = vector.load %arg3[%c0_809, %c9_810] : memref<8x24xf32, #tpu.memory_space<vmem>>, vector<8x1xf32>
    %1219 = vector.broadcast %1218 : vector<8x1xf32> to vector<8x1024xf32>
    %1220 = arith.mulf %1219, %1151 : vector<8x1024xf32>
    %1221 = vector.broadcast %1217 : vector<8x1xf32> to vector<8x1024xf32>
    %1222 = arith.addf %1221, %1220 : vector<8x1024xf32>
    %c0_811 = arith.constant 0 : index
    %c10_812 = arith.constant 10 : index
    %1223 = vector.load %arg3[%c0_811, %c10_812] : memref<8x24xf32, #tpu.memory_space<vmem>>, vector<8x1xf32>
    %1224 = vector.broadcast %1223 : vector<8x1xf32> to vector<8x1024xf32>
    %1225 = arith.mulf %1224, %1155 : vector<8x1024xf32>
    %1226 = arith.addf %1222, %1225 : vector<8x1024xf32>
    %c0_813 = arith.constant 0 : index
    %c11_814 = arith.constant 11 : index
    %1227 = vector.load %arg3[%c0_813, %c11_814] : memref<8x24xf32, #tpu.memory_space<vmem>>, vector<8x1xf32>
    %1228 = vector.broadcast %1227 : vector<8x1xf32> to vector<8x1024xf32>
    %1229 = arith.mulf %1228, %1159 : vector<8x1024xf32>
    %1230 = arith.addf %1226, %1229 : vector<8x1024xf32>
    %cst_815 = arith.constant 0.000000e+00 : f32
    %1231 = vector.broadcast %cst_815 : f32 to vector<8x1024xf32>
    %1232 = arith.maximumf %1230, %1231 : vector<8x1024xf32>
    %c0_816 = arith.constant 0 : index
    %c3_817 = arith.constant 3 : index
    %c0_818 = arith.constant 0 : index
    %c7168_819 = arith.constant 7168 : index
    %1233 = vector.load %arg5[%c0_816, %c3_817, %c0_818, %c7168_819] : memref<1x8x8x8192xf32, #tpu.memory_space<vmem>>, vector<1x1x8x1024xf32>
    %1234 = vector.shape_cast %1233 : vector<1x1x8x1024xf32> to vector<8x1024xf32>
    %1235 = vector.shape_cast %1232 : vector<8x1024xf32> to vector<1x1x8x1024xf32>
    tpu.vector_store %arg5[%c0_816, %c3_817, %c0_818, %c7168_819], %1235 {strides = array<i32>} : memref<1x8x8x8192xf32, #tpu.memory_space<vmem>>, vector<1x1x8x1024xf32>,
    %c0_820 = arith.constant 0 : index
    %c4_821 = arith.constant 4 : index
    %1236 = vector.load %arg4[%c0_820, %c4_821] : memref<8x8xf32, #tpu.memory_space<vmem>>, vector<8x1xf32>
    %c0_822 = arith.constant 0 : index
    %c12_823 = arith.constant 12 : index
    %1237 = vector.load %arg3[%c0_822, %c12_823] : memref<8x24xf32, #tpu.memory_space<vmem>>, vector<8x1xf32>
    %1238 = vector.broadcast %1237 : vector<8x1xf32> to vector<8x1024xf32>
    %1239 = arith.mulf %1238, %1151 : vector<8x1024xf32>
    %1240 = vector.broadcast %1236 : vector<8x1xf32> to vector<8x1024xf32>
    %1241 = arith.addf %1240, %1239 : vector<8x1024xf32>
    %c0_824 = arith.constant 0 : index
    %c13_825 = arith.constant 13 : index
    %1242 = vector.load %arg3[%c0_824, %c13_825] : memref<8x24xf32, #tpu.memory_space<vmem>>, vector<8x1xf32>
    %1243 = vector.broadcast %1242 : vector<8x1xf32> to vector<8x1024xf32>
    %1244 = arith.mulf %1243, %1155 : vector<8x1024xf32>
    %1245 = arith.addf %1241, %1244 : vector<8x1024xf32>
    %c0_826 = arith.constant 0 : index
    %c14_827 = arith.constant 14 : index
    %1246 = vector.load %arg3[%c0_826, %c14_827] : memref<8x24xf32, #tpu.memory_space<vmem>>, vector<8x1xf32>
    %1247 = vector.broadcast %1246 : vector<8x1xf32> to vector<8x1024xf32>
    %1248 = arith.mulf %1247, %1159 : vector<8x1024xf32>
    %1249 = arith.addf %1245, %1248 : vector<8x1024xf32>
    %cst_828 = arith.constant 0.000000e+00 : f32
    %1250 = vector.broadcast %cst_828 : f32 to vector<8x1024xf32>
    %1251 = arith.maximumf %1249, %1250 : vector<8x1024xf32>
    %c0_829 = arith.constant 0 : index
    %c4_830 = arith.constant 4 : index
    %c0_831 = arith.constant 0 : index
    %c7168_832 = arith.constant 7168 : index
    %1252 = vector.load %arg5[%c0_829, %c4_830, %c0_831, %c7168_832] : memref<1x8x8x8192xf32, #tpu.memory_space<vmem>>, vector<1x1x8x1024xf32>
    %1253 = vector.shape_cast %1252 : vector<1x1x8x1024xf32> to vector<8x1024xf32>
    %1254 = vector.shape_cast %1251 : vector<8x1024xf32> to vector<1x1x8x1024xf32>
    tpu.vector_store %arg5[%c0_829, %c4_830, %c0_831, %c7168_832], %1254 {strides = array<i32>} : memref<1x8x8x8192xf32, #tpu.memory_space<vmem>>, vector<1x1x8x1024xf32>,
    %c0_833 = arith.constant 0 : index
    %c5_834 = arith.constant 5 : index
    %1255 = vector.load %arg4[%c0_833, %c5_834] : memref<8x8xf32, #tpu.memory_space<vmem>>, vector<8x1xf32>
    %c0_835 = arith.constant 0 : index
    %c15_836 = arith.constant 15 : index
    %1256 = vector.load %arg3[%c0_835, %c15_836] : memref<8x24xf32, #tpu.memory_space<vmem>>, vector<8x1xf32>
    %1257 = vector.broadcast %1256 : vector<8x1xf32> to vector<8x1024xf32>
    %1258 = arith.mulf %1257, %1151 : vector<8x1024xf32>
    %1259 = vector.broadcast %1255 : vector<8x1xf32> to vector<8x1024xf32>
    %1260 = arith.addf %1259, %1258 : vector<8x1024xf32>
    %c0_837 = arith.constant 0 : index
    %c16_838 = arith.constant 16 : index
    %1261 = vector.load %arg3[%c0_837, %c16_838] : memref<8x24xf32, #tpu.memory_space<vmem>>, vector<8x1xf32>
    %1262 = vector.broadcast %1261 : vector<8x1xf32> to vector<8x1024xf32>
    %1263 = arith.mulf %1262, %1155 : vector<8x1024xf32>
    %1264 = arith.addf %1260, %1263 : vector<8x1024xf32>
    %c0_839 = arith.constant 0 : index
    %c17_840 = arith.constant 17 : index
    %1265 = vector.load %arg3[%c0_839, %c17_840] : memref<8x24xf32, #tpu.memory_space<vmem>>, vector<8x1xf32>
    %1266 = vector.broadcast %1265 : vector<8x1xf32> to vector<8x1024xf32>
    %1267 = arith.mulf %1266, %1159 : vector<8x1024xf32>
    %1268 = arith.addf %1264, %1267 : vector<8x1024xf32>
    %cst_841 = arith.constant 0.000000e+00 : f32
    %1269 = vector.broadcast %cst_841 : f32 to vector<8x1024xf32>
    %1270 = arith.maximumf %1268, %1269 : vector<8x1024xf32>
    %c0_842 = arith.constant 0 : index
    %c5_843 = arith.constant 5 : index
    %c0_844 = arith.constant 0 : index
    %c7168_845 = arith.constant 7168 : index
    %1271 = vector.load %arg5[%c0_842, %c5_843, %c0_844, %c7168_845] : memref<1x8x8x8192xf32, #tpu.memory_space<vmem>>, vector<1x1x8x1024xf32>
    %1272 = vector.shape_cast %1271 : vector<1x1x8x1024xf32> to vector<8x1024xf32>
    %1273 = vector.shape_cast %1270 : vector<8x1024xf32> to vector<1x1x8x1024xf32>
    tpu.vector_store %arg5[%c0_842, %c5_843, %c0_844, %c7168_845], %1273 {strides = array<i32>} : memref<1x8x8x8192xf32, #tpu.memory_space<vmem>>, vector<1x1x8x1024xf32>,
    %c0_846 = arith.constant 0 : index
    %c6_847 = arith.constant 6 : index
    %1274 = vector.load %arg4[%c0_846, %c6_847] : memref<8x8xf32, #tpu.memory_space<vmem>>, vector<8x1xf32>
    %c0_848 = arith.constant 0 : index
    %c18_849 = arith.constant 18 : index
    %1275 = vector.load %arg3[%c0_848, %c18_849] : memref<8x24xf32, #tpu.memory_space<vmem>>, vector<8x1xf32>
    %1276 = vector.broadcast %1275 : vector<8x1xf32> to vector<8x1024xf32>
    %1277 = arith.mulf %1276, %1151 : vector<8x1024xf32>
    %1278 = vector.broadcast %1274 : vector<8x1xf32> to vector<8x1024xf32>
    %1279 = arith.addf %1278, %1277 : vector<8x1024xf32>
    %c0_850 = arith.constant 0 : index
    %c19_851 = arith.constant 19 : index
    %1280 = vector.load %arg3[%c0_850, %c19_851] : memref<8x24xf32, #tpu.memory_space<vmem>>, vector<8x1xf32>
    %1281 = vector.broadcast %1280 : vector<8x1xf32> to vector<8x1024xf32>
    %1282 = arith.mulf %1281, %1155 : vector<8x1024xf32>
    %1283 = arith.addf %1279, %1282 : vector<8x1024xf32>
    %c0_852 = arith.constant 0 : index
    %c20_853 = arith.constant 20 : index
    %1284 = vector.load %arg3[%c0_852, %c20_853] : memref<8x24xf32, #tpu.memory_space<vmem>>, vector<8x1xf32>
    %1285 = vector.broadcast %1284 : vector<8x1xf32> to vector<8x1024xf32>
    %1286 = arith.mulf %1285, %1159 : vector<8x1024xf32>
    %1287 = arith.addf %1283, %1286 : vector<8x1024xf32>
    %cst_854 = arith.constant 0.000000e+00 : f32
    %1288 = vector.broadcast %cst_854 : f32 to vector<8x1024xf32>
    %1289 = arith.maximumf %1287, %1288 : vector<8x1024xf32>
    %c0_855 = arith.constant 0 : index
    %c6_856 = arith.constant 6 : index
    %c0_857 = arith.constant 0 : index
    %c7168_858 = arith.constant 7168 : index
    %1290 = vector.load %arg5[%c0_855, %c6_856, %c0_857, %c7168_858] : memref<1x8x8x8192xf32, #tpu.memory_space<vmem>>, vector<1x1x8x1024xf32>
    %1291 = vector.shape_cast %1290 : vector<1x1x8x1024xf32> to vector<8x1024xf32>
    %1292 = vector.shape_cast %1289 : vector<8x1024xf32> to vector<1x1x8x1024xf32>
    tpu.vector_store %arg5[%c0_855, %c6_856, %c0_857, %c7168_858], %1292 {strides = array<i32>} : memref<1x8x8x8192xf32, #tpu.memory_space<vmem>>, vector<1x1x8x1024xf32>,
    %c0_859 = arith.constant 0 : index
    %c7_860 = arith.constant 7 : index
    %1293 = vector.load %arg4[%c0_859, %c7_860] : memref<8x8xf32, #tpu.memory_space<vmem>>, vector<8x1xf32>
    %c0_861 = arith.constant 0 : index
    %c21_862 = arith.constant 21 : index
    %1294 = vector.load %arg3[%c0_861, %c21_862] : memref<8x24xf32, #tpu.memory_space<vmem>>, vector<8x1xf32>
    %1295 = vector.broadcast %1294 : vector<8x1xf32> to vector<8x1024xf32>
    %1296 = arith.mulf %1295, %1151 : vector<8x1024xf32>
    %1297 = vector.broadcast %1293 : vector<8x1xf32> to vector<8x1024xf32>
    %1298 = arith.addf %1297, %1296 : vector<8x1024xf32>
    %c0_863 = arith.constant 0 : index
    %c22_864 = arith.constant 22 : index
    %1299 = vector.load %arg3[%c0_863, %c22_864] : memref<8x24xf32, #tpu.memory_space<vmem>>, vector<8x1xf32>
    %1300 = vector.broadcast %1299 : vector<8x1xf32> to vector<8x1024xf32>
    %1301 = arith.mulf %1300, %1155 : vector<8x1024xf32>
    %1302 = arith.addf %1298, %1301 : vector<8x1024xf32>
    %c0_865 = arith.constant 0 : index
    %c23_866 = arith.constant 23 : index
    %1303 = vector.load %arg3[%c0_865, %c23_866] : memref<8x24xf32, #tpu.memory_space<vmem>>, vector<8x1xf32>
    %1304 = vector.broadcast %1303 : vector<8x1xf32> to vector<8x1024xf32>
    %1305 = arith.mulf %1304, %1159 : vector<8x1024xf32>
    %1306 = arith.addf %1302, %1305 : vector<8x1024xf32>
    %cst_867 = arith.constant 0.000000e+00 : f32
    %1307 = vector.broadcast %cst_867 : f32 to vector<8x1024xf32>
    %1308 = arith.maximumf %1306, %1307 : vector<8x1024xf32>
    %c0_868 = arith.constant 0 : index
    %c7_869 = arith.constant 7 : index
    %c0_870 = arith.constant 0 : index
    %c7168_871 = arith.constant 7168 : index
    %1309 = vector.load %arg5[%c0_868, %c7_869, %c0_870, %c7168_871] : memref<1x8x8x8192xf32, #tpu.memory_space<vmem>>, vector<1x1x8x1024xf32>
    %1310 = vector.shape_cast %1309 : vector<1x1x8x1024xf32> to vector<8x1024xf32>
    %1311 = vector.shape_cast %1308 : vector<8x1024xf32> to vector<1x1x8x1024xf32>
    tpu.vector_store %arg5[%c0_868, %c7_869, %c0_870, %c7168_871], %1311 {strides = array<i32>} : memref<1x8x8x8192xf32, #tpu.memory_space<vmem>>, vector<1x1x8x1024xf32>,
    return
  }
  func.func @transform_0(%arg0: i32, %arg1: i32) -> (i32, i32, i32) {
    %c0_i32 = arith.constant 0 : i32
    %c0_i32_0 = arith.constant 0 : i32
    return %arg0, %c0_i32, %arg1 : i32, i32, i32
  }
  func.func @transform_1(%arg0: i32, %arg1: i32) -> (i32, i32) {
    %c0_i32 = arith.constant 0 : i32
    %c0_i32_0 = arith.constant 0 : i32
    %c0_i32_1 = arith.constant 0 : i32
    return %c0_i32, %c0_i32_0 : i32, i32
  }
  func.func @transform_2(%arg0: i32, %arg1: i32) -> (i32, i32) {
    %c0_i32 = arith.constant 0 : i32
    %c0_i32_0 = arith.constant 0 : i32
    %c0_i32_1 = arith.constant 0 : i32
    return %c0_i32, %c0_i32_0 : i32, i32
  }
  func.func @transform_3(%arg0: i32, %arg1: i32) -> (i32, i32, i32, i32) {
    %c0_i32 = arith.constant 0 : i32
    %c0_i32_0 = arith.constant 0 : i32
    %c0_i32_1 = arith.constant 0 : i32
    return %arg0, %c0_i32, %c0_i32_0, %arg1 : i32, i32, i32, i32
  }
}

</mosaic_0001>

<llo_original>
// kernel: tpu_custom_call.1
$region0: #{tpu_custom_call.1}
  #allocation0 [shape = 'u32[]', space=smem, size = 0x4, offset = 0x4, fixed_abs, tag = 'smem constant byte address 0x4 - core index']
  #allocation1 [shape = 'u32[72,128]{1,0:T(1,128)}', space=vmem, size = 0x9000, scoped, tag = 'internal scratch']
  %s0 = inlined_call_operand.vmem [shape: f32[1,3,16384], index: 0, kind: input, shape index: {}]
  %s1 = inlined_call_operand.hbm [shape: f32[8,24], index: 1, kind: input, shape index: {}]
  %s2 = inlined_call_operand.hbm [shape: f32[8,8], index: 2, kind: input, shape index: {}]
  %s3 = inlined_call_operand.hbm [shape: f32[1,8,8,15876], index: 3, kind: output, shape index: {}]
  %s4 = sld [smem:[#allocation0]]
  $region53: #{tpu_custom_call.1} parent=0
    _
  %s6 = ssub.s32 1, %s4
  %s7 = scalar_select 0, %s6, %s4
  $region1: #{tpu_custom_call.1} parent=0
    #allocation2 [shape = 'u8[4096]{0}', space=vmem, size = 0x1000, scoped, tag = 'input window, operand 1, single buffered']
    #allocation3 [shape = 's32[2]{0}', space=sflag, size = 0x8, scoped, tag = 'scoped memory for tpu_custom_call.1']
    #allocation4 [shape = 's32[2]{0}', space=sflag, size = 0x8, scoped, tag = 'scoped memory for tpu_custom_call.1']
    #allocation5 [shape = 'u8[4096]{0}', space=vmem, size = 0x1000, scoped, tag = 'input window, operand 2, single buffered']
    #allocation6 [shape = 's32[1]{0}', space=sflag, size = 0x4, scoped, tag = 'scoped memory for tpu_custom_call.1']
    #allocation7 [shape = 'u8[4194304]{0}', space=vmem, size = 0x400000, scoped, tag = 'output window, operand 0']
    %8 = vsyncpa [#allocation3], 0
    %9 = vsyncpa [#allocation6], 0
    %10 = vsyncpa [#allocation4], 0
    %s11 = scalar_lea.sflag [#allocation4], 1
    %12 = vsyncpa %s11, 0
    loop: start=0, step=1, limit=4
    $region2: #{tpu_custom_call.1} parent=1 // loop_pre_header
      _
    $region3: #{tpu_custom_call.1} parent=1 // loop_header
      %s14 = sphi 0, %s18
      %p15 = scmp.ge.s32.totalorder %s14, 4
      %s21 = sphi 0, %s33
      %s22 = sphi 0, %s29
      %s23 = sphi 0, %s21
      %s24 = sphi 0, %s22
      %s25 = sphi 0, %s23
      %s26 = sphi 0, %s24
      %s38 = sphi 0, %s40
      %s41 = sphi 0, %s38
      %s42 = sphi 0, %s41
      %s58 = sphi 0, %s42
      %s62 = sphi 0, %s62
      %s64 = sphi 0, %s62
      %s65 = sphi 0, %s64
      %s79 = sphi 0, %s65
      %s83 = sphi 0, %s83
      %s85 = sphi 0, %s83
      %s86 = sphi 0, %s85
      %s100 = sphi 0, %s86
      %s108 = sphi 0, %s110
      %s111 = sphi 0, %s108
      %s112 = sphi 0, %s111
      %s128 = sphi 0, %s112
    $region4: #{tpu_custom_call.1} parent=1 // loop_header_branch
      %17 = sbr.rel (%p15) target = $region8
    $region5: #{tpu_custom_call.1} parent=1 // loop_body
      %s19 = ssub.s32 %s14, 1
      %s20 = ssub.s32 %s14, 2
      %s27 = sadd.s32 1, %s22
      %p28 = scmp.ge.s32.totalorder %s27, 2
      %s29 = scalar_select %p28, 0, %s27
      %s30 = sadd.s32 1, %s21
      %s31 = scalar_select %p28, %s30, %s21
      %p32 = scmp.ge.s32.totalorder %s31, 1
      %s33 = scalar_select %p32, 0, %s31
      %s34 = ssub.s32 %s21, %s33
      %s35 = ssub.s32 %s22, %s29
      %s36 = sor.u32 %s34, %s35
      %p37 = scmp.eq.s32.totalorder %s36, 0
      %s39 = sadd.s32 %s38, 1
      %s40 = scalar_select %p37, %s38, %s39
      %p43 = pneg %p37
      %p44 = scmp.eq.s32.totalorder %s14, 1
      %p45 = por %p43, %p44
      %p46 = scmp.ne.s32.totalorder %s38, %s41
      %p47 = scmp.eq.s32.totalorder %s14, 0
      %p48 = por %p46, %p47
      %p49 = scmp.ne.s32.totalorder %s38, %s41
      %p50 = scmp.eq.s32.totalorder %s19, 1
      %p51 = por %p49, %p50
      %p52 = scmp.ne.s32.totalorder %s41, %s42
      %p53 = scmp.eq.s32.totalorder %s19, 0
      %p54 = por %p52, %p53
      %p55 = scmp.ne.s32.totalorder %s41, %s42
      %p56 = scmp.eq.s32.totalorder %s20, 1
      %p57 = por %p55, %p56
      %p59 = scmp.ne.s32.totalorder %s42, %s58
      %p60 = scmp.eq.s32.totalorder %s20, 0
      %p61 = por %p59, %p60
      %s63 = sadd.s32 %s62, 1
      %p66 = scmp.eq.s32.totalorder %s14, 1
      %p67 = scmp.ne.s32.totalorder %s62, %s64
      %p68 = scmp.eq.s32.totalorder %s14, 0
      %p69 = por %p67, %p68
      %p70 = scmp.ne.s32.totalorder %s62, %s64
      %p71 = scmp.eq.s32.totalorder %s19, 1
      %p72 = por %p70, %p71
      %p73 = scmp.ne.s32.totalorder %s64, %s65
      %p74 = scmp.eq.s32.totalorder %s19, 0
      %p75 = por %p73, %p74
      %p76 = scmp.ne.s32.totalorder %s64, %s65
      %p77 = scmp.eq.s32.totalorder %s20, 1
      %p78 = por %p76, %p77
      %p80 = scmp.ne.s32.totalorder %s65, %s79
      %p81 = scmp.eq.s32.totalorder %s20, 0
      %p82 = por %p80, %p81
      %s84 = sadd.s32 %s83, 1
      %p87 = scmp.eq.s32.totalorder %s14, 1
      %p88 = scmp.ne.s32.totalorder %s83, %s85
      %p89 = scmp.eq.s32.totalorder %s14, 0
      %p90 = por %p88, %p89
      %p91 = scmp.ne.s32.totalorder %s83, %s85
      %p92 = scmp.eq.s32.totalorder %s19, 1
      %p93 = por %p91, %p92
      %p94 = scmp.ne.s32.totalorder %s85, %s86
      %p95 = scmp.eq.s32.totalorder %s19, 0
      %p96 = por %p94, %p95
      %p97 = scmp.ne.s32.totalorder %s85, %s86
      %p98 = scmp.eq.s32.totalorder %s20, 1
      %p99 = por %p97, %p98
      %p101 = scmp.ne.s32.totalorder %s86, %s100
      %p102 = scmp.eq.s32.totalorder %s20, 0
      %p103 = por %p101, %p102
      %s104 = ssub.s32 %s21, %s33
      %s105 = ssub.s32 %s22, %s29
      %s106 = sor.u32 %s104, %s105
      %p107 = scmp.eq.s32.totalorder %s106, 0
      %s109 = sadd.s32 %s108, 1
      %s110 = scalar_select %p107, %s108, %s109
      %p113 = pneg %p107
      %p114 = scmp.eq.s32.totalorder %s14, 1
      %p115 = por %p113, %p114
      %p116 = scmp.ne.s32.totalorder %s108, %s111
      %p117 = scmp.eq.s32.totalorder %s14, 0
      %p118 = por %p116, %p117
      %p119 = scmp.ne.s32.totalorder %s108, %s111
      %p120 = scmp.eq.s32.totalorder %s19, 1
      %p121 = por %p119, %p120
      %p122 = scmp.ne.s32.totalorder %s111, %s112
      %p123 = scmp.eq.s32.totalorder %s19, 0
      %p124 = por %p122, %p123
      %p125 = scmp.ne.s32.totalorder %s111, %s112
      %p126 = scmp.eq.s32.totalorder %s20, 1
      %p127 = por %p125, %p126
      %p129 = scmp.ne.s32.totalorder %s112, %s128
      %p130 = scmp.eq.s32.totalorder %s20, 0
      %p131 = por %p129, %p130
      %p132 = scmp.le.s32.totalorder 1, %s14
      %p133 = scmp.lt.s32.totalorder %s14, 3
      %p134 = pnand %p132, %p133
      %p135 = pneg %p134
      // Predicated region
      $region9: #{tpu_custom_call.1} parent=5 // pred_check
        _
      $region10: #{tpu_custom_call.1} parent=5 // pred_check_branch
        %137 = sbr.rel (%p134) target = $region12
      $region11: #{tpu_custom_call.1} parent=5 // pred_region
        %s138 = ssub.s32 %s14, 1
        // Predicated region
        $region13: #{tpu_custom_call.1} parent=11 // pred_check
          %p139 = pneg %p75
        $region14: #{tpu_custom_call.1} parent=11 // pred_check_branch
          %141 = sbr.rel (%p139) target = $region16
        $region15: #{tpu_custom_call.1} parent=11 // pred_region
          %143 = vsyncadd [#allocation3], 0
          %s145 = sshll.u32 %s1, 4
          %s146 = int_to_ptr.hbm [resolvable:$true] %s145
          %s147 = sshll.u32 [#allocation2], 4
          %s148 = int_to_ptr.vmem [resolvable:$true] %s147
          %150 = dma.hbm_to_vmem [thread:$0]  %s146, 128, %s148, [#allocation3]
        $region16: #{tpu_custom_call.1} parent=11 // pred_fallthru
          _
        // Predicated region
        $region17: #{tpu_custom_call.1} parent=11 // pred_check
          %p151 = pneg %p96
        $region18: #{tpu_custom_call.1} parent=11 // pred_check_branch
          %153 = sbr.rel (%p151) target = $region20
        $region19: #{tpu_custom_call.1} parent=11 // pred_region
          %155 = vsyncadd [#allocation6], 0
          %s157 = sshll.u32 %s2, 4
          %s158 = int_to_ptr.hbm [resolvable:$true] %s157
          %s159 = sshll.u32 [#allocation5], 4
          %s160 = int_to_ptr.vmem [resolvable:$true] %s159
          %162 = dma.hbm_to_vmem [thread:$0]  %s158, 128, %s160, [#allocation6]
        $region20: #{tpu_custom_call.1} parent=11 // pred_fallthru
          _
      $region12: #{tpu_custom_call.1} parent=5 // pred_fallthru
        _
      %p163 = scmp.lt.s32.totalorder %s14, 2
      // Predicated region
      $region21: #{tpu_custom_call.1} parent=5 // pred_check
        %p164 = pneg %p163
      $region22: #{tpu_custom_call.1} parent=5 // pred_check_branch
        %166 = sbr.rel (%p164) target = $region24
      $region23: #{tpu_custom_call.1} parent=5 // pred_region
        // Predicated region
        $region25: #{tpu_custom_call.1} parent=23 // pred_check
          %p167 = pneg %p48
        $region26: #{tpu_custom_call.1} parent=23 // pred_check_branch
          %169 = sbr.rel (%p167) target = $region28
        $region27: #{tpu_custom_call.1} parent=23 // pred_region
          %s170 = smul.u32 64, %s22
          %p171 = scmp.lt.s32.totalorder %s21, 0
          %s172 = scalar_select %p171, %s21, 0
          %p173 = scmp.lt.s32.totalorder %s170, 127
          %s174 = scalar_select %p173, %s170, 127
          %s175 = smul.addr %s172, 128
          %s176 = sadd.s32 %s174, %s175
          %s177 = smul.addr %s176, 4
          %s178 = scalar_lea.vmem %s0, %s177
          %s179 = smul.u32 64, %s22
        $region28: #{tpu_custom_call.1} parent=23 // pred_fallthru
          _
      $region24: #{tpu_custom_call.1} parent=5 // pred_fallthru
        _
      %p180 = scmp.le.s32.totalorder 1, %s14
      %p181 = scmp.lt.s32.totalorder %s14, 3
      %p182 = pnand %p180, %p181
      %p183 = pneg %p182
      // Predicated region
      $region29: #{tpu_custom_call.1} parent=5 // pred_check
        _
      $region30: #{tpu_custom_call.1} parent=5 // pred_check_branch
        %185 = sbr.rel (%p182) target = $region32
      $region31: #{tpu_custom_call.1} parent=5 // pred_region
        %s186 = ssub.s32 %s14, 1
        // Predicated region
        $region33: #{tpu_custom_call.1} parent=31 // pred_check
          %p187 = pneg %p75
        $region34: #{tpu_custom_call.1} parent=31 // pred_check_branch
          %189 = sbr.rel (%p187) target = $region36
        $region35: #{tpu_custom_call.1} parent=31 // pred_region
          %191 = dma.done [#allocation3], 128
        $region36: #{tpu_custom_call.1} parent=31 // pred_fallthru
          _
        // Predicated region
        $region37: #{tpu_custom_call.1} parent=31 // pred_check
          %p192 = pneg %p96
        $region38: #{tpu_custom_call.1} parent=31 // pred_check_branch
          %194 = sbr.rel (%p192) target = $region40
        $region39: #{tpu_custom_call.1} parent=31 // pred_region
          %196 = dma.done [#allocation6], 128
        $region40: #{tpu_custom_call.1} parent=31 // pred_fallthru
          _
        %s197 = smul.u32 64, %s24
        %p198 = scmp.lt.s32.totalorder %s23, 0
        %s199 = scalar_select %p198, %s23, 0
        %p200 = scmp.lt.s32.totalorder %s197, 127
        %s201 = scalar_select %p200, %s197, 127
        %s202 = smul.addr %s199, 128
        %s203 = sadd.s32 %s201, %s202
        %s204 = smul.addr %s203, 4
        %s205 = scalar_lea.vmem %s0, %s204
        %p206 = pneg %p54
        %p207 = pneg %p51
        %p208 = pneg %p75
        %p209 = pneg %p72
        %p210 = pneg %p96
        %p211 = pneg %p93
        %p212 = pneg %p124
        %p213 = pneg %p121
        %s214 = sand.u32 %s111, 1
        %s215 = scalar_lea.sflag [#allocation4], %s214
        %s216 = sand.u32 %s111, 1
        %s217 = smul.addr %s216, 4096
        %s218 = scalar_lea.vmem [#allocation7], %s217
        %s219 = smul.u32 64, %s24
        %p220 = scmp.lt.s32.totalorder %s23, 0
        %s221 = scalar_select %p220, %s23, 0
        %p222 = scmp.lt.s32.totalorder %s219, 127
        %s223 = scalar_select %p222, %s219, 127
        %s224 = smul.addr %s221, 128
        %s225 = sadd.s32 %s223, %s224
        %s226 = smul.addr %s225, 4
        %s227 = scalar_lea.vmem %s0, %s226
        %s228 = smul.u32 64, %s24
        %s229 = smul.u32 64, %s24
        %s230 = ssub.s32 125, %s229
        %p231 = scmp.lt.s32.totalorder %s230, 64
        %s232 = scalar_select %p231, %s230, 64
        %s233 = smul.u32 64, %s232
        %v234 = vld [vmem:[%s227] ss:$4 sm:$0xff]
        %v236 = vperm.slane %v234, 0
        %v237 = vperm.slane %v234, 1
        %v238 = vperm.slane %v234, 2
        %v239 = vperm.slane %v234, 3
        %v240 = vperm.slane %v234, 4
        %v241 = vperm.slane %v234, 5
        %v242 = vperm.slane %v234, 6
        %v243 = vperm.slane %v234, 7
        %s252 = scalar_lea.vmem %s227, 1
        %v253 = vld [vmem:[%s252] ss:$4 sm:$0xff]
        %v255 = vperm.slane %v253, 0
        %v256 = vperm.slane %v253, 1
        %v257 = vperm.slane %v253, 2
        %v258 = vperm.slane %v253, 3
        %v259 = vperm.slane %v253, 4
        %v260 = vperm.slane %v253, 5
        %v261 = vperm.slane %v253, 6
        %v262 = vperm.slane %v253, 7
        %s271 = scalar_lea.vmem %s227, 2
        %v272 = vld [vmem:[%s271] ss:$4 sm:$0xff]
        %v274 = vperm.slane %v272, 0
        %v275 = vperm.slane %v272, 1
        %v276 = vperm.slane %v272, 2
        %v277 = vperm.slane %v272, 3
        %v278 = vperm.slane %v272, 4
        %v279 = vperm.slane %v272, 5
        %v280 = vperm.slane %v272, 6
        %v281 = vperm.slane %v272, 7
        %v290 = vld [vmem:[#allocation5] sm:$0xff]
        %v291 = vld [vmem:[#allocation2] sm:$0xff]
        %293 = vset.pattern.permute.xlu0 0
        %294 = vperm.xlu0 %293, %v291
        %v295 = vpop.permute.xlu0 %294
        %v297 = vmul.f32 %v295, %v236
        %v298 = vmul.f32 %v295, %v237
        %v299 = vmul.f32 %v295, %v238
        %v300 = vmul.f32 %v295, %v239
        %v301 = vmul.f32 %v295, %v240
        %v302 = vmul.f32 %v295, %v241
        %v303 = vmul.f32 %v295, %v242
        %v304 = vmul.f32 %v295, %v243
        %306 = vset.pattern.permute.xlu0 0
        %307 = vperm.xlu0 %306, %v290
        %v308 = vpop.permute.xlu0 %307
        %v310 = vadd.f32 %v308, %v297
        %v311 = vadd.f32 %v308, %v298
        %v312 = vadd.f32 %v308, %v299
        %v313 = vadd.f32 %v308, %v300
        %v314 = vadd.f32 %v308, %v301
        %v315 = vadd.f32 %v308, %v302
        %v316 = vadd.f32 %v308, %v303
        %v317 = vadd.f32 %v308, %v304
        %318 = vset.pattern.permute.xlu0 1
        %319 = vperm.xlu0 %318, %v291
        %v320 = vpop.permute.xlu0 %319
        %v322 = vmul.f32 %v320, %v255
        %v323 = vmul.f32 %v320, %v256
        %v324 = vmul.f32 %v320, %v257
        %v325 = vmul.f32 %v320, %v258
        %v326 = vmul.f32 %v320, %v259
        %v327 = vmul.f32 %v320, %v260
        %v328 = vmul.f32 %v320, %v261
        %v329 = vmul.f32 %v320, %v262
        %v330 = vadd.f32 %v310, %v322
        %v331 = vadd.f32 %v311, %v323
        %v332 = vadd.f32 %v312, %v324
        %v333 = vadd.f32 %v313, %v325
        %v334 = vadd.f32 %v314, %v326
        %v335 = vadd.f32 %v315, %v327
        %v336 = vadd.f32 %v316, %v328
        %v337 = vadd.f32 %v317, %v329
        %338 = vset.pattern.permute.xlu0 2
        %339 = vperm.xlu0 %338, %v291
        %v340 = vpop.permute.xlu0 %339
        %v342 = vmul.f32 %v340, %v274
        %v343 = vmul.f32 %v340, %v275
        %v344 = vmul.f32 %v340, %v276
        %v345 = vmul.f32 %v340, %v277
        %v346 = vmul.f32 %v340, %v278
        %v347 = vmul.f32 %v340, %v279
        %v348 = vmul.f32 %v340, %v280
        %v349 = vmul.f32 %v340, %v281
        %v350 = vadd.f32 %v330, %v342
        %v351 = vadd.f32 %v331, %v343
        %v352 = vadd.f32 %v332, %v344
        %v353 = vadd.f32 %v333, %v345
        %v354 = vadd.f32 %v334, %v346
        %v355 = vadd.f32 %v335, %v347
        %v356 = vadd.f32 %v336, %v348
        %v357 = vadd.f32 %v337, %v349
        %v358 = vmax.f32 %v350, 0.0
        %v359 = vmax.f32 %v351, 0.0
        %v360 = vmax.f32 %v352, 0.0
        %v361 = vmax.f32 %v353, 0.0
        %v362 = vmax.f32 %v354, 0.0
        %v363 = vmax.f32 %v355, 0.0
        %v364 = vmax.f32 %v356, 0.0
        %v365 = vmax.f32 %v357, 0.0
        %366 = vst [vmem:[%s218] sm:$0xff] %v358
        %367 = vst [vmem:[%s218 + $0x8] sm:$0xff] %v359
        %368 = vst [vmem:[%s218 + $0x10] sm:$0xff] %v360
        %369 = vst [vmem:[%s218 + $0x18] sm:$0xff] %v361
        %370 = vst [vmem:[%s218 + $0x20] sm:$0xff] %v362
        %371 = vst [vmem:[%s218 + $0x28] sm:$0xff] %v363
        %372 = vst [vmem:[%s218 + $0x30] sm:$0xff] %v364
        %373 = vst [vmem:[%s218 + $0x38] sm:$0xff] %v365
        %v374 = vld [vmem:[#allocation5] sm:$0xff]
        %v375 = vld [vmem:[#allocation2] sm:$0xff]
        %377 = vset.pattern.permute.xlu0 3
        %378 = vperm.xlu0 %377, %v375
        %v379 = vpop.permute.xlu0 %378
        %v381 = vmul.f32 %v379, %v236
        %v382 = vmul.f32 %v379, %v237
        %v383 = vmul.f32 %v379, %v238
        %v384 = vmul.f32 %v379, %v239
        %v385 = vmul.f32 %v379, %v240
        %v386 = vmul.f32 %v379, %v241
        %v387 = vmul.f32 %v379, %v242
        %v388 = vmul.f32 %v379, %v243
        %390 = vset.pattern.permute.xlu0 1
        %391 = vperm.xlu0 %390, %v374
        %v392 = vpop.permute.xlu0 %391
        %v394 = vadd.f32 %v392, %v381
        %v395 = vadd.f32 %v392, %v382
        %v396 = vadd.f32 %v392, %v383
        %v397 = vadd.f32 %v392, %v384
        %v398 = vadd.f32 %v392, %v385
        %v399 = vadd.f32 %v392, %v386
        %v400 = vadd.f32 %v392, %v387
        %v401 = vadd.f32 %v392, %v388
        %402 = vset.pattern.permute.xlu0 4
        %403 = vperm.xlu0 %402, %v375
        %v404 = vpop.permute.xlu0 %403
        %v406 = vmul.f32 %v404, %v255
        %v407 = vmul.f32 %v404, %v256
        %v408 = vmul.f32 %v404, %v257
        %v409 = vmul.f32 %v404, %v258
        %v410 = vmul.f32 %v404, %v259
        %v411 = vmul.f32 %v404, %v260
        %v412 = vmul.f32 %v404, %v261
        %v413 = vmul.f32 %v404, %v262
        %v414 = vadd.f32 %v394, %v406
        %v415 = vadd.f32 %v395, %v407
        %v416 = vadd.f32 %v396, %v408
        %v417 = vadd.f32 %v397, %v409
        %v418 = vadd.f32 %v398, %v410
        %v419 = vadd.f32 %v399, %v411
        %v420 = vadd.f32 %v400, %v412
        %v421 = vadd.f32 %v401, %v413
        %422 = vset.pattern.permute.xlu0 5
        %423 = vperm.xlu0 %422, %v375
        %v424 = vpop.permute.xlu0 %423
        %v426 = vmul.f32 %v424, %v274
        %v427 = vmul.f32 %v424, %v275
        %v428 = vmul.f32 %v424, %v276
        %v429 = vmul.f32 %v424, %v277
        %v430 = vmul.f32 %v424, %v278
        %v431 = vmul.f32 %v424, %v279
        %v432 = vmul.f32 %v424, %v280
        %v433 = vmul.f32 %v424, %v281
        %v434 = vadd.f32 %v414, %v426
        %v435 = vadd.f32 %v415, %v427
        %v436 = vadd.f32 %v416, %v428
        %v437 = vadd.f32 %v417, %v429
        %v438 = vadd.f32 %v418, %v430
        %v439 = vadd.f32 %v419, %v431
        %v440 = vadd.f32 %v420, %v432
        %v441 = vadd.f32 %v421, %v433
        %v442 = vmax.f32 %v434, 0.0
        %v443 = vmax.f32 %v435, 0.0
        %v444 = vmax.f32 %v436, 0.0
        %v445 = vmax.f32 %v437, 0.0
        %v446 = vmax.f32 %v438, 0.0
        %v447 = vmax.f32 %v439, 0.0
        %v448 = vmax.f32 %v440, 0.0
        %v449 = vmax.f32 %v441, 0.0
        %s450 = scalar_lea.vmem %s218, 512 [#allocation7]
        %451 = vst [vmem:[%s450] sm:$0xff] %v442
        %452 = vst [vmem:[%s450 + $0x8] sm:$0xff] %v443
        %453 = vst [vmem:[%s450 + $0x10] sm:$0xff] %v444
        %454 = vst [vmem:[%s450 + $0x18] sm:$0xff] %v445
        %455 = vst [vmem:[%s450 + $0x20] sm:$0xff] %v446
        %456 = vst [vmem:[%s450 + $0x28] sm:$0xff] %v447
        %457 = vst [vmem:[%s450 + $0x30] sm:$0xff] %v448
        %458 = vst [vmem:[%s450 + $0x38] sm:$0xff] %v449
        %v459 = vld [vmem:[#allocation5] sm:$0xff]
        %v460 = vld [vmem:[#allocation2] sm:$0xff]
        %462 = vset.pattern.permute.xlu0 6
        %463 = vperm.xlu0 %462, %v460
        %v464 = vpop.permute.xlu0 %463
        %v466 = vmul.f32 %v464, %v236
        %v467 = vmul.f32 %v464, %v237
        %v468 = vmul.f32 %v464, %v238
        %v469 = vmul.f32 %v464, %v239
        %v470 = vmul.f32 %v464, %v240
        %v471 = vmul.f32 %v464, %v241
        %v472 = vmul.f32 %v464, %v242
        %v473 = vmul.f32 %v464, %v243
        %475 = vset.pattern.permute.xlu0 2
        %476 = vperm.xlu0 %475, %v459
        %v477 = vpop.permute.xlu0 %476
        %v479 = vadd.f32 %v477, %v466
        %v480 = vadd.f32 %v477, %v467
        %v481 = vadd.f32 %v477, %v468
        %v482 = vadd.f32 %v477, %v469
        %v483 = vadd.f32 %v477, %v470
        %v484 = vadd.f32 %v477, %v471
        %v485 = vadd.f32 %v477, %v472
        %v486 = vadd.f32 %v477, %v473
        %487 = vset.pattern.permute.xlu0 7
        %488 = vperm.xlu0 %487, %v460
        %v489 = vpop.permute.xlu0 %488
        %v491 = vmul.f32 %v489, %v255
        %v492 = vmul.f32 %v489, %v256
        %v493 = vmul.f32 %v489, %v257
        %v494 = vmul.f32 %v489, %v258
        %v495 = vmul.f32 %v489, %v259
        %v496 = vmul.f32 %v489, %v260
        %v497 = vmul.f32 %v489, %v261
        %v498 = vmul.f32 %v489, %v262
        %v499 = vadd.f32 %v479, %v491
        %v500 = vadd.f32 %v480, %v492
        %v501 = vadd.f32 %v481, %v493
        %v502 = vadd.f32 %v482, %v494
        %v503 = vadd.f32 %v483, %v495
        %v504 = vadd.f32 %v484, %v496
        %v505 = vadd.f32 %v485, %v497
        %v506 = vadd.f32 %v486, %v498
        %507 = vset.pattern.permute.xlu0 8
        %508 = vperm.xlu0 %507, %v460
        %v509 = vpop.permute.xlu0 %508
        %v511 = vmul.f32 %v509, %v274
        %v512 = vmul.f32 %v509, %v275
        %v513 = vmul.f32 %v509, %v276
        %v514 = vmul.f32 %v509, %v277
        %v515 = vmul.f32 %v509, %v278
        %v516 = vmul.f32 %v509, %v279
        %v517 = vmul.f32 %v509, %v280
        %v518 = vmul.f32 %v509, %v281
        %v519 = vadd.f32 %v499, %v511
        %v520 = vadd.f32 %v500, %v512
        %v521 = vadd.f32 %v501, %v513
        %v522 = vadd.f32 %v502, %v514
        %v523 = vadd.f32 %v503, %v515
        %v524 = vadd.f32 %v504, %v516
        %v525 = vadd.f32 %v505, %v517
        %v526 = vadd.f32 %v506, %v518
        %v527 = vmax.f32 %v519, 0.0
        %v528 = vmax.f32 %v520, 0.0
        %v529 = vmax.f32 %v521, 0.0
        %v530 = vmax.f32 %v522, 0.0
        %v531 = vmax.f32 %v523, 0.0
        %v532 = vmax.f32 %v524, 0.0
        %v533 = vmax.f32 %v525, 0.0
        %v534 = vmax.f32 %v526, 0.0
        %s535 = scalar_lea.vmem %s218, 1024 [#allocation7]
        %536 = vst [vmem:[%s535] sm:$0xff] %v527
        %537 = vst [vmem:[%s535 + $0x8] sm:$0xff] %v528
        %538 = vst [vmem:[%s535 + $0x10] sm:$0xff] %v529
        %539 = vst [vmem:[%s535 + $0x18] sm:$0xff] %v530
        %540 = vst [vmem:[%s535 + $0x20] sm:$0xff] %v531
        %541 = vst [vmem:[%s535 + $0x28] sm:$0xff] %v532
        %542 = vst [vmem:[%s535 + $0x30] sm:$0xff] %v533
        %543 = vst [vmem:[%s535 + $0x38] sm:$0xff] %v534
        %v544 = vld [vmem:[#allocation5] sm:$0xff]
        %v545 = vld [vmem:[#allocation2] sm:$0xff]
        %547 = vset.pattern.permute.xlu0 9
        %548 = vperm.xlu0 %547, %v545
        %v549 = vpop.permute.xlu0 %548
        %v551 = vmul.f32 %v549, %v236
        %v552 = vmul.f32 %v549, %v237
        %v553 = vmul.f32 %v549, %v238
        %v554 = vmul.f32 %v549, %v239
        %v555 = vmul.f32 %v549, %v240
        %v556 = vmul.f32 %v549, %v241
        %v557 = vmul.f32 %v549, %v242
        %v558 = vmul.f32 %v549, %v243
        %560 = vset.pattern.permute.xlu0 3
        %561 = vperm.xlu0 %560, %v544
        %v562 = vpop.permute.xlu0 %561
        %v564 = vadd.f32 %v562, %v551
        %v565 = vadd.f32 %v562, %v552
        %v566 = vadd.f32 %v562, %v553
        %v567 = vadd.f32 %v562, %v554
        %v568 = vadd.f32 %v562, %v555
        %v569 = vadd.f32 %v562, %v556
        %v570 = vadd.f32 %v562, %v557
        %v571 = vadd.f32 %v562, %v558
        %572 = vset.pattern.permute.xlu0 10
        %573 = vperm.xlu0 %572, %v545
        %v574 = vpop.permute.xlu0 %573
        %v576 = vmul.f32 %v574, %v255
        %v577 = vmul.f32 %v574, %v256
        %v578 = vmul.f32 %v574, %v257
        %v579 = vmul.f32 %v574, %v258
        %v580 = vmul.f32 %v574, %v259
        %v581 = vmul.f32 %v574, %v260
        %v582 = vmul.f32 %v574, %v261
        %v583 = vmul.f32 %v574, %v262
        %v584 = vadd.f32 %v564, %v576
        %v585 = vadd.f32 %v565, %v577
        %v586 = vadd.f32 %v566, %v578
        %v587 = vadd.f32 %v567, %v579
        %v588 = vadd.f32 %v568, %v580
        %v589 = vadd.f32 %v569, %v581
        %v590 = vadd.f32 %v570, %v582
        %v591 = vadd.f32 %v571, %v583
        %592 = vset.pattern.permute.xlu0 11
        %593 = vperm.xlu0 %592, %v545
        %v594 = vpop.permute.xlu0 %593
        %v596 = vmul.f32 %v594, %v274
        %v597 = vmul.f32 %v594, %v275
        %v598 = vmul.f32 %v594, %v276
        %v599 = vmul.f32 %v594, %v277
        %v600 = vmul.f32 %v594, %v278
        %v601 = vmul.f32 %v594, %v279
        %v602 = vmul.f32 %v594, %v280
        %v603 = vmul.f32 %v594, %v281
        %v604 = vadd.f32 %v584, %v596
        %v605 = vadd.f32 %v585, %v597
        %v606 = vadd.f32 %v586, %v598
        %v607 = vadd.f32 %v587, %v599
        %v608 = vadd.f32 %v588, %v600
        %v609 = vadd.f32 %v589, %v601
        %v610 = vadd.f32 %v590, %v602
        %v611 = vadd.f32 %v591, %v603
        %v612 = vmax.f32 %v604, 0.0
        %v613 = vmax.f32 %v605, 0.0
        %v614 = vmax.f32 %v606, 0.0
        %v615 = vmax.f32 %v607, 0.0
        %v616 = vmax.f32 %v608, 0.0
        %v617 = vmax.f32 %v609, 0.0
        %v618 = vmax.f32 %v610, 0.0
        %v619 = vmax.f32 %v611, 0.0
        %s620 = scalar_lea.vmem %s218, 1536 [#allocation7]
        %621 = vst [vmem:[%s620] sm:$0xff] %v612
        %622 = vst [vmem:[%s620 + $0x8] sm:$0xff] %v613
        %623 = vst [vmem:[%s620 + $0x10] sm:$0xff] %v614
        %624 = vst [vmem:[%s620 + $0x18] sm:$0xff] %v615
        %625 = vst [vmem:[%s620 + $0x20] sm:$0xff] %v616
        %626 = vst [vmem:[%s620 + $0x28] sm:$0xff] %v617
        %627 = vst [vmem:[%s620 + $0x30] sm:$0xff] %v618
        %628 = vst [vmem:[%s620 + $0x38] sm:$0xff] %v619
        %v629 = vld [vmem:[#allocation5] sm:$0xff]
        %v630 = vld [vmem:[#allocation2] sm:$0xff]
        %632 = vset.pattern.permute.xlu0 12
        %633 = vperm.xlu0 %632, %v630
        %v634 = vpop.permute.xlu0 %633
        %v636 = vmul.f32 %v634, %v236
        %v637 = vmul.f32 %v634, %v237
        %v638 = vmul.f32 %v634, %v238
        %v639 = vmul.f32 %v634, %v239
        %v640 = vmul.f32 %v634, %v240
        %v641 = vmul.f32 %v634, %v241
        %v642 = vmul.f32 %v634, %v242
        %v643 = vmul.f32 %v634, %v243
        %645 = vset.pattern.permute.xlu0 4
        %646 = vperm.xlu0 %645, %v629
        %v647 = vpop.permute.xlu0 %646
        %v649 = vadd.f32 %v647, %v636
        %v650 = vadd.f32 %v647, %v637
        %v651 = vadd.f32 %v647, %v638
        %v652 = vadd.f32 %v647, %v639
        %v653 = vadd.f32 %v647, %v640
        %v654 = vadd.f32 %v647, %v641
        %v655 = vadd.f32 %v647, %v642
        %v656 = vadd.f32 %v647, %v643
        %657 = vset.pattern.permute.xlu0 13
        %658 = vperm.xlu0 %657, %v630
        %v659 = vpop.permute.xlu0 %658
        %v661 = vmul.f32 %v659, %v255
        %v662 = vmul.f32 %v659, %v256
        %v663 = vmul.f32 %v659, %v257
        %v664 = vmul.f32 %v659, %v258
        %v665 = vmul.f32 %v659, %v259
        %v666 = vmul.f32 %v659, %v260
        %v667 = vmul.f32 %v659, %v261
        %v668 = vmul.f32 %v659, %v262
        %v669 = vadd.f32 %v649, %v661
        %v670 = vadd.f32 %v650, %v662
        %v671 = vadd.f32 %v651, %v663
        %v672 = vadd.f32 %v652, %v664
        %v673 = vadd.f32 %v653, %v665
        %v674 = vadd.f32 %v654, %v666
        %v675 = vadd.f32 %v655, %v667
        %v676 = vadd.f32 %v656, %v668
        %677 = vset.pattern.permute.xlu0 14
        %678 = vperm.xlu0 %677, %v630
        %v679 = vpop.permute.xlu0 %678
        %v681 = vmul.f32 %v679, %v274
        %v682 = vmul.f32 %v679, %v275
        %v683 = vmul.f32 %v679, %v276
        %v684 = vmul.f32 %v679, %v277
        %v685 = vmul.f32 %v679, %v278
        %v686 = vmul.f32 %v679, %v279
        %v687 = vmul.f32 %v679, %v280
        %v688 = vmul.f32 %v679, %v281
        %v689 = vadd.f32 %v669, %v681
        %v690 = vadd.f32 %v670, %v682
        %v691 = vadd.f32 %v671, %v683
        %v692 = vadd.f32 %v672, %v684
        %v693 = vadd.f32 %v673, %v685
        %v694 = vadd.f32 %v674, %v686
        %v695 = vadd.f32 %v675, %v687
        %v696 = vadd.f32 %v676, %v688
        %v697 = vmax.f32 %v689, 0.0
        %v698 = vmax.f32 %v690, 0.0
        %v699 = vmax.f32 %v691, 0.0
        %v700 = vmax.f32 %v692, 0.0
        %v701 = vmax.f32 %v693, 0.0
        %v702 = vmax.f32 %v694, 0.0
        %v703 = vmax.f32 %v695, 0.0
        %v704 = vmax.f32 %v696, 0.0
        %s705 = scalar_lea.vmem %s218, 2048 [#allocation7]
        %706 = vst [vmem:[%s705] sm:$0xff] %v697
        %707 = vst [vmem:[%s705 + $0x8] sm:$0xff] %v698
        %708 = vst [vmem:[%s705 + $0x10] sm:$0xff] %v699
        %709 = vst [vmem:[%s705 + $0x18] sm:$0xff] %v700
        %710 = vst [vmem:[%s705 + $0x20] sm:$0xff] %v701
        %711 = vst [vmem:[%s705 + $0x28] sm:$0xff] %v702
        %712 = vst [vmem:[%s705 + $0x30] sm:$0xff] %v703
        %713 = vst [vmem:[%s705 + $0x38] sm:$0xff] %v704
        %v714 = vld [vmem:[#allocation5] sm:$0xff]
        %v715 = vld [vmem:[#allocation2] sm:$0xff]
        %717 = vset.pattern.permute.xlu0 15
        %718 = vperm.xlu0 %717, %v715
        %v719 = vpop.permute.xlu0 %718
        %v721 = vmul.f32 %v719, %v236
        %v722 = vmul.f32 %v719, %v237
        %v723 = vmul.f32 %v719, %v238
        %v724 = vmul.f32 %v719, %v239
        %v725 = vmul.f32 %v719, %v240
        %v726 = vmul.f32 %v719, %v241
        %v727 = vmul.f32 %v719, %v242
        %v728 = vmul.f32 %v719, %v243
        %730 = vset.pattern.permute.xlu0 5
        %731 = vperm.xlu0 %730, %v714
        %v732 = vpop.permute.xlu0 %731
        %v734 = vadd.f32 %v732, %v721
        %v735 = vadd.f32 %v732, %v722
        %v736 = vadd.f32 %v732, %v723
        %v737 = vadd.f32 %v732, %v724
        %v738 = vadd.f32 %v732, %v725
        %v739 = vadd.f32 %v732, %v726
        %v740 = vadd.f32 %v732, %v727
        %v741 = vadd.f32 %v732, %v728
        %742 = vset.pattern.permute.xlu0 16
        %743 = vperm.xlu0 %742, %v715
        %v744 = vpop.permute.xlu0 %743
        %v746 = vmul.f32 %v744, %v255
        %v747 = vmul.f32 %v744, %v256
        %v748 = vmul.f32 %v744, %v257
        %v749 = vmul.f32 %v744, %v258
        %v750 = vmul.f32 %v744, %v259
        %v751 = vmul.f32 %v744, %v260
        %v752 = vmul.f32 %v744, %v261
        %v753 = vmul.f32 %v744, %v262
        %v754 = vadd.f32 %v734, %v746
        %v755 = vadd.f32 %v735, %v747
        %v756 = vadd.f32 %v736, %v748
        %v757 = vadd.f32 %v737, %v749
        %v758 = vadd.f32 %v738, %v750
        %v759 = vadd.f32 %v739, %v751
        %v760 = vadd.f32 %v740, %v752
        %v761 = vadd.f32 %v741, %v753
        %762 = vset.pattern.permute.xlu0 17
        %763 = vperm.xlu0 %762, %v715
        %v764 = vpop.permute.xlu0 %763
        %v766 = vmul.f32 %v764, %v274
        %v767 = vmul.f32 %v764, %v275
        %v768 = vmul.f32 %v764, %v276
        %v769 = vmul.f32 %v764, %v277
        %v770 = vmul.f32 %v764, %v278
        %v771 = vmul.f32 %v764, %v279
        %v772 = vmul.f32 %v764, %v280
        %v773 = vmul.f32 %v764, %v281
        %v774 = vadd.f32 %v754, %v766
        %v775 = vadd.f32 %v755, %v767
        %v776 = vadd.f32 %v756, %v768
        %v777 = vadd.f32 %v757, %v769
        %v778 = vadd.f32 %v758, %v770
        %v779 = vadd.f32 %v759, %v771
        %v780 = vadd.f32 %v760, %v772
        %v781 = vadd.f32 %v761, %v773
        %v782 = vmax.f32 %v774, 0.0
        %v783 = vmax.f32 %v775, 0.0
        %v784 = vmax.f32 %v776, 0.0
        %v785 = vmax.f32 %v777, 0.0
        %v786 = vmax.f32 %v778, 0.0
        %v787 = vmax.f32 %v779, 0.0
        %v788 = vmax.f32 %v780, 0.0
        %v789 = vmax.f32 %v781, 0.0
        %s790 = scalar_lea.vmem %s218, 2560 [#allocation7]
        %791 = vst [vmem:[%s790] sm:$0xff] %v782
        %792 = vst [vmem:[%s790 + $0x8] sm:$0xff] %v783
        %793 = vst [vmem:[%s790 + $0x10] sm:$0xff] %v784
        %794 = vst [vmem:[%s790 + $0x18] sm:$0xff] %v785
        %795 = vst [vmem:[%s790 + $0x20] sm:$0xff] %v786
        %796 = vst [vmem:[%s790 + $0x28] sm:$0xff] %v787
        %797 = vst [vmem:[%s790 + $0x30] sm:$0xff] %v788
        %798 = vst [vmem:[%s790 + $0x38] sm:$0xff] %v789
        %v799 = vld [vmem:[#allocation5] sm:$0xff]
        %v800 = vld [vmem:[#allocation2] sm:$0xff]
        %802 = vset.pattern.permute.xlu0 18
        %803 = vperm.xlu0 %802, %v800
        %v804 = vpop.permute.xlu0 %803
        %v806 = vmul.f32 %v804, %v236
        %v807 = vmul.f32 %v804, %v237
        %v808 = vmul.f32 %v804, %v238
        %v809 = vmul.f32 %v804, %v239
        %v810 = vmul.f32 %v804, %v240
        %v811 = vmul.f32 %v804, %v241
        %v812 = vmul.f32 %v804, %v242
        %v813 = vmul.f32 %v804, %v243
        %815 = vset.pattern.permute.xlu0 6
        %816 = vperm.xlu0 %815, %v799
        %v817 = vpop.permute.xlu0 %816
        %v819 = vadd.f32 %v817, %v806
        %v820 = vadd.f32 %v817, %v807
        %v821 = vadd.f32 %v817, %v808
        %v822 = vadd.f32 %v817, %v809
        %v823 = vadd.f32 %v817, %v810
        %v824 = vadd.f32 %v817, %v811
        %v825 = vadd.f32 %v817, %v812
        %v826 = vadd.f32 %v817, %v813
        %827 = vset.pattern.permute.xlu0 19
        %828 = vperm.xlu0 %827, %v800
        %v829 = vpop.permute.xlu0 %828
        %v831 = vmul.f32 %v829, %v255
        %v832 = vmul.f32 %v829, %v256
        %v833 = vmul.f32 %v829, %v257
        %v834 = vmul.f32 %v829, %v258
        %v835 = vmul.f32 %v829, %v259
        %v836 = vmul.f32 %v829, %v260
        %v837 = vmul.f32 %v829, %v261
        %v838 = vmul.f32 %v829, %v262
        %v839 = vadd.f32 %v819, %v831
        %v840 = vadd.f32 %v820, %v832
        %v841 = vadd.f32 %v821, %v833
        %v842 = vadd.f32 %v822, %v834
        %v843 = vadd.f32 %v823, %v835
        %v844 = vadd.f32 %v824, %v836
        %v845 = vadd.f32 %v825, %v837
        %v846 = vadd.f32 %v826, %v838
        %847 = vset.pattern.permute.xlu0 20
        %848 = vperm.xlu0 %847, %v800
        %v849 = vpop.permute.xlu0 %848
        %v851 = vmul.f32 %v849, %v274
        %v852 = vmul.f32 %v849, %v275
        %v853 = vmul.f32 %v849, %v276
        %v854 = vmul.f32 %v849, %v277
        %v855 = vmul.f32 %v849, %v278
        %v856 = vmul.f32 %v849, %v279
        %v857 = vmul.f32 %v849, %v280
        %v858 = vmul.f32 %v849, %v281
        %v859 = vadd.f32 %v839, %v851
        %v860 = vadd.f32 %v840, %v852
        %v861 = vadd.f32 %v841, %v853
        %v862 = vadd.f32 %v842, %v854
        %v863 = vadd.f32 %v843, %v855
        %v864 = vadd.f32 %v844, %v856
        %v865 = vadd.f32 %v845, %v857
        %v866 = vadd.f32 %v846, %v858
        %v867 = vmax.f32 %v859, 0.0
        %v868 = vmax.f32 %v860, 0.0
        %v869 = vmax.f32 %v861, 0.0
        %v870 = vmax.f32 %v862, 0.0
        %v871 = vmax.f32 %v863, 0.0
        %v872 = vmax.f32 %v864, 0.0
        %v873 = vmax.f32 %v865, 0.0
        %v874 = vmax.f32 %v866, 0.0
        %s875 = scalar_lea.vmem %s218, 3072 [#allocation7]
        %876 = vst [vmem:[%s875] sm:$0xff] %v867
        %877 = vst [vmem:[%s875 + $0x8] sm:$0xff] %v868
        %878 = vst [vmem:[%s875 + $0x10] sm:$0xff] %v869
        %879 = vst [vmem:[%s875 + $0x18] sm:$0xff] %v870
        %880 = vst [vmem:[%s875 + $0x20] sm:$0xff] %v871
        %881 = vst [vmem:[%s875 + $0x28] sm:$0xff] %v872
        %882 = vst [vmem:[%s875 + $0x30] sm:$0xff] %v873
        %883 = vst [vmem:[%s875 + $0x38] sm:$0xff] %v874
        %v884 = vld [vmem:[#allocation5] sm:$0xff]
        %v885 = vld [vmem:[#allocation2] sm:$0xff]
        %887 = vset.pattern.permute.xlu0 21
        %888 = vperm.xlu0 %887, %v885
        %v889 = vpop.permute.xlu0 %888
        %v891 = vmul.f32 %v889, %v236
        %v892 = vmul.f32 %v889, %v237
        %v893 = vmul.f32 %v889, %v238
        %v894 = vmul.f32 %v889, %v239
        %v895 = vmul.f32 %v889, %v240
        %v896 = vmul.f32 %v889, %v241
        %v897 = vmul.f32 %v889, %v242
        %v898 = vmul.f32 %v889, %v243
        %900 = vset.pattern.permute.xlu0 7
        %901 = vperm.xlu0 %900, %v884
        %v902 = vpop.permute.xlu0 %901
        %v904 = vadd.f32 %v902, %v891
        %v905 = vadd.f32 %v902, %v892
        %v906 = vadd.f32 %v902, %v893
        %v907 = vadd.f32 %v902, %v894
        %v908 = vadd.f32 %v902, %v895
        %v909 = vadd.f32 %v902, %v896
        %v910 = vadd.f32 %v902, %v897
        %v911 = vadd.f32 %v902, %v898
        %912 = vset.pattern.permute.xlu0 22
        %913 = vperm.xlu0 %912, %v885
        %v914 = vpop.permute.xlu0 %913
        %v916 = vmul.f32 %v914, %v255
        %v917 = vmul.f32 %v914, %v256
        %v918 = vmul.f32 %v914, %v257
        %v919 = vmul.f32 %v914, %v258
        %v920 = vmul.f32 %v914, %v259
        %v921 = vmul.f32 %v914, %v260
        %v922 = vmul.f32 %v914, %v261
        %v923 = vmul.f32 %v914, %v262
        %v924 = vadd.f32 %v904, %v916
        %v925 = vadd.f32 %v905, %v917
        %v926 = vadd.f32 %v906, %v918
        %v927 = vadd.f32 %v907, %v919
        %v928 = vadd.f32 %v908, %v920
        %v929 = vadd.f32 %v909, %v921
        %v930 = vadd.f32 %v910, %v922
        %v931 = vadd.f32 %v911, %v923
        %932 = vset.pattern.permute.xlu0 23
        %933 = vperm.xlu0 %932, %v885
        %v934 = vpop.permute.xlu0 %933
        %v936 = vmul.f32 %v934, %v274
        %v937 = vmul.f32 %v934, %v275
        %v938 = vmul.f32 %v934, %v276
        %v939 = vmul.f32 %v934, %v277
        %v940 = vmul.f32 %v934, %v278
        %v941 = vmul.f32 %v934, %v279
        %v942 = vmul.f32 %v934, %v280
        %v943 = vmul.f32 %v934, %v281
        %v944 = vadd.f32 %v924, %v936
        %v945 = vadd.f32 %v925, %v937
        %v946 = vadd.f32 %v926, %v938
        %v947 = vadd.f32 %v927, %v939
        %v948 = vadd.f32 %v928, %v940
        %v949 = vadd.f32 %v929, %v941
        %v950 = vadd.f32 %v930, %v942
        %v951 = vadd.f32 %v931, %v943
        %v952 = vmax.f32 %v944, 0.0
        %v953 = vmax.f32 %v945, 0.0
        %v954 = vmax.f32 %v946, 0.0
        %v955 = vmax.f32 %v947, 0.0
        %v956 = vmax.f32 %v948, 0.0
        %v957 = vmax.f32 %v949, 0.0
        %v958 = vmax.f32 %v950, 0.0
        %v959 = vmax.f32 %v951, 0.0
        %s960 = scalar_lea.vmem %s218, 3584 [#allocation7]
        %961 = vst [vmem:[%s960] sm:$0xff] %v952
        %962 = vst [vmem:[%s960 + $0x8] sm:$0xff] %v953
        %963 = vst [vmem:[%s960 + $0x10] sm:$0xff] %v954
        %964 = vst [vmem:[%s960 + $0x18] sm:$0xff] %v955
        %965 = vst [vmem:[%s960 + $0x20] sm:$0xff] %v956
        %966 = vst [vmem:[%s960 + $0x28] sm:$0xff] %v957
        %967 = vst [vmem:[%s960 + $0x30] sm:$0xff] %v958
        %968 = vst [vmem:[%s960 + $0x38] sm:$0xff] %v959
        %s969 = scalar_lea.vmem %s227, 32
        %v970 = vld [vmem:[%s969] ss:$4 sm:$0xff]
        %v972 = vperm.slane %v970, 0
        %v973 = vperm.slane %v970, 1
        %v974 = vperm.slane %v970, 2
        %v975 = vperm.slane %v970, 3
        %v976 = vperm.slane %v970, 4
        %v977 = vperm.slane %v970, 5
        %v978 = vperm.slane %v970, 6
        %v979 = vperm.slane %v970, 7
        %s988 = scalar_lea.vmem %s227, 33
        %v989 = vld [vmem:[%s988] ss:$4 sm:$0xff]
        %v991 = vperm.slane %v989, 0
        %v992 = vperm.slane %v989, 1
        %v993 = vperm.slane %v989, 2
        %v994 = vperm.slane %v989, 3
        %v995 = vperm.slane %v989, 4
        %v996 = vperm.slane %v989, 5
        %v997 = vperm.slane %v989, 6
        %v998 = vperm.slane %v989, 7
        %s1007 = scalar_lea.vmem %s227, 34
        %v1008 = vld [vmem:[%s1007] ss:$4 sm:$0xff]
        %v1010 = vperm.slane %v1008, 0
        %v1011 = vperm.slane %v1008, 1
        %v1012 = vperm.slane %v1008, 2
        %v1013 = vperm.slane %v1008, 3
        %v1014 = vperm.slane %v1008, 4
        %v1015 = vperm.slane %v1008, 5
        %v1016 = vperm.slane %v1008, 6
        %v1017 = vperm.slane %v1008, 7
        %v1026 = vld [vmem:[#allocation5] sm:$0xff]
        %v1027 = vld [vmem:[#allocation2] sm:$0xff]
        %1029 = vset.pattern.permute.xlu0 0
        %1030 = vperm.xlu0 %1029, %v1027
        %v1031 = vpop.permute.xlu0 %1030
        %v1033 = vmul.f32 %v1031, %v972
        %v1034 = vmul.f32 %v1031, %v973
        %v1035 = vmul.f32 %v1031, %v974
        %v1036 = vmul.f32 %v1031, %v975
        %v1037 = vmul.f32 %v1031, %v976
        %v1038 = vmul.f32 %v1031, %v977
        %v1039 = vmul.f32 %v1031, %v978
        %v1040 = vmul.f32 %v1031, %v979
        %1042 = vset.pattern.permute.xlu0 0
        %1043 = vperm.xlu0 %1042, %v1026
        %v1044 = vpop.permute.xlu0 %1043
        %v1046 = vadd.f32 %v1044, %v1033
        %v1047 = vadd.f32 %v1044, %v1034
        %v1048 = vadd.f32 %v1044, %v1035
        %v1049 = vadd.f32 %v1044, %v1036
        %v1050 = vadd.f32 %v1044, %v1037
        %v1051 = vadd.f32 %v1044, %v1038
        %v1052 = vadd.f32 %v1044, %v1039
        %v1053 = vadd.f32 %v1044, %v1040
        %1054 = vset.pattern.permute.xlu0 1
        %1055 = vperm.xlu0 %1054, %v1027
        %v1056 = vpop.permute.xlu0 %1055
        %v1058 = vmul.f32 %v1056, %v991
        %v1059 = vmul.f32 %v1056, %v992
        %v1060 = vmul.f32 %v1056, %v993
        %v1061 = vmul.f32 %v1056, %v994
        %v1062 = vmul.f32 %v1056, %v995
        %v1063 = vmul.f32 %v1056, %v996
        %v1064 = vmul.f32 %v1056, %v997
        %v1065 = vmul.f32 %v1056, %v998
        %v1066 = vadd.f32 %v1046, %v1058
        %v1067 = vadd.f32 %v1047, %v1059
        %v1068 = vadd.f32 %v1048, %v1060
        %v1069 = vadd.f32 %v1049, %v1061
        %v1070 = vadd.f32 %v1050, %v1062
        %v1071 = vadd.f32 %v1051, %v1063
        %v1072 = vadd.f32 %v1052, %v1064
        %v1073 = vadd.f32 %v1053, %v1065
        %1074 = vset.pattern.permute.xlu0 2
        %1075 = vperm.xlu0 %1074, %v1027
        %v1076 = vpop.permute.xlu0 %1075
        %v1078 = vmul.f32 %v1076, %v1010
        %v1079 = vmul.f32 %v1076, %v1011
        %v1080 = vmul.f32 %v1076, %v1012
        %v1081 = vmul.f32 %v1076, %v1013
        %v1082 = vmul.f32 %v1076, %v1014
        %v1083 = vmul.f32 %v1076, %v1015
        %v1084 = vmul.f32 %v1076, %v1016
        %v1085 = vmul.f32 %v1076, %v1017
        %v1086 = vadd.f32 %v1066, %v1078
        %v1087 = vadd.f32 %v1067, %v1079
        %v1088 = vadd.f32 %v1068, %v1080
        %v1089 = vadd.f32 %v1069, %v1081
        %v1090 = vadd.f32 %v1070, %v1082
        %v1091 = vadd.f32 %v1071, %v1083
        %v1092 = vadd.f32 %v1072, %v1084
        %v1093 = vadd.f32 %v1073, %v1085
        %v1094 = vmax.f32 %v1086, 0.0
        %v1095 = vmax.f32 %v1087, 0.0
        %v1096 = vmax.f32 %v1088, 0.0
        %v1097 = vmax.f32 %v1089, 0.0
        %v1098 = vmax.f32 %v1090, 0.0
        %v1099 = vmax.f32 %v1091, 0.0
        %v1100 = vmax.f32 %v1092, 0.0
        %v1101 = vmax.f32 %v1093, 0.0
        %1102 = vst [vmem:[%s218 + $0x40] sm:$0xff] %v1094
        %1103 = vst [vmem:[%s218 + $0x48] sm:$0xff] %v1095
        %1104 = vst [vmem:[%s218 + $0x50] sm:$0xff] %v1096
        %1105 = vst [vmem:[%s218 + $0x58] sm:$0xff] %v1097
        %1106 = vst [vmem:[%s218 + $0x60] sm:$0xff] %v1098
        %1107 = vst [vmem:[%s218 + $0x68] sm:$0xff] %v1099
        %1108 = vst [vmem:[%s218 + $0x70] sm:$0xff] %v1100
        %1109 = vst [vmem:[%s218 + $0x78] sm:$0xff] %v1101
        %v1110 = vld [vmem:[#allocation5] sm:$0xff]
        %v1111 = vld [vmem:[#allocation2] sm:$0xff]
        %1113 = vset.pattern.permute.xlu0 3
        %1114 = vperm.xlu0 %1113, %v1111
        %v1115 = vpop.permute.xlu0 %1114
        %v1117 = vmul.f32 %v1115, %v972
        %v1118 = vmul.f32 %v1115, %v973
        %v1119 = vmul.f32 %v1115, %v974
        %v1120 = vmul.f32 %v1115, %v975
        %v1121 = vmul.f32 %v1115, %v976
        %v1122 = vmul.f32 %v1115, %v977
        %v1123 = vmul.f32 %v1115, %v978
        %v1124 = vmul.f32 %v1115, %v979
        %1126 = vset.pattern.permute.xlu0 1
        %1127 = vperm.xlu0 %1126, %v1110
        %v1128 = vpop.permute.xlu0 %1127
        %v1130 = vadd.f32 %v1128, %v1117
        %v1131 = vadd.f32 %v1128, %v1118
        %v1132 = vadd.f32 %v1128, %v1119
        %v1133 = vadd.f32 %v1128, %v1120
        %v1134 = vadd.f32 %v1128, %v1121
        %v1135 = vadd.f32 %v1128, %v1122
        %v1136 = vadd.f32 %v1128, %v1123
        %v1137 = vadd.f32 %v1128, %v1124
        %1138 = vset.pattern.permute.xlu0 4
        %1139 = vperm.xlu0 %1138, %v1111
        %v1140 = vpop.permute.xlu0 %1139
        %v1142 = vmul.f32 %v1140, %v991
        %v1143 = vmul.f32 %v1140, %v992
        %v1144 = vmul.f32 %v1140, %v993
        %v1145 = vmul.f32 %v1140, %v994
        %v1146 = vmul.f32 %v1140, %v995
        %v1147 = vmul.f32 %v1140, %v996
        %v1148 = vmul.f32 %v1140, %v997
        %v1149 = vmul.f32 %v1140, %v998
        %v1150 = vadd.f32 %v1130, %v1142
        %v1151 = vadd.f32 %v1131, %v1143
        %v1152 = vadd.f32 %v1132, %v1144
        %v1153 = vadd.f32 %v1133, %v1145
        %v1154 = vadd.f32 %v1134, %v1146
        %v1155 = vadd.f32 %v1135, %v1147
        %v1156 = vadd.f32 %v1136, %v1148
        %v1157 = vadd.f32 %v1137, %v1149
        %1158 = vset.pattern.permute.xlu0 5
        %1159 = vperm.xlu0 %1158, %v1111
        %v1160 = vpop.permute.xlu0 %1159
        %v1162 = vmul.f32 %v1160, %v1010
        %v1163 = vmul.f32 %v1160, %v1011
        %v1164 = vmul.f32 %v1160, %v1012
        %v1165 = vmul.f32 %v1160, %v1013
        %v1166 = vmul.f32 %v1160, %v1014
        %v1167 = vmul.f32 %v1160, %v1015
        %v1168 = vmul.f32 %v1160, %v1016
        %v1169 = vmul.f32 %v1160, %v1017
        %v1170 = vadd.f32 %v1150, %v1162
        %v1171 = vadd.f32 %v1151, %v1163
        %v1172 = vadd.f32 %v1152, %v1164
        %v1173 = vadd.f32 %v1153, %v1165
        %v1174 = vadd.f32 %v1154, %v1166
        %v1175 = vadd.f32 %v1155, %v1167
        %v1176 = vadd.f32 %v1156, %v1168
        %v1177 = vadd.f32 %v1157, %v1169
        %v1178 = vmax.f32 %v1170, 0.0
        %v1179 = vmax.f32 %v1171, 0.0
        %v1180 = vmax.f32 %v1172, 0.0
        %v1181 = vmax.f32 %v1173, 0.0
        %v1182 = vmax.f32 %v1174, 0.0
        %v1183 = vmax.f32 %v1175, 0.0
        %v1184 = vmax.f32 %v1176, 0.0
        %v1185 = vmax.f32 %v1177, 0.0
        %1186 = vst [vmem:[%s450 + $0x40] sm:$0xff] %v1178
        %1187 = vst [vmem:[%s450 + $0x48] sm:$0xff] %v1179
        %1188 = vst [vmem:[%s450 + $0x50] sm:$0xff] %v1180
        %1189 = vst [vmem:[%s450 + $0x58] sm:$0xff] %v1181
        %1190 = vst [vmem:[%s450 + $0x60] sm:$0xff] %v1182
        %1191 = vst [vmem:[%s450 + $0x68] sm:$0xff] %v1183
        %1192 = vst [vmem:[%s450 + $0x70] sm:$0xff] %v1184
        %1193 = vst [vmem:[%s450 + $0x78] sm:$0xff] %v1185
        %v1194 = vld [vmem:[#allocation5] sm:$0xff]
        %v1195 = vld [vmem:[#allocation2] sm:$0xff]
        %1197 = vset.pattern.permute.xlu0 6
        %1198 = vperm.xlu0 %1197, %v1195
        %v1199 = vpop.permute.xlu0 %1198
        %v1201 = vmul.f32 %v1199, %v972
        %v1202 = vmul.f32 %v1199, %v973
        %v1203 = vmul.f32 %v1199, %v974
        %v1204 = vmul.f32 %v1199, %v975
        %v1205 = vmul.f32 %v1199, %v976
        %v1206 = vmul.f32 %v1199, %v977
        %v1207 = vmul.f32 %v1199, %v978
        %v1208 = vmul.f32 %v1199, %v979
        %1210 = vset.pattern.permute.xlu0 2
        %1211 = vperm.xlu0 %1210, %v1194
        %v1212 = vpop.permute.xlu0 %1211
        %v1214 = vadd.f32 %v1212, %v1201
        %v1215 = vadd.f32 %v1212, %v1202
        %v1216 = vadd.f32 %v1212, %v1203
        %v1217 = vadd.f32 %v1212, %v1204
        %v1218 = vadd.f32 %v1212, %v1205
        %v1219 = vadd.f32 %v1212, %v1206
        %v1220 = vadd.f32 %v1212, %v1207
        %v1221 = vadd.f32 %v1212, %v1208
        %1222 = vset.pattern.permute.xlu0 7
        %1223 = vperm.xlu0 %1222, %v1195
        %v1224 = vpop.permute.xlu0 %1223
        %v1226 = vmul.f32 %v1224, %v991
        %v1227 = vmul.f32 %v1224, %v992
        %v1228 = vmul.f32 %v1224, %v993
        %v1229 = vmul.f32 %v1224, %v994
        %v1230 = vmul.f32 %v1224, %v995
        %v1231 = vmul.f32 %v1224, %v996
        %v1232 = vmul.f32 %v1224, %v997
        %v1233 = vmul.f32 %v1224, %v998
        %v1234 = vadd.f32 %v1214, %v1226
        %v1235 = vadd.f32 %v1215, %v1227
        %v1236 = vadd.f32 %v1216, %v1228
        %v1237 = vadd.f32 %v1217, %v1229
        %v1238 = vadd.f32 %v1218, %v1230
        %v1239 = vadd.f32 %v1219, %v1231
        %v1240 = vadd.f32 %v1220, %v1232
        %v1241 = vadd.f32 %v1221, %v1233
        %1242 = vset.pattern.permute.xlu0 8
        %1243 = vperm.xlu0 %1242, %v1195
        %v1244 = vpop.permute.xlu0 %1243
        %v1246 = vmul.f32 %v1244, %v1010
        %v1247 = vmul.f32 %v1244, %v1011
        %v1248 = vmul.f32 %v1244, %v1012
        %v1249 = vmul.f32 %v1244, %v1013
        %v1250 = vmul.f32 %v1244, %v1014
        %v1251 = vmul.f32 %v1244, %v1015
        %v1252 = vmul.f32 %v1244, %v1016
        %v1253 = vmul.f32 %v1244, %v1017
        %v1254 = vadd.f32 %v1234, %v1246
        %v1255 = vadd.f32 %v1235, %v1247
        %v1256 = vadd.f32 %v1236, %v1248
        %v1257 = vadd.f32 %v1237, %v1249
        %v1258 = vadd.f32 %v1238, %v1250
        %v1259 = vadd.f32 %v1239, %v1251
        %v1260 = vadd.f32 %v1240, %v1252
        %v1261 = vadd.f32 %v1241, %v1253
        %v1262 = vmax.f32 %v1254, 0.0
        %v1263 = vmax.f32 %v1255, 0.0
        %v1264 = vmax.f32 %v1256, 0.0
        %v1265 = vmax.f32 %v1257, 0.0
        %v1266 = vmax.f32 %v1258, 0.0
        %v1267 = vmax.f32 %v1259, 0.0
        %v1268 = vmax.f32 %v1260, 0.0
        %v1269 = vmax.f32 %v1261, 0.0
        %1270 = vst [vmem:[%s535 + $0x40] sm:$0xff] %v1262
        %1271 = vst [vmem:[%s535 + $0x48] sm:$0xff] %v1263
        %1272 = vst [vmem:[%s535 + $0x50] sm:$0xff] %v1264
        %1273 = vst [vmem:[%s535 + $0x58] sm:$0xff] %v1265
        %1274 = vst [vmem:[%s535 + $0x60] sm:$0xff] %v1266
        %1275 = vst [vmem:[%s535 + $0x68] sm:$0xff] %v1267
        %1276 = vst [vmem:[%s535 + $0x70] sm:$0xff] %v1268
        %1277 = vst [vmem:[%s535 + $0x78] sm:$0xff] %v1269
        %v1278 = vld [vmem:[#allocation5] sm:$0xff]
        %v1279 = vld [vmem:[#allocation2] sm:$0xff]
        %1281 = vset.pattern.permute.xlu0 9
        %1282 = vperm.xlu0 %1281, %v1279
        %v1283 = vpop.permute.xlu0 %1282
        %v1285 = vmul.f32 %v1283, %v972
        %v1286 = vmul.f32 %v1283, %v973
        %v1287 = vmul.f32 %v1283, %v974
        %v1288 = vmul.f32 %v1283, %v975
        %v1289 = vmul.f32 %v1283, %v976
        %v1290 = vmul.f32 %v1283, %v977
        %v1291 = vmul.f32 %v1283, %v978
        %v1292 = vmul.f32 %v1283, %v979
        %1294 = vset.pattern.permute.xlu0 3
        %1295 = vperm.xlu0 %1294, %v1278
        %v1296 = vpop.permute.xlu0 %1295
        %v1298 = vadd.f32 %v1296, %v1285
        %v1299 = vadd.f32 %v1296, %v1286
        %v1300 = vadd.f32 %v1296, %v1287
        %v1301 = vadd.f32 %v1296, %v1288
        %v1302 = vadd.f32 %v1296, %v1289
        %v1303 = vadd.f32 %v1296, %v1290
        %v1304 = vadd.f32 %v1296, %v1291
        %v1305 = vadd.f32 %v1296, %v1292
        %1306 = vset.pattern.permute.xlu0 10
        %1307 = vperm.xlu0 %1306, %v1279
        %v1308 = vpop.permute.xlu0 %1307
        %v1310 = vmul.f32 %v1308, %v991
        %v1311 = vmul.f32 %v1308, %v992
        %v1312 = vmul.f32 %v1308, %v993
        %v1313 = vmul.f32 %v1308, %v994
        %v1314 = vmul.f32 %v1308, %v995
        %v1315 = vmul.f32 %v1308, %v996
        %v1316 = vmul.f32 %v1308, %v997
        %v1317 = vmul.f32 %v1308, %v998
        %v1318 = vadd.f32 %v1298, %v1310
        %v1319 = vadd.f32 %v1299, %v1311
        %v1320 = vadd.f32 %v1300, %v1312
        %v1321 = vadd.f32 %v1301, %v1313
        %v1322 = vadd.f32 %v1302, %v1314
        %v1323 = vadd.f32 %v1303, %v1315
        %v1324 = vadd.f32 %v1304, %v1316
        %v1325 = vadd.f32 %v1305, %v1317
        %1326 = vset.pattern.permute.xlu0 11
        %1327 = vperm.xlu0 %1326, %v1279
        %v1328 = vpop.permute.xlu0 %1327
        %v1330 = vmul.f32 %v1328, %v1010
        %v1331 = vmul.f32 %v1328, %v1011
        %v1332 = vmul.f32 %v1328, %v1012
        %v1333 = vmul.f32 %v1328, %v1013
        %v1334 = vmul.f32 %v1328, %v1014
        %v1335 = vmul.f32 %v1328, %v1015
        %v1336 = vmul.f32 %v1328, %v1016
        %v1337 = vmul.f32 %v1328, %v1017
        %v1338 = vadd.f32 %v1318, %v1330
        %v1339 = vadd.f32 %v1319, %v1331
        %v1340 = vadd.f32 %v1320, %v1332
        %v1341 = vadd.f32 %v1321, %v1333
        %v1342 = vadd.f32 %v1322, %v1334
        %v1343 = vadd.f32 %v1323, %v1335
        %v1344 = vadd.f32 %v1324, %v1336
        %v1345 = vadd.f32 %v1325, %v1337
        %v1346 = vmax.f32 %v1338, 0.0
        %v1347 = vmax.f32 %v1339, 0.0
        %v1348 = vmax.f32 %v1340, 0.0
        %v1349 = vmax.f32 %v1341, 0.0
        %v1350 = vmax.f32 %v1342, 0.0
        %v1351 = vmax.f32 %v1343, 0.0
        %v1352 = vmax.f32 %v1344, 0.0
        %v1353 = vmax.f32 %v1345, 0.0
        %1354 = vst [vmem:[%s620 + $0x40] sm:$0xff] %v1346
        %1355 = vst [vmem:[%s620 + $0x48] sm:$0xff] %v1347
        %1356 = vst [vmem:[%s620 + $0x50] sm:$0xff] %v1348
        %1357 = vst [vmem:[%s620 + $0x58] sm:$0xff] %v1349
        %1358 = vst [vmem:[%s620 + $0x60] sm:$0xff] %v1350
        %1359 = vst [vmem:[%s620 + $0x68] sm:$0xff] %v1351
        %1360 = vst [vmem:[%s620 + $0x70] sm:$0xff] %v1352
        %1361 = vst [vmem:[%s620 + $0x78] sm:$0xff] %v1353
        %v1362 = vld [vmem:[#allocation5] sm:$0xff]
        %v1363 = vld [vmem:[#allocation2] sm:$0xff]
        %1365 = vset.pattern.permute.xlu0 12
        %1366 = vperm.xlu0 %1365, %v1363
        %v1367 = vpop.permute.xlu0 %1366
        %v1369 = vmul.f32 %v1367, %v972
        %v1370 = vmul.f32 %v1367, %v973
        %v1371 = vmul.f32 %v1367, %v974
        %v1372 = vmul.f32 %v1367, %v975
        %v1373 = vmul.f32 %v1367, %v976
        %v1374 = vmul.f32 %v1367, %v977
        %v1375 = vmul.f32 %v1367, %v978
        %v1376 = vmul.f32 %v1367, %v979
        %1378 = vset.pattern.permute.xlu0 4
        %1379 = vperm.xlu0 %1378, %v1362
        %v1380 = vpop.permute.xlu0 %1379
        %v1382 = vadd.f32 %v1380, %v1369
        %v1383 = vadd.f32 %v1380, %v1370
        %v1384 = vadd.f32 %v1380, %v1371
        %v1385 = vadd.f32 %v1380, %v1372
        %v1386 = vadd.f32 %v1380, %v1373
        %v1387 = vadd.f32 %v1380, %v1374
        %v1388 = vadd.f32 %v1380, %v1375
        %v1389 = vadd.f32 %v1380, %v1376
        %1390 = vset.pattern.permute.xlu0 13
        %1391 = vperm.xlu0 %1390, %v1363
        %v1392 = vpop.permute.xlu0 %1391
        %v1394 = vmul.f32 %v1392, %v991
        %v1395 = vmul.f32 %v1392, %v992
        %v1396 = vmul.f32 %v1392, %v993
        %v1397 = vmul.f32 %v1392, %v994
        %v1398 = vmul.f32 %v1392, %v995
        %v1399 = vmul.f32 %v1392, %v996
        %v1400 = vmul.f32 %v1392, %v997
        %v1401 = vmul.f32 %v1392, %v998
        %v1402 = vadd.f32 %v1382, %v1394
        %v1403 = vadd.f32 %v1383, %v1395
        %v1404 = vadd.f32 %v1384, %v1396
        %v1405 = vadd.f32 %v1385, %v1397
        %v1406 = vadd.f32 %v1386, %v1398
        %v1407 = vadd.f32 %v1387, %v1399
        %v1408 = vadd.f32 %v1388, %v1400
        %v1409 = vadd.f32 %v1389, %v1401
        %1410 = vset.pattern.permute.xlu0 14
        %1411 = vperm.xlu0 %1410, %v1363
        %v1412 = vpop.permute.xlu0 %1411
        %v1414 = vmul.f32 %v1412, %v1010
        %v1415 = vmul.f32 %v1412, %v1011
        %v1416 = vmul.f32 %v1412, %v1012
        %v1417 = vmul.f32 %v1412, %v1013
        %v1418 = vmul.f32 %v1412, %v1014
        %v1419 = vmul.f32 %v1412, %v1015
        %v1420 = vmul.f32 %v1412, %v1016
        %v1421 = vmul.f32 %v1412, %v1017
        %v1422 = vadd.f32 %v1402, %v1414
        %v1423 = vadd.f32 %v1403, %v1415
        %v1424 = vadd.f32 %v1404, %v1416
        %v1425 = vadd.f32 %v1405, %v1417
        %v1426 = vadd.f32 %v1406, %v1418
        %v1427 = vadd.f32 %v1407, %v1419
        %v1428 = vadd.f32 %v1408, %v1420
        %v1429 = vadd.f32 %v1409, %v1421
        %v1430 = vmax.f32 %v1422, 0.0
        %v1431 = vmax.f32 %v1423, 0.0
        %v1432 = vmax.f32 %v1424, 0.0
        %v1433 = vmax.f32 %v1425, 0.0
        %v1434 = vmax.f32 %v1426, 0.0
        %v1435 = vmax.f32 %v1427, 0.0
        %v1436 = vmax.f32 %v1428, 0.0
        %v1437 = vmax.f32 %v1429, 0.0
        %1438 = vst [vmem:[%s705 + $0x40] sm:$0xff] %v1430
        %1439 = vst [vmem:[%s705 + $0x48] sm:$0xff] %v1431
        %1440 = vst [vmem:[%s705 + $0x50] sm:$0xff] %v1432
        %1441 = vst [vmem:[%s705 + $0x58] sm:$0xff] %v1433
        %1442 = vst [vmem:[%s705 + $0x60] sm:$0xff] %v1434
        %1443 = vst [vmem:[%s705 + $0x68] sm:$0xff] %v1435
        %1444 = vst [vmem:[%s705 + $0x70] sm:$0xff] %v1436
        %1445 = vst [vmem:[%s705 + $0x78] sm:$0xff] %v1437
        %v1446 = vld [vmem:[#allocation5] sm:$0xff]
        %v1447 = vld [vmem:[#allocation2] sm:$0xff]
        %1449 = vset.pattern.permute.xlu0 15
        %1450 = vperm.xlu0 %1449, %v1447
        %v1451 = vpop.permute.xlu0 %1450
        %v1453 = vmul.f32 %v1451, %v972
        %v1454 = vmul.f32 %v1451, %v973
        %v1455 = vmul.f32 %v1451, %v974
        %v1456 = vmul.f32 %v1451, %v975
        %v1457 = vmul.f32 %v1451, %v976
        %v1458 = vmul.f32 %v1451, %v977
        %v1459 = vmul.f32 %v1451, %v978
        %v1460 = vmul.f32 %v1451, %v979
        %1462 = vset.pattern.permute.xlu0 5
        %1463 = vperm.xlu0 %1462, %v1446
        %v1464 = vpop.permute.xlu0 %1463
        %v1466 = vadd.f32 %v1464, %v1453
        %v1467 = vadd.f32 %v1464, %v1454
        %v1468 = vadd.f32 %v1464, %v1455
        %v1469 = vadd.f32 %v1464, %v1456
        %v1470 = vadd.f32 %v1464, %v1457
        %v1471 = vadd.f32 %v1464, %v1458
        %v1472 = vadd.f32 %v1464, %v1459
        %v1473 = vadd.f32 %v1464, %v1460
        %1474 = vset.pattern.permute.xlu0 16
        %1475 = vperm.xlu0 %1474, %v1447
        %v1476 = vpop.permute.xlu0 %1475
        %v1478 = vmul.f32 %v1476, %v991
        %v1479 = vmul.f32 %v1476, %v992
        %v1480 = vmul.f32 %v1476, %v993
        %v1481 = vmul.f32 %v1476, %v994
        %v1482 = vmul.f32 %v1476, %v995
        %v1483 = vmul.f32 %v1476, %v996
        %v1484 = vmul.f32 %v1476, %v997
        %v1485 = vmul.f32 %v1476, %v998
        %v1486 = vadd.f32 %v1466, %v1478
        %v1487 = vadd.f32 %v1467, %v1479
        %v1488 = vadd.f32 %v1468, %v1480
        %v1489 = vadd.f32 %v1469, %v1481
        %v1490 = vadd.f32 %v1470, %v1482
        %v1491 = vadd.f32 %v1471, %v1483
        %v1492 = vadd.f32 %v1472, %v1484
        %v1493 = vadd.f32 %v1473, %v1485
        %1494 = vset.pattern.permute.xlu0 17
        %1495 = vperm.xlu0 %1494, %v1447
        %v1496 = vpop.permute.xlu0 %1495
        %v1498 = vmul.f32 %v1496, %v1010
        %v1499 = vmul.f32 %v1496, %v1011
        %v1500 = vmul.f32 %v1496, %v1012
        %v1501 = vmul.f32 %v1496, %v1013
        %v1502 = vmul.f32 %v1496, %v1014
        %v1503 = vmul.f32 %v1496, %v1015
        %v1504 = vmul.f32 %v1496, %v1016
        %v1505 = vmul.f32 %v1496, %v1017
        %v1506 = vadd.f32 %v1486, %v1498
        %v1507 = vadd.f32 %v1487, %v1499
        %v1508 = vadd.f32 %v1488, %v1500
        %v1509 = vadd.f32 %v1489, %v1501
        %v1510 = vadd.f32 %v1490, %v1502
        %v1511 = vadd.f32 %v1491, %v1503
        %v1512 = vadd.f32 %v1492, %v1504
        %v1513 = vadd.f32 %v1493, %v1505
        %v1514 = vmax.f32 %v1506, 0.0
        %v1515 = vmax.f32 %v1507, 0.0
        %v1516 = vmax.f32 %v1508, 0.0
        %v1517 = vmax.f32 %v1509, 0.0
        %v1518 = vmax.f32 %v1510, 0.0
        %v1519 = vmax.f32 %v1511, 0.0
        %v1520 = vmax.f32 %v1512, 0.0
        %v1521 = vmax.f32 %v1513, 0.0
        %1522 = vst [vmem:[%s790 + $0x40] sm:$0xff] %v1514
        %1523 = vst [vmem:[%s790 + $0x48] sm:$0xff] %v1515
        %1524 = vst [vmem:[%s790 + $0x50] sm:$0xff] %v1516
        %1525 = vst [vmem:[%s790 + $0x58] sm:$0xff] %v1517
        %1526 = vst [vmem:[%s790 + $0x60] sm:$0xff] %v1518
        %1527 = vst [vmem:[%s790 + $0x68] sm:$0xff] %v1519
        %1528 = vst [vmem:[%s790 + $0x70] sm:$0xff] %v1520
        %1529 = vst [vmem:[%s790 + $0x78] sm:$0xff] %v1521
        %v1530 = vld [vmem:[#allocation5] sm:$0xff]
        %v1531 = vld [vmem:[#allocation2] sm:$0xff]
        %1533 = vset.pattern.permute.xlu0 18
        %1534 = vperm.xlu0 %1533, %v1531
        %v1535 = vpop.permute.xlu0 %1534
        %v1537 = vmul.f32 %v1535, %v972
        %v1538 = vmul.f32 %v1535, %v973
        %v1539 = vmul.f32 %v1535, %v974
        %v1540 = vmul.f32 %v1535, %v975
        %v1541 = vmul.f32 %v1535, %v976
        %v1542 = vmul.f32 %v1535, %v977
        %v1543 = vmul.f32 %v1535, %v978
        %v1544 = vmul.f32 %v1535, %v979
        %1546 = vset.pattern.permute.xlu0 6
        %1547 = vperm.xlu0 %1546, %v1530
        %v1548 = vpop.permute.xlu0 %1547
        %v1550 = vadd.f32 %v1548, %v1537
        %v1551 = vadd.f32 %v1548, %v1538
        %v1552 = vadd.f32 %v1548, %v1539
        %v1553 = vadd.f32 %v1548, %v1540
        %v1554 = vadd.f32 %v1548, %v1541
        %v1555 = vadd.f32 %v1548, %v1542
        %v1556 = vadd.f32 %v1548, %v1543
        %v1557 = vadd.f32 %v1548, %v1544
        %1558 = vset.pattern.permute.xlu0 19
        %1559 = vperm.xlu0 %1558, %v1531
        %v1560 = vpop.permute.xlu0 %1559
        %v1562 = vmul.f32 %v1560, %v991
        %v1563 = vmul.f32 %v1560, %v992
        %v1564 = vmul.f32 %v1560, %v993
        %v1565 = vmul.f32 %v1560, %v994
        %v1566 = vmul.f32 %v1560, %v995
        %v1567 = vmul.f32 %v1560, %v996
        %v1568 = vmul.f32 %v1560, %v997
        %v1569 = vmul.f32 %v1560, %v998
        %v1570 = vadd.f32 %v1550, %v1562
        %v1571 = vadd.f32 %v1551, %v1563
        %v1572 = vadd.f32 %v1552, %v1564
        %v1573 = vadd.f32 %v1553, %v1565
        %v1574 = vadd.f32 %v1554, %v1566
        %v1575 = vadd.f32 %v1555, %v1567
        %v1576 = vadd.f32 %v1556, %v1568
        %v1577 = vadd.f32 %v1557, %v1569
        %1578 = vset.pattern.permute.xlu0 20
        %1579 = vperm.xlu0 %1578, %v1531
        %v1580 = vpop.permute.xlu0 %1579
        %v1582 = vmul.f32 %v1580, %v1010
        %v1583 = vmul.f32 %v1580, %v1011
        %v1584 = vmul.f32 %v1580, %v1012
        %v1585 = vmul.f32 %v1580, %v1013
        %v1586 = vmul.f32 %v1580, %v1014
        %v1587 = vmul.f32 %v1580, %v1015
        %v1588 = vmul.f32 %v1580, %v1016
        %v1589 = vmul.f32 %v1580, %v1017
        %v1590 = vadd.f32 %v1570, %v1582
        %v1591 = vadd.f32 %v1571, %v1583
        %v1592 = vadd.f32 %v1572, %v1584
        %v1593 = vadd.f32 %v1573, %v1585
        %v1594 = vadd.f32 %v1574, %v1586
        %v1595 = vadd.f32 %v1575, %v1587
        %v1596 = vadd.f32 %v1576, %v1588
        %v1597 = vadd.f32 %v1577, %v1589
        %v1598 = vmax.f32 %v1590, 0.0
        %v1599 = vmax.f32 %v1591, 0.0
        %v1600 = vmax.f32 %v1592, 0.0
        %v1601 = vmax.f32 %v1593, 0.0
        %v1602 = vmax.f32 %v1594, 0.0
        %v1603 = vmax.f32 %v1595, 0.0
        %v1604 = vmax.f32 %v1596, 0.0
        %v1605 = vmax.f32 %v1597, 0.0
        %1606 = vst [vmem:[%s875 + $0x40] sm:$0xff] %v1598
        %1607 = vst [vmem:[%s875 + $0x48] sm:$0xff] %v1599
        %1608 = vst [vmem:[%s875 + $0x50] sm:$0xff] %v1600
        %1609 = vst [vmem:[%s875 + $0x58] sm:$0xff] %v1601
        %1610 = vst [vmem:[%s875 + $0x60] sm:$0xff] %v1602
        %1611 = vst [vmem:[%s875 + $0x68] sm:$0xff] %v1603
        %1612 = vst [vmem:[%s875 + $0x70] sm:$0xff] %v1604
        %1613 = vst [vmem:[%s875 + $0x78] sm:$0xff] %v1605
        %v1614 = vld [vmem:[#allocation5] sm:$0xff]
        %v1615 = vld [vmem:[#allocation2] sm:$0xff]
        %1617 = vset.pattern.permute.xlu0 21
        %1618 = vperm.xlu0 %1617, %v1615
        %v1619 = vpop.permute.xlu0 %1618
        %v1621 = vmul.f32 %v1619, %v972
        %v1622 = vmul.f32 %v1619, %v973
        %v1623 = vmul.f32 %v1619, %v974
        %v1624 = vmul.f32 %v1619, %v975
        %v1625 = vmul.f32 %v1619, %v976
        %v1626 = vmul.f32 %v1619, %v977
        %v1627 = vmul.f32 %v1619, %v978
        %v1628 = vmul.f32 %v1619, %v979
        %1630 = vset.pattern.permute.xlu0 7
        %1631 = vperm.xlu0 %1630, %v1614
        %v1632 = vpop.permute.xlu0 %1631
        %v1634 = vadd.f32 %v1632, %v1621
        %v1635 = vadd.f32 %v1632, %v1622
        %v1636 = vadd.f32 %v1632, %v1623
        %v1637 = vadd.f32 %v1632, %v1624
        %v1638 = vadd.f32 %v1632, %v1625
        %v1639 = vadd.f32 %v1632, %v1626
        %v1640 = vadd.f32 %v1632, %v1627
        %v1641 = vadd.f32 %v1632, %v1628
        %1642 = vset.pattern.permute.xlu0 22
        %1643 = vperm.xlu0 %1642, %v1615
        %v1644 = vpop.permute.xlu0 %1643
        %v1646 = vmul.f32 %v1644, %v991
        %v1647 = vmul.f32 %v1644, %v992
        %v1648 = vmul.f32 %v1644, %v993
        %v1649 = vmul.f32 %v1644, %v994
        %v1650 = vmul.f32 %v1644, %v995
        %v1651 = vmul.f32 %v1644, %v996
        %v1652 = vmul.f32 %v1644, %v997
        %v1653 = vmul.f32 %v1644, %v998
        %v1654 = vadd.f32 %v1634, %v1646
        %v1655 = vadd.f32 %v1635, %v1647
        %v1656 = vadd.f32 %v1636, %v1648
        %v1657 = vadd.f32 %v1637, %v1649
        %v1658 = vadd.f32 %v1638, %v1650
        %v1659 = vadd.f32 %v1639, %v1651
        %v1660 = vadd.f32 %v1640, %v1652
        %v1661 = vadd.f32 %v1641, %v1653
        %1662 = vset.pattern.permute.xlu0 23
        %1663 = vperm.xlu0 %1662, %v1615
        %v1664 = vpop.permute.xlu0 %1663
        %v1666 = vmul.f32 %v1664, %v1010
        %v1667 = vmul.f32 %v1664, %v1011
        %v1668 = vmul.f32 %v1664, %v1012
        %v1669 = vmul.f32 %v1664, %v1013
        %v1670 = vmul.f32 %v1664, %v1014
        %v1671 = vmul.f32 %v1664, %v1015
        %v1672 = vmul.f32 %v1664, %v1016
        %v1673 = vmul.f32 %v1664, %v1017
        %v1674 = vadd.f32 %v1654, %v1666
        %v1675 = vadd.f32 %v1655, %v1667
        %v1676 = vadd.f32 %v1656, %v1668
        %v1677 = vadd.f32 %v1657, %v1669
        %v1678 = vadd.f32 %v1658, %v1670
        %v1679 = vadd.f32 %v1659, %v1671
        %v1680 = vadd.f32 %v1660, %v1672
        %v1681 = vadd.f32 %v1661, %v1673
        %v1682 = vmax.f32 %v1674, 0.0
        %v1683 = vmax.f32 %v1675, 0.0
        %v1684 = vmax.f32 %v1676, 0.0
        %v1685 = vmax.f32 %v1677, 0.0
        %v1686 = vmax.f32 %v1678, 0.0
        %v1687 = vmax.f32 %v1679, 0.0
        %v1688 = vmax.f32 %v1680, 0.0
        %v1689 = vmax.f32 %v1681, 0.0
        %1690 = vst [vmem:[%s960 + $0x40] sm:$0xff] %v1682
        %1691 = vst [vmem:[%s960 + $0x48] sm:$0xff] %v1683
        %1692 = vst [vmem:[%s960 + $0x50] sm:$0xff] %v1684
        %1693 = vst [vmem:[%s960 + $0x58] sm:$0xff] %v1685
        %1694 = vst [vmem:[%s960 + $0x60] sm:$0xff] %v1686
        %1695 = vst [vmem:[%s960 + $0x68] sm:$0xff] %v1687
        %1696 = vst [vmem:[%s960 + $0x70] sm:$0xff] %v1688
        %1697 = vst [vmem:[%s960 + $0x78] sm:$0xff] %v1689
        %s1698 = scalar_lea.vmem %s227, 64
        %v1699 = vld [vmem:[%s1698] ss:$4 sm:$0xff]
        %v1701 = vperm.slane %v1699, 0
        %v1702 = vperm.slane %v1699, 1
        %v1703 = vperm.slane %v1699, 2
        %v1704 = vperm.slane %v1699, 3
        %v1705 = vperm.slane %v1699, 4
        %v1706 = vperm.slane %v1699, 5
        %v1707 = vperm.slane %v1699, 6
        %v1708 = vperm.slane %v1699, 7
        %s1717 = scalar_lea.vmem %s227, 65
        %v1718 = vld [vmem:[%s1717] ss:$4 sm:$0xff]
        %v1720 = vperm.slane %v1718, 0
        %v1721 = vperm.slane %v1718, 1
        %v1722 = vperm.slane %v1718, 2
        %v1723 = vperm.slane %v1718, 3
        %v1724 = vperm.slane %v1718, 4
        %v1725 = vperm.slane %v1718, 5
        %v1726 = vperm.slane %v1718, 6
        %v1727 = vperm.slane %v1718, 7
        %s1736 = scalar_lea.vmem %s227, 66
        %v1737 = vld [vmem:[%s1736] ss:$4 sm:$0xff]
        %v1739 = vperm.slane %v1737, 0
        %v1740 = vperm.slane %v1737, 1
        %v1741 = vperm.slane %v1737, 2
        %v1742 = vperm.slane %v1737, 3
        %v1743 = vperm.slane %v1737, 4
        %v1744 = vperm.slane %v1737, 5
        %v1745 = vperm.slane %v1737, 6
        %v1746 = vperm.slane %v1737, 7
        %v1755 = vld [vmem:[#allocation5] sm:$0xff]
        %v1756 = vld [vmem:[#allocation2] sm:$0xff]
        %1758 = vset.pattern.permute.xlu0 0
        %1759 = vperm.xlu0 %1758, %v1756
        %v1760 = vpop.permute.xlu0 %1759
        %v1762 = vmul.f32 %v1760, %v1701
        %v1763 = vmul.f32 %v1760, %v1702
        %v1764 = vmul.f32 %v1760, %v1703
        %v1765 = vmul.f32 %v1760, %v1704
        %v1766 = vmul.f32 %v1760, %v1705
        %v1767 = vmul.f32 %v1760, %v1706
        %v1768 = vmul.f32 %v1760, %v1707
        %v1769 = vmul.f32 %v1760, %v1708
        %1771 = vset.pattern.permute.xlu0 0
        %1772 = vperm.xlu0 %1771, %v1755
        %v1773 = vpop.permute.xlu0 %1772
        %v1775 = vadd.f32 %v1773, %v1762
        %v1776 = vadd.f32 %v1773, %v1763
        %v1777 = vadd.f32 %v1773, %v1764
        %v1778 = vadd.f32 %v1773, %v1765
        %v1779 = vadd.f32 %v1773, %v1766
        %v1780 = vadd.f32 %v1773, %v1767
        %v1781 = vadd.f32 %v1773, %v1768
        %v1782 = vadd.f32 %v1773, %v1769
        %1783 = vset.pattern.permute.xlu0 1
        %1784 = vperm.xlu0 %1783, %v1756
        %v1785 = vpop.permute.xlu0 %1784
        %v1787 = vmul.f32 %v1785, %v1720
        %v1788 = vmul.f32 %v1785, %v1721
        %v1789 = vmul.f32 %v1785, %v1722
        %v1790 = vmul.f32 %v1785, %v1723
        %v1791 = vmul.f32 %v1785, %v1724
        %v1792 = vmul.f32 %v1785, %v1725
        %v1793 = vmul.f32 %v1785, %v1726
        %v1794 = vmul.f32 %v1785, %v1727
        %v1795 = vadd.f32 %v1775, %v1787
        %v1796 = vadd.f32 %v1776, %v1788
        %v1797 = vadd.f32 %v1777, %v1789
        %v1798 = vadd.f32 %v1778, %v1790
        %v1799 = vadd.f32 %v1779, %v1791
        %v1800 = vadd.f32 %v1780, %v1792
        %v1801 = vadd.f32 %v1781, %v1793
        %v1802 = vadd.f32 %v1782, %v1794
        %1803 = vset.pattern.permute.xlu0 2
        %1804 = vperm.xlu0 %1803, %v1756
        %v1805 = vpop.permute.xlu0 %1804
        %v1807 = vmul.f32 %v1805, %v1739
        %v1808 = vmul.f32 %v1805, %v1740
        %v1809 = vmul.f32 %v1805, %v1741
        %v1810 = vmul.f32 %v1805, %v1742
        %v1811 = vmul.f32 %v1805, %v1743
        %v1812 = vmul.f32 %v1805, %v1744
        %v1813 = vmul.f32 %v1805, %v1745
        %v1814 = vmul.f32 %v1805, %v1746
        %v1815 = vadd.f32 %v1795, %v1807
        %v1816 = vadd.f32 %v1796, %v1808
        %v1817 = vadd.f32 %v1797, %v1809
        %v1818 = vadd.f32 %v1798, %v1810
        %v1819 = vadd.f32 %v1799, %v1811
        %v1820 = vadd.f32 %v1800, %v1812
        %v1821 = vadd.f32 %v1801, %v1813
        %v1822 = vadd.f32 %v1802, %v1814
        %v1823 = vmax.f32 %v1815, 0.0
        %v1824 = vmax.f32 %v1816, 0.0
        %v1825 = vmax.f32 %v1817, 0.0
        %v1826 = vmax.f32 %v1818, 0.0
        %v1827 = vmax.f32 %v1819, 0.0
        %v1828 = vmax.f32 %v1820, 0.0
        %v1829 = vmax.f32 %v1821, 0.0
        %v1830 = vmax.f32 %v1822, 0.0
        %1831 = vst [vmem:[%s218 + $0x80] sm:$0xff] %v1823
        %1832 = vst [vmem:[%s218 + $0x88] sm:$0xff] %v1824
        %1833 = vst [vmem:[%s218 + $0x90] sm:$0xff] %v1825
        %1834 = vst [vmem:[%s218 + $0x98] sm:$0xff] %v1826
        %1835 = vst [vmem:[%s218 + $0xa0] sm:$0xff] %v1827
        %1836 = vst [vmem:[%s218 + $0xa8] sm:$0xff] %v1828
        %1837 = vst [vmem:[%s218 + $0xb0] sm:$0xff] %v1829
        %1838 = vst [vmem:[%s218 + $0xb8] sm:$0xff] %v1830
        %v1839 = vld [vmem:[#allocation5] sm:$0xff]
        %v1840 = vld [vmem:[#allocation2] sm:$0xff]
        %1842 = vset.pattern.permute.xlu0 3
        %1843 = vperm.xlu0 %1842, %v1840
        %v1844 = vpop.permute.xlu0 %1843
        %v1846 = vmul.f32 %v1844, %v1701
        %v1847 = vmul.f32 %v1844, %v1702
        %v1848 = vmul.f32 %v1844, %v1703
        %v1849 = vmul.f32 %v1844, %v1704
        %v1850 = vmul.f32 %v1844, %v1705
        %v1851 = vmul.f32 %v1844, %v1706
        %v1852 = vmul.f32 %v1844, %v1707
        %v1853 = vmul.f32 %v1844, %v1708
        %1855 = vset.pattern.permute.xlu0 1
        %1856 = vperm.xlu0 %1855, %v1839
        %v1857 = vpop.permute.xlu0 %1856
        %v1859 = vadd.f32 %v1857, %v1846
        %v1860 = vadd.f32 %v1857, %v1847
        %v1861 = vadd.f32 %v1857, %v1848
        %v1862 = vadd.f32 %v1857, %v1849
        %v1863 = vadd.f32 %v1857, %v1850
        %v1864 = vadd.f32 %v1857, %v1851
        %v1865 = vadd.f32 %v1857, %v1852
        %v1866 = vadd.f32 %v1857, %v1853
        %1867 = vset.pattern.permute.xlu0 4
        %1868 = vperm.xlu0 %1867, %v1840
        %v1869 = vpop.permute.xlu0 %1868
        %v1871 = vmul.f32 %v1869, %v1720
        %v1872 = vmul.f32 %v1869, %v1721
        %v1873 = vmul.f32 %v1869, %v1722
        %v1874 = vmul.f32 %v1869, %v1723
        %v1875 = vmul.f32 %v1869, %v1724
        %v1876 = vmul.f32 %v1869, %v1725
        %v1877 = vmul.f32 %v1869, %v1726
        %v1878 = vmul.f32 %v1869, %v1727
        %v1879 = vadd.f32 %v1859, %v1871
        %v1880 = vadd.f32 %v1860, %v1872
        %v1881 = vadd.f32 %v1861, %v1873
        %v1882 = vadd.f32 %v1862, %v1874
        %v1883 = vadd.f32 %v1863, %v1875
        %v1884 = vadd.f32 %v1864, %v1876
        %v1885 = vadd.f32 %v1865, %v1877
        %v1886 = vadd.f32 %v1866, %v1878
        %1887 = vset.pattern.permute.xlu0 5
        %1888 = vperm.xlu0 %1887, %v1840
        %v1889 = vpop.permute.xlu0 %1888
        %v1891 = vmul.f32 %v1889, %v1739
        %v1892 = vmul.f32 %v1889, %v1740
        %v1893 = vmul.f32 %v1889, %v1741
        %v1894 = vmul.f32 %v1889, %v1742
        %v1895 = vmul.f32 %v1889, %v1743
        %v1896 = vmul.f32 %v1889, %v1744
        %v1897 = vmul.f32 %v1889, %v1745
        %v1898 = vmul.f32 %v1889, %v1746
        %v1899 = vadd.f32 %v1879, %v1891
        %v1900 = vadd.f32 %v1880, %v1892
        %v1901 = vadd.f32 %v1881, %v1893
        %v1902 = vadd.f32 %v1882, %v1894
        %v1903 = vadd.f32 %v1883, %v1895
        %v1904 = vadd.f32 %v1884, %v1896
        %v1905 = vadd.f32 %v1885, %v1897
        %v1906 = vadd.f32 %v1886, %v1898
        %v1907 = vmax.f32 %v1899, 0.0
        %v1908 = vmax.f32 %v1900, 0.0
        %v1909 = vmax.f32 %v1901, 0.0
        %v1910 = vmax.f32 %v1902, 0.0
        %v1911 = vmax.f32 %v1903, 0.0
        %v1912 = vmax.f32 %v1904, 0.0
        %v1913 = vmax.f32 %v1905, 0.0
        %v1914 = vmax.f32 %v1906, 0.0
        %1915 = vst [vmem:[%s450 + $0x80] sm:$0xff] %v1907
        %1916 = vst [vmem:[%s450 + $0x88] sm:$0xff] %v1908
        %1917 = vst [vmem:[%s450 + $0x90] sm:$0xff] %v1909
        %1918 = vst [vmem:[%s450 + $0x98] sm:$0xff] %v1910
        %1919 = vst [vmem:[%s450 + $0xa0] sm:$0xff] %v1911
        %1920 = vst [vmem:[%s450 + $0xa8] sm:$0xff] %v1912
        %1921 = vst [vmem:[%s450 + $0xb0] sm:$0xff] %v1913
        %1922 = vst [vmem:[%s450 + $0xb8] sm:$0xff] %v1914
        %v1923 = vld [vmem:[#allocation5] sm:$0xff]
        %v1924 = vld [vmem:[#allocation2] sm:$0xff]
        %1926 = vset.pattern.permute.xlu0 6
        %1927 = vperm.xlu0 %1926, %v1924
        %v1928 = vpop.permute.xlu0 %1927
        %v1930 = vmul.f32 %v1928, %v1701
        %v1931 = vmul.f32 %v1928, %v1702
        %v1932 = vmul.f32 %v1928, %v1703
        %v1933 = vmul.f32 %v1928, %v1704
        %v1934 = vmul.f32 %v1928, %v1705
        %v1935 = vmul.f32 %v1928, %v1706
        %v1936 = vmul.f32 %v1928, %v1707
        %v1937 = vmul.f32 %v1928, %v1708
        %1939 = vset.pattern.permute.xlu0 2
        %1940 = vperm.xlu0 %1939, %v1923
        %v1941 = vpop.permute.xlu0 %1940
        %v1943 = vadd.f32 %v1941, %v1930
        %v1944 = vadd.f32 %v1941, %v1931
        %v1945 = vadd.f32 %v1941, %v1932
        %v1946 = vadd.f32 %v1941, %v1933
        %v1947 = vadd.f32 %v1941, %v1934
        %v1948 = vadd.f32 %v1941, %v1935
        %v1949 = vadd.f32 %v1941, %v1936
        %v1950 = vadd.f32 %v1941, %v1937
        %1951 = vset.pattern.permute.xlu0 7
        %1952 = vperm.xlu0 %1951, %v1924
        %v1953 = vpop.permute.xlu0 %1952
        %v1955 = vmul.f32 %v1953, %v1720
        %v1956 = vmul.f32 %v1953, %v1721
        %v1957 = vmul.f32 %v1953, %v1722
        %v1958 = vmul.f32 %v1953, %v1723
        %v1959 = vmul.f32 %v1953, %v1724
        %v1960 = vmul.f32 %v1953, %v1725
        %v1961 = vmul.f32 %v1953, %v1726
        %v1962 = vmul.f32 %v1953, %v1727
        %v1963 = vadd.f32 %v1943, %v1955
        %v1964 = vadd.f32 %v1944, %v1956
        %v1965 = vadd.f32 %v1945, %v1957
        %v1966 = vadd.f32 %v1946, %v1958
        %v1967 = vadd.f32 %v1947, %v1959
        %v1968 = vadd.f32 %v1948, %v1960
        %v1969 = vadd.f32 %v1949, %v1961
        %v1970 = vadd.f32 %v1950, %v1962
        %1971 = vset.pattern.permute.xlu0 8
        %1972 = vperm.xlu0 %1971, %v1924
        %v1973 = vpop.permute.xlu0 %1972
        %v1975 = vmul.f32 %v1973, %v1739
        %v1976 = vmul.f32 %v1973, %v1740
        %v1977 = vmul.f32 %v1973, %v1741
        %v1978 = vmul.f32 %v1973, %v1742
        %v1979 = vmul.f32 %v1973, %v1743
        %v1980 = vmul.f32 %v1973, %v1744
        %v1981 = vmul.f32 %v1973, %v1745
        %v1982 = vmul.f32 %v1973, %v1746
        %v1983 = vadd.f32 %v1963, %v1975
        %v1984 = vadd.f32 %v1964, %v1976
        %v1985 = vadd.f32 %v1965, %v1977
        %v1986 = vadd.f32 %v1966, %v1978
        %v1987 = vadd.f32 %v1967, %v1979
        %v1988 = vadd.f32 %v1968, %v1980
        %v1989 = vadd.f32 %v1969, %v1981
        %v1990 = vadd.f32 %v1970, %v1982
        %v1991 = vmax.f32 %v1983, 0.0
        %v1992 = vmax.f32 %v1984, 0.0
        %v1993 = vmax.f32 %v1985, 0.0
        %v1994 = vmax.f32 %v1986, 0.0
        %v1995 = vmax.f32 %v1987, 0.0
        %v1996 = vmax.f32 %v1988, 0.0
        %v1997 = vmax.f32 %v1989, 0.0
        %v1998 = vmax.f32 %v1990, 0.0
        %1999 = vst [vmem:[%s535 + $0x80] sm:$0xff] %v1991
        %2000 = vst [vmem:[%s535 + $0x88] sm:$0xff] %v1992
        %2001 = vst [vmem:[%s535 + $0x90] sm:$0xff] %v1993
        %2002 = vst [vmem:[%s535 + $0x98] sm:$0xff] %v1994
        %2003 = vst [vmem:[%s535 + $0xa0] sm:$0xff] %v1995
        %2004 = vst [vmem:[%s535 + $0xa8] sm:$0xff] %v1996
        %2005 = vst [vmem:[%s535 + $0xb0] sm:$0xff] %v1997
        %2006 = vst [vmem:[%s535 + $0xb8] sm:$0xff] %v1998
        %v2007 = vld [vmem:[#allocation5] sm:$0xff]
        %v2008 = vld [vmem:[#allocation2] sm:$0xff]
        %2010 = vset.pattern.permute.xlu0 9
        %2011 = vperm.xlu0 %2010, %v2008
        %v2012 = vpop.permute.xlu0 %2011
        %v2014 = vmul.f32 %v2012, %v1701
        %v2015 = vmul.f32 %v2012, %v1702
        %v2016 = vmul.f32 %v2012, %v1703
        %v2017 = vmul.f32 %v2012, %v1704
        %v2018 = vmul.f32 %v2012, %v1705
        %v2019 = vmul.f32 %v2012, %v1706
        %v2020 = vmul.f32 %v2012, %v1707
        %v2021 = vmul.f32 %v2012, %v1708
        %2023 = vset.pattern.permute.xlu0 3
        %2024 = vperm.xlu0 %2023, %v2007
        %v2025 = vpop.permute.xlu0 %2024
        %v2027 = vadd.f32 %v2025, %v2014
        %v2028 = vadd.f32 %v2025, %v2015
        %v2029 = vadd.f32 %v2025, %v2016
        %v2030 = vadd.f32 %v2025, %v2017
        %v2031 = vadd.f32 %v2025, %v2018
        %v2032 = vadd.f32 %v2025, %v2019
        %v2033 = vadd.f32 %v2025, %v2020
        %v2034 = vadd.f32 %v2025, %v2021
        %2035 = vset.pattern.permute.xlu0 10
        %2036 = vperm.xlu0 %2035, %v2008
        %v2037 = vpop.permute.xlu0 %2036
        %v2039 = vmul.f32 %v2037, %v1720
        %v2040 = vmul.f32 %v2037, %v1721
        %v2041 = vmul.f32 %v2037, %v1722
        %v2042 = vmul.f32 %v2037, %v1723
        %v2043 = vmul.f32 %v2037, %v1724
        %v2044 = vmul.f32 %v2037, %v1725
        %v2045 = vmul.f32 %v2037, %v1726
        %v2046 = vmul.f32 %v2037, %v1727
        %v2047 = vadd.f32 %v2027, %v2039
        %v2048 = vadd.f32 %v2028, %v2040
        %v2049 = vadd.f32 %v2029, %v2041
        %v2050 = vadd.f32 %v2030, %v2042
        %v2051 = vadd.f32 %v2031, %v2043
        %v2052 = vadd.f32 %v2032, %v2044
        %v2053 = vadd.f32 %v2033, %v2045
        %v2054 = vadd.f32 %v2034, %v2046
        %2055 = vset.pattern.permute.xlu0 11
        %2056 = vperm.xlu0 %2055, %v2008
        %v2057 = vpop.permute.xlu0 %2056
        %v2059 = vmul.f32 %v2057, %v1739
        %v2060 = vmul.f32 %v2057, %v1740
        %v2061 = vmul.f32 %v2057, %v1741
        %v2062 = vmul.f32 %v2057, %v1742
        %v2063 = vmul.f32 %v2057, %v1743
        %v2064 = vmul.f32 %v2057, %v1744
        %v2065 = vmul.f32 %v2057, %v1745
        %v2066 = vmul.f32 %v2057, %v1746
        %v2067 = vadd.f32 %v2047, %v2059
        %v2068 = vadd.f32 %v2048, %v2060
        %v2069 = vadd.f32 %v2049, %v2061
        %v2070 = vadd.f32 %v2050, %v2062
        %v2071 = vadd.f32 %v2051, %v2063
        %v2072 = vadd.f32 %v2052, %v2064
        %v2073 = vadd.f32 %v2053, %v2065
        %v2074 = vadd.f32 %v2054, %v2066
        %v2075 = vmax.f32 %v2067, 0.0
        %v2076 = vmax.f32 %v2068, 0.0
        %v2077 = vmax.f32 %v2069, 0.0
        %v2078 = vmax.f32 %v2070, 0.0
        %v2079 = vmax.f32 %v2071, 0.0
        %v2080 = vmax.f32 %v2072, 0.0
        %v2081 = vmax.f32 %v2073, 0.0
        %v2082 = vmax.f32 %v2074, 0.0
        %2083 = vst [vmem:[%s620 + $0x80] sm:$0xff] %v2075
        %2084 = vst [vmem:[%s620 + $0x88] sm:$0xff] %v2076
        %2085 = vst [vmem:[%s620 + $0x90] sm:$0xff] %v2077
        %2086 = vst [vmem:[%s620 + $0x98] sm:$0xff] %v2078
        %2087 = vst [vmem:[%s620 + $0xa0] sm:$0xff] %v2079
        %2088 = vst [vmem:[%s620 + $0xa8] sm:$0xff] %v2080
        %2089 = vst [vmem:[%s620 + $0xb0] sm:$0xff] %v2081
        %2090 = vst [vmem:[%s620 + $0xb8] sm:$0xff] %v2082
        %v2091 = vld [vmem:[#allocation5] sm:$0xff]
        %v2092 = vld [vmem:[#allocation2] sm:$0xff]
        %2094 = vset.pattern.permute.xlu0 12
        %2095 = vperm.xlu0 %2094, %v2092
        %v2096 = vpop.permute.xlu0 %2095
        %v2098 = vmul.f32 %v2096, %v1701
        %v2099 = vmul.f32 %v2096, %v1702
        %v2100 = vmul.f32 %v2096, %v1703
        %v2101 = vmul.f32 %v2096, %v1704
        %v2102 = vmul.f32 %v2096, %v1705
        %v2103 = vmul.f32 %v2096, %v1706
        %v2104 = vmul.f32 %v2096, %v1707
        %v2105 = vmul.f32 %v2096, %v1708
        %2107 = vset.pattern.permute.xlu0 4
        %2108 = vperm.xlu0 %2107, %v2091
        %v2109 = vpop.permute.xlu0 %2108
        %v2111 = vadd.f32 %v2109, %v2098
        %v2112 = vadd.f32 %v2109, %v2099
        %v2113 = vadd.f32 %v2109, %v2100
        %v2114 = vadd.f32 %v2109, %v2101
        %v2115 = vadd.f32 %v2109, %v2102
        %v2116 = vadd.f32 %v2109, %v2103
        %v2117 = vadd.f32 %v2109, %v2104
        %v2118 = vadd.f32 %v2109, %v2105
        %2119 = vset.pattern.permute.xlu0 13
        %2120 = vperm.xlu0 %2119, %v2092
        %v2121 = vpop.permute.xlu0 %2120
        %v2123 = vmul.f32 %v2121, %v1720
        %v2124 = vmul.f32 %v2121, %v1721
        %v2125 = vmul.f32 %v2121, %v1722
        %v2126 = vmul.f32 %v2121, %v1723
        %v2127 = vmul.f32 %v2121, %v1724
        %v2128 = vmul.f32 %v2121, %v1725
        %v2129 = vmul.f32 %v2121, %v1726
        %v2130 = vmul.f32 %v2121, %v1727
        %v2131 = vadd.f32 %v2111, %v2123
        %v2132 = vadd.f32 %v2112, %v2124
        %v2133 = vadd.f32 %v2113, %v2125
        %v2134 = vadd.f32 %v2114, %v2126
        %v2135 = vadd.f32 %v2115, %v2127
        %v2136 = vadd.f32 %v2116, %v2128
        %v2137 = vadd.f32 %v2117, %v2129
        %v2138 = vadd.f32 %v2118, %v2130
        %2139 = vset.pattern.permute.xlu0 14
        %2140 = vperm.xlu0 %2139, %v2092
        %v2141 = vpop.permute.xlu0 %2140
        %v2143 = vmul.f32 %v2141, %v1739
        %v2144 = vmul.f32 %v2141, %v1740
        %v2145 = vmul.f32 %v2141, %v1741
        %v2146 = vmul.f32 %v2141, %v1742
        %v2147 = vmul.f32 %v2141, %v1743
        %v2148 = vmul.f32 %v2141, %v1744
        %v2149 = vmul.f32 %v2141, %v1745
        %v2150 = vmul.f32 %v2141, %v1746
        %v2151 = vadd.f32 %v2131, %v2143
        %v2152 = vadd.f32 %v2132, %v2144
        %v2153 = vadd.f32 %v2133, %v2145
        %v2154 = vadd.f32 %v2134, %v2146
        %v2155 = vadd.f32 %v2135, %v2147
        %v2156 = vadd.f32 %v2136, %v2148
        %v2157 = vadd.f32 %v2137, %v2149
        %v2158 = vadd.f32 %v2138, %v2150
        %v2159 = vmax.f32 %v2151, 0.0
        %v2160 = vmax.f32 %v2152, 0.0
        %v2161 = vmax.f32 %v2153, 0.0
        %v2162 = vmax.f32 %v2154, 0.0
        %v2163 = vmax.f32 %v2155, 0.0
        %v2164 = vmax.f32 %v2156, 0.0
        %v2165 = vmax.f32 %v2157, 0.0
        %v2166 = vmax.f32 %v2158, 0.0
        %2167 = vst [vmem:[%s705 + $0x80] sm:$0xff] %v2159
        %2168 = vst [vmem:[%s705 + $0x88] sm:$0xff] %v2160
        %2169 = vst [vmem:[%s705 + $0x90] sm:$0xff] %v2161
        %2170 = vst [vmem:[%s705 + $0x98] sm:$0xff] %v2162
        %2171 = vst [vmem:[%s705 + $0xa0] sm:$0xff] %v2163
        %2172 = vst [vmem:[%s705 + $0xa8] sm:$0xff] %v2164
        %2173 = vst [vmem:[%s705 + $0xb0] sm:$0xff] %v2165
        %2174 = vst [vmem:[%s705 + $0xb8] sm:$0xff] %v2166
        %v2175 = vld [vmem:[#allocation5] sm:$0xff]
        %v2176 = vld [vmem:[#allocation2] sm:$0xff]
        %2178 = vset.pattern.permute.xlu0 15
        %2179 = vperm.xlu0 %2178, %v2176
        %v2180 = vpop.permute.xlu0 %2179
        %v2182 = vmul.f32 %v2180, %v1701
        %v2183 = vmul.f32 %v2180, %v1702
        %v2184 = vmul.f32 %v2180, %v1703
        %v2185 = vmul.f32 %v2180, %v1704
        %v2186 = vmul.f32 %v2180, %v1705
        %v2187 = vmul.f32 %v2180, %v1706
        %v2188 = vmul.f32 %v2180, %v1707
        %v2189 = vmul.f32 %v2180, %v1708
        %2191 = vset.pattern.permute.xlu0 5
        %2192 = vperm.xlu0 %2191, %v2175
        %v2193 = vpop.permute.xlu0 %2192
        %v2195 = vadd.f32 %v2193, %v2182
        %v2196 = vadd.f32 %v2193, %v2183
        %v2197 = vadd.f32 %v2193, %v2184
        %v2198 = vadd.f32 %v2193, %v2185
        %v2199 = vadd.f32 %v2193, %v2186
        %v2200 = vadd.f32 %v2193, %v2187
        %v2201 = vadd.f32 %v2193, %v2188
        %v2202 = vadd.f32 %v2193, %v2189
        %2203 = vset.pattern.permute.xlu0 16
        %2204 = vperm.xlu0 %2203, %v2176
        %v2205 = vpop.permute.xlu0 %2204
        %v2207 = vmul.f32 %v2205, %v1720
        %v2208 = vmul.f32 %v2205, %v1721
        %v2209 = vmul.f32 %v2205, %v1722
        %v2210 = vmul.f32 %v2205, %v1723
        %v2211 = vmul.f32 %v2205, %v1724
        %v2212 = vmul.f32 %v2205, %v1725
        %v2213 = vmul.f32 %v2205, %v1726
        %v2214 = vmul.f32 %v2205, %v1727
        %v2215 = vadd.f32 %v2195, %v2207
        %v2216 = vadd.f32 %v2196, %v2208
        %v2217 = vadd.f32 %v2197, %v2209
        %v2218 = vadd.f32 %v2198, %v2210
        %v2219 = vadd.f32 %v2199, %v2211
        %v2220 = vadd.f32 %v2200, %v2212
        %v2221 = vadd.f32 %v2201, %v2213
        %v2222 = vadd.f32 %v2202, %v2214
        %2223 = vset.pattern.permute.xlu0 17
        %2224 = vperm.xlu0 %2223, %v2176
        %v2225 = vpop.permute.xlu0 %2224
        %v2227 = vmul.f32 %v2225, %v1739
        %v2228 = vmul.f32 %v2225, %v1740
        %v2229 = vmul.f32 %v2225, %v1741
        %v2230 = vmul.f32 %v2225, %v1742
        %v2231 = vmul.f32 %v2225, %v1743
        %v2232 = vmul.f32 %v2225, %v1744
        %v2233 = vmul.f32 %v2225, %v1745
        %v2234 = vmul.f32 %v2225, %v1746
        %v2235 = vadd.f32 %v2215, %v2227
        %v2236 = vadd.f32 %v2216, %v2228
        %v2237 = vadd.f32 %v2217, %v2229
        %v2238 = vadd.f32 %v2218, %v2230
        %v2239 = vadd.f32 %v2219, %v2231
        %v2240 = vadd.f32 %v2220, %v2232
        %v2241 = vadd.f32 %v2221, %v2233
        %v2242 = vadd.f32 %v2222, %v2234
        %v2243 = vmax.f32 %v2235, 0.0
        %v2244 = vmax.f32 %v2236, 0.0
        %v2245 = vmax.f32 %v2237, 0.0
        %v2246 = vmax.f32 %v2238, 0.0
        %v2247 = vmax.f32 %v2239, 0.0
        %v2248 = vmax.f32 %v2240, 0.0
        %v2249 = vmax.f32 %v2241, 0.0
        %v2250 = vmax.f32 %v2242, 0.0
        %2251 = vst [vmem:[%s790 + $0x80] sm:$0xff] %v2243
        %2252 = vst [vmem:[%s790 + $0x88] sm:$0xff] %v2244
        %2253 = vst [vmem:[%s790 + $0x90] sm:$0xff] %v2245
        %2254 = vst [vmem:[%s790 + $0x98] sm:$0xff] %v2246
        %2255 = vst [vmem:[%s790 + $0xa0] sm:$0xff] %v2247
        %2256 = vst [vmem:[%s790 + $0xa8] sm:$0xff] %v2248
        %2257 = vst [vmem:[%s790 + $0xb0] sm:$0xff] %v2249
        %2258 = vst [vmem:[%s790 + $0xb8] sm:$0xff] %v2250
        %v2259 = vld [vmem:[#allocation5] sm:$0xff]
        %v2260 = vld [vmem:[#allocation2] sm:$0xff]
        %2262 = vset.pattern.permute.xlu0 18
        %2263 = vperm.xlu0 %2262, %v2260
        %v2264 = vpop.permute.xlu0 %2263
        %v2266 = vmul.f32 %v2264, %v1701
        %v2267 = vmul.f32 %v2264, %v1702
        %v2268 = vmul.f32 %v2264, %v1703
        %v2269 = vmul.f32 %v2264, %v1704
        %v2270 = vmul.f32 %v2264, %v1705
        %v2271 = vmul.f32 %v2264, %v1706
        %v2272 = vmul.f32 %v2264, %v1707
        %v2273 = vmul.f32 %v2264, %v1708
        %2275 = vset.pattern.permute.xlu0 6
        %2276 = vperm.xlu0 %2275, %v2259
        %v2277 = vpop.permute.xlu0 %2276
        %v2279 = vadd.f32 %v2277, %v2266
        %v2280 = vadd.f32 %v2277, %v2267
        %v2281 = vadd.f32 %v2277, %v2268
        %v2282 = vadd.f32 %v2277, %v2269
        %v2283 = vadd.f32 %v2277, %v2270
        %v2284 = vadd.f32 %v2277, %v2271
        %v2285 = vadd.f32 %v2277, %v2272
        %v2286 = vadd.f32 %v2277, %v2273
        %2287 = vset.pattern.permute.xlu0 19
        %2288 = vperm.xlu0 %2287, %v2260
        %v2289 = vpop.permute.xlu0 %2288
        %v2291 = vmul.f32 %v2289, %v1720
        %v2292 = vmul.f32 %v2289, %v1721
        %v2293 = vmul.f32 %v2289, %v1722
        %v2294 = vmul.f32 %v2289, %v1723
        %v2295 = vmul.f32 %v2289, %v1724
        %v2296 = vmul.f32 %v2289, %v1725
        %v2297 = vmul.f32 %v2289, %v1726
        %v2298 = vmul.f32 %v2289, %v1727
        %v2299 = vadd.f32 %v2279, %v2291
        %v2300 = vadd.f32 %v2280, %v2292
        %v2301 = vadd.f32 %v2281, %v2293
        %v2302 = vadd.f32 %v2282, %v2294
        %v2303 = vadd.f32 %v2283, %v2295
        %v2304 = vadd.f32 %v2284, %v2296
        %v2305 = vadd.f32 %v2285, %v2297
        %v2306 = vadd.f32 %v2286, %v2298
        %2307 = vset.pattern.permute.xlu0 20
        %2308 = vperm.xlu0 %2307, %v2260
        %v2309 = vpop.permute.xlu0 %2308
        %v2311 = vmul.f32 %v2309, %v1739
        %v2312 = vmul.f32 %v2309, %v1740
        %v2313 = vmul.f32 %v2309, %v1741
        %v2314 = vmul.f32 %v2309, %v1742
        %v2315 = vmul.f32 %v2309, %v1743
        %v2316 = vmul.f32 %v2309, %v1744
        %v2317 = vmul.f32 %v2309, %v1745
        %v2318 = vmul.f32 %v2309, %v1746
        %v2319 = vadd.f32 %v2299, %v2311
        %v2320 = vadd.f32 %v2300, %v2312
        %v2321 = vadd.f32 %v2301, %v2313
        %v2322 = vadd.f32 %v2302, %v2314
        %v2323 = vadd.f32 %v2303, %v2315
        %v2324 = vadd.f32 %v2304, %v2316
        %v2325 = vadd.f32 %v2305, %v2317
        %v2326 = vadd.f32 %v2306, %v2318
        %v2327 = vmax.f32 %v2319, 0.0
        %v2328 = vmax.f32 %v2320, 0.0
        %v2329 = vmax.f32 %v2321, 0.0
        %v2330 = vmax.f32 %v2322, 0.0
        %v2331 = vmax.f32 %v2323, 0.0
        %v2332 = vmax.f32 %v2324, 0.0
        %v2333 = vmax.f32 %v2325, 0.0
        %v2334 = vmax.f32 %v2326, 0.0
        %2335 = vst [vmem:[%s875 + $0x80] sm:$0xff] %v2327
        %2336 = vst [vmem:[%s875 + $0x88] sm:$0xff] %v2328
        %2337 = vst [vmem:[%s875 + $0x90] sm:$0xff] %v2329
        %2338 = vst [vmem:[%s875 + $0x98] sm:$0xff] %v2330
        %2339 = vst [vmem:[%s875 + $0xa0] sm:$0xff] %v2331
        %2340 = vst [vmem:[%s875 + $0xa8] sm:$0xff] %v2332
        %2341 = vst [vmem:[%s875 + $0xb0] sm:$0xff] %v2333
        %2342 = vst [vmem:[%s875 + $0xb8] sm:$0xff] %v2334
        %v2343 = vld [vmem:[#allocation5] sm:$0xff]
        %v2344 = vld [vmem:[#allocation2] sm:$0xff]
        %2346 = vset.pattern.permute.xlu0 21
        %2347 = vperm.xlu0 %2346, %v2344
        %v2348 = vpop.permute.xlu0 %2347
        %v2350 = vmul.f32 %v2348, %v1701
        %v2351 = vmul.f32 %v2348, %v1702
        %v2352 = vmul.f32 %v2348, %v1703
        %v2353 = vmul.f32 %v2348, %v1704
        %v2354 = vmul.f32 %v2348, %v1705
        %v2355 = vmul.f32 %v2348, %v1706
        %v2356 = vmul.f32 %v2348, %v1707
        %v2357 = vmul.f32 %v2348, %v1708
        %2359 = vset.pattern.permute.xlu0 7
        %2360 = vperm.xlu0 %2359, %v2343
        %v2361 = vpop.permute.xlu0 %2360
        %v2363 = vadd.f32 %v2361, %v2350
        %v2364 = vadd.f32 %v2361, %v2351
        %v2365 = vadd.f32 %v2361, %v2352
        %v2366 = vadd.f32 %v2361, %v2353
        %v2367 = vadd.f32 %v2361, %v2354
        %v2368 = vadd.f32 %v2361, %v2355
        %v2369 = vadd.f32 %v2361, %v2356
        %v2370 = vadd.f32 %v2361, %v2357
        %2371 = vset.pattern.permute.xlu0 22
        %2372 = vperm.xlu0 %2371, %v2344
        %v2373 = vpop.permute.xlu0 %2372
        %v2375 = vmul.f32 %v2373, %v1720
        %v2376 = vmul.f32 %v2373, %v1721
        %v2377 = vmul.f32 %v2373, %v1722
        %v2378 = vmul.f32 %v2373, %v1723
        %v2379 = vmul.f32 %v2373, %v1724
        %v2380 = vmul.f32 %v2373, %v1725
        %v2381 = vmul.f32 %v2373, %v1726
        %v2382 = vmul.f32 %v2373, %v1727
        %v2383 = vadd.f32 %v2363, %v2375
        %v2384 = vadd.f32 %v2364, %v2376
        %v2385 = vadd.f32 %v2365, %v2377
        %v2386 = vadd.f32 %v2366, %v2378
        %v2387 = vadd.f32 %v2367, %v2379
        %v2388 = vadd.f32 %v2368, %v2380
        %v2389 = vadd.f32 %v2369, %v2381
        %v2390 = vadd.f32 %v2370, %v2382
        %2391 = vset.pattern.permute.xlu0 23
        %2392 = vperm.xlu0 %2391, %v2344
        %v2393 = vpop.permute.xlu0 %2392
        %v2395 = vmul.f32 %v2393, %v1739
        %v2396 = vmul.f32 %v2393, %v1740
        %v2397 = vmul.f32 %v2393, %v1741
        %v2398 = vmul.f32 %v2393, %v1742
        %v2399 = vmul.f32 %v2393, %v1743
        %v2400 = vmul.f32 %v2393, %v1744
        %v2401 = vmul.f32 %v2393, %v1745
        %v2402 = vmul.f32 %v2393, %v1746
        %v2403 = vadd.f32 %v2383, %v2395
        %v2404 = vadd.f32 %v2384, %v2396
        %v2405 = vadd.f32 %v2385, %v2397
        %v2406 = vadd.f32 %v2386, %v2398
        %v2407 = vadd.f32 %v2387, %v2399
        %v2408 = vadd.f32 %v2388, %v2400
        %v2409 = vadd.f32 %v2389, %v2401
        %v2410 = vadd.f32 %v2390, %v2402
        %v2411 = vmax.f32 %v2403, 0.0
        %v2412 = vmax.f32 %v2404, 0.0
        %v2413 = vmax.f32 %v2405, 0.0
        %v2414 = vmax.f32 %v2406, 0.0
        %v2415 = vmax.f32 %v2407, 0.0
        %v2416 = vmax.f32 %v2408, 0.0
        %v2417 = vmax.f32 %v2409, 0.0
        %v2418 = vmax.f32 %v2410, 0.0
        %2419 = vst [vmem:[%s960 + $0x80] sm:$0xff] %v2411
        %2420 = vst [vmem:[%s960 + $0x88] sm:$0xff] %v2412
        %2421 = vst [vmem:[%s960 + $0x90] sm:$0xff] %v2413
        %2422 = vst [vmem:[%s960 + $0x98] sm:$0xff] %v2414
        %2423 = vst [vmem:[%s960 + $0xa0] sm:$0xff] %v2415
        %2424 = vst [vmem:[%s960 + $0xa8] sm:$0xff] %v2416
        %2425 = vst [vmem:[%s960 + $0xb0] sm:$0xff] %v2417
        %2426 = vst [vmem:[%s960 + $0xb8] sm:$0xff] %v2418
        %s2427 = scalar_lea.vmem %s227, 96
        %v2428 = vld [vmem:[%s2427] ss:$4 sm:$0xff]
        %v2430 = vperm.slane %v2428, 0
        %v2431 = vperm.slane %v2428, 1
        %v2432 = vperm.slane %v2428, 2
        %v2433 = vperm.slane %v2428, 3
        %v2434 = vperm.slane %v2428, 4
        %v2435 = vperm.slane %v2428, 5
        %v2436 = vperm.slane %v2428, 6
        %v2437 = vperm.slane %v2428, 7
        %s2446 = scalar_lea.vmem %s227, 97
        %v2447 = vld [vmem:[%s2446] ss:$4 sm:$0xff]
        %v2449 = vperm.slane %v2447, 0
        %v2450 = vperm.slane %v2447, 1
        %v2451 = vperm.slane %v2447, 2
        %v2452 = vperm.slane %v2447, 3
        %v2453 = vperm.slane %v2447, 4
        %v2454 = vperm.slane %v2447, 5
        %v2455 = vperm.slane %v2447, 6
        %v2456 = vperm.slane %v2447, 7
        %s2465 = scalar_lea.vmem %s227, 98
        %v2466 = vld [vmem:[%s2465] ss:$4 sm:$0xff]
        %v2468 = vperm.slane %v2466, 0
        %v2469 = vperm.slane %v2466, 1
        %v2470 = vperm.slane %v2466, 2
        %v2471 = vperm.slane %v2466, 3
        %v2472 = vperm.slane %v2466, 4
        %v2473 = vperm.slane %v2466, 5
        %v2474 = vperm.slane %v2466, 6
        %v2475 = vperm.slane %v2466, 7
        %v2484 = vld [vmem:[#allocation5] sm:$0xff]
        %v2485 = vld [vmem:[#allocation2] sm:$0xff]
        %2487 = vset.pattern.permute.xlu0 0
        %2488 = vperm.xlu0 %2487, %v2485
        %v2489 = vpop.permute.xlu0 %2488
        %v2491 = vmul.f32 %v2489, %v2430
        %v2492 = vmul.f32 %v2489, %v2431
        %v2493 = vmul.f32 %v2489, %v2432
        %v2494 = vmul.f32 %v2489, %v2433
        %v2495 = vmul.f32 %v2489, %v2434
        %v2496 = vmul.f32 %v2489, %v2435
        %v2497 = vmul.f32 %v2489, %v2436
        %v2498 = vmul.f32 %v2489, %v2437
        %2500 = vset.pattern.permute.xlu0 0
        %2501 = vperm.xlu0 %2500, %v2484
        %v2502 = vpop.permute.xlu0 %2501
        %v2504 = vadd.f32 %v2502, %v2491
        %v2505 = vadd.f32 %v2502, %v2492
        %v2506 = vadd.f32 %v2502, %v2493
        %v2507 = vadd.f32 %v2502, %v2494
        %v2508 = vadd.f32 %v2502, %v2495
        %v2509 = vadd.f32 %v2502, %v2496
        %v2510 = vadd.f32 %v2502, %v2497
        %v2511 = vadd.f32 %v2502, %v2498
        %2512 = vset.pattern.permute.xlu0 1
        %2513 = vperm.xlu0 %2512, %v2485
        %v2514 = vpop.permute.xlu0 %2513
        %v2516 = vmul.f32 %v2514, %v2449
        %v2517 = vmul.f32 %v2514, %v2450
        %v2518 = vmul.f32 %v2514, %v2451
        %v2519 = vmul.f32 %v2514, %v2452
        %v2520 = vmul.f32 %v2514, %v2453
        %v2521 = vmul.f32 %v2514, %v2454
        %v2522 = vmul.f32 %v2514, %v2455
        %v2523 = vmul.f32 %v2514, %v2456
        %v2524 = vadd.f32 %v2504, %v2516
        %v2525 = vadd.f32 %v2505, %v2517
        %v2526 = vadd.f32 %v2506, %v2518
        %v2527 = vadd.f32 %v2507, %v2519
        %v2528 = vadd.f32 %v2508, %v2520
        %v2529 = vadd.f32 %v2509, %v2521
        %v2530 = vadd.f32 %v2510, %v2522
        %v2531 = vadd.f32 %v2511, %v2523
        %2532 = vset.pattern.permute.xlu0 2
        %2533 = vperm.xlu0 %2532, %v2485
        %v2534 = vpop.permute.xlu0 %2533
        %v2536 = vmul.f32 %v2534, %v2468
        %v2537 = vmul.f32 %v2534, %v2469
        %v2538 = vmul.f32 %v2534, %v2470
        %v2539 = vmul.f32 %v2534, %v2471
        %v2540 = vmul.f32 %v2534, %v2472
        %v2541 = vmul.f32 %v2534, %v2473
        %v2542 = vmul.f32 %v2534, %v2474
        %v2543 = vmul.f32 %v2534, %v2475
        %v2544 = vadd.f32 %v2524, %v2536
        %v2545 = vadd.f32 %v2525, %v2537
        %v2546 = vadd.f32 %v2526, %v2538
        %v2547 = vadd.f32 %v2527, %v2539
        %v2548 = vadd.f32 %v2528, %v2540
        %v2549 = vadd.f32 %v2529, %v2541
        %v2550 = vadd.f32 %v2530, %v2542
        %v2551 = vadd.f32 %v2531, %v2543
        %v2552 = vmax.f32 %v2544, 0.0
        %v2553 = vmax.f32 %v2545, 0.0
        %v2554 = vmax.f32 %v2546, 0.0
        %v2555 = vmax.f32 %v2547, 0.0
        %v2556 = vmax.f32 %v2548, 0.0
        %v2557 = vmax.f32 %v2549, 0.0
        %v2558 = vmax.f32 %v2550, 0.0
        %v2559 = vmax.f32 %v2551, 0.0
        %2560 = vst [vmem:[%s218 + $0xc0] sm:$0xff] %v2552
        %2561 = vst [vmem:[%s218 + $0xc8] sm:$0xff] %v2553
        %2562 = vst [vmem:[%s218 + $0xd0] sm:$0xff] %v2554
        %2563 = vst [vmem:[%s218 + $0xd8] sm:$0xff] %v2555
        %2564 = vst [vmem:[%s218 + $0xe0] sm:$0xff] %v2556
        %2565 = vst [vmem:[%s218 + $0xe8] sm:$0xff] %v2557
        %2566 = vst [vmem:[%s218 + $0xf0] sm:$0xff] %v2558
        %2567 = vst [vmem:[%s218 + $0xf8] sm:$0xff] %v2559
        %v2568 = vld [vmem:[#allocation5] sm:$0xff]
        %v2569 = vld [vmem:[#allocation2] sm:$0xff]
        %2571 = vset.pattern.permute.xlu0 3
        %2572 = vperm.xlu0 %2571, %v2569
        %v2573 = vpop.permute.xlu0 %2572
        %v2575 = vmul.f32 %v2573, %v2430
        %v2576 = vmul.f32 %v2573, %v2431
        %v2577 = vmul.f32 %v2573, %v2432
        %v2578 = vmul.f32 %v2573, %v2433
        %v2579 = vmul.f32 %v2573, %v2434
        %v2580 = vmul.f32 %v2573, %v2435
        %v2581 = vmul.f32 %v2573, %v2436
        %v2582 = vmul.f32 %v2573, %v2437
        %2584 = vset.pattern.permute.xlu0 1
        %2585 = vperm.xlu0 %2584, %v2568
        %v2586 = vpop.permute.xlu0 %2585
        %v2588 = vadd.f32 %v2586, %v2575
        %v2589 = vadd.f32 %v2586, %v2576
        %v2590 = vadd.f32 %v2586, %v2577
        %v2591 = vadd.f32 %v2586, %v2578
        %v2592 = vadd.f32 %v2586, %v2579
        %v2593 = vadd.f32 %v2586, %v2580
        %v2594 = vadd.f32 %v2586, %v2581
        %v2595 = vadd.f32 %v2586, %v2582
        %2596 = vset.pattern.permute.xlu0 4
        %2597 = vperm.xlu0 %2596, %v2569
        %v2598 = vpop.permute.xlu0 %2597
        %v2600 = vmul.f32 %v2598, %v2449
        %v2601 = vmul.f32 %v2598, %v2450
        %v2602 = vmul.f32 %v2598, %v2451
        %v2603 = vmul.f32 %v2598, %v2452
        %v2604 = vmul.f32 %v2598, %v2453
        %v2605 = vmul.f32 %v2598, %v2454
        %v2606 = vmul.f32 %v2598, %v2455
        %v2607 = vmul.f32 %v2598, %v2456
        %v2608 = vadd.f32 %v2588, %v2600
        %v2609 = vadd.f32 %v2589, %v2601
        %v2610 = vadd.f32 %v2590, %v2602
        %v2611 = vadd.f32 %v2591, %v2603
        %v2612 = vadd.f32 %v2592, %v2604
        %v2613 = vadd.f32 %v2593, %v2605
        %v2614 = vadd.f32 %v2594, %v2606
        %v2615 = vadd.f32 %v2595, %v2607
        %2616 = vset.pattern.permute.xlu0 5
        %2617 = vperm.xlu0 %2616, %v2569
        %v2618 = vpop.permute.xlu0 %2617
        %v2620 = vmul.f32 %v2618, %v2468
        %v2621 = vmul.f32 %v2618, %v2469
        %v2622 = vmul.f32 %v2618, %v2470
        %v2623 = vmul.f32 %v2618, %v2471
        %v2624 = vmul.f32 %v2618, %v2472
        %v2625 = vmul.f32 %v2618, %v2473
        %v2626 = vmul.f32 %v2618, %v2474
        %v2627 = vmul.f32 %v2618, %v2475
        %v2628 = vadd.f32 %v2608, %v2620
        %v2629 = vadd.f32 %v2609, %v2621
        %v2630 = vadd.f32 %v2610, %v2622
        %v2631 = vadd.f32 %v2611, %v2623
        %v2632 = vadd.f32 %v2612, %v2624
        %v2633 = vadd.f32 %v2613, %v2625
        %v2634 = vadd.f32 %v2614, %v2626
        %v2635 = vadd.f32 %v2615, %v2627
        %v2636 = vmax.f32 %v2628, 0.0
        %v2637 = vmax.f32 %v2629, 0.0
        %v2638 = vmax.f32 %v2630, 0.0
        %v2639 = vmax.f32 %v2631, 0.0
        %v2640 = vmax.f32 %v2632, 0.0
        %v2641 = vmax.f32 %v2633, 0.0
        %v2642 = vmax.f32 %v2634, 0.0
        %v2643 = vmax.f32 %v2635, 0.0
        %2644 = vst [vmem:[%s450 + $0xc0] sm:$0xff] %v2636
        %2645 = vst [vmem:[%s450 + $0xc8] sm:$0xff] %v2637
        %2646 = vst [vmem:[%s450 + $0xd0] sm:$0xff] %v2638
        %2647 = vst [vmem:[%s450 + $0xd8] sm:$0xff] %v2639
        %2648 = vst [vmem:[%s450 + $0xe0] sm:$0xff] %v2640
        %2649 = vst [vmem:[%s450 + $0xe8] sm:$0xff] %v2641
        %2650 = vst [vmem:[%s450 + $0xf0] sm:$0xff] %v2642
        %2651 = vst [vmem:[%s450 + $0xf8] sm:$0xff] %v2643
        %v2652 = vld [vmem:[#allocation5] sm:$0xff]
        %v2653 = vld [vmem:[#allocation2] sm:$0xff]
        %2655 = vset.pattern.permute.xlu0 6
        %2656 = vperm.xlu0 %2655, %v2653
        %v2657 = vpop.permute.xlu0 %2656
        %v2659 = vmul.f32 %v2657, %v2430
        %v2660 = vmul.f32 %v2657, %v2431
        %v2661 = vmul.f32 %v2657, %v2432
        %v2662 = vmul.f32 %v2657, %v2433
        %v2663 = vmul.f32 %v2657, %v2434
        %v2664 = vmul.f32 %v2657, %v2435
        %v2665 = vmul.f32 %v2657, %v2436
        %v2666 = vmul.f32 %v2657, %v2437
        %2668 = vset.pattern.permute.xlu0 2
        %2669 = vperm.xlu0 %2668, %v2652
        %v2670 = vpop.permute.xlu0 %2669
        %v2672 = vadd.f32 %v2670, %v2659
        %v2673 = vadd.f32 %v2670, %v2660
        %v2674 = vadd.f32 %v2670, %v2661
        %v2675 = vadd.f32 %v2670, %v2662
        %v2676 = vadd.f32 %v2670, %v2663
        %v2677 = vadd.f32 %v2670, %v2664
        %v2678 = vadd.f32 %v2670, %v2665
        %v2679 = vadd.f32 %v2670, %v2666
        %2680 = vset.pattern.permute.xlu0 7
        %2681 = vperm.xlu0 %2680, %v2653
        %v2682 = vpop.permute.xlu0 %2681
        %v2684 = vmul.f32 %v2682, %v2449
        %v2685 = vmul.f32 %v2682, %v2450
        %v2686 = vmul.f32 %v2682, %v2451
        %v2687 = vmul.f32 %v2682, %v2452
        %v2688 = vmul.f32 %v2682, %v2453
        %v2689 = vmul.f32 %v2682, %v2454
        %v2690 = vmul.f32 %v2682, %v2455
        %v2691 = vmul.f32 %v2682, %v2456
        %v2692 = vadd.f32 %v2672, %v2684
        %v2693 = vadd.f32 %v2673, %v2685
        %v2694 = vadd.f32 %v2674, %v2686
        %v2695 = vadd.f32 %v2675, %v2687
        %v2696 = vadd.f32 %v2676, %v2688
        %v2697 = vadd.f32 %v2677, %v2689
        %v2698 = vadd.f32 %v2678, %v2690
        %v2699 = vadd.f32 %v2679, %v2691
        %2700 = vset.pattern.permute.xlu0 8
        %2701 = vperm.xlu0 %2700, %v2653
        %v2702 = vpop.permute.xlu0 %2701
        %v2704 = vmul.f32 %v2702, %v2468
        %v2705 = vmul.f32 %v2702, %v2469
        %v2706 = vmul.f32 %v2702, %v2470
        %v2707 = vmul.f32 %v2702, %v2471
        %v2708 = vmul.f32 %v2702, %v2472
        %v2709 = vmul.f32 %v2702, %v2473
        %v2710 = vmul.f32 %v2702, %v2474
        %v2711 = vmul.f32 %v2702, %v2475
        %v2712 = vadd.f32 %v2692, %v2704
        %v2713 = vadd.f32 %v2693, %v2705
        %v2714 = vadd.f32 %v2694, %v2706
        %v2715 = vadd.f32 %v2695, %v2707
        %v2716 = vadd.f32 %v2696, %v2708
        %v2717 = vadd.f32 %v2697, %v2709
        %v2718 = vadd.f32 %v2698, %v2710
        %v2719 = vadd.f32 %v2699, %v2711
        %v2720 = vmax.f32 %v2712, 0.0
        %v2721 = vmax.f32 %v2713, 0.0
        %v2722 = vmax.f32 %v2714, 0.0
        %v2723 = vmax.f32 %v2715, 0.0
        %v2724 = vmax.f32 %v2716, 0.0
        %v2725 = vmax.f32 %v2717, 0.0
        %v2726 = vmax.f32 %v2718, 0.0
        %v2727 = vmax.f32 %v2719, 0.0
        %2728 = vst [vmem:[%s535 + $0xc0] sm:$0xff] %v2720
        %2729 = vst [vmem:[%s535 + $0xc8] sm:$0xff] %v2721
        %2730 = vst [vmem:[%s535 + $0xd0] sm:$0xff] %v2722
        %2731 = vst [vmem:[%s535 + $0xd8] sm:$0xff] %v2723
        %2732 = vst [vmem:[%s535 + $0xe0] sm:$0xff] %v2724
        %2733 = vst [vmem:[%s535 + $0xe8] sm:$0xff] %v2725
        %2734 = vst [vmem:[%s535 + $0xf0] sm:$0xff] %v2726
        %2735 = vst [vmem:[%s535 + $0xf8] sm:$0xff] %v2727
        %v2736 = vld [vmem:[#allocation5] sm:$0xff]
        %v2737 = vld [vmem:[#allocation2] sm:$0xff]
        %2739 = vset.pattern.permute.xlu0 9
        %2740 = vperm.xlu0 %2739, %v2737
        %v2741 = vpop.permute.xlu0 %2740
        %v2743 = vmul.f32 %v2741, %v2430
        %v2744 = vmul.f32 %v2741, %v2431
        %v2745 = vmul.f32 %v2741, %v2432
        %v2746 = vmul.f32 %v2741, %v2433
        %v2747 = vmul.f32 %v2741, %v2434
        %v2748 = vmul.f32 %v2741, %v2435
        %v2749 = vmul.f32 %v2741, %v2436
        %v2750 = vmul.f32 %v2741, %v2437
        %2752 = vset.pattern.permute.xlu0 3
        %2753 = vperm.xlu0 %2752, %v2736
        %v2754 = vpop.permute.xlu0 %2753
        %v2756 = vadd.f32 %v2754, %v2743
        %v2757 = vadd.f32 %v2754, %v2744
        %v2758 = vadd.f32 %v2754, %v2745
        %v2759 = vadd.f32 %v2754, %v2746
        %v2760 = vadd.f32 %v2754, %v2747
        %v2761 = vadd.f32 %v2754, %v2748
        %v2762 = vadd.f32 %v2754, %v2749
        %v2763 = vadd.f32 %v2754, %v2750
        %2764 = vset.pattern.permute.xlu0 10
        %2765 = vperm.xlu0 %2764, %v2737
        %v2766 = vpop.permute.xlu0 %2765
        %v2768 = vmul.f32 %v2766, %v2449
        %v2769 = vmul.f32 %v2766, %v2450
        %v2770 = vmul.f32 %v2766, %v2451
        %v2771 = vmul.f32 %v2766, %v2452
        %v2772 = vmul.f32 %v2766, %v2453
        %v2773 = vmul.f32 %v2766, %v2454
        %v2774 = vmul.f32 %v2766, %v2455
        %v2775 = vmul.f32 %v2766, %v2456
        %v2776 = vadd.f32 %v2756, %v2768
        %v2777 = vadd.f32 %v2757, %v2769
        %v2778 = vadd.f32 %v2758, %v2770
        %v2779 = vadd.f32 %v2759, %v2771
        %v2780 = vadd.f32 %v2760, %v2772
        %v2781 = vadd.f32 %v2761, %v2773
        %v2782 = vadd.f32 %v2762, %v2774
        %v2783 = vadd.f32 %v2763, %v2775
        %2784 = vset.pattern.permute.xlu0 11
        %2785 = vperm.xlu0 %2784, %v2737
        %v2786 = vpop.permute.xlu0 %2785
        %v2788 = vmul.f32 %v2786, %v2468
        %v2789 = vmul.f32 %v2786, %v2469
        %v2790 = vmul.f32 %v2786, %v2470
        %v2791 = vmul.f32 %v2786, %v2471
        %v2792 = vmul.f32 %v2786, %v2472
        %v2793 = vmul.f32 %v2786, %v2473
        %v2794 = vmul.f32 %v2786, %v2474
        %v2795 = vmul.f32 %v2786, %v2475
        %v2796 = vadd.f32 %v2776, %v2788
        %v2797 = vadd.f32 %v2777, %v2789
        %v2798 = vadd.f32 %v2778, %v2790
        %v2799 = vadd.f32 %v2779, %v2791
        %v2800 = vadd.f32 %v2780, %v2792
        %v2801 = vadd.f32 %v2781, %v2793
        %v2802 = vadd.f32 %v2782, %v2794
        %v2803 = vadd.f32 %v2783, %v2795
        %v2804 = vmax.f32 %v2796, 0.0
        %v2805 = vmax.f32 %v2797, 0.0
        %v2806 = vmax.f32 %v2798, 0.0
        %v2807 = vmax.f32 %v2799, 0.0
        %v2808 = vmax.f32 %v2800, 0.0
        %v2809 = vmax.f32 %v2801, 0.0
        %v2810 = vmax.f32 %v2802, 0.0
        %v2811 = vmax.f32 %v2803, 0.0
        %2812 = vst [vmem:[%s620 + $0xc0] sm:$0xff] %v2804
        %2813 = vst [vmem:[%s620 + $0xc8] sm:$0xff] %v2805
        %2814 = vst [vmem:[%s620 + $0xd0] sm:$0xff] %v2806
        %2815 = vst [vmem:[%s620 + $0xd8] sm:$0xff] %v2807
        %2816 = vst [vmem:[%s620 + $0xe0] sm:$0xff] %v2808
        %2817 = vst [vmem:[%s620 + $0xe8] sm:$0xff] %v2809
        %2818 = vst [vmem:[%s620 + $0xf0] sm:$0xff] %v2810
        %2819 = vst [vmem:[%s620 + $0xf8] sm:$0xff] %v2811
        %v2820 = vld [vmem:[#allocation5] sm:$0xff]
        %v2821 = vld [vmem:[#allocation2] sm:$0xff]
        %2823 = vset.pattern.permute.xlu0 12
        %2824 = vperm.xlu0 %2823, %v2821
        %v2825 = vpop.permute.xlu0 %2824
        %v2827 = vmul.f32 %v2825, %v2430
        %v2828 = vmul.f32 %v2825, %v2431
        %v2829 = vmul.f32 %v2825, %v2432
        %v2830 = vmul.f32 %v2825, %v2433
        %v2831 = vmul.f32 %v2825, %v2434
        %v2832 = vmul.f32 %v2825, %v2435
        %v2833 = vmul.f32 %v2825, %v2436
        %v2834 = vmul.f32 %v2825, %v2437
        %2836 = vset.pattern.permute.xlu0 4
        %2837 = vperm.xlu0 %2836, %v2820
        %v2838 = vpop.permute.xlu0 %2837
        %v2840 = vadd.f32 %v2838, %v2827
        %v2841 = vadd.f32 %v2838, %v2828
        %v2842 = vadd.f32 %v2838, %v2829
        %v2843 = vadd.f32 %v2838, %v2830
        %v2844 = vadd.f32 %v2838, %v2831
        %v2845 = vadd.f32 %v2838, %v2832
        %v2846 = vadd.f32 %v2838, %v2833
        %v2847 = vadd.f32 %v2838, %v2834
        %2848 = vset.pattern.permute.xlu0 13
        %2849 = vperm.xlu0 %2848, %v2821
        %v2850 = vpop.permute.xlu0 %2849
        %v2852 = vmul.f32 %v2850, %v2449
        %v2853 = vmul.f32 %v2850, %v2450
        %v2854 = vmul.f32 %v2850, %v2451
        %v2855 = vmul.f32 %v2850, %v2452
        %v2856 = vmul.f32 %v2850, %v2453
        %v2857 = vmul.f32 %v2850, %v2454
        %v2858 = vmul.f32 %v2850, %v2455
        %v2859 = vmul.f32 %v2850, %v2456
        %v2860 = vadd.f32 %v2840, %v2852
        %v2861 = vadd.f32 %v2841, %v2853
        %v2862 = vadd.f32 %v2842, %v2854
        %v2863 = vadd.f32 %v2843, %v2855
        %v2864 = vadd.f32 %v2844, %v2856
        %v2865 = vadd.f32 %v2845, %v2857
        %v2866 = vadd.f32 %v2846, %v2858
        %v2867 = vadd.f32 %v2847, %v2859
        %2868 = vset.pattern.permute.xlu0 14
        %2869 = vperm.xlu0 %2868, %v2821
        %v2870 = vpop.permute.xlu0 %2869
        %v2872 = vmul.f32 %v2870, %v2468
        %v2873 = vmul.f32 %v2870, %v2469
        %v2874 = vmul.f32 %v2870, %v2470
        %v2875 = vmul.f32 %v2870, %v2471
        %v2876 = vmul.f32 %v2870, %v2472
        %v2877 = vmul.f32 %v2870, %v2473
        %v2878 = vmul.f32 %v2870, %v2474
        %v2879 = vmul.f32 %v2870, %v2475
        %v2880 = vadd.f32 %v2860, %v2872
        %v2881 = vadd.f32 %v2861, %v2873
        %v2882 = vadd.f32 %v2862, %v2874
        %v2883 = vadd.f32 %v2863, %v2875
        %v2884 = vadd.f32 %v2864, %v2876
        %v2885 = vadd.f32 %v2865, %v2877
        %v2886 = vadd.f32 %v2866, %v2878
        %v2887 = vadd.f32 %v2867, %v2879
        %v2888 = vmax.f32 %v2880, 0.0
        %v2889 = vmax.f32 %v2881, 0.0
        %v2890 = vmax.f32 %v2882, 0.0
        %v2891 = vmax.f32 %v2883, 0.0
        %v2892 = vmax.f32 %v2884, 0.0
        %v2893 = vmax.f32 %v2885, 0.0
        %v2894 = vmax.f32 %v2886, 0.0
        %v2895 = vmax.f32 %v2887, 0.0
        %2896 = vst [vmem:[%s705 + $0xc0] sm:$0xff] %v2888
        %2897 = vst [vmem:[%s705 + $0xc8] sm:$0xff] %v2889
        %2898 = vst [vmem:[%s705 + $0xd0] sm:$0xff] %v2890
        %2899 = vst [vmem:[%s705 + $0xd8] sm:$0xff] %v2891
        %2900 = vst [vmem:[%s705 + $0xe0] sm:$0xff] %v2892
        %2901 = vst [vmem:[%s705 + $0xe8] sm:$0xff] %v2893
        %2902 = vst [vmem:[%s705 + $0xf0] sm:$0xff] %v2894
        %2903 = vst [vmem:[%s705 + $0xf8] sm:$0xff] %v2895
        %v2904 = vld [vmem:[#allocation5] sm:$0xff]
        %v2905 = vld [vmem:[#allocation2] sm:$0xff]
        %2907 = vset.pattern.permute.xlu0 15
        %2908 = vperm.xlu0 %2907, %v2905
        %v2909 = vpop.permute.xlu0 %2908
        %v2911 = vmul.f32 %v2909, %v2430
        %v2912 = vmul.f32 %v2909, %v2431
        %v2913 = vmul.f32 %v2909, %v2432
        %v2914 = vmul.f32 %v2909, %v2433
        %v2915 = vmul.f32 %v2909, %v2434
        %v2916 = vmul.f32 %v2909, %v2435
        %v2917 = vmul.f32 %v2909, %v2436
        %v2918 = vmul.f32 %v2909, %v2437
        %2920 = vset.pattern.permute.xlu0 5
        %2921 = vperm.xlu0 %2920, %v2904
        %v2922 = vpop.permute.xlu0 %2921
        %v2924 = vadd.f32 %v2922, %v2911
        %v2925 = vadd.f32 %v2922, %v2912
        %v2926 = vadd.f32 %v2922, %v2913
        %v2927 = vadd.f32 %v2922, %v2914
        %v2928 = vadd.f32 %v2922, %v2915
        %v2929 = vadd.f32 %v2922, %v2916
        %v2930 = vadd.f32 %v2922, %v2917
        %v2931 = vadd.f32 %v2922, %v2918
        %2932 = vset.pattern.permute.xlu0 16
        %2933 = vperm.xlu0 %2932, %v2905
        %v2934 = vpop.permute.xlu0 %2933
        %v2936 = vmul.f32 %v2934, %v2449
        %v2937 = vmul.f32 %v2934, %v2450
        %v2938 = vmul.f32 %v2934, %v2451
        %v2939 = vmul.f32 %v2934, %v2452
        %v2940 = vmul.f32 %v2934, %v2453
        %v2941 = vmul.f32 %v2934, %v2454
        %v2942 = vmul.f32 %v2934, %v2455
        %v2943 = vmul.f32 %v2934, %v2456
        %v2944 = vadd.f32 %v2924, %v2936
        %v2945 = vadd.f32 %v2925, %v2937
        %v2946 = vadd.f32 %v2926, %v2938
        %v2947 = vadd.f32 %v2927, %v2939
        %v2948 = vadd.f32 %v2928, %v2940
        %v2949 = vadd.f32 %v2929, %v2941
        %v2950 = vadd.f32 %v2930, %v2942
        %v2951 = vadd.f32 %v2931, %v2943
        %2952 = vset.pattern.permute.xlu0 17
        %2953 = vperm.xlu0 %2952, %v2905
        %v2954 = vpop.permute.xlu0 %2953
        %v2956 = vmul.f32 %v2954, %v2468
        %v2957 = vmul.f32 %v2954, %v2469
        %v2958 = vmul.f32 %v2954, %v2470
        %v2959 = vmul.f32 %v2954, %v2471
        %v2960 = vmul.f32 %v2954, %v2472
        %v2961 = vmul.f32 %v2954, %v2473
        %v2962 = vmul.f32 %v2954, %v2474
        %v2963 = vmul.f32 %v2954, %v2475
        %v2964 = vadd.f32 %v2944, %v2956
        %v2965 = vadd.f32 %v2945, %v2957
        %v2966 = vadd.f32 %v2946, %v2958
        %v2967 = vadd.f32 %v2947, %v2959
        %v2968 = vadd.f32 %v2948, %v2960
        %v2969 = vadd.f32 %v2949, %v2961
        %v2970 = vadd.f32 %v2950, %v2962
        %v2971 = vadd.f32 %v2951, %v2963
        %v2972 = vmax.f32 %v2964, 0.0
        %v2973 = vmax.f32 %v2965, 0.0
        %v2974 = vmax.f32 %v2966, 0.0
        %v2975 = vmax.f32 %v2967, 0.0
        %v2976 = vmax.f32 %v2968, 0.0
        %v2977 = vmax.f32 %v2969, 0.0
        %v2978 = vmax.f32 %v2970, 0.0
        %v2979 = vmax.f32 %v2971, 0.0
        %2980 = vst [vmem:[%s790 + $0xc0] sm:$0xff] %v2972
        %2981 = vst [vmem:[%s790 + $0xc8] sm:$0xff] %v2973
        %2982 = vst [vmem:[%s790 + $0xd0] sm:$0xff] %v2974
        %2983 = vst [vmem:[%s790 + $0xd8] sm:$0xff] %v2975
        %2984 = vst [vmem:[%s790 + $0xe0] sm:$0xff] %v2976
        %2985 = vst [vmem:[%s790 + $0xe8] sm:$0xff] %v2977
        %2986 = vst [vmem:[%s790 + $0xf0] sm:$0xff] %v2978
        %2987 = vst [vmem:[%s790 + $0xf8] sm:$0xff] %v2979
        %v2988 = vld [vmem:[#allocation5] sm:$0xff]
        %v2989 = vld [vmem:[#allocation2] sm:$0xff]
        %2991 = vset.pattern.permute.xlu0 18
        %2992 = vperm.xlu0 %2991, %v2989
        %v2993 = vpop.permute.xlu0 %2992
        %v2995 = vmul.f32 %v2993, %v2430
        %v2996 = vmul.f32 %v2993, %v2431
        %v2997 = vmul.f32 %v2993, %v2432
        %v2998 = vmul.f32 %v2993, %v2433
        %v2999 = vmul.f32 %v2993, %v2434
        %v3000 = vmul.f32 %v2993, %v2435
        %v3001 = vmul.f32 %v2993, %v2436
        %v3002 = vmul.f32 %v2993, %v2437
        %3004 = vset.pattern.permute.xlu0 6
        %3005 = vperm.xlu0 %3004, %v2988
        %v3006 = vpop.permute.xlu0 %3005
        %v3008 = vadd.f32 %v3006, %v2995
        %v3009 = vadd.f32 %v3006, %v2996
        %v3010 = vadd.f32 %v3006, %v2997
        %v3011 = vadd.f32 %v3006, %v2998
        %v3012 = vadd.f32 %v3006, %v2999
        %v3013 = vadd.f32 %v3006, %v3000
        %v3014 = vadd.f32 %v3006, %v3001
        %v3015 = vadd.f32 %v3006, %v3002
        %3016 = vset.pattern.permute.xlu0 19
        %3017 = vperm.xlu0 %3016, %v2989
        %v3018 = vpop.permute.xlu0 %3017
        %v3020 = vmul.f32 %v3018, %v2449
        %v3021 = vmul.f32 %v3018, %v2450
        %v3022 = vmul.f32 %v3018, %v2451
        %v3023 = vmul.f32 %v3018, %v2452
        %v3024 = vmul.f32 %v3018, %v2453
        %v3025 = vmul.f32 %v3018, %v2454
        %v3026 = vmul.f32 %v3018, %v2455
        %v3027 = vmul.f32 %v3018, %v2456
        %v3028 = vadd.f32 %v3008, %v3020
        %v3029 = vadd.f32 %v3009, %v3021
        %v3030 = vadd.f32 %v3010, %v3022
        %v3031 = vadd.f32 %v3011, %v3023
        %v3032 = vadd.f32 %v3012, %v3024
        %v3033 = vadd.f32 %v3013, %v3025
        %v3034 = vadd.f32 %v3014, %v3026
        %v3035 = vadd.f32 %v3015, %v3027
        %3036 = vset.pattern.permute.xlu0 20
        %3037 = vperm.xlu0 %3036, %v2989
        %v3038 = vpop.permute.xlu0 %3037
        %v3040 = vmul.f32 %v3038, %v2468
        %v3041 = vmul.f32 %v3038, %v2469
        %v3042 = vmul.f32 %v3038, %v2470
        %v3043 = vmul.f32 %v3038, %v2471
        %v3044 = vmul.f32 %v3038, %v2472
        %v3045 = vmul.f32 %v3038, %v2473
        %v3046 = vmul.f32 %v3038, %v2474
        %v3047 = vmul.f32 %v3038, %v2475
        %v3048 = vadd.f32 %v3028, %v3040
        %v3049 = vadd.f32 %v3029, %v3041
        %v3050 = vadd.f32 %v3030, %v3042
        %v3051 = vadd.f32 %v3031, %v3043
        %v3052 = vadd.f32 %v3032, %v3044
        %v3053 = vadd.f32 %v3033, %v3045
        %v3054 = vadd.f32 %v3034, %v3046
        %v3055 = vadd.f32 %v3035, %v3047
        %v3056 = vmax.f32 %v3048, 0.0
        %v3057 = vmax.f32 %v3049, 0.0
        %v3058 = vmax.f32 %v3050, 0.0
        %v3059 = vmax.f32 %v3051, 0.0
        %v3060 = vmax.f32 %v3052, 0.0
        %v3061 = vmax.f32 %v3053, 0.0
        %v3062 = vmax.f32 %v3054, 0.0
        %v3063 = vmax.f32 %v3055, 0.0
        %3064 = vst [vmem:[%s875 + $0xc0] sm:$0xff] %v3056
        %3065 = vst [vmem:[%s875 + $0xc8] sm:$0xff] %v3057
        %3066 = vst [vmem:[%s875 + $0xd0] sm:$0xff] %v3058
        %3067 = vst [vmem:[%s875 + $0xd8] sm:$0xff] %v3059
        %3068 = vst [vmem:[%s875 + $0xe0] sm:$0xff] %v3060
        %3069 = vst [vmem:[%s875 + $0xe8] sm:$0xff] %v3061
        %3070 = vst [vmem:[%s875 + $0xf0] sm:$0xff] %v3062
        %3071 = vst [vmem:[%s875 + $0xf8] sm:$0xff] %v3063
        %v3072 = vld [vmem:[#allocation5] sm:$0xff]
        %v3073 = vld [vmem:[#allocation2] sm:$0xff]
        %3075 = vset.pattern.permute.xlu0 21
        %3076 = vperm.xlu0 %3075, %v3073
        %v3077 = vpop.permute.xlu0 %3076
        %v3079 = vmul.f32 %v3077, %v2430
        %v3080 = vmul.f32 %v3077, %v2431
        %v3081 = vmul.f32 %v3077, %v2432
        %v3082 = vmul.f32 %v3077, %v2433
        %v3083 = vmul.f32 %v3077, %v2434
        %v3084 = vmul.f32 %v3077, %v2435
        %v3085 = vmul.f32 %v3077, %v2436
        %v3086 = vmul.f32 %v3077, %v2437
        %3088 = vset.pattern.permute.xlu0 7
        %3089 = vperm.xlu0 %3088, %v3072
        %v3090 = vpop.permute.xlu0 %3089
        %v3092 = vadd.f32 %v3090, %v3079
        %v3093 = vadd.f32 %v3090, %v3080
        %v3094 = vadd.f32 %v3090, %v3081
        %v3095 = vadd.f32 %v3090, %v3082
        %v3096 = vadd.f32 %v3090, %v3083
        %v3097 = vadd.f32 %v3090, %v3084
        %v3098 = vadd.f32 %v3090, %v3085
        %v3099 = vadd.f32 %v3090, %v3086
        %3100 = vset.pattern.permute.xlu0 22
        %3101 = vperm.xlu0 %3100, %v3073
        %v3102 = vpop.permute.xlu0 %3101
        %v3104 = vmul.f32 %v3102, %v2449
        %v3105 = vmul.f32 %v3102, %v2450
        %v3106 = vmul.f32 %v3102, %v2451
        %v3107 = vmul.f32 %v3102, %v2452
        %v3108 = vmul.f32 %v3102, %v2453
        %v3109 = vmul.f32 %v3102, %v2454
        %v3110 = vmul.f32 %v3102, %v2455
        %v3111 = vmul.f32 %v3102, %v2456
        %v3112 = vadd.f32 %v3092, %v3104
        %v3113 = vadd.f32 %v3093, %v3105
        %v3114 = vadd.f32 %v3094, %v3106
        %v3115 = vadd.f32 %v3095, %v3107
        %v3116 = vadd.f32 %v3096, %v3108
        %v3117 = vadd.f32 %v3097, %v3109
        %v3118 = vadd.f32 %v3098, %v3110
        %v3119 = vadd.f32 %v3099, %v3111
        %3120 = vset.pattern.permute.xlu0 23
        %3121 = vperm.xlu0 %3120, %v3073
        %v3122 = vpop.permute.xlu0 %3121
        %v3124 = vmul.f32 %v3122, %v2468
        %v3125 = vmul.f32 %v3122, %v2469
        %v3126 = vmul.f32 %v3122, %v2470
        %v3127 = vmul.f32 %v3122, %v2471
        %v3128 = vmul.f32 %v3122, %v2472
        %v3129 = vmul.f32 %v3122, %v2473
        %v3130 = vmul.f32 %v3122, %v2474
        %v3131 = vmul.f32 %v3122, %v2475
        %v3132 = vadd.f32 %v3112, %v3124
        %v3133 = vadd.f32 %v3113, %v3125
        %v3134 = vadd.f32 %v3114, %v3126
        %v3135 = vadd.f32 %v3115, %v3127
        %v3136 = vadd.f32 %v3116, %v3128
        %v3137 = vadd.f32 %v3117, %v3129
        %v3138 = vadd.f32 %v3118, %v3130
        %v3139 = vadd.f32 %v3119, %v3131
        %v3140 = vmax.f32 %v3132, 0.0
        %v3141 = vmax.f32 %v3133, 0.0
        %v3142 = vmax.f32 %v3134, 0.0
        %v3143 = vmax.f32 %v3135, 0.0
        %v3144 = vmax.f32 %v3136, 0.0
        %v3145 = vmax.f32 %v3137, 0.0
        %v3146 = vmax.f32 %v3138, 0.0
        %v3147 = vmax.f32 %v3139, 0.0
        %3148 = vst [vmem:[%s960 + $0xc0] sm:$0xff] %v3140
        %3149 = vst [vmem:[%s960 + $0xc8] sm:$0xff] %v3141
        %3150 = vst [vmem:[%s960 + $0xd0] sm:$0xff] %v3142
        %3151 = vst [vmem:[%s960 + $0xd8] sm:$0xff] %v3143
        %3152 = vst [vmem:[%s960 + $0xe0] sm:$0xff] %v3144
        %3153 = vst [vmem:[%s960 + $0xe8] sm:$0xff] %v3145
        %3154 = vst [vmem:[%s960 + $0xf0] sm:$0xff] %v3146
        %3155 = vst [vmem:[%s960 + $0xf8] sm:$0xff] %v3147
        %s3156 = scalar_lea.vmem %s227, 128
        %v3157 = vld [vmem:[%s3156] ss:$4 sm:$0xff]
        %v3159 = vperm.slane %v3157, 0
        %v3160 = vperm.slane %v3157, 1
        %v3161 = vperm.slane %v3157, 2
        %v3162 = vperm.slane %v3157, 3
        %v3163 = vperm.slane %v3157, 4
        %v3164 = vperm.slane %v3157, 5
        %v3165 = vperm.slane %v3157, 6
        %v3166 = vperm.slane %v3157, 7
        %s3175 = scalar_lea.vmem %s227, 129
        %v3176 = vld [vmem:[%s3175] ss:$4 sm:$0xff]
        %v3178 = vperm.slane %v3176, 0
        %v3179 = vperm.slane %v3176, 1
        %v3180 = vperm.slane %v3176, 2
        %v3181 = vperm.slane %v3176, 3
        %v3182 = vperm.slane %v3176, 4
        %v3183 = vperm.slane %v3176, 5
        %v3184 = vperm.slane %v3176, 6
        %v3185 = vperm.slane %v3176, 7
        %s3194 = scalar_lea.vmem %s227, 130
        %v3195 = vld [vmem:[%s3194] ss:$4 sm:$0xff]
        %v3197 = vperm.slane %v3195, 0
        %v3198 = vperm.slane %v3195, 1
        %v3199 = vperm.slane %v3195, 2
        %v3200 = vperm.slane %v3195, 3
        %v3201 = vperm.slane %v3195, 4
        %v3202 = vperm.slane %v3195, 5
        %v3203 = vperm.slane %v3195, 6
        %v3204 = vperm.slane %v3195, 7
        %v3213 = vld [vmem:[#allocation5] sm:$0xff]
        %v3214 = vld [vmem:[#allocation2] sm:$0xff]
        %3216 = vset.pattern.permute.xlu0 0
        %3217 = vperm.xlu0 %3216, %v3214
        %v3218 = vpop.permute.xlu0 %3217
        %v3220 = vmul.f32 %v3218, %v3159
        %v3221 = vmul.f32 %v3218, %v3160
        %v3222 = vmul.f32 %v3218, %v3161
        %v3223 = vmul.f32 %v3218, %v3162
        %v3224 = vmul.f32 %v3218, %v3163
        %v3225 = vmul.f32 %v3218, %v3164
        %v3226 = vmul.f32 %v3218, %v3165
        %v3227 = vmul.f32 %v3218, %v3166
        %3229 = vset.pattern.permute.xlu0 0
        %3230 = vperm.xlu0 %3229, %v3213
        %v3231 = vpop.permute.xlu0 %3230
        %v3233 = vadd.f32 %v3231, %v3220
        %v3234 = vadd.f32 %v3231, %v3221
        %v3235 = vadd.f32 %v3231, %v3222
        %v3236 = vadd.f32 %v3231, %v3223
        %v3237 = vadd.f32 %v3231, %v3224
        %v3238 = vadd.f32 %v3231, %v3225
        %v3239 = vadd.f32 %v3231, %v3226
        %v3240 = vadd.f32 %v3231, %v3227
        %3241 = vset.pattern.permute.xlu0 1
        %3242 = vperm.xlu0 %3241, %v3214
        %v3243 = vpop.permute.xlu0 %3242
        %v3245 = vmul.f32 %v3243, %v3178
        %v3246 = vmul.f32 %v3243, %v3179
        %v3247 = vmul.f32 %v3243, %v3180
        %v3248 = vmul.f32 %v3243, %v3181
        %v3249 = vmul.f32 %v3243, %v3182
        %v3250 = vmul.f32 %v3243, %v3183
        %v3251 = vmul.f32 %v3243, %v3184
        %v3252 = vmul.f32 %v3243, %v3185
        %v3253 = vadd.f32 %v3233, %v3245
        %v3254 = vadd.f32 %v3234, %v3246
        %v3255 = vadd.f32 %v3235, %v3247
        %v3256 = vadd.f32 %v3236, %v3248
        %v3257 = vadd.f32 %v3237, %v3249
        %v3258 = vadd.f32 %v3238, %v3250
        %v3259 = vadd.f32 %v3239, %v3251
        %v3260 = vadd.f32 %v3240, %v3252
        %3261 = vset.pattern.permute.xlu0 2
        %3262 = vperm.xlu0 %3261, %v3214
        %v3263 = vpop.permute.xlu0 %3262
        %v3265 = vmul.f32 %v3263, %v3197
        %v3266 = vmul.f32 %v3263, %v3198
        %v3267 = vmul.f32 %v3263, %v3199
        %v3268 = vmul.f32 %v3263, %v3200
        %v3269 = vmul.f32 %v3263, %v3201
        %v3270 = vmul.f32 %v3263, %v3202
        %v3271 = vmul.f32 %v3263, %v3203
        %v3272 = vmul.f32 %v3263, %v3204
        %v3273 = vadd.f32 %v3253, %v3265
        %v3274 = vadd.f32 %v3254, %v3266
        %v3275 = vadd.f32 %v3255, %v3267
        %v3276 = vadd.f32 %v3256, %v3268
        %v3277 = vadd.f32 %v3257, %v3269
        %v3278 = vadd.f32 %v3258, %v3270
        %v3279 = vadd.f32 %v3259, %v3271
        %v3280 = vadd.f32 %v3260, %v3272
        %v3281 = vmax.f32 %v3273, 0.0
        %v3282 = vmax.f32 %v3274, 0.0
        %v3283 = vmax.f32 %v3275, 0.0
        %v3284 = vmax.f32 %v3276, 0.0
        %v3285 = vmax.f32 %v3277, 0.0
        %v3286 = vmax.f32 %v3278, 0.0
        %v3287 = vmax.f32 %v3279, 0.0
        %v3288 = vmax.f32 %v3280, 0.0
        %3289 = vst [vmem:[%s218 + $0x100] sm:$0xff] %v3281
        %3290 = vst [vmem:[%s218 + $0x108] sm:$0xff] %v3282
        %3291 = vst [vmem:[%s218 + $0x110] sm:$0xff] %v3283
        %3292 = vst [vmem:[%s218 + $0x118] sm:$0xff] %v3284
        %3293 = vst [vmem:[%s218 + $0x120] sm:$0xff] %v3285
        %3294 = vst [vmem:[%s218 + $0x128] sm:$0xff] %v3286
        %3295 = vst [vmem:[%s218 + $0x130] sm:$0xff] %v3287
        %3296 = vst [vmem:[%s218 + $0x138] sm:$0xff] %v3288
        %v3297 = vld [vmem:[#allocation5] sm:$0xff]
        %v3298 = vld [vmem:[#allocation2] sm:$0xff]
        %3300 = vset.pattern.permute.xlu0 3
        %3301 = vperm.xlu0 %3300, %v3298
        %v3302 = vpop.permute.xlu0 %3301
        %v3304 = vmul.f32 %v3302, %v3159
        %v3305 = vmul.f32 %v3302, %v3160
        %v3306 = vmul.f32 %v3302, %v3161
        %v3307 = vmul.f32 %v3302, %v3162
        %v3308 = vmul.f32 %v3302, %v3163
        %v3309 = vmul.f32 %v3302, %v3164
        %v3310 = vmul.f32 %v3302, %v3165
        %v3311 = vmul.f32 %v3302, %v3166
        %3313 = vset.pattern.permute.xlu0 1
        %3314 = vperm.xlu0 %3313, %v3297
        %v3315 = vpop.permute.xlu0 %3314
        %v3317 = vadd.f32 %v3315, %v3304
        %v3318 = vadd.f32 %v3315, %v3305
        %v3319 = vadd.f32 %v3315, %v3306
        %v3320 = vadd.f32 %v3315, %v3307
        %v3321 = vadd.f32 %v3315, %v3308
        %v3322 = vadd.f32 %v3315, %v3309
        %v3323 = vadd.f32 %v3315, %v3310
        %v3324 = vadd.f32 %v3315, %v3311
        %3325 = vset.pattern.permute.xlu0 4
        %3326 = vperm.xlu0 %3325, %v3298
        %v3327 = vpop.permute.xlu0 %3326
        %v3329 = vmul.f32 %v3327, %v3178
        %v3330 = vmul.f32 %v3327, %v3179
        %v3331 = vmul.f32 %v3327, %v3180
        %v3332 = vmul.f32 %v3327, %v3181
        %v3333 = vmul.f32 %v3327, %v3182
        %v3334 = vmul.f32 %v3327, %v3183
        %v3335 = vmul.f32 %v3327, %v3184
        %v3336 = vmul.f32 %v3327, %v3185
        %v3337 = vadd.f32 %v3317, %v3329
        %v3338 = vadd.f32 %v3318, %v3330
        %v3339 = vadd.f32 %v3319, %v3331
        %v3340 = vadd.f32 %v3320, %v3332
        %v3341 = vadd.f32 %v3321, %v3333
        %v3342 = vadd.f32 %v3322, %v3334
        %v3343 = vadd.f32 %v3323, %v3335
        %v3344 = vadd.f32 %v3324, %v3336
        %3345 = vset.pattern.permute.xlu0 5
        %3346 = vperm.xlu0 %3345, %v3298
        %v3347 = vpop.permute.xlu0 %3346
        %v3349 = vmul.f32 %v3347, %v3197
        %v3350 = vmul.f32 %v3347, %v3198
        %v3351 = vmul.f32 %v3347, %v3199
        %v3352 = vmul.f32 %v3347, %v3200
        %v3353 = vmul.f32 %v3347, %v3201
        %v3354 = vmul.f32 %v3347, %v3202
        %v3355 = vmul.f32 %v3347, %v3203
        %v3356 = vmul.f32 %v3347, %v3204
        %v3357 = vadd.f32 %v3337, %v3349
        %v3358 = vadd.f32 %v3338, %v3350
        %v3359 = vadd.f32 %v3339, %v3351
        %v3360 = vadd.f32 %v3340, %v3352
        %v3361 = vadd.f32 %v3341, %v3353
        %v3362 = vadd.f32 %v3342, %v3354
        %v3363 = vadd.f32 %v3343, %v3355
        %v3364 = vadd.f32 %v3344, %v3356
        %v3365 = vmax.f32 %v3357, 0.0
        %v3366 = vmax.f32 %v3358, 0.0
        %v3367 = vmax.f32 %v3359, 0.0
        %v3368 = vmax.f32 %v3360, 0.0
        %v3369 = vmax.f32 %v3361, 0.0
        %v3370 = vmax.f32 %v3362, 0.0
        %v3371 = vmax.f32 %v3363, 0.0
        %v3372 = vmax.f32 %v3364, 0.0
        %3373 = vst [vmem:[%s450 + $0x100] sm:$0xff] %v3365
        %3374 = vst [vmem:[%s450 + $0x108] sm:$0xff] %v3366
        %3375 = vst [vmem:[%s450 + $0x110] sm:$0xff] %v3367
        %3376 = vst [vmem:[%s450 + $0x118] sm:$0xff] %v3368
        %3377 = vst [vmem:[%s450 + $0x120] sm:$0xff] %v3369
        %3378 = vst [vmem:[%s450 + $0x128] sm:$0xff] %v3370
        %3379 = vst [vmem:[%s450 + $0x130] sm:$0xff] %v3371
        %3380 = vst [vmem:[%s450 + $0x138] sm:$0xff] %v3372
        %v3381 = vld [vmem:[#allocation5] sm:$0xff]
        %v3382 = vld [vmem:[#allocation2] sm:$0xff]
        %3384 = vset.pattern.permute.xlu0 6
        %3385 = vperm.xlu0 %3384, %v3382
        %v3386 = vpop.permute.xlu0 %3385
        %v3388 = vmul.f32 %v3386, %v3159
        %v3389 = vmul.f32 %v3386, %v3160
        %v3390 = vmul.f32 %v3386, %v3161
        %v3391 = vmul.f32 %v3386, %v3162
        %v3392 = vmul.f32 %v3386, %v3163
        %v3393 = vmul.f32 %v3386, %v3164
        %v3394 = vmul.f32 %v3386, %v3165
        %v3395 = vmul.f32 %v3386, %v3166
        %3397 = vset.pattern.permute.xlu0 2
        %3398 = vperm.xlu0 %3397, %v3381
        %v3399 = vpop.permute.xlu0 %3398
        %v3401 = vadd.f32 %v3399, %v3388
        %v3402 = vadd.f32 %v3399, %v3389
        %v3403 = vadd.f32 %v3399, %v3390
        %v3404 = vadd.f32 %v3399, %v3391
        %v3405 = vadd.f32 %v3399, %v3392
        %v3406 = vadd.f32 %v3399, %v3393
        %v3407 = vadd.f32 %v3399, %v3394
        %v3408 = vadd.f32 %v3399, %v3395
        %3409 = vset.pattern.permute.xlu0 7
        %3410 = vperm.xlu0 %3409, %v3382
        %v3411 = vpop.permute.xlu0 %3410
        %v3413 = vmul.f32 %v3411, %v3178
        %v3414 = vmul.f32 %v3411, %v3179
        %v3415 = vmul.f32 %v3411, %v3180
        %v3416 = vmul.f32 %v3411, %v3181
        %v3417 = vmul.f32 %v3411, %v3182
        %v3418 = vmul.f32 %v3411, %v3183
        %v3419 = vmul.f32 %v3411, %v3184
        %v3420 = vmul.f32 %v3411, %v3185
        %v3421 = vadd.f32 %v3401, %v3413
        %v3422 = vadd.f32 %v3402, %v3414
        %v3423 = vadd.f32 %v3403, %v3415
        %v3424 = vadd.f32 %v3404, %v3416
        %v3425 = vadd.f32 %v3405, %v3417
        %v3426 = vadd.f32 %v3406, %v3418
        %v3427 = vadd.f32 %v3407, %v3419
        %v3428 = vadd.f32 %v3408, %v3420
        %3429 = vset.pattern.permute.xlu0 8
        %3430 = vperm.xlu0 %3429, %v3382
        %v3431 = vpop.permute.xlu0 %3430
        %v3433 = vmul.f32 %v3431, %v3197
        %v3434 = vmul.f32 %v3431, %v3198
        %v3435 = vmul.f32 %v3431, %v3199
        %v3436 = vmul.f32 %v3431, %v3200
        %v3437 = vmul.f32 %v3431, %v3201
        %v3438 = vmul.f32 %v3431, %v3202
        %v3439 = vmul.f32 %v3431, %v3203
        %v3440 = vmul.f32 %v3431, %v3204
        %v3441 = vadd.f32 %v3421, %v3433
        %v3442 = vadd.f32 %v3422, %v3434
        %v3443 = vadd.f32 %v3423, %v3435
        %v3444 = vadd.f32 %v3424, %v3436
        %v3445 = vadd.f32 %v3425, %v3437
        %v3446 = vadd.f32 %v3426, %v3438
        %v3447 = vadd.f32 %v3427, %v3439
        %v3448 = vadd.f32 %v3428, %v3440
        %v3449 = vmax.f32 %v3441, 0.0
        %v3450 = vmax.f32 %v3442, 0.0
        %v3451 = vmax.f32 %v3443, 0.0
        %v3452 = vmax.f32 %v3444, 0.0
        %v3453 = vmax.f32 %v3445, 0.0
        %v3454 = vmax.f32 %v3446, 0.0
        %v3455 = vmax.f32 %v3447, 0.0
        %v3456 = vmax.f32 %v3448, 0.0
        %3457 = vst [vmem:[%s535 + $0x100] sm:$0xff] %v3449
        %3458 = vst [vmem:[%s535 + $0x108] sm:$0xff] %v3450
        %3459 = vst [vmem:[%s535 + $0x110] sm:$0xff] %v3451
        %3460 = vst [vmem:[%s535 + $0x118] sm:$0xff] %v3452
        %3461 = vst [vmem:[%s535 + $0x120] sm:$0xff] %v3453
        %3462 = vst [vmem:[%s535 + $0x128] sm:$0xff] %v3454
        %3463 = vst [vmem:[%s535 + $0x130] sm:$0xff] %v3455
        %3464 = vst [vmem:[%s535 + $0x138] sm:$0xff] %v3456
        %v3465 = vld [vmem:[#allocation5] sm:$0xff]
        %v3466 = vld [vmem:[#allocation2] sm:$0xff]
        %3468 = vset.pattern.permute.xlu0 9
        %3469 = vperm.xlu0 %3468, %v3466
        %v3470 = vpop.permute.xlu0 %3469
        %v3472 = vmul.f32 %v3470, %v3159
        %v3473 = vmul.f32 %v3470, %v3160
        %v3474 = vmul.f32 %v3470, %v3161
        %v3475 = vmul.f32 %v3470, %v3162
        %v3476 = vmul.f32 %v3470, %v3163
        %v3477 = vmul.f32 %v3470, %v3164
        %v3478 = vmul.f32 %v3470, %v3165
        %v3479 = vmul.f32 %v3470, %v3166
        %3481 = vset.pattern.permute.xlu0 3
        %3482 = vperm.xlu0 %3481, %v3465
        %v3483 = vpop.permute.xlu0 %3482
        %v3485 = vadd.f32 %v3483, %v3472
        %v3486 = vadd.f32 %v3483, %v3473
        %v3487 = vadd.f32 %v3483, %v3474
        %v3488 = vadd.f32 %v3483, %v3475
        %v3489 = vadd.f32 %v3483, %v3476
        %v3490 = vadd.f32 %v3483, %v3477
        %v3491 = vadd.f32 %v3483, %v3478
        %v3492 = vadd.f32 %v3483, %v3479
        %3493 = vset.pattern.permute.xlu0 10
        %3494 = vperm.xlu0 %3493, %v3466
        %v3495 = vpop.permute.xlu0 %3494
        %v3497 = vmul.f32 %v3495, %v3178
        %v3498 = vmul.f32 %v3495, %v3179
        %v3499 = vmul.f32 %v3495, %v3180
        %v3500 = vmul.f32 %v3495, %v3181
        %v3501 = vmul.f32 %v3495, %v3182
        %v3502 = vmul.f32 %v3495, %v3183
        %v3503 = vmul.f32 %v3495, %v3184
        %v3504 = vmul.f32 %v3495, %v3185
        %v3505 = vadd.f32 %v3485, %v3497
        %v3506 = vadd.f32 %v3486, %v3498
        %v3507 = vadd.f32 %v3487, %v3499
        %v3508 = vadd.f32 %v3488, %v3500
        %v3509 = vadd.f32 %v3489, %v3501
        %v3510 = vadd.f32 %v3490, %v3502
        %v3511 = vadd.f32 %v3491, %v3503
        %v3512 = vadd.f32 %v3492, %v3504
        %3513 = vset.pattern.permute.xlu0 11
        %3514 = vperm.xlu0 %3513, %v3466
        %v3515 = vpop.permute.xlu0 %3514
        %v3517 = vmul.f32 %v3515, %v3197
        %v3518 = vmul.f32 %v3515, %v3198
        %v3519 = vmul.f32 %v3515, %v3199
        %v3520 = vmul.f32 %v3515, %v3200
        %v3521 = vmul.f32 %v3515, %v3201
        %v3522 = vmul.f32 %v3515, %v3202
        %v3523 = vmul.f32 %v3515, %v3203
        %v3524 = vmul.f32 %v3515, %v3204
        %v3525 = vadd.f32 %v3505, %v3517
        %v3526 = vadd.f32 %v3506, %v3518
        %v3527 = vadd.f32 %v3507, %v3519
        %v3528 = vadd.f32 %v3508, %v3520
        %v3529 = vadd.f32 %v3509, %v3521
        %v3530 = vadd.f32 %v3510, %v3522
        %v3531 = vadd.f32 %v3511, %v3523
        %v3532 = vadd.f32 %v3512, %v3524
        %v3533 = vmax.f32 %v3525, 0.0
        %v3534 = vmax.f32 %v3526, 0.0
        %v3535 = vmax.f32 %v3527, 0.0
        %v3536 = vmax.f32 %v3528, 0.0
        %v3537 = vmax.f32 %v3529, 0.0
        %v3538 = vmax.f32 %v3530, 0.0
        %v3539 = vmax.f32 %v3531, 0.0
        %v3540 = vmax.f32 %v3532, 0.0
        %3541 = vst [vmem:[%s620 + $0x100] sm:$0xff] %v3533
        %3542 = vst [vmem:[%s620 + $0x108] sm:$0xff] %v3534
        %3543 = vst [vmem:[%s620 + $0x110] sm:$0xff] %v3535
        %3544 = vst [vmem:[%s620 + $0x118] sm:$0xff] %v3536
        %3545 = vst [vmem:[%s620 + $0x120] sm:$0xff] %v3537
        %3546 = vst [vmem:[%s620 + $0x128] sm:$0xff] %v3538
        %3547 = vst [vmem:[%s620 + $0x130] sm:$0xff] %v3539
        %3548 = vst [vmem:[%s620 + $0x138] sm:$0xff] %v3540
        %v3549 = vld [vmem:[#allocation5] sm:$0xff]
        %v3550 = vld [vmem:[#allocation2] sm:$0xff]
        %3552 = vset.pattern.permute.xlu0 12
        %3553 = vperm.xlu0 %3552, %v3550
        %v3554 = vpop.permute.xlu0 %3553
        %v3556 = vmul.f32 %v3554, %v3159
        %v3557 = vmul.f32 %v3554, %v3160
        %v3558 = vmul.f32 %v3554, %v3161
        %v3559 = vmul.f32 %v3554, %v3162
        %v3560 = vmul.f32 %v3554, %v3163
        %v3561 = vmul.f32 %v3554, %v3164
        %v3562 = vmul.f32 %v3554, %v3165
        %v3563 = vmul.f32 %v3554, %v3166
        %3565 = vset.pattern.permute.xlu0 4
        %3566 = vperm.xlu0 %3565, %v3549
        %v3567 = vpop.permute.xlu0 %3566
        %v3569 = vadd.f32 %v3567, %v3556
        %v3570 = vadd.f32 %v3567, %v3557
        %v3571 = vadd.f32 %v3567, %v3558
        %v3572 = vadd.f32 %v3567, %v3559
        %v3573 = vadd.f32 %v3567, %v3560
        %v3574 = vadd.f32 %v3567, %v3561
        %v3575 = vadd.f32 %v3567, %v3562
        %v3576 = vadd.f32 %v3567, %v3563
        %3577 = vset.pattern.permute.xlu0 13
        %3578 = vperm.xlu0 %3577, %v3550
        %v3579 = vpop.permute.xlu0 %3578
        %v3581 = vmul.f32 %v3579, %v3178
        %v3582 = vmul.f32 %v3579, %v3179
        %v3583 = vmul.f32 %v3579, %v3180
        %v3584 = vmul.f32 %v3579, %v3181
        %v3585 = vmul.f32 %v3579, %v3182
        %v3586 = vmul.f32 %v3579, %v3183
        %v3587 = vmul.f32 %v3579, %v3184
        %v3588 = vmul.f32 %v3579, %v3185
        %v3589 = vadd.f32 %v3569, %v3581
        %v3590 = vadd.f32 %v3570, %v3582
        %v3591 = vadd.f32 %v3571, %v3583
        %v3592 = vadd.f32 %v3572, %v3584
        %v3593 = vadd.f32 %v3573, %v3585
        %v3594 = vadd.f32 %v3574, %v3586
        %v3595 = vadd.f32 %v3575, %v3587
        %v3596 = vadd.f32 %v3576, %v3588
        %3597 = vset.pattern.permute.xlu0 14
        %3598 = vperm.xlu0 %3597, %v3550
        %v3599 = vpop.permute.xlu0 %3598
        %v3601 = vmul.f32 %v3599, %v3197
        %v3602 = vmul.f32 %v3599, %v3198
        %v3603 = vmul.f32 %v3599, %v3199
        %v3604 = vmul.f32 %v3599, %v3200
        %v3605 = vmul.f32 %v3599, %v3201
        %v3606 = vmul.f32 %v3599, %v3202
        %v3607 = vmul.f32 %v3599, %v3203
        %v3608 = vmul.f32 %v3599, %v3204
        %v3609 = vadd.f32 %v3589, %v3601
        %v3610 = vadd.f32 %v3590, %v3602
        %v3611 = vadd.f32 %v3591, %v3603
        %v3612 = vadd.f32 %v3592, %v3604
        %v3613 = vadd.f32 %v3593, %v3605
        %v3614 = vadd.f32 %v3594, %v3606
        %v3615 = vadd.f32 %v3595, %v3607
        %v3616 = vadd.f32 %v3596, %v3608
        %v3617 = vmax.f32 %v3609, 0.0
        %v3618 = vmax.f32 %v3610, 0.0
        %v3619 = vmax.f32 %v3611, 0.0
        %v3620 = vmax.f32 %v3612, 0.0
        %v3621 = vmax.f32 %v3613, 0.0
        %v3622 = vmax.f32 %v3614, 0.0
        %v3623 = vmax.f32 %v3615, 0.0
        %v3624 = vmax.f32 %v3616, 0.0
        %3625 = vst [vmem:[%s705 + $0x100] sm:$0xff] %v3617
        %3626 = vst [vmem:[%s705 + $0x108] sm:$0xff] %v3618
        %3627 = vst [vmem:[%s705 + $0x110] sm:$0xff] %v3619
        %3628 = vst [vmem:[%s705 + $0x118] sm:$0xff] %v3620
        %3629 = vst [vmem:[%s705 + $0x120] sm:$0xff] %v3621
        %3630 = vst [vmem:[%s705 + $0x128] sm:$0xff] %v3622
        %3631 = vst [vmem:[%s705 + $0x130] sm:$0xff] %v3623
        %3632 = vst [vmem:[%s705 + $0x138] sm:$0xff] %v3624
        %v3633 = vld [vmem:[#allocation5] sm:$0xff]
        %v3634 = vld [vmem:[#allocation2] sm:$0xff]
        %3636 = vset.pattern.permute.xlu0 15
        %3637 = vperm.xlu0 %3636, %v3634
        %v3638 = vpop.permute.xlu0 %3637
        %v3640 = vmul.f32 %v3638, %v3159
        %v3641 = vmul.f32 %v3638, %v3160
        %v3642 = vmul.f32 %v3638, %v3161
        %v3643 = vmul.f32 %v3638, %v3162
        %v3644 = vmul.f32 %v3638, %v3163
        %v3645 = vmul.f32 %v3638, %v3164
        %v3646 = vmul.f32 %v3638, %v3165
        %v3647 = vmul.f32 %v3638, %v3166
        %3649 = vset.pattern.permute.xlu0 5
        %3650 = vperm.xlu0 %3649, %v3633
        %v3651 = vpop.permute.xlu0 %3650
        %v3653 = vadd.f32 %v3651, %v3640
        %v3654 = vadd.f32 %v3651, %v3641
        %v3655 = vadd.f32 %v3651, %v3642
        %v3656 = vadd.f32 %v3651, %v3643
        %v3657 = vadd.f32 %v3651, %v3644
        %v3658 = vadd.f32 %v3651, %v3645
        %v3659 = vadd.f32 %v3651, %v3646
        %v3660 = vadd.f32 %v3651, %v3647
        %3661 = vset.pattern.permute.xlu0 16
        %3662 = vperm.xlu0 %3661, %v3634
        %v3663 = vpop.permute.xlu0 %3662
        %v3665 = vmul.f32 %v3663, %v3178
        %v3666 = vmul.f32 %v3663, %v3179
        %v3667 = vmul.f32 %v3663, %v3180
        %v3668 = vmul.f32 %v3663, %v3181
        %v3669 = vmul.f32 %v3663, %v3182
        %v3670 = vmul.f32 %v3663, %v3183
        %v3671 = vmul.f32 %v3663, %v3184
        %v3672 = vmul.f32 %v3663, %v3185
        %v3673 = vadd.f32 %v3653, %v3665
        %v3674 = vadd.f32 %v3654, %v3666
        %v3675 = vadd.f32 %v3655, %v3667
        %v3676 = vadd.f32 %v3656, %v3668
        %v3677 = vadd.f32 %v3657, %v3669
        %v3678 = vadd.f32 %v3658, %v3670
        %v3679 = vadd.f32 %v3659, %v3671
        %v3680 = vadd.f32 %v3660, %v3672
        %3681 = vset.pattern.permute.xlu0 17
        %3682 = vperm.xlu0 %3681, %v3634
        %v3683 = vpop.permute.xlu0 %3682
        %v3685 = vmul.f32 %v3683, %v3197
        %v3686 = vmul.f32 %v3683, %v3198
        %v3687 = vmul.f32 %v3683, %v3199
        %v3688 = vmul.f32 %v3683, %v3200
        %v3689 = vmul.f32 %v3683, %v3201
        %v3690 = vmul.f32 %v3683, %v3202
        %v3691 = vmul.f32 %v3683, %v3203
        %v3692 = vmul.f32 %v3683, %v3204
        %v3693 = vadd.f32 %v3673, %v3685
        %v3694 = vadd.f32 %v3674, %v3686
        %v3695 = vadd.f32 %v3675, %v3687
        %v3696 = vadd.f32 %v3676, %v3688
        %v3697 = vadd.f32 %v3677, %v3689
        %v3698 = vadd.f32 %v3678, %v3690
        %v3699 = vadd.f32 %v3679, %v3691
        %v3700 = vadd.f32 %v3680, %v3692
        %v3701 = vmax.f32 %v3693, 0.0
        %v3702 = vmax.f32 %v3694, 0.0
        %v3703 = vmax.f32 %v3695, 0.0
        %v3704 = vmax.f32 %v3696, 0.0
        %v3705 = vmax.f32 %v3697, 0.0
        %v3706 = vmax.f32 %v3698, 0.0
        %v3707 = vmax.f32 %v3699, 0.0
        %v3708 = vmax.f32 %v3700, 0.0
        %3709 = vst [vmem:[%s790 + $0x100] sm:$0xff] %v3701
        %3710 = vst [vmem:[%s790 + $0x108] sm:$0xff] %v3702
        %3711 = vst [vmem:[%s790 + $0x110] sm:$0xff] %v3703
        %3712 = vst [vmem:[%s790 + $0x118] sm:$0xff] %v3704
        %3713 = vst [vmem:[%s790 + $0x120] sm:$0xff] %v3705
        %3714 = vst [vmem:[%s790 + $0x128] sm:$0xff] %v3706
        %3715 = vst [vmem:[%s790 + $0x130] sm:$0xff] %v3707
        %3716 = vst [vmem:[%s790 + $0x138] sm:$0xff] %v3708
        %v3717 = vld [vmem:[#allocation5] sm:$0xff]
        %v3718 = vld [vmem:[#allocation2] sm:$0xff]
        %3720 = vset.pattern.permute.xlu0 18
        %3721 = vperm.xlu0 %3720, %v3718
        %v3722 = vpop.permute.xlu0 %3721
        %v3724 = vmul.f32 %v3722, %v3159
        %v3725 = vmul.f32 %v3722, %v3160
        %v3726 = vmul.f32 %v3722, %v3161
        %v3727 = vmul.f32 %v3722, %v3162
        %v3728 = vmul.f32 %v3722, %v3163
        %v3729 = vmul.f32 %v3722, %v3164
        %v3730 = vmul.f32 %v3722, %v3165
        %v3731 = vmul.f32 %v3722, %v3166
        %3733 = vset.pattern.permute.xlu0 6
        %3734 = vperm.xlu0 %3733, %v3717
        %v3735 = vpop.permute.xlu0 %3734
        %v3737 = vadd.f32 %v3735, %v3724
        %v3738 = vadd.f32 %v3735, %v3725
        %v3739 = vadd.f32 %v3735, %v3726
        %v3740 = vadd.f32 %v3735, %v3727
        %v3741 = vadd.f32 %v3735, %v3728
        %v3742 = vadd.f32 %v3735, %v3729
        %v3743 = vadd.f32 %v3735, %v3730
        %v3744 = vadd.f32 %v3735, %v3731
        %3745 = vset.pattern.permute.xlu0 19
        %3746 = vperm.xlu0 %3745, %v3718
        %v3747 = vpop.permute.xlu0 %3746
        %v3749 = vmul.f32 %v3747, %v3178
        %v3750 = vmul.f32 %v3747, %v3179
        %v3751 = vmul.f32 %v3747, %v3180
        %v3752 = vmul.f32 %v3747, %v3181
        %v3753 = vmul.f32 %v3747, %v3182
        %v3754 = vmul.f32 %v3747, %v3183
        %v3755 = vmul.f32 %v3747, %v3184
        %v3756 = vmul.f32 %v3747, %v3185
        %v3757 = vadd.f32 %v3737, %v3749
        %v3758 = vadd.f32 %v3738, %v3750
        %v3759 = vadd.f32 %v3739, %v3751
        %v3760 = vadd.f32 %v3740, %v3752
        %v3761 = vadd.f32 %v3741, %v3753
        %v3762 = vadd.f32 %v3742, %v3754
        %v3763 = vadd.f32 %v3743, %v3755
        %v3764 = vadd.f32 %v3744, %v3756
        %3765 = vset.pattern.permute.xlu0 20
        %3766 = vperm.xlu0 %3765, %v3718
        %v3767 = vpop.permute.xlu0 %3766
        %v3769 = vmul.f32 %v3767, %v3197
        %v3770 = vmul.f32 %v3767, %v3198
        %v3771 = vmul.f32 %v3767, %v3199
        %v3772 = vmul.f32 %v3767, %v3200
        %v3773 = vmul.f32 %v3767, %v3201
        %v3774 = vmul.f32 %v3767, %v3202
        %v3775 = vmul.f32 %v3767, %v3203
        %v3776 = vmul.f32 %v3767, %v3204
        %v3777 = vadd.f32 %v3757, %v3769
        %v3778 = vadd.f32 %v3758, %v3770
        %v3779 = vadd.f32 %v3759, %v3771
        %v3780 = vadd.f32 %v3760, %v3772
        %v3781 = vadd.f32 %v3761, %v3773
        %v3782 = vadd.f32 %v3762, %v3774
        %v3783 = vadd.f32 %v3763, %v3775
        %v3784 = vadd.f32 %v3764, %v3776
        %v3785 = vmax.f32 %v3777, 0.0
        %v3786 = vmax.f32 %v3778, 0.0
        %v3787 = vmax.f32 %v3779, 0.0
        %v3788 = vmax.f32 %v3780, 0.0
        %v3789 = vmax.f32 %v3781, 0.0
        %v3790 = vmax.f32 %v3782, 0.0
        %v3791 = vmax.f32 %v3783, 0.0
        %v3792 = vmax.f32 %v3784, 0.0
        %3793 = vst [vmem:[%s875 + $0x100] sm:$0xff] %v3785
        %3794 = vst [vmem:[%s875 + $0x108] sm:$0xff] %v3786
        %3795 = vst [vmem:[%s875 + $0x110] sm:$0xff] %v3787
        %3796 = vst [vmem:[%s875 + $0x118] sm:$0xff] %v3788
        %3797 = vst [vmem:[%s875 + $0x120] sm:$0xff] %v3789
        %3798 = vst [vmem:[%s875 + $0x128] sm:$0xff] %v3790
        %3799 = vst [vmem:[%s875 + $0x130] sm:$0xff] %v3791
        %3800 = vst [vmem:[%s875 + $0x138] sm:$0xff] %v3792
        %v3801 = vld [vmem:[#allocation5] sm:$0xff]
        %v3802 = vld [vmem:[#allocation2] sm:$0xff]
        %3804 = vset.pattern.permute.xlu0 21
        %3805 = vperm.xlu0 %3804, %v3802
        %v3806 = vpop.permute.xlu0 %3805
        %v3808 = vmul.f32 %v3806, %v3159
        %v3809 = vmul.f32 %v3806, %v3160
        %v3810 = vmul.f32 %v3806, %v3161
        %v3811 = vmul.f32 %v3806, %v3162
        %v3812 = vmul.f32 %v3806, %v3163
        %v3813 = vmul.f32 %v3806, %v3164
        %v3814 = vmul.f32 %v3806, %v3165
        %v3815 = vmul.f32 %v3806, %v3166
        %3817 = vset.pattern.permute.xlu0 7
        %3818 = vperm.xlu0 %3817, %v3801
        %v3819 = vpop.permute.xlu0 %3818
        %v3821 = vadd.f32 %v3819, %v3808
        %v3822 = vadd.f32 %v3819, %v3809
        %v3823 = vadd.f32 %v3819, %v3810
        %v3824 = vadd.f32 %v3819, %v3811
        %v3825 = vadd.f32 %v3819, %v3812
        %v3826 = vadd.f32 %v3819, %v3813
        %v3827 = vadd.f32 %v3819, %v3814
        %v3828 = vadd.f32 %v3819, %v3815
        %3829 = vset.pattern.permute.xlu0 22
        %3830 = vperm.xlu0 %3829, %v3802
        %v3831 = vpop.permute.xlu0 %3830
        %v3833 = vmul.f32 %v3831, %v3178
        %v3834 = vmul.f32 %v3831, %v3179
        %v3835 = vmul.f32 %v3831, %v3180
        %v3836 = vmul.f32 %v3831, %v3181
        %v3837 = vmul.f32 %v3831, %v3182
        %v3838 = vmul.f32 %v3831, %v3183
        %v3839 = vmul.f32 %v3831, %v3184
        %v3840 = vmul.f32 %v3831, %v3185
        %v3841 = vadd.f32 %v3821, %v3833
        %v3842 = vadd.f32 %v3822, %v3834
        %v3843 = vadd.f32 %v3823, %v3835
        %v3844 = vadd.f32 %v3824, %v3836
        %v3845 = vadd.f32 %v3825, %v3837
        %v3846 = vadd.f32 %v3826, %v3838
        %v3847 = vadd.f32 %v3827, %v3839
        %v3848 = vadd.f32 %v3828, %v3840
        %3849 = vset.pattern.permute.xlu0 23
        %3850 = vperm.xlu0 %3849, %v3802
        %v3851 = vpop.permute.xlu0 %3850
        %v3853 = vmul.f32 %v3851, %v3197
        %v3854 = vmul.f32 %v3851, %v3198
        %v3855 = vmul.f32 %v3851, %v3199
        %v3856 = vmul.f32 %v3851, %v3200
        %v3857 = vmul.f32 %v3851, %v3201
        %v3858 = vmul.f32 %v3851, %v3202
        %v3859 = vmul.f32 %v3851, %v3203
        %v3860 = vmul.f32 %v3851, %v3204
        %v3861 = vadd.f32 %v3841, %v3853
        %v3862 = vadd.f32 %v3842, %v3854
        %v3863 = vadd.f32 %v3843, %v3855
        %v3864 = vadd.f32 %v3844, %v3856
        %v3865 = vadd.f32 %v3845, %v3857
        %v3866 = vadd.f32 %v3846, %v3858
        %v3867 = vadd.f32 %v3847, %v3859
        %v3868 = vadd.f32 %v3848, %v3860
        %v3869 = vmax.f32 %v3861, 0.0
        %v3870 = vmax.f32 %v3862, 0.0
        %v3871 = vmax.f32 %v3863, 0.0
        %v3872 = vmax.f32 %v3864, 0.0
        %v3873 = vmax.f32 %v3865, 0.0
        %v3874 = vmax.f32 %v3866, 0.0
        %v3875 = vmax.f32 %v3867, 0.0
        %v3876 = vmax.f32 %v3868, 0.0
        %3877 = vst [vmem:[%s960 + $0x100] sm:$0xff] %v3869
        %3878 = vst [vmem:[%s960 + $0x108] sm:$0xff] %v3870
        %3879 = vst [vmem:[%s960 + $0x110] sm:$0xff] %v3871
        %3880 = vst [vmem:[%s960 + $0x118] sm:$0xff] %v3872
        %3881 = vst [vmem:[%s960 + $0x120] sm:$0xff] %v3873
        %3882 = vst [vmem:[%s960 + $0x128] sm:$0xff] %v3874
        %3883 = vst [vmem:[%s960 + $0x130] sm:$0xff] %v3875
        %3884 = vst [vmem:[%s960 + $0x138] sm:$0xff] %v3876
        %s3885 = scalar_lea.vmem %s227, 160
        %v3886 = vld [vmem:[%s3885] ss:$4 sm:$0xff]
        %v3888 = vperm.slane %v3886, 0
        %v3889 = vperm.slane %v3886, 1
        %v3890 = vperm.slane %v3886, 2
        %v3891 = vperm.slane %v3886, 3
        %v3892 = vperm.slane %v3886, 4
        %v3893 = vperm.slane %v3886, 5
        %v3894 = vperm.slane %v3886, 6
        %v3895 = vperm.slane %v3886, 7
        %s3904 = scalar_lea.vmem %s227, 161
        %v3905 = vld [vmem:[%s3904] ss:$4 sm:$0xff]
        %v3907 = vperm.slane %v3905, 0
        %v3908 = vperm.slane %v3905, 1
        %v3909 = vperm.slane %v3905, 2
        %v3910 = vperm.slane %v3905, 3
        %v3911 = vperm.slane %v3905, 4
        %v3912 = vperm.slane %v3905, 5
        %v3913 = vperm.slane %v3905, 6
        %v3914 = vperm.slane %v3905, 7
        %s3923 = scalar_lea.vmem %s227, 162
        %v3924 = vld [vmem:[%s3923] ss:$4 sm:$0xff]
        %v3926 = vperm.slane %v3924, 0
        %v3927 = vperm.slane %v3924, 1
        %v3928 = vperm.slane %v3924, 2
        %v3929 = vperm.slane %v3924, 3
        %v3930 = vperm.slane %v3924, 4
        %v3931 = vperm.slane %v3924, 5
        %v3932 = vperm.slane %v3924, 6
        %v3933 = vperm.slane %v3924, 7
        %v3942 = vld [vmem:[#allocation5] sm:$0xff]
        %v3943 = vld [vmem:[#allocation2] sm:$0xff]
        %3945 = vset.pattern.permute.xlu0 0
        %3946 = vperm.xlu0 %3945, %v3943
        %v3947 = vpop.permute.xlu0 %3946
        %v3949 = vmul.f32 %v3947, %v3888
        %v3950 = vmul.f32 %v3947, %v3889
        %v3951 = vmul.f32 %v3947, %v3890
        %v3952 = vmul.f32 %v3947, %v3891
        %v3953 = vmul.f32 %v3947, %v3892
        %v3954 = vmul.f32 %v3947, %v3893
        %v3955 = vmul.f32 %v3947, %v3894
        %v3956 = vmul.f32 %v3947, %v3895
        %3958 = vset.pattern.permute.xlu0 0
        %3959 = vperm.xlu0 %3958, %v3942
        %v3960 = vpop.permute.xlu0 %3959
        %v3962 = vadd.f32 %v3960, %v3949
        %v3963 = vadd.f32 %v3960, %v3950
        %v3964 = vadd.f32 %v3960, %v3951
        %v3965 = vadd.f32 %v3960, %v3952
        %v3966 = vadd.f32 %v3960, %v3953
        %v3967 = vadd.f32 %v3960, %v3954
        %v3968 = vadd.f32 %v3960, %v3955
        %v3969 = vadd.f32 %v3960, %v3956
        %3970 = vset.pattern.permute.xlu0 1
        %3971 = vperm.xlu0 %3970, %v3943
        %v3972 = vpop.permute.xlu0 %3971
        %v3974 = vmul.f32 %v3972, %v3907
        %v3975 = vmul.f32 %v3972, %v3908
        %v3976 = vmul.f32 %v3972, %v3909
        %v3977 = vmul.f32 %v3972, %v3910
        %v3978 = vmul.f32 %v3972, %v3911
        %v3979 = vmul.f32 %v3972, %v3912
        %v3980 = vmul.f32 %v3972, %v3913
        %v3981 = vmul.f32 %v3972, %v3914
        %v3982 = vadd.f32 %v3962, %v3974
        %v3983 = vadd.f32 %v3963, %v3975
        %v3984 = vadd.f32 %v3964, %v3976
        %v3985 = vadd.f32 %v3965, %v3977
        %v3986 = vadd.f32 %v3966, %v3978
        %v3987 = vadd.f32 %v3967, %v3979
        %v3988 = vadd.f32 %v3968, %v3980
        %v3989 = vadd.f32 %v3969, %v3981
        %3990 = vset.pattern.permute.xlu0 2
        %3991 = vperm.xlu0 %3990, %v3943
        %v3992 = vpop.permute.xlu0 %3991
        %v3994 = vmul.f32 %v3992, %v3926
        %v3995 = vmul.f32 %v3992, %v3927
        %v3996 = vmul.f32 %v3992, %v3928
        %v3997 = vmul.f32 %v3992, %v3929
        %v3998 = vmul.f32 %v3992, %v3930
        %v3999 = vmul.f32 %v3992, %v3931
        %v4000 = vmul.f32 %v3992, %v3932
        %v4001 = vmul.f32 %v3992, %v3933
        %v4002 = vadd.f32 %v3982, %v3994
        %v4003 = vadd.f32 %v3983, %v3995
        %v4004 = vadd.f32 %v3984, %v3996
        %v4005 = vadd.f32 %v3985, %v3997
        %v4006 = vadd.f32 %v3986, %v3998
        %v4007 = vadd.f32 %v3987, %v3999
        %v4008 = vadd.f32 %v3988, %v4000
        %v4009 = vadd.f32 %v3989, %v4001
        %v4010 = vmax.f32 %v4002, 0.0
        %v4011 = vmax.f32 %v4003, 0.0
        %v4012 = vmax.f32 %v4004, 0.0
        %v4013 = vmax.f32 %v4005, 0.0
        %v4014 = vmax.f32 %v4006, 0.0
        %v4015 = vmax.f32 %v4007, 0.0
        %v4016 = vmax.f32 %v4008, 0.0
        %v4017 = vmax.f32 %v4009, 0.0
        %4018 = vst [vmem:[%s218 + $0x140] sm:$0xff] %v4010
        %4019 = vst [vmem:[%s218 + $0x148] sm:$0xff] %v4011
        %4020 = vst [vmem:[%s218 + $0x150] sm:$0xff] %v4012
        %4021 = vst [vmem:[%s218 + $0x158] sm:$0xff] %v4013
        %4022 = vst [vmem:[%s218 + $0x160] sm:$0xff] %v4014
        %4023 = vst [vmem:[%s218 + $0x168] sm:$0xff] %v4015
        %4024 = vst [vmem:[%s218 + $0x170] sm:$0xff] %v4016
        %4025 = vst [vmem:[%s218 + $0x178] sm:$0xff] %v4017
        %v4026 = vld [vmem:[#allocation5] sm:$0xff]
        %v4027 = vld [vmem:[#allocation2] sm:$0xff]
        %4029 = vset.pattern.permute.xlu0 3
        %4030 = vperm.xlu0 %4029, %v4027
        %v4031 = vpop.permute.xlu0 %4030
        %v4033 = vmul.f32 %v4031, %v3888
        %v4034 = vmul.f32 %v4031, %v3889
        %v4035 = vmul.f32 %v4031, %v3890
        %v4036 = vmul.f32 %v4031, %v3891
        %v4037 = vmul.f32 %v4031, %v3892
        %v4038 = vmul.f32 %v4031, %v3893
        %v4039 = vmul.f32 %v4031, %v3894
        %v4040 = vmul.f32 %v4031, %v3895
        %4042 = vset.pattern.permute.xlu0 1
        %4043 = vperm.xlu0 %4042, %v4026
        %v4044 = vpop.permute.xlu0 %4043
        %v4046 = vadd.f32 %v4044, %v4033
        %v4047 = vadd.f32 %v4044, %v4034
        %v4048 = vadd.f32 %v4044, %v4035
        %v4049 = vadd.f32 %v4044, %v4036
        %v4050 = vadd.f32 %v4044, %v4037
        %v4051 = vadd.f32 %v4044, %v4038
        %v4052 = vadd.f32 %v4044, %v4039
        %v4053 = vadd.f32 %v4044, %v4040
        %4054 = vset.pattern.permute.xlu0 4
        %4055 = vperm.xlu0 %4054, %v4027
        %v4056 = vpop.permute.xlu0 %4055
        %v4058 = vmul.f32 %v4056, %v3907
        %v4059 = vmul.f32 %v4056, %v3908
        %v4060 = vmul.f32 %v4056, %v3909
        %v4061 = vmul.f32 %v4056, %v3910
        %v4062 = vmul.f32 %v4056, %v3911
        %v4063 = vmul.f32 %v4056, %v3912
        %v4064 = vmul.f32 %v4056, %v3913
        %v4065 = vmul.f32 %v4056, %v3914
        %v4066 = vadd.f32 %v4046, %v4058
        %v4067 = vadd.f32 %v4047, %v4059
        %v4068 = vadd.f32 %v4048, %v4060
        %v4069 = vadd.f32 %v4049, %v4061
        %v4070 = vadd.f32 %v4050, %v4062
        %v4071 = vadd.f32 %v4051, %v4063
        %v4072 = vadd.f32 %v4052, %v4064
        %v4073 = vadd.f32 %v4053, %v4065
        %4074 = vset.pattern.permute.xlu0 5
        %4075 = vperm.xlu0 %4074, %v4027
        %v4076 = vpop.permute.xlu0 %4075
        %v4078 = vmul.f32 %v4076, %v3926
        %v4079 = vmul.f32 %v4076, %v3927
        %v4080 = vmul.f32 %v4076, %v3928
        %v4081 = vmul.f32 %v4076, %v3929
        %v4082 = vmul.f32 %v4076, %v3930
        %v4083 = vmul.f32 %v4076, %v3931
        %v4084 = vmul.f32 %v4076, %v3932
        %v4085 = vmul.f32 %v4076, %v3933
        %v4086 = vadd.f32 %v4066, %v4078
        %v4087 = vadd.f32 %v4067, %v4079
        %v4088 = vadd.f32 %v4068, %v4080
        %v4089 = vadd.f32 %v4069, %v4081
        %v4090 = vadd.f32 %v4070, %v4082
        %v4091 = vadd.f32 %v4071, %v4083
        %v4092 = vadd.f32 %v4072, %v4084
        %v4093 = vadd.f32 %v4073, %v4085
        %v4094 = vmax.f32 %v4086, 0.0
        %v4095 = vmax.f32 %v4087, 0.0
        %v4096 = vmax.f32 %v4088, 0.0
        %v4097 = vmax.f32 %v4089, 0.0
        %v4098 = vmax.f32 %v4090, 0.0
        %v4099 = vmax.f32 %v4091, 0.0
        %v4100 = vmax.f32 %v4092, 0.0
        %v4101 = vmax.f32 %v4093, 0.0
        %4102 = vst [vmem:[%s450 + $0x140] sm:$0xff] %v4094
        %4103 = vst [vmem:[%s450 + $0x148] sm:$0xff] %v4095
        %4104 = vst [vmem:[%s450 + $0x150] sm:$0xff] %v4096
        %4105 = vst [vmem:[%s450 + $0x158] sm:$0xff] %v4097
        %4106 = vst [vmem:[%s450 + $0x160] sm:$0xff] %v4098
        %4107 = vst [vmem:[%s450 + $0x168] sm:$0xff] %v4099
        %4108 = vst [vmem:[%s450 + $0x170] sm:$0xff] %v4100
        %4109 = vst [vmem:[%s450 + $0x178] sm:$0xff] %v4101
        %v4110 = vld [vmem:[#allocation5] sm:$0xff]
        %v4111 = vld [vmem:[#allocation2] sm:$0xff]
        %4113 = vset.pattern.permute.xlu0 6
        %4114 = vperm.xlu0 %4113, %v4111
        %v4115 = vpop.permute.xlu0 %4114
        %v4117 = vmul.f32 %v4115, %v3888
        %v4118 = vmul.f32 %v4115, %v3889
        %v4119 = vmul.f32 %v4115, %v3890
        %v4120 = vmul.f32 %v4115, %v3891
        %v4121 = vmul.f32 %v4115, %v3892
        %v4122 = vmul.f32 %v4115, %v3893
        %v4123 = vmul.f32 %v4115, %v3894
        %v4124 = vmul.f32 %v4115, %v3895
        %4126 = vset.pattern.permute.xlu0 2
        %4127 = vperm.xlu0 %4126, %v4110
        %v4128 = vpop.permute.xlu0 %4127
        %v4130 = vadd.f32 %v4128, %v4117
        %v4131 = vadd.f32 %v4128, %v4118
        %v4132 = vadd.f32 %v4128, %v4119
        %v4133 = vadd.f32 %v4128, %v4120
        %v4134 = vadd.f32 %v4128, %v4121
        %v4135 = vadd.f32 %v4128, %v4122
        %v4136 = vadd.f32 %v4128, %v4123
        %v4137 = vadd.f32 %v4128, %v4124
        %4138 = vset.pattern.permute.xlu0 7
        %4139 = vperm.xlu0 %4138, %v4111
        %v4140 = vpop.permute.xlu0 %4139
        %v4142 = vmul.f32 %v4140, %v3907
        %v4143 = vmul.f32 %v4140, %v3908
        %v4144 = vmul.f32 %v4140, %v3909
        %v4145 = vmul.f32 %v4140, %v3910
        %v4146 = vmul.f32 %v4140, %v3911
        %v4147 = vmul.f32 %v4140, %v3912
        %v4148 = vmul.f32 %v4140, %v3913
        %v4149 = vmul.f32 %v4140, %v3914
        %v4150 = vadd.f32 %v4130, %v4142
        %v4151 = vadd.f32 %v4131, %v4143
        %v4152 = vadd.f32 %v4132, %v4144
        %v4153 = vadd.f32 %v4133, %v4145
        %v4154 = vadd.f32 %v4134, %v4146
        %v4155 = vadd.f32 %v4135, %v4147
        %v4156 = vadd.f32 %v4136, %v4148
        %v4157 = vadd.f32 %v4137, %v4149
        %4158 = vset.pattern.permute.xlu0 8
        %4159 = vperm.xlu0 %4158, %v4111
        %v4160 = vpop.permute.xlu0 %4159
        %v4162 = vmul.f32 %v4160, %v3926
        %v4163 = vmul.f32 %v4160, %v3927
        %v4164 = vmul.f32 %v4160, %v3928
        %v4165 = vmul.f32 %v4160, %v3929
        %v4166 = vmul.f32 %v4160, %v3930
        %v4167 = vmul.f32 %v4160, %v3931
        %v4168 = vmul.f32 %v4160, %v3932
        %v4169 = vmul.f32 %v4160, %v3933
        %v4170 = vadd.f32 %v4150, %v4162
        %v4171 = vadd.f32 %v4151, %v4163
        %v4172 = vadd.f32 %v4152, %v4164
        %v4173 = vadd.f32 %v4153, %v4165
        %v4174 = vadd.f32 %v4154, %v4166
        %v4175 = vadd.f32 %v4155, %v4167
        %v4176 = vadd.f32 %v4156, %v4168
        %v4177 = vadd.f32 %v4157, %v4169
        %v4178 = vmax.f32 %v4170, 0.0
        %v4179 = vmax.f32 %v4171, 0.0
        %v4180 = vmax.f32 %v4172, 0.0
        %v4181 = vmax.f32 %v4173, 0.0
        %v4182 = vmax.f32 %v4174, 0.0
        %v4183 = vmax.f32 %v4175, 0.0
        %v4184 = vmax.f32 %v4176, 0.0
        %v4185 = vmax.f32 %v4177, 0.0
        %4186 = vst [vmem:[%s535 + $0x140] sm:$0xff] %v4178
        %4187 = vst [vmem:[%s535 + $0x148] sm:$0xff] %v4179
        %4188 = vst [vmem:[%s535 + $0x150] sm:$0xff] %v4180
        %4189 = vst [vmem:[%s535 + $0x158] sm:$0xff] %v4181
        %4190 = vst [vmem:[%s535 + $0x160] sm:$0xff] %v4182
        %4191 = vst [vmem:[%s535 + $0x168] sm:$0xff] %v4183
        %4192 = vst [vmem:[%s535 + $0x170] sm:$0xff] %v4184
        %4193 = vst [vmem:[%s535 + $0x178] sm:$0xff] %v4185
        %v4194 = vld [vmem:[#allocation5] sm:$0xff]
        %v4195 = vld [vmem:[#allocation2] sm:$0xff]
        %4197 = vset.pattern.permute.xlu0 9
        %4198 = vperm.xlu0 %4197, %v4195
        %v4199 = vpop.permute.xlu0 %4198
        %v4201 = vmul.f32 %v4199, %v3888
        %v4202 = vmul.f32 %v4199, %v3889
        %v4203 = vmul.f32 %v4199, %v3890
        %v4204 = vmul.f32 %v4199, %v3891
        %v4205 = vmul.f32 %v4199, %v3892
        %v4206 = vmul.f32 %v4199, %v3893
        %v4207 = vmul.f32 %v4199, %v3894
        %v4208 = vmul.f32 %v4199, %v3895
        %4210 = vset.pattern.permute.xlu0 3
        %4211 = vperm.xlu0 %4210, %v4194
        %v4212 = vpop.permute.xlu0 %4211
        %v4214 = vadd.f32 %v4212, %v4201
        %v4215 = vadd.f32 %v4212, %v4202
        %v4216 = vadd.f32 %v4212, %v4203
        %v4217 = vadd.f32 %v4212, %v4204
        %v4218 = vadd.f32 %v4212, %v4205
        %v4219 = vadd.f32 %v4212, %v4206
        %v4220 = vadd.f32 %v4212, %v4207
        %v4221 = vadd.f32 %v4212, %v4208
        %4222 = vset.pattern.permute.xlu0 10
        %4223 = vperm.xlu0 %4222, %v4195
        %v4224 = vpop.permute.xlu0 %4223
        %v4226 = vmul.f32 %v4224, %v3907
        %v4227 = vmul.f32 %v4224, %v3908
        %v4228 = vmul.f32 %v4224, %v3909
        %v4229 = vmul.f32 %v4224, %v3910
        %v4230 = vmul.f32 %v4224, %v3911
        %v4231 = vmul.f32 %v4224, %v3912
        %v4232 = vmul.f32 %v4224, %v3913
        %v4233 = vmul.f32 %v4224, %v3914
        %v4234 = vadd.f32 %v4214, %v4226
        %v4235 = vadd.f32 %v4215, %v4227
        %v4236 = vadd.f32 %v4216, %v4228
        %v4237 = vadd.f32 %v4217, %v4229
        %v4238 = vadd.f32 %v4218, %v4230
        %v4239 = vadd.f32 %v4219, %v4231
        %v4240 = vadd.f32 %v4220, %v4232
        %v4241 = vadd.f32 %v4221, %v4233
        %4242 = vset.pattern.permute.xlu0 11
        %4243 = vperm.xlu0 %4242, %v4195
        %v4244 = vpop.permute.xlu0 %4243
        %v4246 = vmul.f32 %v4244, %v3926
        %v4247 = vmul.f32 %v4244, %v3927
        %v4248 = vmul.f32 %v4244, %v3928
        %v4249 = vmul.f32 %v4244, %v3929
        %v4250 = vmul.f32 %v4244, %v3930
        %v4251 = vmul.f32 %v4244, %v3931
        %v4252 = vmul.f32 %v4244, %v3932
        %v4253 = vmul.f32 %v4244, %v3933
        %v4254 = vadd.f32 %v4234, %v4246
        %v4255 = vadd.f32 %v4235, %v4247
        %v4256 = vadd.f32 %v4236, %v4248
        %v4257 = vadd.f32 %v4237, %v4249
        %v4258 = vadd.f32 %v4238, %v4250
        %v4259 = vadd.f32 %v4239, %v4251
        %v4260 = vadd.f32 %v4240, %v4252
        %v4261 = vadd.f32 %v4241, %v4253
        %v4262 = vmax.f32 %v4254, 0.0
        %v4263 = vmax.f32 %v4255, 0.0
        %v4264 = vmax.f32 %v4256, 0.0
        %v4265 = vmax.f32 %v4257, 0.0
        %v4266 = vmax.f32 %v4258, 0.0
        %v4267 = vmax.f32 %v4259, 0.0
        %v4268 = vmax.f32 %v4260, 0.0
        %v4269 = vmax.f32 %v4261, 0.0
        %4270 = vst [vmem:[%s620 + $0x140] sm:$0xff] %v4262
        %4271 = vst [vmem:[%s620 + $0x148] sm:$0xff] %v4263
        %4272 = vst [vmem:[%s620 + $0x150] sm:$0xff] %v4264
        %4273 = vst [vmem:[%s620 + $0x158] sm:$0xff] %v4265
        %4274 = vst [vmem:[%s620 + $0x160] sm:$0xff] %v4266
        %4275 = vst [vmem:[%s620 + $0x168] sm:$0xff] %v4267
        %4276 = vst [vmem:[%s620 + $0x170] sm:$0xff] %v4268
        %4277 = vst [vmem:[%s620 + $0x178] sm:$0xff] %v4269
        %v4278 = vld [vmem:[#allocation5] sm:$0xff]
        %v4279 = vld [vmem:[#allocation2] sm:$0xff]
        %4281 = vset.pattern.permute.xlu0 12
        %4282 = vperm.xlu0 %4281, %v4279
        %v4283 = vpop.permute.xlu0 %4282
        %v4285 = vmul.f32 %v4283, %v3888
        %v4286 = vmul.f32 %v4283, %v3889
        %v4287 = vmul.f32 %v4283, %v3890
        %v4288 = vmul.f32 %v4283, %v3891
        %v4289 = vmul.f32 %v4283, %v3892
        %v4290 = vmul.f32 %v4283, %v3893
        %v4291 = vmul.f32 %v4283, %v3894
        %v4292 = vmul.f32 %v4283, %v3895
        %4294 = vset.pattern.permute.xlu0 4
        %4295 = vperm.xlu0 %4294, %v4278
        %v4296 = vpop.permute.xlu0 %4295
        %v4298 = vadd.f32 %v4296, %v4285
        %v4299 = vadd.f32 %v4296, %v4286
        %v4300 = vadd.f32 %v4296, %v4287
        %v4301 = vadd.f32 %v4296, %v4288
        %v4302 = vadd.f32 %v4296, %v4289
        %v4303 = vadd.f32 %v4296, %v4290
        %v4304 = vadd.f32 %v4296, %v4291
        %v4305 = vadd.f32 %v4296, %v4292
        %4306 = vset.pattern.permute.xlu0 13
        %4307 = vperm.xlu0 %4306, %v4279
        %v4308 = vpop.permute.xlu0 %4307
        %v4310 = vmul.f32 %v4308, %v3907
        %v4311 = vmul.f32 %v4308, %v3908
        %v4312 = vmul.f32 %v4308, %v3909
        %v4313 = vmul.f32 %v4308, %v3910
        %v4314 = vmul.f32 %v4308, %v3911
        %v4315 = vmul.f32 %v4308, %v3912
        %v4316 = vmul.f32 %v4308, %v3913
        %v4317 = vmul.f32 %v4308, %v3914
        %v4318 = vadd.f32 %v4298, %v4310
        %v4319 = vadd.f32 %v4299, %v4311
        %v4320 = vadd.f32 %v4300, %v4312
        %v4321 = vadd.f32 %v4301, %v4313
        %v4322 = vadd.f32 %v4302, %v4314
        %v4323 = vadd.f32 %v4303, %v4315
        %v4324 = vadd.f32 %v4304, %v4316
        %v4325 = vadd.f32 %v4305, %v4317
        %4326 = vset.pattern.permute.xlu0 14
        %4327 = vperm.xlu0 %4326, %v4279
        %v4328 = vpop.permute.xlu0 %4327
        %v4330 = vmul.f32 %v4328, %v3926
        %v4331 = vmul.f32 %v4328, %v3927
        %v4332 = vmul.f32 %v4328, %v3928
        %v4333 = vmul.f32 %v4328, %v3929
        %v4334 = vmul.f32 %v4328, %v3930
        %v4335 = vmul.f32 %v4328, %v3931
        %v4336 = vmul.f32 %v4328, %v3932
        %v4337 = vmul.f32 %v4328, %v3933
        %v4338 = vadd.f32 %v4318, %v4330
        %v4339 = vadd.f32 %v4319, %v4331
        %v4340 = vadd.f32 %v4320, %v4332
        %v4341 = vadd.f32 %v4321, %v4333
        %v4342 = vadd.f32 %v4322, %v4334
        %v4343 = vadd.f32 %v4323, %v4335
        %v4344 = vadd.f32 %v4324, %v4336
        %v4345 = vadd.f32 %v4325, %v4337
        %v4346 = vmax.f32 %v4338, 0.0
        %v4347 = vmax.f32 %v4339, 0.0
        %v4348 = vmax.f32 %v4340, 0.0
        %v4349 = vmax.f32 %v4341, 0.0
        %v4350 = vmax.f32 %v4342, 0.0
        %v4351 = vmax.f32 %v4343, 0.0
        %v4352 = vmax.f32 %v4344, 0.0
        %v4353 = vmax.f32 %v4345, 0.0
        %4354 = vst [vmem:[%s705 + $0x140] sm:$0xff] %v4346
        %4355 = vst [vmem:[%s705 + $0x148] sm:$0xff] %v4347
        %4356 = vst [vmem:[%s705 + $0x150] sm:$0xff] %v4348
        %4357 = vst [vmem:[%s705 + $0x158] sm:$0xff] %v4349
        %4358 = vst [vmem:[%s705 + $0x160] sm:$0xff] %v4350
        %4359 = vst [vmem:[%s705 + $0x168] sm:$0xff] %v4351
        %4360 = vst [vmem:[%s705 + $0x170] sm:$0xff] %v4352
        %4361 = vst [vmem:[%s705 + $0x178] sm:$0xff] %v4353
        %v4362 = vld [vmem:[#allocation5] sm:$0xff]
        %v4363 = vld [vmem:[#allocation2] sm:$0xff]
        %4365 = vset.pattern.permute.xlu0 15
        %4366 = vperm.xlu0 %4365, %v4363
        %v4367 = vpop.permute.xlu0 %4366
        %v4369 = vmul.f32 %v4367, %v3888
        %v4370 = vmul.f32 %v4367, %v3889
        %v4371 = vmul.f32 %v4367, %v3890
        %v4372 = vmul.f32 %v4367, %v3891
        %v4373 = vmul.f32 %v4367, %v3892
        %v4374 = vmul.f32 %v4367, %v3893
        %v4375 = vmul.f32 %v4367, %v3894
        %v4376 = vmul.f32 %v4367, %v3895
        %4378 = vset.pattern.permute.xlu0 5
        %4379 = vperm.xlu0 %4378, %v4362
        %v4380 = vpop.permute.xlu0 %4379
        %v4382 = vadd.f32 %v4380, %v4369
        %v4383 = vadd.f32 %v4380, %v4370
        %v4384 = vadd.f32 %v4380, %v4371
        %v4385 = vadd.f32 %v4380, %v4372
        %v4386 = vadd.f32 %v4380, %v4373
        %v4387 = vadd.f32 %v4380, %v4374
        %v4388 = vadd.f32 %v4380, %v4375
        %v4389 = vadd.f32 %v4380, %v4376
        %4390 = vset.pattern.permute.xlu0 16
        %4391 = vperm.xlu0 %4390, %v4363
        %v4392 = vpop.permute.xlu0 %4391
        %v4394 = vmul.f32 %v4392, %v3907
        %v4395 = vmul.f32 %v4392, %v3908
        %v4396 = vmul.f32 %v4392, %v3909
        %v4397 = vmul.f32 %v4392, %v3910
        %v4398 = vmul.f32 %v4392, %v3911
        %v4399 = vmul.f32 %v4392, %v3912
        %v4400 = vmul.f32 %v4392, %v3913
        %v4401 = vmul.f32 %v4392, %v3914
        %v4402 = vadd.f32 %v4382, %v4394
        %v4403 = vadd.f32 %v4383, %v4395
        %v4404 = vadd.f32 %v4384, %v4396
        %v4405 = vadd.f32 %v4385, %v4397
        %v4406 = vadd.f32 %v4386, %v4398
        %v4407 = vadd.f32 %v4387, %v4399
        %v4408 = vadd.f32 %v4388, %v4400
        %v4409 = vadd.f32 %v4389, %v4401
        %4410 = vset.pattern.permute.xlu0 17
        %4411 = vperm.xlu0 %4410, %v4363
        %v4412 = vpop.permute.xlu0 %4411
        %v4414 = vmul.f32 %v4412, %v3926
        %v4415 = vmul.f32 %v4412, %v3927
        %v4416 = vmul.f32 %v4412, %v3928
        %v4417 = vmul.f32 %v4412, %v3929
        %v4418 = vmul.f32 %v4412, %v3930
        %v4419 = vmul.f32 %v4412, %v3931
        %v4420 = vmul.f32 %v4412, %v3932
        %v4421 = vmul.f32 %v4412, %v3933
        %v4422 = vadd.f32 %v4402, %v4414
        %v4423 = vadd.f32 %v4403, %v4415
        %v4424 = vadd.f32 %v4404, %v4416
        %v4425 = vadd.f32 %v4405, %v4417
        %v4426 = vadd.f32 %v4406, %v4418
        %v4427 = vadd.f32 %v4407, %v4419
        %v4428 = vadd.f32 %v4408, %v4420
        %v4429 = vadd.f32 %v4409, %v4421
        %v4430 = vmax.f32 %v4422, 0.0
        %v4431 = vmax.f32 %v4423, 0.0
        %v4432 = vmax.f32 %v4424, 0.0
        %v4433 = vmax.f32 %v4425, 0.0
        %v4434 = vmax.f32 %v4426, 0.0
        %v4435 = vmax.f32 %v4427, 0.0
        %v4436 = vmax.f32 %v4428, 0.0
        %v4437 = vmax.f32 %v4429, 0.0
        %4438 = vst [vmem:[%s790 + $0x140] sm:$0xff] %v4430
        %4439 = vst [vmem:[%s790 + $0x148] sm:$0xff] %v4431
        %4440 = vst [vmem:[%s790 + $0x150] sm:$0xff] %v4432
        %4441 = vst [vmem:[%s790 + $0x158] sm:$0xff] %v4433
        %4442 = vst [vmem:[%s790 + $0x160] sm:$0xff] %v4434
        %4443 = vst [vmem:[%s790 + $0x168] sm:$0xff] %v4435
        %4444 = vst [vmem:[%s790 + $0x170] sm:$0xff] %v4436
        %4445 = vst [vmem:[%s790 + $0x178] sm:$0xff] %v4437
        %v4446 = vld [vmem:[#allocation5] sm:$0xff]
        %v4447 = vld [vmem:[#allocation2] sm:$0xff]
        %4449 = vset.pattern.permute.xlu0 18
        %4450 = vperm.xlu0 %4449, %v4447
        %v4451 = vpop.permute.xlu0 %4450
        %v4453 = vmul.f32 %v4451, %v3888
        %v4454 = vmul.f32 %v4451, %v3889
        %v4455 = vmul.f32 %v4451, %v3890
        %v4456 = vmul.f32 %v4451, %v3891
        %v4457 = vmul.f32 %v4451, %v3892
        %v4458 = vmul.f32 %v4451, %v3893
        %v4459 = vmul.f32 %v4451, %v3894
        %v4460 = vmul.f32 %v4451, %v3895
        %4462 = vset.pattern.permute.xlu0 6
        %4463 = vperm.xlu0 %4462, %v4446
        %v4464 = vpop.permute.xlu0 %4463
        %v4466 = vadd.f32 %v4464, %v4453
        %v4467 = vadd.f32 %v4464, %v4454
        %v4468 = vadd.f32 %v4464, %v4455
        %v4469 = vadd.f32 %v4464, %v4456
        %v4470 = vadd.f32 %v4464, %v4457
        %v4471 = vadd.f32 %v4464, %v4458
        %v4472 = vadd.f32 %v4464, %v4459
        %v4473 = vadd.f32 %v4464, %v4460
        %4474 = vset.pattern.permute.xlu0 19
        %4475 = vperm.xlu0 %4474, %v4447
        %v4476 = vpop.permute.xlu0 %4475
        %v4478 = vmul.f32 %v4476, %v3907
        %v4479 = vmul.f32 %v4476, %v3908
        %v4480 = vmul.f32 %v4476, %v3909
        %v4481 = vmul.f32 %v4476, %v3910
        %v4482 = vmul.f32 %v4476, %v3911
        %v4483 = vmul.f32 %v4476, %v3912
        %v4484 = vmul.f32 %v4476, %v3913
        %v4485 = vmul.f32 %v4476, %v3914
        %v4486 = vadd.f32 %v4466, %v4478
        %v4487 = vadd.f32 %v4467, %v4479
        %v4488 = vadd.f32 %v4468, %v4480
        %v4489 = vadd.f32 %v4469, %v4481
        %v4490 = vadd.f32 %v4470, %v4482
        %v4491 = vadd.f32 %v4471, %v4483
        %v4492 = vadd.f32 %v4472, %v4484
        %v4493 = vadd.f32 %v4473, %v4485
        %4494 = vset.pattern.permute.xlu0 20
        %4495 = vperm.xlu0 %4494, %v4447
        %v4496 = vpop.permute.xlu0 %4495
        %v4498 = vmul.f32 %v4496, %v3926
        %v4499 = vmul.f32 %v4496, %v3927
        %v4500 = vmul.f32 %v4496, %v3928
        %v4501 = vmul.f32 %v4496, %v3929
        %v4502 = vmul.f32 %v4496, %v3930
        %v4503 = vmul.f32 %v4496, %v3931
        %v4504 = vmul.f32 %v4496, %v3932
        %v4505 = vmul.f32 %v4496, %v3933
        %v4506 = vadd.f32 %v4486, %v4498
        %v4507 = vadd.f32 %v4487, %v4499
        %v4508 = vadd.f32 %v4488, %v4500
        %v4509 = vadd.f32 %v4489, %v4501
        %v4510 = vadd.f32 %v4490, %v4502
        %v4511 = vadd.f32 %v4491, %v4503
        %v4512 = vadd.f32 %v4492, %v4504
        %v4513 = vadd.f32 %v4493, %v4505
        %v4514 = vmax.f32 %v4506, 0.0
        %v4515 = vmax.f32 %v4507, 0.0
        %v4516 = vmax.f32 %v4508, 0.0
        %v4517 = vmax.f32 %v4509, 0.0
        %v4518 = vmax.f32 %v4510, 0.0
        %v4519 = vmax.f32 %v4511, 0.0
        %v4520 = vmax.f32 %v4512, 0.0
        %v4521 = vmax.f32 %v4513, 0.0
        %4522 = vst [vmem:[%s875 + $0x140] sm:$0xff] %v4514
        %4523 = vst [vmem:[%s875 + $0x148] sm:$0xff] %v4515
        %4524 = vst [vmem:[%s875 + $0x150] sm:$0xff] %v4516
        %4525 = vst [vmem:[%s875 + $0x158] sm:$0xff] %v4517
        %4526 = vst [vmem:[%s875 + $0x160] sm:$0xff] %v4518
        %4527 = vst [vmem:[%s875 + $0x168] sm:$0xff] %v4519
        %4528 = vst [vmem:[%s875 + $0x170] sm:$0xff] %v4520
        %4529 = vst [vmem:[%s875 + $0x178] sm:$0xff] %v4521
        %v4530 = vld [vmem:[#allocation5] sm:$0xff]
        %v4531 = vld [vmem:[#allocation2] sm:$0xff]
        %4533 = vset.pattern.permute.xlu0 21
        %4534 = vperm.xlu0 %4533, %v4531
        %v4535 = vpop.permute.xlu0 %4534
        %v4537 = vmul.f32 %v4535, %v3888
        %v4538 = vmul.f32 %v4535, %v3889
        %v4539 = vmul.f32 %v4535, %v3890
        %v4540 = vmul.f32 %v4535, %v3891
        %v4541 = vmul.f32 %v4535, %v3892
        %v4542 = vmul.f32 %v4535, %v3893
        %v4543 = vmul.f32 %v4535, %v3894
        %v4544 = vmul.f32 %v4535, %v3895
        %4546 = vset.pattern.permute.xlu0 7
        %4547 = vperm.xlu0 %4546, %v4530
        %v4548 = vpop.permute.xlu0 %4547
        %v4550 = vadd.f32 %v4548, %v4537
        %v4551 = vadd.f32 %v4548, %v4538
        %v4552 = vadd.f32 %v4548, %v4539
        %v4553 = vadd.f32 %v4548, %v4540
        %v4554 = vadd.f32 %v4548, %v4541
        %v4555 = vadd.f32 %v4548, %v4542
        %v4556 = vadd.f32 %v4548, %v4543
        %v4557 = vadd.f32 %v4548, %v4544
        %4558 = vset.pattern.permute.xlu0 22
        %4559 = vperm.xlu0 %4558, %v4531
        %v4560 = vpop.permute.xlu0 %4559
        %v4562 = vmul.f32 %v4560, %v3907
        %v4563 = vmul.f32 %v4560, %v3908
        %v4564 = vmul.f32 %v4560, %v3909
        %v4565 = vmul.f32 %v4560, %v3910
        %v4566 = vmul.f32 %v4560, %v3911
        %v4567 = vmul.f32 %v4560, %v3912
        %v4568 = vmul.f32 %v4560, %v3913
        %v4569 = vmul.f32 %v4560, %v3914
        %v4570 = vadd.f32 %v4550, %v4562
        %v4571 = vadd.f32 %v4551, %v4563
        %v4572 = vadd.f32 %v4552, %v4564
        %v4573 = vadd.f32 %v4553, %v4565
        %v4574 = vadd.f32 %v4554, %v4566
        %v4575 = vadd.f32 %v4555, %v4567
        %v4576 = vadd.f32 %v4556, %v4568
        %v4577 = vadd.f32 %v4557, %v4569
        %4578 = vset.pattern.permute.xlu0 23
        %4579 = vperm.xlu0 %4578, %v4531
        %v4580 = vpop.permute.xlu0 %4579
        %v4582 = vmul.f32 %v4580, %v3926
        %v4583 = vmul.f32 %v4580, %v3927
        %v4584 = vmul.f32 %v4580, %v3928
        %v4585 = vmul.f32 %v4580, %v3929
        %v4586 = vmul.f32 %v4580, %v3930
        %v4587 = vmul.f32 %v4580, %v3931
        %v4588 = vmul.f32 %v4580, %v3932
        %v4589 = vmul.f32 %v4580, %v3933
        %v4590 = vadd.f32 %v4570, %v4582
        %v4591 = vadd.f32 %v4571, %v4583
        %v4592 = vadd.f32 %v4572, %v4584
        %v4593 = vadd.f32 %v4573, %v4585
        %v4594 = vadd.f32 %v4574, %v4586
        %v4595 = vadd.f32 %v4575, %v4587
        %v4596 = vadd.f32 %v4576, %v4588
        %v4597 = vadd.f32 %v4577, %v4589
        %v4598 = vmax.f32 %v4590, 0.0
        %v4599 = vmax.f32 %v4591, 0.0
        %v4600 = vmax.f32 %v4592, 0.0
        %v4601 = vmax.f32 %v4593, 0.0
        %v4602 = vmax.f32 %v4594, 0.0
        %v4603 = vmax.f32 %v4595, 0.0
        %v4604 = vmax.f32 %v4596, 0.0
        %v4605 = vmax.f32 %v4597, 0.0
        %4606 = vst [vmem:[%s960 + $0x140] sm:$0xff] %v4598
        %4607 = vst [vmem:[%s960 + $0x148] sm:$0xff] %v4599
        %4608 = vst [vmem:[%s960 + $0x150] sm:$0xff] %v4600
        %4609 = vst [vmem:[%s960 + $0x158] sm:$0xff] %v4601
        %4610 = vst [vmem:[%s960 + $0x160] sm:$0xff] %v4602
        %4611 = vst [vmem:[%s960 + $0x168] sm:$0xff] %v4603
        %4612 = vst [vmem:[%s960 + $0x170] sm:$0xff] %v4604
        %4613 = vst [vmem:[%s960 + $0x178] sm:$0xff] %v4605
        %s4614 = scalar_lea.vmem %s227, 192
        %v4615 = vld [vmem:[%s4614] ss:$4 sm:$0xff]
        %v4617 = vperm.slane %v4615, 0
        %v4618 = vperm.slane %v4615, 1
        %v4619 = vperm.slane %v4615, 2
        %v4620 = vperm.slane %v4615, 3
        %v4621 = vperm.slane %v4615, 4
        %v4622 = vperm.slane %v4615, 5
        %v4623 = vperm.slane %v4615, 6
        %v4624 = vperm.slane %v4615, 7
        %s4633 = scalar_lea.vmem %s227, 193
        %v4634 = vld [vmem:[%s4633] ss:$4 sm:$0xff]
        %v4636 = vperm.slane %v4634, 0
        %v4637 = vperm.slane %v4634, 1
        %v4638 = vperm.slane %v4634, 2
        %v4639 = vperm.slane %v4634, 3
        %v4640 = vperm.slane %v4634, 4
        %v4641 = vperm.slane %v4634, 5
        %v4642 = vperm.slane %v4634, 6
        %v4643 = vperm.slane %v4634, 7
        %s4652 = scalar_lea.vmem %s227, 194
        %v4653 = vld [vmem:[%s4652] ss:$4 sm:$0xff]
        %v4655 = vperm.slane %v4653, 0
        %v4656 = vperm.slane %v4653, 1
        %v4657 = vperm.slane %v4653, 2
        %v4658 = vperm.slane %v4653, 3
        %v4659 = vperm.slane %v4653, 4
        %v4660 = vperm.slane %v4653, 5
        %v4661 = vperm.slane %v4653, 6
        %v4662 = vperm.slane %v4653, 7
        %v4671 = vld [vmem:[#allocation5] sm:$0xff]
        %v4672 = vld [vmem:[#allocation2] sm:$0xff]
        %4674 = vset.pattern.permute.xlu0 0
        %4675 = vperm.xlu0 %4674, %v4672
        %v4676 = vpop.permute.xlu0 %4675
        %v4678 = vmul.f32 %v4676, %v4617
        %v4679 = vmul.f32 %v4676, %v4618
        %v4680 = vmul.f32 %v4676, %v4619
        %v4681 = vmul.f32 %v4676, %v4620
        %v4682 = vmul.f32 %v4676, %v4621
        %v4683 = vmul.f32 %v4676, %v4622
        %v4684 = vmul.f32 %v4676, %v4623
        %v4685 = vmul.f32 %v4676, %v4624
        %4687 = vset.pattern.permute.xlu0 0
        %4688 = vperm.xlu0 %4687, %v4671
        %v4689 = vpop.permute.xlu0 %4688
        %v4691 = vadd.f32 %v4689, %v4678
        %v4692 = vadd.f32 %v4689, %v4679
        %v4693 = vadd.f32 %v4689, %v4680
        %v4694 = vadd.f32 %v4689, %v4681
        %v4695 = vadd.f32 %v4689, %v4682
        %v4696 = vadd.f32 %v4689, %v4683
        %v4697 = vadd.f32 %v4689, %v4684
        %v4698 = vadd.f32 %v4689, %v4685
        %4699 = vset.pattern.permute.xlu0 1
        %4700 = vperm.xlu0 %4699, %v4672
        %v4701 = vpop.permute.xlu0 %4700
        %v4703 = vmul.f32 %v4701, %v4636
        %v4704 = vmul.f32 %v4701, %v4637
        %v4705 = vmul.f32 %v4701, %v4638
        %v4706 = vmul.f32 %v4701, %v4639
        %v4707 = vmul.f32 %v4701, %v4640
        %v4708 = vmul.f32 %v4701, %v4641
        %v4709 = vmul.f32 %v4701, %v4642
        %v4710 = vmul.f32 %v4701, %v4643
        %v4711 = vadd.f32 %v4691, %v4703
        %v4712 = vadd.f32 %v4692, %v4704
        %v4713 = vadd.f32 %v4693, %v4705
        %v4714 = vadd.f32 %v4694, %v4706
        %v4715 = vadd.f32 %v4695, %v4707
        %v4716 = vadd.f32 %v4696, %v4708
        %v4717 = vadd.f32 %v4697, %v4709
        %v4718 = vadd.f32 %v4698, %v4710
        %4719 = vset.pattern.permute.xlu0 2
        %4720 = vperm.xlu0 %4719, %v4672
        %v4721 = vpop.permute.xlu0 %4720
        %v4723 = vmul.f32 %v4721, %v4655
        %v4724 = vmul.f32 %v4721, %v4656
        %v4725 = vmul.f32 %v4721, %v4657
        %v4726 = vmul.f32 %v4721, %v4658
        %v4727 = vmul.f32 %v4721, %v4659
        %v4728 = vmul.f32 %v4721, %v4660
        %v4729 = vmul.f32 %v4721, %v4661
        %v4730 = vmul.f32 %v4721, %v4662
        %v4731 = vadd.f32 %v4711, %v4723
        %v4732 = vadd.f32 %v4712, %v4724
        %v4733 = vadd.f32 %v4713, %v4725
        %v4734 = vadd.f32 %v4714, %v4726
        %v4735 = vadd.f32 %v4715, %v4727
        %v4736 = vadd.f32 %v4716, %v4728
        %v4737 = vadd.f32 %v4717, %v4729
        %v4738 = vadd.f32 %v4718, %v4730
        %v4739 = vmax.f32 %v4731, 0.0
        %v4740 = vmax.f32 %v4732, 0.0
        %v4741 = vmax.f32 %v4733, 0.0
        %v4742 = vmax.f32 %v4734, 0.0
        %v4743 = vmax.f32 %v4735, 0.0
        %v4744 = vmax.f32 %v4736, 0.0
        %v4745 = vmax.f32 %v4737, 0.0
        %v4746 = vmax.f32 %v4738, 0.0
        %4747 = vst [vmem:[%s218 + $0x180] sm:$0xff] %v4739
        %4748 = vst [vmem:[%s218 + $0x188] sm:$0xff] %v4740
        %4749 = vst [vmem:[%s218 + $0x190] sm:$0xff] %v4741
        %4750 = vst [vmem:[%s218 + $0x198] sm:$0xff] %v4742
        %4751 = vst [vmem:[%s218 + $0x1a0] sm:$0xff] %v4743
        %4752 = vst [vmem:[%s218 + $0x1a8] sm:$0xff] %v4744
        %4753 = vst [vmem:[%s218 + $0x1b0] sm:$0xff] %v4745
        %4754 = vst [vmem:[%s218 + $0x1b8] sm:$0xff] %v4746
        %v4755 = vld [vmem:[#allocation5] sm:$0xff]
        %v4756 = vld [vmem:[#allocation2] sm:$0xff]
        %4758 = vset.pattern.permute.xlu0 3
        %4759 = vperm.xlu0 %4758, %v4756
        %v4760 = vpop.permute.xlu0 %4759
        %v4762 = vmul.f32 %v4760, %v4617
        %v4763 = vmul.f32 %v4760, %v4618
        %v4764 = vmul.f32 %v4760, %v4619
        %v4765 = vmul.f32 %v4760, %v4620
        %v4766 = vmul.f32 %v4760, %v4621
        %v4767 = vmul.f32 %v4760, %v4622
        %v4768 = vmul.f32 %v4760, %v4623
        %v4769 = vmul.f32 %v4760, %v4624
        %4771 = vset.pattern.permute.xlu0 1
        %4772 = vperm.xlu0 %4771, %v4755
        %v4773 = vpop.permute.xlu0 %4772
        %v4775 = vadd.f32 %v4773, %v4762
        %v4776 = vadd.f32 %v4773, %v4763
        %v4777 = vadd.f32 %v4773, %v4764
        %v4778 = vadd.f32 %v4773, %v4765
        %v4779 = vadd.f32 %v4773, %v4766
        %v4780 = vadd.f32 %v4773, %v4767
        %v4781 = vadd.f32 %v4773, %v4768
        %v4782 = vadd.f32 %v4773, %v4769
        %4783 = vset.pattern.permute.xlu0 4
        %4784 = vperm.xlu0 %4783, %v4756
        %v4785 = vpop.permute.xlu0 %4784
        %v4787 = vmul.f32 %v4785, %v4636
        %v4788 = vmul.f32 %v4785, %v4637
        %v4789 = vmul.f32 %v4785, %v4638
        %v4790 = vmul.f32 %v4785, %v4639
        %v4791 = vmul.f32 %v4785, %v4640
        %v4792 = vmul.f32 %v4785, %v4641
        %v4793 = vmul.f32 %v4785, %v4642
        %v4794 = vmul.f32 %v4785, %v4643
        %v4795 = vadd.f32 %v4775, %v4787
        %v4796 = vadd.f32 %v4776, %v4788
        %v4797 = vadd.f32 %v4777, %v4789
        %v4798 = vadd.f32 %v4778, %v4790
        %v4799 = vadd.f32 %v4779, %v4791
        %v4800 = vadd.f32 %v4780, %v4792
        %v4801 = vadd.f32 %v4781, %v4793
        %v4802 = vadd.f32 %v4782, %v4794
        %4803 = vset.pattern.permute.xlu0 5
        %4804 = vperm.xlu0 %4803, %v4756
        %v4805 = vpop.permute.xlu0 %4804
        %v4807 = vmul.f32 %v4805, %v4655
        %v4808 = vmul.f32 %v4805, %v4656
        %v4809 = vmul.f32 %v4805, %v4657
        %v4810 = vmul.f32 %v4805, %v4658
        %v4811 = vmul.f32 %v4805, %v4659
        %v4812 = vmul.f32 %v4805, %v4660
        %v4813 = vmul.f32 %v4805, %v4661
        %v4814 = vmul.f32 %v4805, %v4662
        %v4815 = vadd.f32 %v4795, %v4807
        %v4816 = vadd.f32 %v4796, %v4808
        %v4817 = vadd.f32 %v4797, %v4809
        %v4818 = vadd.f32 %v4798, %v4810
        %v4819 = vadd.f32 %v4799, %v4811
        %v4820 = vadd.f32 %v4800, %v4812
        %v4821 = vadd.f32 %v4801, %v4813
        %v4822 = vadd.f32 %v4802, %v4814
        %v4823 = vmax.f32 %v4815, 0.0
        %v4824 = vmax.f32 %v4816, 0.0
        %v4825 = vmax.f32 %v4817, 0.0
        %v4826 = vmax.f32 %v4818, 0.0
        %v4827 = vmax.f32 %v4819, 0.0
        %v4828 = vmax.f32 %v4820, 0.0
        %v4829 = vmax.f32 %v4821, 0.0
        %v4830 = vmax.f32 %v4822, 0.0
        %4831 = vst [vmem:[%s450 + $0x180] sm:$0xff] %v4823
        %4832 = vst [vmem:[%s450 + $0x188] sm:$0xff] %v4824
        %4833 = vst [vmem:[%s450 + $0x190] sm:$0xff] %v4825
        %4834 = vst [vmem:[%s450 + $0x198] sm:$0xff] %v4826
        %4835 = vst [vmem:[%s450 + $0x1a0] sm:$0xff] %v4827
        %4836 = vst [vmem:[%s450 + $0x1a8] sm:$0xff] %v4828
        %4837 = vst [vmem:[%s450 + $0x1b0] sm:$0xff] %v4829
        %4838 = vst [vmem:[%s450 + $0x1b8] sm:$0xff] %v4830
        %v4839 = vld [vmem:[#allocation5] sm:$0xff]
        %v4840 = vld [vmem:[#allocation2] sm:$0xff]
        %4842 = vset.pattern.permute.xlu0 6
        %4843 = vperm.xlu0 %4842, %v4840
        %v4844 = vpop.permute.xlu0 %4843
        %v4846 = vmul.f32 %v4844, %v4617
        %v4847 = vmul.f32 %v4844, %v4618
        %v4848 = vmul.f32 %v4844, %v4619
        %v4849 = vmul.f32 %v4844, %v4620
        %v4850 = vmul.f32 %v4844, %v4621
        %v4851 = vmul.f32 %v4844, %v4622
        %v4852 = vmul.f32 %v4844, %v4623
        %v4853 = vmul.f32 %v4844, %v4624
        %4855 = vset.pattern.permute.xlu0 2
        %4856 = vperm.xlu0 %4855, %v4839
        %v4857 = vpop.permute.xlu0 %4856
        %v4859 = vadd.f32 %v4857, %v4846
        %v4860 = vadd.f32 %v4857, %v4847
        %v4861 = vadd.f32 %v4857, %v4848
        %v4862 = vadd.f32 %v4857, %v4849
        %v4863 = vadd.f32 %v4857, %v4850
        %v4864 = vadd.f32 %v4857, %v4851
        %v4865 = vadd.f32 %v4857, %v4852
        %v4866 = vadd.f32 %v4857, %v4853
        %4867 = vset.pattern.permute.xlu0 7
        %4868 = vperm.xlu0 %4867, %v4840
        %v4869 = vpop.permute.xlu0 %4868
        %v4871 = vmul.f32 %v4869, %v4636
        %v4872 = vmul.f32 %v4869, %v4637
        %v4873 = vmul.f32 %v4869, %v4638
        %v4874 = vmul.f32 %v4869, %v4639
        %v4875 = vmul.f32 %v4869, %v4640
        %v4876 = vmul.f32 %v4869, %v4641
        %v4877 = vmul.f32 %v4869, %v4642
        %v4878 = vmul.f32 %v4869, %v4643
        %v4879 = vadd.f32 %v4859, %v4871
        %v4880 = vadd.f32 %v4860, %v4872
        %v4881 = vadd.f32 %v4861, %v4873
        %v4882 = vadd.f32 %v4862, %v4874
        %v4883 = vadd.f32 %v4863, %v4875
        %v4884 = vadd.f32 %v4864, %v4876
        %v4885 = vadd.f32 %v4865, %v4877
        %v4886 = vadd.f32 %v4866, %v4878
        %4887 = vset.pattern.permute.xlu0 8
        %4888 = vperm.xlu0 %4887, %v4840
        %v4889 = vpop.permute.xlu0 %4888
        %v4891 = vmul.f32 %v4889, %v4655
        %v4892 = vmul.f32 %v4889, %v4656
        %v4893 = vmul.f32 %v4889, %v4657
        %v4894 = vmul.f32 %v4889, %v4658
        %v4895 = vmul.f32 %v4889, %v4659
        %v4896 = vmul.f32 %v4889, %v4660
        %v4897 = vmul.f32 %v4889, %v4661
        %v4898 = vmul.f32 %v4889, %v4662
        %v4899 = vadd.f32 %v4879, %v4891
        %v4900 = vadd.f32 %v4880, %v4892
        %v4901 = vadd.f32 %v4881, %v4893
        %v4902 = vadd.f32 %v4882, %v4894
        %v4903 = vadd.f32 %v4883, %v4895
        %v4904 = vadd.f32 %v4884, %v4896
        %v4905 = vadd.f32 %v4885, %v4897
        %v4906 = vadd.f32 %v4886, %v4898
        %v4907 = vmax.f32 %v4899, 0.0
        %v4908 = vmax.f32 %v4900, 0.0
        %v4909 = vmax.f32 %v4901, 0.0
        %v4910 = vmax.f32 %v4902, 0.0
        %v4911 = vmax.f32 %v4903, 0.0
        %v4912 = vmax.f32 %v4904, 0.0
        %v4913 = vmax.f32 %v4905, 0.0
        %v4914 = vmax.f32 %v4906, 0.0
        %4915 = vst [vmem:[%s535 + $0x180] sm:$0xff] %v4907
        %4916 = vst [vmem:[%s535 + $0x188] sm:$0xff] %v4908
        %4917 = vst [vmem:[%s535 + $0x190] sm:$0xff] %v4909
        %4918 = vst [vmem:[%s535 + $0x198] sm:$0xff] %v4910
        %4919 = vst [vmem:[%s535 + $0x1a0] sm:$0xff] %v4911
        %4920 = vst [vmem:[%s535 + $0x1a8] sm:$0xff] %v4912
        %4921 = vst [vmem:[%s535 + $0x1b0] sm:$0xff] %v4913
        %4922 = vst [vmem:[%s535 + $0x1b8] sm:$0xff] %v4914
        %v4923 = vld [vmem:[#allocation5] sm:$0xff]
        %v4924 = vld [vmem:[#allocation2] sm:$0xff]
        %4926 = vset.pattern.permute.xlu0 9
        %4927 = vperm.xlu0 %4926, %v4924
        %v4928 = vpop.permute.xlu0 %4927
        %v4930 = vmul.f32 %v4928, %v4617
        %v4931 = vmul.f32 %v4928, %v4618
        %v4932 = vmul.f32 %v4928, %v4619
        %v4933 = vmul.f32 %v4928, %v4620
        %v4934 = vmul.f32 %v4928, %v4621
        %v4935 = vmul.f32 %v4928, %v4622
        %v4936 = vmul.f32 %v4928, %v4623
        %v4937 = vmul.f32 %v4928, %v4624
        %4939 = vset.pattern.permute.xlu0 3
        %4940 = vperm.xlu0 %4939, %v4923
        %v4941 = vpop.permute.xlu0 %4940
        %v4943 = vadd.f32 %v4941, %v4930
        %v4944 = vadd.f32 %v4941, %v4931
        %v4945 = vadd.f32 %v4941, %v4932
        %v4946 = vadd.f32 %v4941, %v4933
        %v4947 = vadd.f32 %v4941, %v4934
        %v4948 = vadd.f32 %v4941, %v4935
        %v4949 = vadd.f32 %v4941, %v4936
        %v4950 = vadd.f32 %v4941, %v4937
        %4951 = vset.pattern.permute.xlu0 10
        %4952 = vperm.xlu0 %4951, %v4924
        %v4953 = vpop.permute.xlu0 %4952
        %v4955 = vmul.f32 %v4953, %v4636
        %v4956 = vmul.f32 %v4953, %v4637
        %v4957 = vmul.f32 %v4953, %v4638
        %v4958 = vmul.f32 %v4953, %v4639
        %v4959 = vmul.f32 %v4953, %v4640
        %v4960 = vmul.f32 %v4953, %v4641
        %v4961 = vmul.f32 %v4953, %v4642
        %v4962 = vmul.f32 %v4953, %v4643
        %v4963 = vadd.f32 %v4943, %v4955
        %v4964 = vadd.f32 %v4944, %v4956
        %v4965 = vadd.f32 %v4945, %v4957
        %v4966 = vadd.f32 %v4946, %v4958
        %v4967 = vadd.f32 %v4947, %v4959
        %v4968 = vadd.f32 %v4948, %v4960
        %v4969 = vadd.f32 %v4949, %v4961
        %v4970 = vadd.f32 %v4950, %v4962
        %4971 = vset.pattern.permute.xlu0 11
        %4972 = vperm.xlu0 %4971, %v4924
        %v4973 = vpop.permute.xlu0 %4972
        %v4975 = vmul.f32 %v4973, %v4655
        %v4976 = vmul.f32 %v4973, %v4656
        %v4977 = vmul.f32 %v4973, %v4657
        %v4978 = vmul.f32 %v4973, %v4658
        %v4979 = vmul.f32 %v4973, %v4659
        %v4980 = vmul.f32 %v4973, %v4660
        %v4981 = vmul.f32 %v4973, %v4661
        %v4982 = vmul.f32 %v4973, %v4662
        %v4983 = vadd.f32 %v4963, %v4975
        %v4984 = vadd.f32 %v4964, %v4976
        %v4985 = vadd.f32 %v4965, %v4977
        %v4986 = vadd.f32 %v4966, %v4978
        %v4987 = vadd.f32 %v4967, %v4979
        %v4988 = vadd.f32 %v4968, %v4980
        %v4989 = vadd.f32 %v4969, %v4981
        %v4990 = vadd.f32 %v4970, %v4982
        %v4991 = vmax.f32 %v4983, 0.0
        %v4992 = vmax.f32 %v4984, 0.0
        %v4993 = vmax.f32 %v4985, 0.0
        %v4994 = vmax.f32 %v4986, 0.0
        %v4995 = vmax.f32 %v4987, 0.0
        %v4996 = vmax.f32 %v4988, 0.0
        %v4997 = vmax.f32 %v4989, 0.0
        %v4998 = vmax.f32 %v4990, 0.0
        %4999 = vst [vmem:[%s620 + $0x180] sm:$0xff] %v4991
        %5000 = vst [vmem:[%s620 + $0x188] sm:$0xff] %v4992
        %5001 = vst [vmem:[%s620 + $0x190] sm:$0xff] %v4993
        %5002 = vst [vmem:[%s620 + $0x198] sm:$0xff] %v4994
        %5003 = vst [vmem:[%s620 + $0x1a0] sm:$0xff] %v4995
        %5004 = vst [vmem:[%s620 + $0x1a8] sm:$0xff] %v4996
        %5005 = vst [vmem:[%s620 + $0x1b0] sm:$0xff] %v4997
        %5006 = vst [vmem:[%s620 + $0x1b8] sm:$0xff] %v4998
        %v5007 = vld [vmem:[#allocation5] sm:$0xff]
        %v5008 = vld [vmem:[#allocation2] sm:$0xff]
        %5010 = vset.pattern.permute.xlu0 12
        %5011 = vperm.xlu0 %5010, %v5008
        %v5012 = vpop.permute.xlu0 %5011
        %v5014 = vmul.f32 %v5012, %v4617
        %v5015 = vmul.f32 %v5012, %v4618
        %v5016 = vmul.f32 %v5012, %v4619
        %v5017 = vmul.f32 %v5012, %v4620
        %v5018 = vmul.f32 %v5012, %v4621
        %v5019 = vmul.f32 %v5012, %v4622
        %v5020 = vmul.f32 %v5012, %v4623
        %v5021 = vmul.f32 %v5012, %v4624
        %5023 = vset.pattern.permute.xlu0 4
        %5024 = vperm.xlu0 %5023, %v5007
        %v5025 = vpop.permute.xlu0 %5024
        %v5027 = vadd.f32 %v5025, %v5014
        %v5028 = vadd.f32 %v5025, %v5015
        %v5029 = vadd.f32 %v5025, %v5016
        %v5030 = vadd.f32 %v5025, %v5017
        %v5031 = vadd.f32 %v5025, %v5018
        %v5032 = vadd.f32 %v5025, %v5019
        %v5033 = vadd.f32 %v5025, %v5020
        %v5034 = vadd.f32 %v5025, %v5021
        %5035 = vset.pattern.permute.xlu0 13
        %5036 = vperm.xlu0 %5035, %v5008
        %v5037 = vpop.permute.xlu0 %5036
        %v5039 = vmul.f32 %v5037, %v4636
        %v5040 = vmul.f32 %v5037, %v4637
        %v5041 = vmul.f32 %v5037, %v4638
        %v5042 = vmul.f32 %v5037, %v4639
        %v5043 = vmul.f32 %v5037, %v4640
        %v5044 = vmul.f32 %v5037, %v4641
        %v5045 = vmul.f32 %v5037, %v4642
        %v5046 = vmul.f32 %v5037, %v4643
        %v5047 = vadd.f32 %v5027, %v5039
        %v5048 = vadd.f32 %v5028, %v5040
        %v5049 = vadd.f32 %v5029, %v5041
        %v5050 = vadd.f32 %v5030, %v5042
        %v5051 = vadd.f32 %v5031, %v5043
        %v5052 = vadd.f32 %v5032, %v5044
        %v5053 = vadd.f32 %v5033, %v5045
        %v5054 = vadd.f32 %v5034, %v5046
        %5055 = vset.pattern.permute.xlu0 14
        %5056 = vperm.xlu0 %5055, %v5008
        %v5057 = vpop.permute.xlu0 %5056
        %v5059 = vmul.f32 %v5057, %v4655
        %v5060 = vmul.f32 %v5057, %v4656
        %v5061 = vmul.f32 %v5057, %v4657
        %v5062 = vmul.f32 %v5057, %v4658
        %v5063 = vmul.f32 %v5057, %v4659
        %v5064 = vmul.f32 %v5057, %v4660
        %v5065 = vmul.f32 %v5057, %v4661
        %v5066 = vmul.f32 %v5057, %v4662
        %v5067 = vadd.f32 %v5047, %v5059
        %v5068 = vadd.f32 %v5048, %v5060
        %v5069 = vadd.f32 %v5049, %v5061
        %v5070 = vadd.f32 %v5050, %v5062
        %v5071 = vadd.f32 %v5051, %v5063
        %v5072 = vadd.f32 %v5052, %v5064
        %v5073 = vadd.f32 %v5053, %v5065
        %v5074 = vadd.f32 %v5054, %v5066
        %v5075 = vmax.f32 %v5067, 0.0
        %v5076 = vmax.f32 %v5068, 0.0
        %v5077 = vmax.f32 %v5069, 0.0
        %v5078 = vmax.f32 %v5070, 0.0
        %v5079 = vmax.f32 %v5071, 0.0
        %v5080 = vmax.f32 %v5072, 0.0
        %v5081 = vmax.f32 %v5073, 0.0
        %v5082 = vmax.f32 %v5074, 0.0
        %5083 = vst [vmem:[%s705 + $0x180] sm:$0xff] %v5075
        %5084 = vst [vmem:[%s705 + $0x188] sm:$0xff] %v5076
        %5085 = vst [vmem:[%s705 + $0x190] sm:$0xff] %v5077
        %5086 = vst [vmem:[%s705 + $0x198] sm:$0xff] %v5078
        %5087 = vst [vmem:[%s705 + $0x1a0] sm:$0xff] %v5079
        %5088 = vst [vmem:[%s705 + $0x1a8] sm:$0xff] %v5080
        %5089 = vst [vmem:[%s705 + $0x1b0] sm:$0xff] %v5081
        %5090 = vst [vmem:[%s705 + $0x1b8] sm:$0xff] %v5082
        %v5091 = vld [vmem:[#allocation5] sm:$0xff]
        %v5092 = vld [vmem:[#allocation2] sm:$0xff]
        %5094 = vset.pattern.permute.xlu0 15
        %5095 = vperm.xlu0 %5094, %v5092
        %v5096 = vpop.permute.xlu0 %5095
        %v5098 = vmul.f32 %v5096, %v4617
        %v5099 = vmul.f32 %v5096, %v4618
        %v5100 = vmul.f32 %v5096, %v4619
        %v5101 = vmul.f32 %v5096, %v4620
        %v5102 = vmul.f32 %v5096, %v4621
        %v5103 = vmul.f32 %v5096, %v4622
        %v5104 = vmul.f32 %v5096, %v4623
        %v5105 = vmul.f32 %v5096, %v4624
        %5107 = vset.pattern.permute.xlu0 5
        %5108 = vperm.xlu0 %5107, %v5091
        %v5109 = vpop.permute.xlu0 %5108
        %v5111 = vadd.f32 %v5109, %v5098
        %v5112 = vadd.f32 %v5109, %v5099
        %v5113 = vadd.f32 %v5109, %v5100
        %v5114 = vadd.f32 %v5109, %v5101
        %v5115 = vadd.f32 %v5109, %v5102
        %v5116 = vadd.f32 %v5109, %v5103
        %v5117 = vadd.f32 %v5109, %v5104
        %v5118 = vadd.f32 %v5109, %v5105
        %5119 = vset.pattern.permute.xlu0 16
        %5120 = vperm.xlu0 %5119, %v5092
        %v5121 = vpop.permute.xlu0 %5120
        %v5123 = vmul.f32 %v5121, %v4636
        %v5124 = vmul.f32 %v5121, %v4637
        %v5125 = vmul.f32 %v5121, %v4638
        %v5126 = vmul.f32 %v5121, %v4639
        %v5127 = vmul.f32 %v5121, %v4640
        %v5128 = vmul.f32 %v5121, %v4641
        %v5129 = vmul.f32 %v5121, %v4642
        %v5130 = vmul.f32 %v5121, %v4643
        %v5131 = vadd.f32 %v5111, %v5123
        %v5132 = vadd.f32 %v5112, %v5124
        %v5133 = vadd.f32 %v5113, %v5125
        %v5134 = vadd.f32 %v5114, %v5126
        %v5135 = vadd.f32 %v5115, %v5127
        %v5136 = vadd.f32 %v5116, %v5128
        %v5137 = vadd.f32 %v5117, %v5129
        %v5138 = vadd.f32 %v5118, %v5130
        %5139 = vset.pattern.permute.xlu0 17
        %5140 = vperm.xlu0 %5139, %v5092
        %v5141 = vpop.permute.xlu0 %5140
        %v5143 = vmul.f32 %v5141, %v4655
        %v5144 = vmul.f32 %v5141, %v4656
        %v5145 = vmul.f32 %v5141, %v4657
        %v5146 = vmul.f32 %v5141, %v4658
        %v5147 = vmul.f32 %v5141, %v4659
        %v5148 = vmul.f32 %v5141, %v4660
        %v5149 = vmul.f32 %v5141, %v4661
        %v5150 = vmul.f32 %v5141, %v4662
        %v5151 = vadd.f32 %v5131, %v5143
        %v5152 = vadd.f32 %v5132, %v5144
        %v5153 = vadd.f32 %v5133, %v5145
        %v5154 = vadd.f32 %v5134, %v5146
        %v5155 = vadd.f32 %v5135, %v5147
        %v5156 = vadd.f32 %v5136, %v5148
        %v5157 = vadd.f32 %v5137, %v5149
        %v5158 = vadd.f32 %v5138, %v5150
        %v5159 = vmax.f32 %v5151, 0.0
        %v5160 = vmax.f32 %v5152, 0.0
        %v5161 = vmax.f32 %v5153, 0.0
        %v5162 = vmax.f32 %v5154, 0.0
        %v5163 = vmax.f32 %v5155, 0.0
        %v5164 = vmax.f32 %v5156, 0.0
        %v5165 = vmax.f32 %v5157, 0.0
        %v5166 = vmax.f32 %v5158, 0.0
        %5167 = vst [vmem:[%s790 + $0x180] sm:$0xff] %v5159
        %5168 = vst [vmem:[%s790 + $0x188] sm:$0xff] %v5160
        %5169 = vst [vmem:[%s790 + $0x190] sm:$0xff] %v5161
        %5170 = vst [vmem:[%s790 + $0x198] sm:$0xff] %v5162
        %5171 = vst [vmem:[%s790 + $0x1a0] sm:$0xff] %v5163
        %5172 = vst [vmem:[%s790 + $0x1a8] sm:$0xff] %v5164
        %5173 = vst [vmem:[%s790 + $0x1b0] sm:$0xff] %v5165
        %5174 = vst [vmem:[%s790 + $0x1b8] sm:$0xff] %v5166
        %v5175 = vld [vmem:[#allocation5] sm:$0xff]
        %v5176 = vld [vmem:[#allocation2] sm:$0xff]
        %5178 = vset.pattern.permute.xlu0 18
        %5179 = vperm.xlu0 %5178, %v5176
        %v5180 = vpop.permute.xlu0 %5179
        %v5182 = vmul.f32 %v5180, %v4617
        %v5183 = vmul.f32 %v5180, %v4618
        %v5184 = vmul.f32 %v5180, %v4619
        %v5185 = vmul.f32 %v5180, %v4620
        %v5186 = vmul.f32 %v5180, %v4621
        %v5187 = vmul.f32 %v5180, %v4622
        %v5188 = vmul.f32 %v5180, %v4623
        %v5189 = vmul.f32 %v5180, %v4624
        %5191 = vset.pattern.permute.xlu0 6
        %5192 = vperm.xlu0 %5191, %v5175
        %v5193 = vpop.permute.xlu0 %5192
        %v5195 = vadd.f32 %v5193, %v5182
        %v5196 = vadd.f32 %v5193, %v5183
        %v5197 = vadd.f32 %v5193, %v5184
        %v5198 = vadd.f32 %v5193, %v5185
        %v5199 = vadd.f32 %v5193, %v5186
        %v5200 = vadd.f32 %v5193, %v5187
        %v5201 = vadd.f32 %v5193, %v5188
        %v5202 = vadd.f32 %v5193, %v5189
        %5203 = vset.pattern.permute.xlu0 19
        %5204 = vperm.xlu0 %5203, %v5176
        %v5205 = vpop.permute.xlu0 %5204
        %v5207 = vmul.f32 %v5205, %v4636
        %v5208 = vmul.f32 %v5205, %v4637
        %v5209 = vmul.f32 %v5205, %v4638
        %v5210 = vmul.f32 %v5205, %v4639
        %v5211 = vmul.f32 %v5205, %v4640
        %v5212 = vmul.f32 %v5205, %v4641
        %v5213 = vmul.f32 %v5205, %v4642
        %v5214 = vmul.f32 %v5205, %v4643
        %v5215 = vadd.f32 %v5195, %v5207
        %v5216 = vadd.f32 %v5196, %v5208
        %v5217 = vadd.f32 %v5197, %v5209
        %v5218 = vadd.f32 %v5198, %v5210
        %v5219 = vadd.f32 %v5199, %v5211
        %v5220 = vadd.f32 %v5200, %v5212
        %v5221 = vadd.f32 %v5201, %v5213
        %v5222 = vadd.f32 %v5202, %v5214
        %5223 = vset.pattern.permute.xlu0 20
        %5224 = vperm.xlu0 %5223, %v5176
        %v5225 = vpop.permute.xlu0 %5224
        %v5227 = vmul.f32 %v5225, %v4655
        %v5228 = vmul.f32 %v5225, %v4656
        %v5229 = vmul.f32 %v5225, %v4657
        %v5230 = vmul.f32 %v5225, %v4658
        %v5231 = vmul.f32 %v5225, %v4659
        %v5232 = vmul.f32 %v5225, %v4660
        %v5233 = vmul.f32 %v5225, %v4661
        %v5234 = vmul.f32 %v5225, %v4662
        %v5235 = vadd.f32 %v5215, %v5227
        %v5236 = vadd.f32 %v5216, %v5228
        %v5237 = vadd.f32 %v5217, %v5229
        %v5238 = vadd.f32 %v5218, %v5230
        %v5239 = vadd.f32 %v5219, %v5231
        %v5240 = vadd.f32 %v5220, %v5232
        %v5241 = vadd.f32 %v5221, %v5233
        %v5242 = vadd.f32 %v5222, %v5234
        %v5243 = vmax.f32 %v5235, 0.0
        %v5244 = vmax.f32 %v5236, 0.0
        %v5245 = vmax.f32 %v5237, 0.0
        %v5246 = vmax.f32 %v5238, 0.0
        %v5247 = vmax.f32 %v5239, 0.0
        %v5248 = vmax.f32 %v5240, 0.0
        %v5249 = vmax.f32 %v5241, 0.0
        %v5250 = vmax.f32 %v5242, 0.0
        %5251 = vst [vmem:[%s875 + $0x180] sm:$0xff] %v5243
        %5252 = vst [vmem:[%s875 + $0x188] sm:$0xff] %v5244
        %5253 = vst [vmem:[%s875 + $0x190] sm:$0xff] %v5245
        %5254 = vst [vmem:[%s875 + $0x198] sm:$0xff] %v5246
        %5255 = vst [vmem:[%s875 + $0x1a0] sm:$0xff] %v5247
        %5256 = vst [vmem:[%s875 + $0x1a8] sm:$0xff] %v5248
        %5257 = vst [vmem:[%s875 + $0x1b0] sm:$0xff] %v5249
        %5258 = vst [vmem:[%s875 + $0x1b8] sm:$0xff] %v5250
        %v5259 = vld [vmem:[#allocation5] sm:$0xff]
        %v5260 = vld [vmem:[#allocation2] sm:$0xff]
        %5262 = vset.pattern.permute.xlu0 21
        %5263 = vperm.xlu0 %5262, %v5260
        %v5264 = vpop.permute.xlu0 %5263
        %v5266 = vmul.f32 %v5264, %v4617
        %v5267 = vmul.f32 %v5264, %v4618
        %v5268 = vmul.f32 %v5264, %v4619
        %v5269 = vmul.f32 %v5264, %v4620
        %v5270 = vmul.f32 %v5264, %v4621
        %v5271 = vmul.f32 %v5264, %v4622
        %v5272 = vmul.f32 %v5264, %v4623
        %v5273 = vmul.f32 %v5264, %v4624
        %5275 = vset.pattern.permute.xlu0 7
        %5276 = vperm.xlu0 %5275, %v5259
        %v5277 = vpop.permute.xlu0 %5276
        %v5279 = vadd.f32 %v5277, %v5266
        %v5280 = vadd.f32 %v5277, %v5267
        %v5281 = vadd.f32 %v5277, %v5268
        %v5282 = vadd.f32 %v5277, %v5269
        %v5283 = vadd.f32 %v5277, %v5270
        %v5284 = vadd.f32 %v5277, %v5271
        %v5285 = vadd.f32 %v5277, %v5272
        %v5286 = vadd.f32 %v5277, %v5273
        %5287 = vset.pattern.permute.xlu0 22
        %5288 = vperm.xlu0 %5287, %v5260
        %v5289 = vpop.permute.xlu0 %5288
        %v5291 = vmul.f32 %v5289, %v4636
        %v5292 = vmul.f32 %v5289, %v4637
        %v5293 = vmul.f32 %v5289, %v4638
        %v5294 = vmul.f32 %v5289, %v4639
        %v5295 = vmul.f32 %v5289, %v4640
        %v5296 = vmul.f32 %v5289, %v4641
        %v5297 = vmul.f32 %v5289, %v4642
        %v5298 = vmul.f32 %v5289, %v4643
        %v5299 = vadd.f32 %v5279, %v5291
        %v5300 = vadd.f32 %v5280, %v5292
        %v5301 = vadd.f32 %v5281, %v5293
        %v5302 = vadd.f32 %v5282, %v5294
        %v5303 = vadd.f32 %v5283, %v5295
        %v5304 = vadd.f32 %v5284, %v5296
        %v5305 = vadd.f32 %v5285, %v5297
        %v5306 = vadd.f32 %v5286, %v5298
        %5307 = vset.pattern.permute.xlu0 23
        %5308 = vperm.xlu0 %5307, %v5260
        %v5309 = vpop.permute.xlu0 %5308
        %v5311 = vmul.f32 %v5309, %v4655
        %v5312 = vmul.f32 %v5309, %v4656
        %v5313 = vmul.f32 %v5309, %v4657
        %v5314 = vmul.f32 %v5309, %v4658
        %v5315 = vmul.f32 %v5309, %v4659
        %v5316 = vmul.f32 %v5309, %v4660
        %v5317 = vmul.f32 %v5309, %v4661
        %v5318 = vmul.f32 %v5309, %v4662
        %v5319 = vadd.f32 %v5299, %v5311
        %v5320 = vadd.f32 %v5300, %v5312
        %v5321 = vadd.f32 %v5301, %v5313
        %v5322 = vadd.f32 %v5302, %v5314
        %v5323 = vadd.f32 %v5303, %v5315
        %v5324 = vadd.f32 %v5304, %v5316
        %v5325 = vadd.f32 %v5305, %v5317
        %v5326 = vadd.f32 %v5306, %v5318
        %v5327 = vmax.f32 %v5319, 0.0
        %v5328 = vmax.f32 %v5320, 0.0
        %v5329 = vmax.f32 %v5321, 0.0
        %v5330 = vmax.f32 %v5322, 0.0
        %v5331 = vmax.f32 %v5323, 0.0
        %v5332 = vmax.f32 %v5324, 0.0
        %v5333 = vmax.f32 %v5325, 0.0
        %v5334 = vmax.f32 %v5326, 0.0
        %5335 = vst [vmem:[%s960 + $0x180] sm:$0xff] %v5327
        %5336 = vst [vmem:[%s960 + $0x188] sm:$0xff] %v5328
        %5337 = vst [vmem:[%s960 + $0x190] sm:$0xff] %v5329
        %5338 = vst [vmem:[%s960 + $0x198] sm:$0xff] %v5330
        %5339 = vst [vmem:[%s960 + $0x1a0] sm:$0xff] %v5331
        %5340 = vst [vmem:[%s960 + $0x1a8] sm:$0xff] %v5332
        %5341 = vst [vmem:[%s960 + $0x1b0] sm:$0xff] %v5333
        %5342 = vst [vmem:[%s960 + $0x1b8] sm:$0xff] %v5334
        %s5343 = scalar_lea.vmem %s227, 224
        %v5344 = vld [vmem:[%s5343] ss:$4 sm:$0xff]
        %v5346 = vperm.slane %v5344, 0
        %v5347 = vperm.slane %v5344, 1
        %v5348 = vperm.slane %v5344, 2
        %v5349 = vperm.slane %v5344, 3
        %v5350 = vperm.slane %v5344, 4
        %v5351 = vperm.slane %v5344, 5
        %v5352 = vperm.slane %v5344, 6
        %v5353 = vperm.slane %v5344, 7
        %s5362 = scalar_lea.vmem %s227, 225
        %v5363 = vld [vmem:[%s5362] ss:$4 sm:$0xff]
        %v5365 = vperm.slane %v5363, 0
        %v5366 = vperm.slane %v5363, 1
        %v5367 = vperm.slane %v5363, 2
        %v5368 = vperm.slane %v5363, 3
        %v5369 = vperm.slane %v5363, 4
        %v5370 = vperm.slane %v5363, 5
        %v5371 = vperm.slane %v5363, 6
        %v5372 = vperm.slane %v5363, 7
        %s5381 = scalar_lea.vmem %s227, 226
        %v5382 = vld [vmem:[%s5381] ss:$4 sm:$0xff]
        %v5384 = vperm.slane %v5382, 0
        %v5385 = vperm.slane %v5382, 1
        %v5386 = vperm.slane %v5382, 2
        %v5387 = vperm.slane %v5382, 3
        %v5388 = vperm.slane %v5382, 4
        %v5389 = vperm.slane %v5382, 5
        %v5390 = vperm.slane %v5382, 6
        %v5391 = vperm.slane %v5382, 7
        %v5400 = vld [vmem:[#allocation5] sm:$0xff]
        %v5401 = vld [vmem:[#allocation2] sm:$0xff]
        %5403 = vset.pattern.permute.xlu0 0
        %5404 = vperm.xlu0 %5403, %v5401
        %v5405 = vpop.permute.xlu0 %5404
        %v5407 = vmul.f32 %v5405, %v5346
        %v5408 = vmul.f32 %v5405, %v5347
        %v5409 = vmul.f32 %v5405, %v5348
        %v5410 = vmul.f32 %v5405, %v5349
        %v5411 = vmul.f32 %v5405, %v5350
        %v5412 = vmul.f32 %v5405, %v5351
        %v5413 = vmul.f32 %v5405, %v5352
        %v5414 = vmul.f32 %v5405, %v5353
        %5416 = vset.pattern.permute.xlu0 0
        %5417 = vperm.xlu0 %5416, %v5400
        %v5418 = vpop.permute.xlu0 %5417
        %v5420 = vadd.f32 %v5418, %v5407
        %v5421 = vadd.f32 %v5418, %v5408
        %v5422 = vadd.f32 %v5418, %v5409
        %v5423 = vadd.f32 %v5418, %v5410
        %v5424 = vadd.f32 %v5418, %v5411
        %v5425 = vadd.f32 %v5418, %v5412
        %v5426 = vadd.f32 %v5418, %v5413
        %v5427 = vadd.f32 %v5418, %v5414
        %5428 = vset.pattern.permute.xlu0 1
        %5429 = vperm.xlu0 %5428, %v5401
        %v5430 = vpop.permute.xlu0 %5429
        %v5432 = vmul.f32 %v5430, %v5365
        %v5433 = vmul.f32 %v5430, %v5366
        %v5434 = vmul.f32 %v5430, %v5367
        %v5435 = vmul.f32 %v5430, %v5368
        %v5436 = vmul.f32 %v5430, %v5369
        %v5437 = vmul.f32 %v5430, %v5370
        %v5438 = vmul.f32 %v5430, %v5371
        %v5439 = vmul.f32 %v5430, %v5372
        %v5440 = vadd.f32 %v5420, %v5432
        %v5441 = vadd.f32 %v5421, %v5433
        %v5442 = vadd.f32 %v5422, %v5434
        %v5443 = vadd.f32 %v5423, %v5435
        %v5444 = vadd.f32 %v5424, %v5436
        %v5445 = vadd.f32 %v5425, %v5437
        %v5446 = vadd.f32 %v5426, %v5438
        %v5447 = vadd.f32 %v5427, %v5439
        %5448 = vset.pattern.permute.xlu0 2
        %5449 = vperm.xlu0 %5448, %v5401
        %v5450 = vpop.permute.xlu0 %5449
        %v5452 = vmul.f32 %v5450, %v5384
        %v5453 = vmul.f32 %v5450, %v5385
        %v5454 = vmul.f32 %v5450, %v5386
        %v5455 = vmul.f32 %v5450, %v5387
        %v5456 = vmul.f32 %v5450, %v5388
        %v5457 = vmul.f32 %v5450, %v5389
        %v5458 = vmul.f32 %v5450, %v5390
        %v5459 = vmul.f32 %v5450, %v5391
        %v5460 = vadd.f32 %v5440, %v5452
        %v5461 = vadd.f32 %v5441, %v5453
        %v5462 = vadd.f32 %v5442, %v5454
        %v5463 = vadd.f32 %v5443, %v5455
        %v5464 = vadd.f32 %v5444, %v5456
        %v5465 = vadd.f32 %v5445, %v5457
        %v5466 = vadd.f32 %v5446, %v5458
        %v5467 = vadd.f32 %v5447, %v5459
        %v5468 = vmax.f32 %v5460, 0.0
        %v5469 = vmax.f32 %v5461, 0.0
        %v5470 = vmax.f32 %v5462, 0.0
        %v5471 = vmax.f32 %v5463, 0.0
        %v5472 = vmax.f32 %v5464, 0.0
        %v5473 = vmax.f32 %v5465, 0.0
        %v5474 = vmax.f32 %v5466, 0.0
        %v5475 = vmax.f32 %v5467, 0.0
        %5476 = vst [vmem:[%s218 + $0x1c0] sm:$0xff] %v5468
        %5477 = vst [vmem:[%s218 + $0x1c8] sm:$0xff] %v5469
        %5478 = vst [vmem:[%s218 + $0x1d0] sm:$0xff] %v5470
        %5479 = vst [vmem:[%s218 + $0x1d8] sm:$0xff] %v5471
        %5480 = vst [vmem:[%s218 + $0x1e0] sm:$0xff] %v5472
        %5481 = vst [vmem:[%s218 + $0x1e8] sm:$0xff] %v5473
        %5482 = vst [vmem:[%s218 + $0x1f0] sm:$0xff] %v5474
        %5483 = vst [vmem:[%s218 + $0x1f8] sm:$0xff] %v5475
        %v5484 = vld [vmem:[#allocation5] sm:$0xff]
        %v5485 = vld [vmem:[#allocation2] sm:$0xff]
        %5487 = vset.pattern.permute.xlu0 3
        %5488 = vperm.xlu0 %5487, %v5485
        %v5489 = vpop.permute.xlu0 %5488
        %v5491 = vmul.f32 %v5489, %v5346
        %v5492 = vmul.f32 %v5489, %v5347
        %v5493 = vmul.f32 %v5489, %v5348
        %v5494 = vmul.f32 %v5489, %v5349
        %v5495 = vmul.f32 %v5489, %v5350
        %v5496 = vmul.f32 %v5489, %v5351
        %v5497 = vmul.f32 %v5489, %v5352
        %v5498 = vmul.f32 %v5489, %v5353
        %5500 = vset.pattern.permute.xlu0 1
        %5501 = vperm.xlu0 %5500, %v5484
        %v5502 = vpop.permute.xlu0 %5501
        %v5504 = vadd.f32 %v5502, %v5491
        %v5505 = vadd.f32 %v5502, %v5492
        %v5506 = vadd.f32 %v5502, %v5493
        %v5507 = vadd.f32 %v5502, %v5494
        %v5508 = vadd.f32 %v5502, %v5495
        %v5509 = vadd.f32 %v5502, %v5496
        %v5510 = vadd.f32 %v5502, %v5497
        %v5511 = vadd.f32 %v5502, %v5498
        %5512 = vset.pattern.permute.xlu0 4
        %5513 = vperm.xlu0 %5512, %v5485
        %v5514 = vpop.permute.xlu0 %5513
        %v5516 = vmul.f32 %v5514, %v5365
        %v5517 = vmul.f32 %v5514, %v5366
        %v5518 = vmul.f32 %v5514, %v5367
        %v5519 = vmul.f32 %v5514, %v5368
        %v5520 = vmul.f32 %v5514, %v5369
        %v5521 = vmul.f32 %v5514, %v5370
        %v5522 = vmul.f32 %v5514, %v5371
        %v5523 = vmul.f32 %v5514, %v5372
        %v5524 = vadd.f32 %v5504, %v5516
        %v5525 = vadd.f32 %v5505, %v5517
        %v5526 = vadd.f32 %v5506, %v5518
        %v5527 = vadd.f32 %v5507, %v5519
        %v5528 = vadd.f32 %v5508, %v5520
        %v5529 = vadd.f32 %v5509, %v5521
        %v5530 = vadd.f32 %v5510, %v5522
        %v5531 = vadd.f32 %v5511, %v5523
        %5532 = vset.pattern.permute.xlu0 5
        %5533 = vperm.xlu0 %5532, %v5485
        %v5534 = vpop.permute.xlu0 %5533
        %v5536 = vmul.f32 %v5534, %v5384
        %v5537 = vmul.f32 %v5534, %v5385
        %v5538 = vmul.f32 %v5534, %v5386
        %v5539 = vmul.f32 %v5534, %v5387
        %v5540 = vmul.f32 %v5534, %v5388
        %v5541 = vmul.f32 %v5534, %v5389
        %v5542 = vmul.f32 %v5534, %v5390
        %v5543 = vmul.f32 %v5534, %v5391
        %v5544 = vadd.f32 %v5524, %v5536
        %v5545 = vadd.f32 %v5525, %v5537
        %v5546 = vadd.f32 %v5526, %v5538
        %v5547 = vadd.f32 %v5527, %v5539
        %v5548 = vadd.f32 %v5528, %v5540
        %v5549 = vadd.f32 %v5529, %v5541
        %v5550 = vadd.f32 %v5530, %v5542
        %v5551 = vadd.f32 %v5531, %v5543
        %v5552 = vmax.f32 %v5544, 0.0
        %v5553 = vmax.f32 %v5545, 0.0
        %v5554 = vmax.f32 %v5546, 0.0
        %v5555 = vmax.f32 %v5547, 0.0
        %v5556 = vmax.f32 %v5548, 0.0
        %v5557 = vmax.f32 %v5549, 0.0
        %v5558 = vmax.f32 %v5550, 0.0
        %v5559 = vmax.f32 %v5551, 0.0
        %5560 = vst [vmem:[%s450 + $0x1c0] sm:$0xff] %v5552
        %5561 = vst [vmem:[%s450 + $0x1c8] sm:$0xff] %v5553
        %5562 = vst [vmem:[%s450 + $0x1d0] sm:$0xff] %v5554
        %5563 = vst [vmem:[%s450 + $0x1d8] sm:$0xff] %v5555
        %5564 = vst [vmem:[%s450 + $0x1e0] sm:$0xff] %v5556
        %5565 = vst [vmem:[%s450 + $0x1e8] sm:$0xff] %v5557
        %5566 = vst [vmem:[%s450 + $0x1f0] sm:$0xff] %v5558
        %5567 = vst [vmem:[%s450 + $0x1f8] sm:$0xff] %v5559
        %v5568 = vld [vmem:[#allocation5] sm:$0xff]
        %v5569 = vld [vmem:[#allocation2] sm:$0xff]
        %5571 = vset.pattern.permute.xlu0 6
        %5572 = vperm.xlu0 %5571, %v5569
        %v5573 = vpop.permute.xlu0 %5572
        %v5575 = vmul.f32 %v5573, %v5346
        %v5576 = vmul.f32 %v5573, %v5347
        %v5577 = vmul.f32 %v5573, %v5348
        %v5578 = vmul.f32 %v5573, %v5349
        %v5579 = vmul.f32 %v5573, %v5350
        %v5580 = vmul.f32 %v5573, %v5351
        %v5581 = vmul.f32 %v5573, %v5352
        %v5582 = vmul.f32 %v5573, %v5353
        %5584 = vset.pattern.permute.xlu0 2
        %5585 = vperm.xlu0 %5584, %v5568
        %v5586 = vpop.permute.xlu0 %5585
        %v5588 = vadd.f32 %v5586, %v5575
        %v5589 = vadd.f32 %v5586, %v5576
        %v5590 = vadd.f32 %v5586, %v5577
        %v5591 = vadd.f32 %v5586, %v5578
        %v5592 = vadd.f32 %v5586, %v5579
        %v5593 = vadd.f32 %v5586, %v5580
        %v5594 = vadd.f32 %v5586, %v5581
        %v5595 = vadd.f32 %v5586, %v5582
        %5596 = vset.pattern.permute.xlu0 7
        %5597 = vperm.xlu0 %5596, %v5569
        %v5598 = vpop.permute.xlu0 %5597
        %v5600 = vmul.f32 %v5598, %v5365
        %v5601 = vmul.f32 %v5598, %v5366
        %v5602 = vmul.f32 %v5598, %v5367
        %v5603 = vmul.f32 %v5598, %v5368
        %v5604 = vmul.f32 %v5598, %v5369
        %v5605 = vmul.f32 %v5598, %v5370
        %v5606 = vmul.f32 %v5598, %v5371
        %v5607 = vmul.f32 %v5598, %v5372
        %v5608 = vadd.f32 %v5588, %v5600
        %v5609 = vadd.f32 %v5589, %v5601
        %v5610 = vadd.f32 %v5590, %v5602
        %v5611 = vadd.f32 %v5591, %v5603
        %v5612 = vadd.f32 %v5592, %v5604
        %v5613 = vadd.f32 %v5593, %v5605
        %v5614 = vadd.f32 %v5594, %v5606
        %v5615 = vadd.f32 %v5595, %v5607
        %5616 = vset.pattern.permute.xlu0 8
        %5617 = vperm.xlu0 %5616, %v5569
        %v5618 = vpop.permute.xlu0 %5617
        %v5620 = vmul.f32 %v5618, %v5384
        %v5621 = vmul.f32 %v5618, %v5385
        %v5622 = vmul.f32 %v5618, %v5386
        %v5623 = vmul.f32 %v5618, %v5387
        %v5624 = vmul.f32 %v5618, %v5388
        %v5625 = vmul.f32 %v5618, %v5389
        %v5626 = vmul.f32 %v5618, %v5390
        %v5627 = vmul.f32 %v5618, %v5391
        %v5628 = vadd.f32 %v5608, %v5620
        %v5629 = vadd.f32 %v5609, %v5621
        %v5630 = vadd.f32 %v5610, %v5622
        %v5631 = vadd.f32 %v5611, %v5623
        %v5632 = vadd.f32 %v5612, %v5624
        %v5633 = vadd.f32 %v5613, %v5625
        %v5634 = vadd.f32 %v5614, %v5626
        %v5635 = vadd.f32 %v5615, %v5627
        %v5636 = vmax.f32 %v5628, 0.0
        %v5637 = vmax.f32 %v5629, 0.0
        %v5638 = vmax.f32 %v5630, 0.0
        %v5639 = vmax.f32 %v5631, 0.0
        %v5640 = vmax.f32 %v5632, 0.0
        %v5641 = vmax.f32 %v5633, 0.0
        %v5642 = vmax.f32 %v5634, 0.0
        %v5643 = vmax.f32 %v5635, 0.0
        %5644 = vst [vmem:[%s535 + $0x1c0] sm:$0xff] %v5636
        %5645 = vst [vmem:[%s535 + $0x1c8] sm:$0xff] %v5637
        %5646 = vst [vmem:[%s535 + $0x1d0] sm:$0xff] %v5638
        %5647 = vst [vmem:[%s535 + $0x1d8] sm:$0xff] %v5639
        %5648 = vst [vmem:[%s535 + $0x1e0] sm:$0xff] %v5640
        %5649 = vst [vmem:[%s535 + $0x1e8] sm:$0xff] %v5641
        %5650 = vst [vmem:[%s535 + $0x1f0] sm:$0xff] %v5642
        %5651 = vst [vmem:[%s535 + $0x1f8] sm:$0xff] %v5643
        %v5652 = vld [vmem:[#allocation5] sm:$0xff]
        %v5653 = vld [vmem:[#allocation2] sm:$0xff]
        %5655 = vset.pattern.permute.xlu0 9
        %5656 = vperm.xlu0 %5655, %v5653
        %v5657 = vpop.permute.xlu0 %5656
        %v5659 = vmul.f32 %v5657, %v5346
        %v5660 = vmul.f32 %v5657, %v5347
        %v5661 = vmul.f32 %v5657, %v5348
        %v5662 = vmul.f32 %v5657, %v5349
        %v5663 = vmul.f32 %v5657, %v5350
        %v5664 = vmul.f32 %v5657, %v5351
        %v5665 = vmul.f32 %v5657, %v5352
        %v5666 = vmul.f32 %v5657, %v5353
        %5668 = vset.pattern.permute.xlu0 3
        %5669 = vperm.xlu0 %5668, %v5652
        %v5670 = vpop.permute.xlu0 %5669
        %v5672 = vadd.f32 %v5670, %v5659
        %v5673 = vadd.f32 %v5670, %v5660
        %v5674 = vadd.f32 %v5670, %v5661
        %v5675 = vadd.f32 %v5670, %v5662
        %v5676 = vadd.f32 %v5670, %v5663
        %v5677 = vadd.f32 %v5670, %v5664
        %v5678 = vadd.f32 %v5670, %v5665
        %v5679 = vadd.f32 %v5670, %v5666
        %5680 = vset.pattern.permute.xlu0 10
        %5681 = vperm.xlu0 %5680, %v5653
        %v5682 = vpop.permute.xlu0 %5681
        %v5684 = vmul.f32 %v5682, %v5365
        %v5685 = vmul.f32 %v5682, %v5366
        %v5686 = vmul.f32 %v5682, %v5367
        %v5687 = vmul.f32 %v5682, %v5368
        %v5688 = vmul.f32 %v5682, %v5369
        %v5689 = vmul.f32 %v5682, %v5370
        %v5690 = vmul.f32 %v5682, %v5371
        %v5691 = vmul.f32 %v5682, %v5372
        %v5692 = vadd.f32 %v5672, %v5684
        %v5693 = vadd.f32 %v5673, %v5685
        %v5694 = vadd.f32 %v5674, %v5686
        %v5695 = vadd.f32 %v5675, %v5687
        %v5696 = vadd.f32 %v5676, %v5688
        %v5697 = vadd.f32 %v5677, %v5689
        %v5698 = vadd.f32 %v5678, %v5690
        %v5699 = vadd.f32 %v5679, %v5691
        %5700 = vset.pattern.permute.xlu0 11
        %5701 = vperm.xlu0 %5700, %v5653
        %v5702 = vpop.permute.xlu0 %5701
        %v5704 = vmul.f32 %v5702, %v5384
        %v5705 = vmul.f32 %v5702, %v5385
        %v5706 = vmul.f32 %v5702, %v5386
        %v5707 = vmul.f32 %v5702, %v5387
        %v5708 = vmul.f32 %v5702, %v5388
        %v5709 = vmul.f32 %v5702, %v5389
        %v5710 = vmul.f32 %v5702, %v5390
        %v5711 = vmul.f32 %v5702, %v5391
        %v5712 = vadd.f32 %v5692, %v5704
        %v5713 = vadd.f32 %v5693, %v5705
        %v5714 = vadd.f32 %v5694, %v5706
        %v5715 = vadd.f32 %v5695, %v5707
        %v5716 = vadd.f32 %v5696, %v5708
        %v5717 = vadd.f32 %v5697, %v5709
        %v5718 = vadd.f32 %v5698, %v5710
        %v5719 = vadd.f32 %v5699, %v5711
        %v5720 = vmax.f32 %v5712, 0.0
        %v5721 = vmax.f32 %v5713, 0.0
        %v5722 = vmax.f32 %v5714, 0.0
        %v5723 = vmax.f32 %v5715, 0.0
        %v5724 = vmax.f32 %v5716, 0.0
        %v5725 = vmax.f32 %v5717, 0.0
        %v5726 = vmax.f32 %v5718, 0.0
        %v5727 = vmax.f32 %v5719, 0.0
        %5728 = vst [vmem:[%s620 + $0x1c0] sm:$0xff] %v5720
        %5729 = vst [vmem:[%s620 + $0x1c8] sm:$0xff] %v5721
        %5730 = vst [vmem:[%s620 + $0x1d0] sm:$0xff] %v5722
        %5731 = vst [vmem:[%s620 + $0x1d8] sm:$0xff] %v5723
        %5732 = vst [vmem:[%s620 + $0x1e0] sm:$0xff] %v5724
        %5733 = vst [vmem:[%s620 + $0x1e8] sm:$0xff] %v5725
        %5734 = vst [vmem:[%s620 + $0x1f0] sm:$0xff] %v5726
        %5735 = vst [vmem:[%s620 + $0x1f8] sm:$0xff] %v5727
        %v5736 = vld [vmem:[#allocation5] sm:$0xff]
        %v5737 = vld [vmem:[#allocation2] sm:$0xff]
        %5739 = vset.pattern.permute.xlu0 12
        %5740 = vperm.xlu0 %5739, %v5737
        %v5741 = vpop.permute.xlu0 %5740
        %v5743 = vmul.f32 %v5741, %v5346
        %v5744 = vmul.f32 %v5741, %v5347
        %v5745 = vmul.f32 %v5741, %v5348
        %v5746 = vmul.f32 %v5741, %v5349
        %v5747 = vmul.f32 %v5741, %v5350
        %v5748 = vmul.f32 %v5741, %v5351
        %v5749 = vmul.f32 %v5741, %v5352
        %v5750 = vmul.f32 %v5741, %v5353
        %5752 = vset.pattern.permute.xlu0 4
        %5753 = vperm.xlu0 %5752, %v5736
        %v5754 = vpop.permute.xlu0 %5753
        %v5756 = vadd.f32 %v5754, %v5743
        %v5757 = vadd.f32 %v5754, %v5744
        %v5758 = vadd.f32 %v5754, %v5745
        %v5759 = vadd.f32 %v5754, %v5746
        %v5760 = vadd.f32 %v5754, %v5747
        %v5761 = vadd.f32 %v5754, %v5748
        %v5762 = vadd.f32 %v5754, %v5749
        %v5763 = vadd.f32 %v5754, %v5750
        %5764 = vset.pattern.permute.xlu0 13
        %5765 = vperm.xlu0 %5764, %v5737
        %v5766 = vpop.permute.xlu0 %5765
        %v5768 = vmul.f32 %v5766, %v5365
        %v5769 = vmul.f32 %v5766, %v5366
        %v5770 = vmul.f32 %v5766, %v5367
        %v5771 = vmul.f32 %v5766, %v5368
        %v5772 = vmul.f32 %v5766, %v5369
        %v5773 = vmul.f32 %v5766, %v5370
        %v5774 = vmul.f32 %v5766, %v5371
        %v5775 = vmul.f32 %v5766, %v5372
        %v5776 = vadd.f32 %v5756, %v5768
        %v5777 = vadd.f32 %v5757, %v5769
        %v5778 = vadd.f32 %v5758, %v5770
        %v5779 = vadd.f32 %v5759, %v5771
        %v5780 = vadd.f32 %v5760, %v5772
        %v5781 = vadd.f32 %v5761, %v5773
        %v5782 = vadd.f32 %v5762, %v5774
        %v5783 = vadd.f32 %v5763, %v5775
        %5784 = vset.pattern.permute.xlu0 14
        %5785 = vperm.xlu0 %5784, %v5737
        %v5786 = vpop.permute.xlu0 %5785
        %v5788 = vmul.f32 %v5786, %v5384
        %v5789 = vmul.f32 %v5786, %v5385
        %v5790 = vmul.f32 %v5786, %v5386
        %v5791 = vmul.f32 %v5786, %v5387
        %v5792 = vmul.f32 %v5786, %v5388
        %v5793 = vmul.f32 %v5786, %v5389
        %v5794 = vmul.f32 %v5786, %v5390
        %v5795 = vmul.f32 %v5786, %v5391
        %v5796 = vadd.f32 %v5776, %v5788
        %v5797 = vadd.f32 %v5777, %v5789
        %v5798 = vadd.f32 %v5778, %v5790
        %v5799 = vadd.f32 %v5779, %v5791
        %v5800 = vadd.f32 %v5780, %v5792
        %v5801 = vadd.f32 %v5781, %v5793
        %v5802 = vadd.f32 %v5782, %v5794
        %v5803 = vadd.f32 %v5783, %v5795
        %v5804 = vmax.f32 %v5796, 0.0
        %v5805 = vmax.f32 %v5797, 0.0
        %v5806 = vmax.f32 %v5798, 0.0
        %v5807 = vmax.f32 %v5799, 0.0
        %v5808 = vmax.f32 %v5800, 0.0
        %v5809 = vmax.f32 %v5801, 0.0
        %v5810 = vmax.f32 %v5802, 0.0
        %v5811 = vmax.f32 %v5803, 0.0
        %5812 = vst [vmem:[%s705 + $0x1c0] sm:$0xff] %v5804
        %5813 = vst [vmem:[%s705 + $0x1c8] sm:$0xff] %v5805
        %5814 = vst [vmem:[%s705 + $0x1d0] sm:$0xff] %v5806
        %5815 = vst [vmem:[%s705 + $0x1d8] sm:$0xff] %v5807
        %5816 = vst [vmem:[%s705 + $0x1e0] sm:$0xff] %v5808
        %5817 = vst [vmem:[%s705 + $0x1e8] sm:$0xff] %v5809
        %5818 = vst [vmem:[%s705 + $0x1f0] sm:$0xff] %v5810
        %5819 = vst [vmem:[%s705 + $0x1f8] sm:$0xff] %v5811
        %v5820 = vld [vmem:[#allocation5] sm:$0xff]
        %v5821 = vld [vmem:[#allocation2] sm:$0xff]
        %5823 = vset.pattern.permute.xlu0 15
        %5824 = vperm.xlu0 %5823, %v5821
        %v5825 = vpop.permute.xlu0 %5824
        %v5827 = vmul.f32 %v5825, %v5346
        %v5828 = vmul.f32 %v5825, %v5347
        %v5829 = vmul.f32 %v5825, %v5348
        %v5830 = vmul.f32 %v5825, %v5349
        %v5831 = vmul.f32 %v5825, %v5350
        %v5832 = vmul.f32 %v5825, %v5351
        %v5833 = vmul.f32 %v5825, %v5352
        %v5834 = vmul.f32 %v5825, %v5353
        %5836 = vset.pattern.permute.xlu0 5
        %5837 = vperm.xlu0 %5836, %v5820
        %v5838 = vpop.permute.xlu0 %5837
        %v5840 = vadd.f32 %v5838, %v5827
        %v5841 = vadd.f32 %v5838, %v5828
        %v5842 = vadd.f32 %v5838, %v5829
        %v5843 = vadd.f32 %v5838, %v5830
        %v5844 = vadd.f32 %v5838, %v5831
        %v5845 = vadd.f32 %v5838, %v5832
        %v5846 = vadd.f32 %v5838, %v5833
        %v5847 = vadd.f32 %v5838, %v5834
        %5848 = vset.pattern.permute.xlu0 16
        %5849 = vperm.xlu0 %5848, %v5821
        %v5850 = vpop.permute.xlu0 %5849
        %v5852 = vmul.f32 %v5850, %v5365
        %v5853 = vmul.f32 %v5850, %v5366
        %v5854 = vmul.f32 %v5850, %v5367
        %v5855 = vmul.f32 %v5850, %v5368
        %v5856 = vmul.f32 %v5850, %v5369
        %v5857 = vmul.f32 %v5850, %v5370
        %v5858 = vmul.f32 %v5850, %v5371
        %v5859 = vmul.f32 %v5850, %v5372
        %v5860 = vadd.f32 %v5840, %v5852
        %v5861 = vadd.f32 %v5841, %v5853
        %v5862 = vadd.f32 %v5842, %v5854
        %v5863 = vadd.f32 %v5843, %v5855
        %v5864 = vadd.f32 %v5844, %v5856
        %v5865 = vadd.f32 %v5845, %v5857
        %v5866 = vadd.f32 %v5846, %v5858
        %v5867 = vadd.f32 %v5847, %v5859
        %5868 = vset.pattern.permute.xlu0 17
        %5869 = vperm.xlu0 %5868, %v5821
        %v5870 = vpop.permute.xlu0 %5869
        %v5872 = vmul.f32 %v5870, %v5384
        %v5873 = vmul.f32 %v5870, %v5385
        %v5874 = vmul.f32 %v5870, %v5386
        %v5875 = vmul.f32 %v5870, %v5387
        %v5876 = vmul.f32 %v5870, %v5388
        %v5877 = vmul.f32 %v5870, %v5389
        %v5878 = vmul.f32 %v5870, %v5390
        %v5879 = vmul.f32 %v5870, %v5391
        %v5880 = vadd.f32 %v5860, %v5872
        %v5881 = vadd.f32 %v5861, %v5873
        %v5882 = vadd.f32 %v5862, %v5874
        %v5883 = vadd.f32 %v5863, %v5875
        %v5884 = vadd.f32 %v5864, %v5876
        %v5885 = vadd.f32 %v5865, %v5877
        %v5886 = vadd.f32 %v5866, %v5878
        %v5887 = vadd.f32 %v5867, %v5879
        %v5888 = vmax.f32 %v5880, 0.0
        %v5889 = vmax.f32 %v5881, 0.0
        %v5890 = vmax.f32 %v5882, 0.0
        %v5891 = vmax.f32 %v5883, 0.0
        %v5892 = vmax.f32 %v5884, 0.0
        %v5893 = vmax.f32 %v5885, 0.0
        %v5894 = vmax.f32 %v5886, 0.0
        %v5895 = vmax.f32 %v5887, 0.0
        %5896 = vst [vmem:[%s790 + $0x1c0] sm:$0xff] %v5888
        %5897 = vst [vmem:[%s790 + $0x1c8] sm:$0xff] %v5889
        %5898 = vst [vmem:[%s790 + $0x1d0] sm:$0xff] %v5890
        %5899 = vst [vmem:[%s790 + $0x1d8] sm:$0xff] %v5891
        %5900 = vst [vmem:[%s790 + $0x1e0] sm:$0xff] %v5892
        %5901 = vst [vmem:[%s790 + $0x1e8] sm:$0xff] %v5893
        %5902 = vst [vmem:[%s790 + $0x1f0] sm:$0xff] %v5894
        %5903 = vst [vmem:[%s790 + $0x1f8] sm:$0xff] %v5895
        %v5904 = vld [vmem:[#allocation5] sm:$0xff]
        %v5905 = vld [vmem:[#allocation2] sm:$0xff]
        %5907 = vset.pattern.permute.xlu0 18
        %5908 = vperm.xlu0 %5907, %v5905
        %v5909 = vpop.permute.xlu0 %5908
        %v5911 = vmul.f32 %v5909, %v5346
        %v5912 = vmul.f32 %v5909, %v5347
        %v5913 = vmul.f32 %v5909, %v5348
        %v5914 = vmul.f32 %v5909, %v5349
        %v5915 = vmul.f32 %v5909, %v5350
        %v5916 = vmul.f32 %v5909, %v5351
        %v5917 = vmul.f32 %v5909, %v5352
        %v5918 = vmul.f32 %v5909, %v5353
        %5920 = vset.pattern.permute.xlu0 6
        %5921 = vperm.xlu0 %5920, %v5904
        %v5922 = vpop.permute.xlu0 %5921
        %v5924 = vadd.f32 %v5922, %v5911
        %v5925 = vadd.f32 %v5922, %v5912
        %v5926 = vadd.f32 %v5922, %v5913
        %v5927 = vadd.f32 %v5922, %v5914
        %v5928 = vadd.f32 %v5922, %v5915
        %v5929 = vadd.f32 %v5922, %v5916
        %v5930 = vadd.f32 %v5922, %v5917
        %v5931 = vadd.f32 %v5922, %v5918
        %5932 = vset.pattern.permute.xlu0 19
        %5933 = vperm.xlu0 %5932, %v5905
        %v5934 = vpop.permute.xlu0 %5933
        %v5936 = vmul.f32 %v5934, %v5365
        %v5937 = vmul.f32 %v5934, %v5366
        %v5938 = vmul.f32 %v5934, %v5367
        %v5939 = vmul.f32 %v5934, %v5368
        %v5940 = vmul.f32 %v5934, %v5369
        %v5941 = vmul.f32 %v5934, %v5370
        %v5942 = vmul.f32 %v5934, %v5371
        %v5943 = vmul.f32 %v5934, %v5372
        %v5944 = vadd.f32 %v5924, %v5936
        %v5945 = vadd.f32 %v5925, %v5937
        %v5946 = vadd.f32 %v5926, %v5938
        %v5947 = vadd.f32 %v5927, %v5939
        %v5948 = vadd.f32 %v5928, %v5940
        %v5949 = vadd.f32 %v5929, %v5941
        %v5950 = vadd.f32 %v5930, %v5942
        %v5951 = vadd.f32 %v5931, %v5943
        %5952 = vset.pattern.permute.xlu0 20
        %5953 = vperm.xlu0 %5952, %v5905
        %v5954 = vpop.permute.xlu0 %5953
        %v5956 = vmul.f32 %v5954, %v5384
        %v5957 = vmul.f32 %v5954, %v5385
        %v5958 = vmul.f32 %v5954, %v5386
        %v5959 = vmul.f32 %v5954, %v5387
        %v5960 = vmul.f32 %v5954, %v5388
        %v5961 = vmul.f32 %v5954, %v5389
        %v5962 = vmul.f32 %v5954, %v5390
        %v5963 = vmul.f32 %v5954, %v5391
        %v5964 = vadd.f32 %v5944, %v5956
        %v5965 = vadd.f32 %v5945, %v5957
        %v5966 = vadd.f32 %v5946, %v5958
        %v5967 = vadd.f32 %v5947, %v5959
        %v5968 = vadd.f32 %v5948, %v5960
        %v5969 = vadd.f32 %v5949, %v5961
        %v5970 = vadd.f32 %v5950, %v5962
        %v5971 = vadd.f32 %v5951, %v5963
        %v5972 = vmax.f32 %v5964, 0.0
        %v5973 = vmax.f32 %v5965, 0.0
        %v5974 = vmax.f32 %v5966, 0.0
        %v5975 = vmax.f32 %v5967, 0.0
        %v5976 = vmax.f32 %v5968, 0.0
        %v5977 = vmax.f32 %v5969, 0.0
        %v5978 = vmax.f32 %v5970, 0.0
        %v5979 = vmax.f32 %v5971, 0.0
        %5980 = vst [vmem:[%s875 + $0x1c0] sm:$0xff] %v5972
        %5981 = vst [vmem:[%s875 + $0x1c8] sm:$0xff] %v5973
        %5982 = vst [vmem:[%s875 + $0x1d0] sm:$0xff] %v5974
        %5983 = vst [vmem:[%s875 + $0x1d8] sm:$0xff] %v5975
        %5984 = vst [vmem:[%s875 + $0x1e0] sm:$0xff] %v5976
        %5985 = vst [vmem:[%s875 + $0x1e8] sm:$0xff] %v5977
        %5986 = vst [vmem:[%s875 + $0x1f0] sm:$0xff] %v5978
        %5987 = vst [vmem:[%s875 + $0x1f8] sm:$0xff] %v5979
        %v5988 = vld [vmem:[#allocation5] sm:$0xff]
        %v5989 = vld [vmem:[#allocation2] sm:$0xff]
        %5991 = vset.pattern.permute.xlu0 21
        %5992 = vperm.xlu0 %5991, %v5989
        %v5993 = vpop.permute.xlu0 %5992
        %v5995 = vmul.f32 %v5993, %v5346
        %v5996 = vmul.f32 %v5993, %v5347
        %v5997 = vmul.f32 %v5993, %v5348
        %v5998 = vmul.f32 %v5993, %v5349
        %v5999 = vmul.f32 %v5993, %v5350
        %v6000 = vmul.f32 %v5993, %v5351
        %v6001 = vmul.f32 %v5993, %v5352
        %v6002 = vmul.f32 %v5993, %v5353
        %6004 = vset.pattern.permute.xlu0 7
        %6005 = vperm.xlu0 %6004, %v5988
        %v6006 = vpop.permute.xlu0 %6005
        %v6008 = vadd.f32 %v6006, %v5995
        %v6009 = vadd.f32 %v6006, %v5996
        %v6010 = vadd.f32 %v6006, %v5997
        %v6011 = vadd.f32 %v6006, %v5998
        %v6012 = vadd.f32 %v6006, %v5999
        %v6013 = vadd.f32 %v6006, %v6000
        %v6014 = vadd.f32 %v6006, %v6001
        %v6015 = vadd.f32 %v6006, %v6002
        %6016 = vset.pattern.permute.xlu0 22
        %6017 = vperm.xlu0 %6016, %v5989
        %v6018 = vpop.permute.xlu0 %6017
        %v6020 = vmul.f32 %v6018, %v5365
        %v6021 = vmul.f32 %v6018, %v5366
        %v6022 = vmul.f32 %v6018, %v5367
        %v6023 = vmul.f32 %v6018, %v5368
        %v6024 = vmul.f32 %v6018, %v5369
        %v6025 = vmul.f32 %v6018, %v5370
        %v6026 = vmul.f32 %v6018, %v5371
        %v6027 = vmul.f32 %v6018, %v5372
        %v6028 = vadd.f32 %v6008, %v6020
        %v6029 = vadd.f32 %v6009, %v6021
        %v6030 = vadd.f32 %v6010, %v6022
        %v6031 = vadd.f32 %v6011, %v6023
        %v6032 = vadd.f32 %v6012, %v6024
        %v6033 = vadd.f32 %v6013, %v6025
        %v6034 = vadd.f32 %v6014, %v6026
        %v6035 = vadd.f32 %v6015, %v6027
        %6036 = vset.pattern.permute.xlu0 23
        %6037 = vperm.xlu0 %6036, %v5989
        %v6038 = vpop.permute.xlu0 %6037
        %v6040 = vmul.f32 %v6038, %v5384
        %v6041 = vmul.f32 %v6038, %v5385
        %v6042 = vmul.f32 %v6038, %v5386
        %v6043 = vmul.f32 %v6038, %v5387
        %v6044 = vmul.f32 %v6038, %v5388
        %v6045 = vmul.f32 %v6038, %v5389
        %v6046 = vmul.f32 %v6038, %v5390
        %v6047 = vmul.f32 %v6038, %v5391
        %v6048 = vadd.f32 %v6028, %v6040
        %v6049 = vadd.f32 %v6029, %v6041
        %v6050 = vadd.f32 %v6030, %v6042
        %v6051 = vadd.f32 %v6031, %v6043
        %v6052 = vadd.f32 %v6032, %v6044
        %v6053 = vadd.f32 %v6033, %v6045
        %v6054 = vadd.f32 %v6034, %v6046
        %v6055 = vadd.f32 %v6035, %v6047
        %v6056 = vmax.f32 %v6048, 0.0
        %v6057 = vmax.f32 %v6049, 0.0
        %v6058 = vmax.f32 %v6050, 0.0
        %v6059 = vmax.f32 %v6051, 0.0
        %v6060 = vmax.f32 %v6052, 0.0
        %v6061 = vmax.f32 %v6053, 0.0
        %v6062 = vmax.f32 %v6054, 0.0
        %v6063 = vmax.f32 %v6055, 0.0
        %6064 = vst [vmem:[%s960 + $0x1c0] sm:$0xff] %v6056
        %6065 = vst [vmem:[%s960 + $0x1c8] sm:$0xff] %v6057
        %6066 = vst [vmem:[%s960 + $0x1d0] sm:$0xff] %v6058
        %6067 = vst [vmem:[%s960 + $0x1d8] sm:$0xff] %v6059
        %6068 = vst [vmem:[%s960 + $0x1e0] sm:$0xff] %v6060
        %6069 = vst [vmem:[%s960 + $0x1e8] sm:$0xff] %v6061
        %6070 = vst [vmem:[%s960 + $0x1f0] sm:$0xff] %v6062
        %6071 = vst [vmem:[%s960 + $0x1f8] sm:$0xff] %v6063
        %s6072 = sand.u32 %s111, 1
        %s6073 = scalar_lea.sflag [#allocation4], %s6072
        %s6074 = sand.u32 %s111, 1
        %s6075 = smul.addr %s6074, 4096
        %s6076 = scalar_lea.vmem [#allocation7], %s6075
        // Predicated region
        $region41: #{tpu_custom_call.1} parent=31 // pred_check
          %p6077 = pneg %p121
        $region42: #{tpu_custom_call.1} parent=31 // pred_check_branch
          %6079 = sbr.rel (%p6077) target = $region44
        $region43: #{tpu_custom_call.1} parent=31 // pred_region
          %s6080 = smul.u32 64, %s24
          %s6081 = ssub.s32 125, %s6080
          %p6082 = scmp.lt.s32.totalorder %s6081, 64
          %s6083 = scalar_select %p6082, %s6081, 64
          %s6084 = smul.u32 64, %s6083
          %s6085 = ssub.s32 4096, %s6084
          %s6086 = sshll.u32 %s6085, 4
          %6087 = vsyncadd %s6073, %s6086
          %p6088 = scmp.ne.s32.totalorder 0, %s6084
          %s6089 = smul.addr %s23, 1000
          %s6090 = sadd.s32 %s6080, %s6089
          %s6091 = smul.addr %s6090, 8
          %s6092 = scalar_lea.hbm %s3, %s6091
          %s6093 = smul.u32 %s6083, 8
          %s6094 = smul.u32 %s6093, 8
          %s6095 = sshll.u32 %s6076, 4
          %s6096 = int_to_ptr.vmem [resolvable:$true] %s6095
          %s6097 = sshll.u32 %s6092, 4
          %s6098 = int_to_ptr.hbm [resolvable:$true] %s6097
          %s6099 = sshll.u32 %s6094, 4
          %6103 = dma.vmem_to_hbm [thread:$0]  (%p6088), %s6096, %s6099, %s6098, %s6073, 8192, 16000, %s6093
        $region44: #{tpu_custom_call.1} parent=31 // pred_fallthru
          _
      $region32: #{tpu_custom_call.1} parent=5 // pred_fallthru
        _
      %p6104 = scmp.le.s32.totalorder 2, %s14
      // Predicated region
      $region45: #{tpu_custom_call.1} parent=5 // pred_check
        %p6105 = pneg %p6104
      $region46: #{tpu_custom_call.1} parent=5 // pred_check_branch
        %6107 = sbr.rel (%p6105) target = $region48
      $region47: #{tpu_custom_call.1} parent=5 // pred_region
        %s6108 = ssub.s32 %s14, 2
        // Predicated region
        $region49: #{tpu_custom_call.1} parent=47 // pred_check
          %p6109 = pneg %p127
        $region50: #{tpu_custom_call.1} parent=47 // pred_check_branch
          %6111 = sbr.rel (%p6109) target = $region52
        $region51: #{tpu_custom_call.1} parent=47 // pred_region
          %s6112 = sand.u32 %s112, 1
          %s6113 = scalar_lea.sflag [#allocation4], %s6112
          %s6114 = sand.u32 %s112, 1
          %s6115 = smul.addr %s6114, 4096
          %s6116 = scalar_lea.vmem [#allocation7], %s6115
          %6118 = dma.done %s6113, 65536
        $region52: #{tpu_custom_call.1} parent=47 // pred_fallthru
          _
      $region48: #{tpu_custom_call.1} parent=5 // pred_fallthru
        _
    $region6: #{tpu_custom_call.1} parent=1 // loop_footer
      %s18 = sadd.s32 1, %s14
    $region7: #{tpu_custom_call.1} parent=1 // loop_footer_branch
      %13 = sbr.rel target = $region3
    $region8: #{tpu_custom_call.1} parent=1 // loop_exit
      _
    %6119 = vsyncpa [#allocation3], 1
    %s6120 = scalar_lea.sflag [#allocation3], 1
    %6121 = vsyncpa %s6120, 1
    %6122 = vsyncpa [#allocation6], 1
    %6123 = vsyncpa [#allocation4], 1
    %s6124 = scalar_lea.sflag [#allocation4], 1
    %6125 = vsyncpa %s6124, 1

</llo_original>
